<compile_context>
chip_gen: v7x
topology: tpu7x:2x2x1
jax: 0.10.0
libtpu: 0.0.40
codegen_flags: <defaults>
</compile_context>

<pallas_src>
import functools
import math
import numpy as np

import jax
import jax.numpy as jnp
from jax import lax
from jax.experimental import pallas as pl
from jax.experimental.pallas import tpu as pltpu

EPS = 1e-5  # nn.LayerNorm default eps


def _layernorm(x, w, b):
    # PyTorch nn.LayerNorm: biased variance over last dim, eps inside sqrt.
    mean = jnp.mean(x, axis=-1, keepdims=True)
    var = jnp.mean(jnp.square(x - mean), axis=-1, keepdims=True)
    xn = (x - mean) * lax.rsqrt(var + EPS)
    return xn * w + b


def resnet_kernel(x_ref, wf_ref, bf_ref,
                  nw_ref, nb_ref, w0_ref, b0_ref, w1_ref, b1_ref,
                  lnw_ref, lnb_ref, wh_ref, bh_ref,
                  out_ref):
    n_layers = nw_ref.shape[0]  # static at trace time

    # first_layer: bf16 activation stream x bf16 (embedding-folded) weight,
    # f32 accumulation on the MXU.
    x = jnp.dot(x_ref[...], wf_ref[...],
                preferred_element_type=jnp.float32) + bf_ref[...]

    # residual blocks (statically unrolled; n_layers is small). Matmuls stay
    # f32 — the MXU is nowhere near binding at d=32, and this removes the
    # VPU pack casts (v5e has no bf16 VALU) while improving accuracy.
    for l in range(n_layers):
        z = _layernorm(x, nw_ref[l:l + 1, :], nb_ref[l:l + 1, :])      # norm
        z = jnp.dot(z, w0_ref[l],
                    preferred_element_type=jnp.float32) + b0_ref[l:l + 1, :]
        z = jnp.maximum(z, 0.0)                                        # relu
        # hidden_dropout: identity (eval mode)
        z = jnp.dot(z, w1_ref[l],
                    preferred_element_type=jnp.float32) + b1_ref[l:l + 1, :]
        # residual_dropout: identity (eval mode)
        x = x + z

    # last normalization + activation + head; bf16 store (lane-dense padded).
    x = _layernorm(x, lnw_ref[...], lnb_ref[...])
    x = jnp.maximum(x, 0.0)
    out_ref[...] = (jnp.dot(x, wh_ref[...], preferred_element_type=jnp.float32)
                    + bh_ref[...]).astype(out_ref.dtype)


def init_params(key, *, d_numerical, categories, d_embedding, d,
                d_hidden_factor, n_layers, d_out):
    d_hidden = int(d * d_hidden_factor)
    d_in = d_numerical + len(categories) * d_embedding
    ks = jax.random.split(key, 16)

    def u(k, shape, fan_in):
        bound = 1.0 / math.sqrt(fan_in)
        return jax.random.uniform(k, shape, jnp.float32, -bound, bound)

    params = {
        "emb_w": jax.random.normal(ks[0], (int(sum(categories)), d_embedding),
                                   jnp.float32) * 0.1,
        "wf": u(ks[1], (d_in, d), d_in),
        "bf": u(ks[2], (1, d), d_in),
        "norm_w": jnp.ones((n_layers, d), jnp.float32),
        "norm_b": jnp.zeros((n_layers, d), jnp.float32),
        "w0": u(ks[3], (n_layers, d, d_hidden), d),
        "b0": u(ks[4], (n_layers, d_hidden), d),
        "w1": u(ks[5], (n_layers, d_hidden, d), d_hidden),
        "b1": u(ks[6], (n_layers, d), d_hidden),
        "ln_w": jnp.ones((1, d), jnp.float32),
        "ln_b": jnp.zeros((1, d), jnp.float32),
        "wh": u(ks[7], (d, d_out), d),
        "bh": u(ks[8], (1, d_out), d),
    }
    return params


def prepare_params(params, *, d_numerical, categories, d_embedding, d_out):
    """One-time layout prep (hoisted out of the per-call path).

    Folds the categorical embedding table into the first-layer weight:
      [x_num, onehot(codes)] @ [wf_num ; emb_w @ wf_cat]  ==
      [x_num, concat(emb gather)] @ wf
    Zero-pads the head to a lane-dense 128-wide output and casts the
    streamed-operand first-layer weight to bf16.
    """
    d = params["wf"].shape[1]
    offsets = np.concatenate([[0], np.cumsum(categories)[:-1]]).astype(np.int32)

    wf_num = params["wf"][:d_numerical]                         # (d_num, d)
    wf_cat = params["wf"][d_numerical:]                          # (n_cat*d_emb, d)
    folded = [params["emb_w"][int(o):int(o) + int(c)]
              @ wf_cat[j * d_embedding:(j + 1) * d_embedding]
              for j, (o, c) in enumerate(zip(offsets, categories))]
    w_first = jnp.concatenate([wf_num] + folded, axis=0)         # (d_num+sum_cats, d)

    d_in_eff = w_first.shape[0]
    d_in_pad = ((d_in_eff + 15) // 16) * 16                      # bf16 sublane pack
    w_first = jnp.pad(w_first,
                      ((0, d_in_pad - d_in_eff), (0, 0))).astype(jnp.bfloat16)

    d_out_pad = ((d_out + 127) // 128) * 128                     # lane-dense store
    wh = jnp.pad(params["wh"], ((0, 0), (0, d_out_pad - d_out)))
    bh = jnp.pad(params["bh"], ((0, 0), (0, d_out_pad - d_out)))

    return {
        "w_first": w_first, "bf": params["bf"],
        "norm_w": params["norm_w"], "norm_b": params["norm_b"],
        "w0": params["w0"], "b0": params["b0"],
        "w1": params["w1"], "b1": params["b1"],
        "ln_w": params["ln_w"], "ln_b": params["ln_b"],
        "wh": wh, "bh": bh,
        "offsets": jnp.asarray(offsets, jnp.int32),
    }


@functools.partial(jax.jit,
                   static_argnames=("num_cols", "cat_cols", "sum_cats",
                                    "d_out", "tile_b"))
def resnet_forward(x, prep, *, num_cols, cat_cols, sum_cats, d_out, tile_b=512):
    """Per-call forward. Everything (one-hot build, pad, pallas_call, slice)
    lives inside one jit so XLA fuses the glue around the kernel."""
    B = x.shape[0]
    tile_b = max(16, (tile_b // 16) * 16)          # bf16-sublane-legal batch tile
    b_pad = ((B + tile_b - 1) // tile_b) * tile_b  # keep >=2 steps on v7x when B allows

    # ---- feature glue: numeric pass-through + one-hot of categorical codes.
    parts = []
    if num_cols:
        parts.append(x[:, np.asarray(num_cols)].astype(jnp.bfloat16))
    if cat_cols:
        codes = x[:, np.asarray(cat_cols)].astype(jnp.int32) + prep["offsets"][None, :]
        iota = jnp.arange(sum_cats, dtype=jnp.int32)
        onehot = (codes[:, :, None] == iota[None, None, :]).sum(axis=1)
        parts.append(onehot.astype(jnp.bfloat16))
    x_in = jnp.concatenate(parts, axis=-1)

    d_in_pad = prep["w_first"].shape[0]
    d = prep["w_first"].shape[1]
    n_layers, _, d_hidden = prep["w0"].shape
    d_out_pad = prep["wh"].shape[1]

    x_p = jnp.pad(x_in, ((0, b_pad - B), (0, d_in_pad - x_in.shape[1])))

    ins = (x_p, prep["w_first"], prep["bf"],
           prep["norm_w"], prep["norm_b"],
           prep["w0"], prep["b0"], prep["w1"], prep["b1"],
           prep["ln_w"], prep["ln_b"], prep["wh"], prep["bh"])

    # batch-tiled input/output; weights stay VMEM-resident via constant maps.
    in_specs = [
        pl.BlockSpec((tile_b, d_in_pad), lambda i: (i, 0)),          # x (streamed)
        pl.BlockSpec((d_in_pad, d), lambda i: (0, 0)),               # w_first
        pl.BlockSpec((1, d), lambda i: (0, 0)),                      # bf
        pl.BlockSpec((n_layers, d), lambda i: (0, 0)),               # norm_w
        pl.BlockSpec((n_layers, d), lambda i: (0, 0)),               # norm_b
        pl.BlockSpec((n_layers, d, d_hidden), lambda i: (0, 0, 0)),  # w0
        pl.BlockSpec((n_layers, d_hidden), lambda i: (0, 0)),        # b0
        pl.BlockSpec((n_layers, d_hidden, d), lambda i: (0, 0, 0)),  # w1
        pl.BlockSpec((n_layers, d), lambda i: (0, 0)),               # b1
        pl.BlockSpec((1, d), lambda i: (0, 0)),                      # ln_w
        pl.BlockSpec((1, d), lambda i: (0, 0)),                      # ln_b
        pl.BlockSpec((d, d_out_pad), lambda i: (0, 0)),              # wh
        pl.BlockSpec((1, d_out_pad), lambda i: (0, 0)),              # bh
    ]
    out_spec = pl.BlockSpec((tile_b, d_out_pad), lambda i: (i, 0))

    flops = 2 * b_pad * (d_in_pad * d + n_layers * 2 * d * d_hidden
                         + d * d_out_pad)
    bytes_accessed = int(sum(int(a.size) * a.dtype.itemsize for a in ins)
                         + b_pad * d_out_pad * 2)                    # bf16 out
    cost = pl.CostEstimate(flops=int(flops),
                           transcendentals=int(b_pad * (n_layers + 1)),
                           bytes_accessed=bytes_accessed)

    out = pl.pallas_call(
        resnet_kernel,
        out_shape=jax.ShapeDtypeStruct((b_pad, d_out_pad), jnp.bfloat16),
        grid_spec=pltpu.PrefetchScalarGridSpec(
            num_scalar_prefetch=0,
            grid=(b_pad // tile_b,),
            in_specs=in_specs,
            out_specs=out_spec,
        ),
        compiler_params=pltpu.CompilerParams(
            dimension_semantics=("parallel",)),   # v7x: shard batch over 2 TCs
        cost_estimate=cost,
    )(*ins)

    # regression=True -> no squeeze; slice is inside the jit (no extra copy).
    return out[:B, :d_out].astype(jnp.float32)


def resnet_reference(x, params, categorical_indicator, category_offsets):
    """Pure-JAX f32 reference of the original forward (for correctness)."""
    cat_ind = np.asarray(categorical_indicator, dtype=bool)
    x_num = x[:, np.where(~cat_ind)[0]].astype(jnp.float32)
    x_cat = x[:, np.where(cat_ind)[0]].astype(jnp.int32)
    idx = x_cat + category_offsets[None, :]
    emb = jnp.take(params["emb_w"], idx, axis=0)
    h = jnp.concatenate([x_num, emb.reshape(x.shape[0], -1)], axis=-1)
    h = h @ params["wf"] + params["bf"]
    n_layers = params["norm_w"].shape[0]
    for l in range(n_layers):
        z = _layernorm(h, params["norm_w"][l], params["norm_b"][l])
        z = jnp.maximum(z @ params["w0"][l] + params["b0"][l], 0.0)
        z = z @ params["w1"][l] + params["b1"][l]
        h = h + z
    h = jnp.maximum(_layernorm(h, params["ln_w"], params["ln_b"]), 0.0)
    return h @ params["wh"] + params["bh"]


if __name__ == "__main__":
    # ---- configuration (small shapes)
    d_numerical = 4
    categories = [3, 5]
    d_embedding = 8
    d = 32
    d_hidden_factor = 2.0
    n_layers = 2
    d_out = 2
    B = 1000          # -> b_pad=1024, 2 grid steps at tile_b=512 (feeds both v7x TCs)
    tile_b = 512

    key = jax.random.PRNGKey(0)
    k_params, k_num, k_cat = jax.random.split(key, 3)

    params = init_params(k_params, d_numerical=d_numerical, categories=categories,
                         d_embedding=d_embedding, d=d,
                         d_hidden_factor=d_hidden_factor, n_layers=n_layers,
                         d_out=d_out)

    # input: first 4 columns numeric, last 2 columns categorical codes (as floats)
    categorical_indicator = np.array([False] * d_numerical + [True] * len(categories))
    category_offsets = jnp.array(
        np.concatenate([[0], np.cumsum(categories)[:-1]]), dtype=jnp.int32)
    num_cols = tuple(int(c) for c in np.where(~categorical_indicator)[0])
    cat_cols = tuple(int(c) for c in np.where(categorical_indicator)[0])
    sum_cats = int(sum(categories))

    x_num = jax.random.normal(k_num, (B, d_numerical), jnp.float32)
    x_cat = jnp.stack(
        [jax.random.randint(jax.random.fold_in(k_cat, i), (B,), 0, categories[i])
         for i in range(len(categories))], axis=1).astype(jnp.float32)
    x = jnp.concatenate([x_num, x_cat], axis=1)   # (B, 6)

    # one-time weight prep (fold embeddings, pad head, cast) — hoisted off the
    # per-call path.
    prep = prepare_params(params, d_numerical=d_numerical, categories=categories,
                          d_embedding=d_embedding, d_out=d_out)

    out = resnet_forward(x, prep, num_cols=num_cols, cat_cols=cat_cols,
                         sum_cats=sum_cats, d_out=d_out, tile_b=tile_b)
    out = jax.block_until_ready(out)
    assert out.shape == (B, d_out)

    ref = resnet_reference(x, params, categorical_indicator, category_offsets)
    # bf16 first-matmul operands + bf16 output store (f32 everywhere else)
    # -> tolerance loosened vs the f32 reference.
    np.testing.assert_allclose(np.asarray(out), np.asarray(ref),
                               rtol=2e-2, atol=2e-2)

    print("KERNEL_OK")
</pallas_src>

<mosaic_0001>
module attributes {stable_mosaic.version = 11 : i64} {
  func.func @resnet_kernel(%arg0: i32, %arg1: memref<512x16xbf16, #tpu.memory_space<vmem>>, %arg2: memref<16x32xbf16, #tpu.memory_space<vmem>>, %arg3: memref<1x32xf32, #tpu.memory_space<vmem>>, %arg4: memref<2x32xf32, #tpu.memory_space<vmem>>, %arg5: memref<2x32xf32, #tpu.memory_space<vmem>>, %arg6: memref<2x32x64xf32, #tpu.memory_space<vmem>>, %arg7: memref<2x64xf32, #tpu.memory_space<vmem>>, %arg8: memref<2x64x32xf32, #tpu.memory_space<vmem>>, %arg9: memref<2x32xf32, #tpu.memory_space<vmem>>, %arg10: memref<1x32xf32, #tpu.memory_space<vmem>>, %arg11: memref<1x32xf32, #tpu.memory_space<vmem>>, %arg12: memref<32x128xf32, #tpu.memory_space<vmem>>, %arg13: memref<1x128xf32, #tpu.memory_space<vmem>>, %arg14: memref<512x128xbf16, #tpu.memory_space<vmem>>) attributes {dimension_semantics = [#tpu.dimension_semantics<parallel>], iteration_bounds = array<i64: 2>, scalar_prefetch = 0 : i64, scratch_operands = 0 : i64, tpu.core_type = #tpu.core_type<tc>, window_params = [{transform_indices = @transform_0, window_bounds = array<i64: 512, 16>}, {pipeline_mode = #tpu.pipeline_mode<synchronous>, transform_indices = @transform_1, window_bounds = array<i64: 16, 32>}, {pipeline_mode = #tpu.pipeline_mode<synchronous>, transform_indices = @transform_2, window_bounds = array<i64: 1, 32>}, {pipeline_mode = #tpu.pipeline_mode<synchronous>, transform_indices = @transform_3, window_bounds = array<i64: 2, 32>}, {pipeline_mode = #tpu.pipeline_mode<synchronous>, transform_indices = @transform_4, window_bounds = array<i64: 2, 32>}, {pipeline_mode = #tpu.pipeline_mode<synchronous>, transform_indices = @transform_5, window_bounds = array<i64: 2, 32, 64>}, {pipeline_mode = #tpu.pipeline_mode<synchronous>, transform_indices = @transform_6, window_bounds = array<i64: 2, 64>}, {pipeline_mode = #tpu.pipeline_mode<synchronous>, transform_indices = @transform_7, window_bounds = array<i64: 2, 64, 32>}, {pipeline_mode = #tpu.pipeline_mode<synchronous>, transform_indices = @transform_8, window_bounds = array<i64: 2, 32>}, {pipeline_mode = #tpu.pipeline_mode<synchronous>, transform_indices = @transform_9, window_bounds = array<i64: 1, 32>}, {pipeline_mode = #tpu.pipeline_mode<synchronous>, transform_indices = @transform_10, window_bounds = array<i64: 1, 32>}, {pipeline_mode = #tpu.pipeline_mode<synchronous>, transform_indices = @transform_11, window_bounds = array<i64: 32, 128>}, {pipeline_mode = #tpu.pipeline_mode<synchronous>, transform_indices = @transform_12, window_bounds = array<i64: 1, 128>}, {transform_indices = @transform_13, window_bounds = array<i64: 512, 128>}]} {
    %c0 = arith.constant 0 : index
    %c0_0 = arith.constant 0 : index
    %0 = vector.load %arg1[%c0, %c0_0] : memref<512x16xbf16, #tpu.memory_space<vmem>>, vector<512x16xbf16>
    %c0_1 = arith.constant 0 : index
    %c0_2 = arith.constant 0 : index
    %1 = vector.load %arg2[%c0_1, %c0_2] : memref<16x32xbf16, #tpu.memory_space<vmem>>, vector<16x32xbf16>
    %cst = arith.constant dense<0.000000e+00> : vector<512x32xf32>
    %2 = tpu.matmul %0, %1, %cst {dimension_numbers = #tpu.dot_dimension_numbers<[1], [0], [0], [1], [0, 0, 1, 1], [], []>} : vector<512x16xbf16>, vector<16x32xbf16>, vector<512x32xf32> -> vector<512x32xf32>
    %c0_3 = arith.constant 0 : index
    %c0_4 = arith.constant 0 : index
    %3 = vector.load %arg3[%c0_3, %c0_4] : memref<1x32xf32, #tpu.memory_space<vmem>>, vector<1x32xf32>
    %4 = vector.broadcast %3 : vector<1x32xf32> to vector<512x32xf32>
    %5 = arith.addf %2, %4 : vector<512x32xf32>
    %c0_5 = arith.constant 0 : index
    %c0_6 = arith.constant 0 : index
    %6 = vector.load %arg4[%c0_5, %c0_6] : memref<2x32xf32, #tpu.memory_space<vmem>>, vector<1x32xf32>
    %c0_7 = arith.constant 0 : index
    %c0_8 = arith.constant 0 : index
    %7 = vector.load %arg5[%c0_7, %c0_8] : memref<2x32xf32, #tpu.memory_space<vmem>>, vector<1x32xf32>
    %cst_9 = arith.constant dense<0.000000e+00> : vector<512xf32>
    %8 = vector.multi_reduction <add>, %5, %cst_9 [1] : vector<512x32xf32> to vector<512xf32>
    %9 = vector.shape_cast %8 : vector<512xf32> to vector<512x1xf32>
    %cst_10 = arith.constant 3.200000e+01 : f32
    %10 = vector.broadcast %cst_10 : f32 to vector<512x1xf32>
    %11 = arith.divf %9, %10 : vector<512x1xf32>
    %12 = vector.broadcast %11 : vector<512x1xf32> to vector<512x32xf32>
    %13 = arith.subf %5, %12 : vector<512x32xf32>
    %14 = arith.mulf %13, %13 : vector<512x32xf32>
    %cst_11 = arith.constant dense<0.000000e+00> : vector<512xf32>
    %15 = vector.multi_reduction <add>, %14, %cst_11 [1] : vector<512x32xf32> to vector<512xf32>
    %16 = vector.shape_cast %15 : vector<512xf32> to vector<512x1xf32>
    %cst_12 = arith.constant 3.200000e+01 : f32
    %17 = vector.broadcast %cst_12 : f32 to vector<512x1xf32>
    %18 = arith.divf %16, %17 : vector<512x1xf32>
    %19 = vector.broadcast %11 : vector<512x1xf32> to vector<512x32xf32>
    %20 = arith.subf %5, %19 : vector<512x32xf32>
    %cst_13 = arith.constant 9.99999974E-6 : f32
    %21 = vector.broadcast %cst_13 : f32 to vector<512x1xf32>
    %22 = arith.addf %18, %21 : vector<512x1xf32>
    %23 = math.rsqrt %22 : vector<512x1xf32>
    %24 = vector.broadcast %23 : vector<512x1xf32> to vector<512x32xf32>
    %25 = arith.mulf %20, %24 : vector<512x32xf32>
    %26 = vector.broadcast %6 : vector<1x32xf32> to vector<512x32xf32>
    %27 = arith.mulf %25, %26 : vector<512x32xf32>
    %28 = vector.broadcast %7 : vector<1x32xf32> to vector<512x32xf32>
    %29 = arith.addf %27, %28 : vector<512x32xf32>
    %c0_14 = arith.constant 0 : index
    %c0_15 = arith.constant 0 : index
    %c0_16 = arith.constant 0 : index
    %30 = vector.load %arg6[%c0_14, %c0_15, %c0_16] : memref<2x32x64xf32, #tpu.memory_space<vmem>>, vector<1x32x64xf32>
    %31 = vector.shape_cast %30 : vector<1x32x64xf32> to vector<32x64xf32>
    %cst_17 = arith.constant dense<0.000000e+00> : vector<512x64xf32>
    %32 = tpu.matmul %29, %31, %cst_17 {dimension_numbers = #tpu.dot_dimension_numbers<[1], [0], [0], [1], [0, 0, 1, 1], [], []>} : vector<512x32xf32>, vector<32x64xf32>, vector<512x64xf32> -> vector<512x64xf32>
    %c0_18 = arith.constant 0 : index
    %c0_19 = arith.constant 0 : index
    %33 = vector.load %arg7[%c0_18, %c0_19] : memref<2x64xf32, #tpu.memory_space<vmem>>, vector<1x64xf32>
    %34 = vector.broadcast %33 : vector<1x64xf32> to vector<512x64xf32>
    %35 = arith.addf %32, %34 : vector<512x64xf32>
    %cst_20 = arith.constant 0.000000e+00 : f32
    %36 = vector.broadcast %cst_20 : f32 to vector<512x64xf32>
    %37 = arith.maximumf %35, %36 : vector<512x64xf32>
    %c0_21 = arith.constant 0 : index
    %c0_22 = arith.constant 0 : index
    %c0_23 = arith.constant 0 : index
    %38 = vector.load %arg8[%c0_21, %c0_22, %c0_23] : memref<2x64x32xf32, #tpu.memory_space<vmem>>, vector<1x64x32xf32>
    %39 = vector.shape_cast %38 : vector<1x64x32xf32> to vector<64x32xf32>
    %cst_24 = arith.constant dense<0.000000e+00> : vector<512x32xf32>
    %40 = tpu.matmul %37, %39, %cst_24 {dimension_numbers = #tpu.dot_dimension_numbers<[1], [0], [0], [1], [0, 0, 1, 1], [], []>} : vector<512x64xf32>, vector<64x32xf32>, vector<512x32xf32> -> vector<512x32xf32>
    %c0_25 = arith.constant 0 : index
    %c0_26 = arith.constant 0 : index
    %41 = vector.load %arg9[%c0_25, %c0_26] : memref<2x32xf32, #tpu.memory_space<vmem>>, vector<1x32xf32>
    %42 = vector.broadcast %41 : vector<1x32xf32> to vector<512x32xf32>
    %43 = arith.addf %40, %42 : vector<512x32xf32>
    %44 = arith.addf %5, %43 : vector<512x32xf32>
    %c1 = arith.constant 1 : index
    %c0_27 = arith.constant 0 : index
    %45 = vector.load %arg4[%c1, %c0_27] : memref<2x32xf32, #tpu.memory_space<vmem>>, vector<1x32xf32>
    %c1_28 = arith.constant 1 : index
    %c0_29 = arith.constant 0 : index
    %46 = vector.load %arg5[%c1_28, %c0_29] : memref<2x32xf32, #tpu.memory_space<vmem>>, vector<1x32xf32>
    %cst_30 = arith.constant dense<0.000000e+00> : vector<512xf32>
    %47 = vector.multi_reduction <add>, %44, %cst_30 [1] : vector<512x32xf32> to vector<512xf32>
    %48 = vector.shape_cast %47 : vector<512xf32> to vector<512x1xf32>
    %cst_31 = arith.constant 3.200000e+01 : f32
    %49 = vector.broadcast %cst_31 : f32 to vector<512x1xf32>
    %50 = arith.divf %48, %49 : vector<512x1xf32>
    %51 = vector.broadcast %50 : vector<512x1xf32> to vector<512x32xf32>
    %52 = arith.subf %44, %51 : vector<512x32xf32>
    %53 = arith.mulf %52, %52 : vector<512x32xf32>
    %cst_32 = arith.constant dense<0.000000e+00> : vector<512xf32>
    %54 = vector.multi_reduction <add>, %53, %cst_32 [1] : vector<512x32xf32> to vector<512xf32>
    %55 = vector.shape_cast %54 : vector<512xf32> to vector<512x1xf32>
    %cst_33 = arith.constant 3.200000e+01 : f32
    %56 = vector.broadcast %cst_33 : f32 to vector<512x1xf32>
    %57 = arith.divf %55, %56 : vector<512x1xf32>
    %58 = vector.broadcast %50 : vector<512x1xf32> to vector<512x32xf32>
    %59 = arith.subf %44, %58 : vector<512x32xf32>
    %cst_34 = arith.constant 9.99999974E-6 : f32
    %60 = vector.broadcast %cst_34 : f32 to vector<512x1xf32>
    %61 = arith.addf %57, %60 : vector<512x1xf32>
    %62 = math.rsqrt %61 : vector<512x1xf32>
    %63 = vector.broadcast %62 : vector<512x1xf32> to vector<512x32xf32>
    %64 = arith.mulf %59, %63 : vector<512x32xf32>
    %65 = vector.broadcast %45 : vector<1x32xf32> to vector<512x32xf32>
    %66 = arith.mulf %64, %65 : vector<512x32xf32>
    %67 = vector.broadcast %46 : vector<1x32xf32> to vector<512x32xf32>
    %68 = arith.addf %66, %67 : vector<512x32xf32>
    %c1_35 = arith.constant 1 : index
    %c0_36 = arith.constant 0 : index
    %c0_37 = arith.constant 0 : index
    %69 = vector.load %arg6[%c1_35, %c0_36, %c0_37] : memref<2x32x64xf32, #tpu.memory_space<vmem>>, vector<1x32x64xf32>
    %70 = vector.shape_cast %69 : vector<1x32x64xf32> to vector<32x64xf32>
    %cst_38 = arith.constant dense<0.000000e+00> : vector<512x64xf32>
    %71 = tpu.matmul %68, %70, %cst_38 {dimension_numbers = #tpu.dot_dimension_numbers<[1], [0], [0], [1], [0, 0, 1, 1], [], []>} : vector<512x32xf32>, vector<32x64xf32>, vector<512x64xf32> -> vector<512x64xf32>
    %c1_39 = arith.constant 1 : index
    %c0_40 = arith.constant 0 : index
    %72 = vector.load %arg7[%c1_39, %c0_40] : memref<2x64xf32, #tpu.memory_space<vmem>>, vector<1x64xf32>
    %73 = vector.broadcast %72 : vector<1x64xf32> to vector<512x64xf32>
    %74 = arith.addf %71, %73 : vector<512x64xf32>
    %cst_41 = arith.constant 0.000000e+00 : f32
    %75 = vector.broadcast %cst_41 : f32 to vector<512x64xf32>
    %76 = arith.maximumf %74, %75 : vector<512x64xf32>
    %c1_42 = arith.constant 1 : index
    %c0_43 = arith.constant 0 : index
    %c0_44 = arith.constant 0 : index
    %77 = vector.load %arg8[%c1_42, %c0_43, %c0_44] : memref<2x64x32xf32, #tpu.memory_space<vmem>>, vector<1x64x32xf32>
    %78 = vector.shape_cast %77 : vector<1x64x32xf32> to vector<64x32xf32>
    %cst_45 = arith.constant dense<0.000000e+00> : vector<512x32xf32>
    %79 = tpu.matmul %76, %78, %cst_45 {dimension_numbers = #tpu.dot_dimension_numbers<[1], [0], [0], [1], [0, 0, 1, 1], [], []>} : vector<512x64xf32>, vector<64x32xf32>, vector<512x32xf32> -> vector<512x32xf32>
    %c1_46 = arith.constant 1 : index
    %c0_47 = arith.constant 0 : index
    %80 = vector.load %arg9[%c1_46, %c0_47] : memref<2x32xf32, #tpu.memory_space<vmem>>, vector<1x32xf32>
    %81 = vector.broadcast %80 : vector<1x32xf32> to vector<512x32xf32>
    %82 = arith.addf %79, %81 : vector<512x32xf32>
    %83 = arith.addf %44, %82 : vector<512x32xf32>
    %c0_48 = arith.constant 0 : index
    %c0_49 = arith.constant 0 : index
    %84 = vector.load %arg10[%c0_48, %c0_49] : memref<1x32xf32, #tpu.memory_space<vmem>>, vector<1x32xf32>
    %c0_50 = arith.constant 0 : index
    %c0_51 = arith.constant 0 : index
    %85 = vector.load %arg11[%c0_50, %c0_51] : memref<1x32xf32, #tpu.memory_space<vmem>>, vector<1x32xf32>
    %cst_52 = arith.constant dense<0.000000e+00> : vector<512xf32>
    %86 = vector.multi_reduction <add>, %83, %cst_52 [1] : vector<512x32xf32> to vector<512xf32>
    %87 = vector.shape_cast %86 : vector<512xf32> to vector<512x1xf32>
    %cst_53 = arith.constant 3.200000e+01 : f32
    %88 = vector.broadcast %cst_53 : f32 to vector<512x1xf32>
    %89 = arith.divf %87, %88 : vector<512x1xf32>
    %90 = vector.broadcast %89 : vector<512x1xf32> to vector<512x32xf32>
    %91 = arith.subf %83, %90 : vector<512x32xf32>
    %92 = arith.mulf %91, %91 : vector<512x32xf32>
    %cst_54 = arith.constant dense<0.000000e+00> : vector<512xf32>
    %93 = vector.multi_reduction <add>, %92, %cst_54 [1] : vector<512x32xf32> to vector<512xf32>
    %94 = vector.shape_cast %93 : vector<512xf32> to vector<512x1xf32>
    %cst_55 = arith.constant 3.200000e+01 : f32
    %95 = vector.broadcast %cst_55 : f32 to vector<512x1xf32>
    %96 = arith.divf %94, %95 : vector<512x1xf32>
    %97 = vector.broadcast %89 : vector<512x1xf32> to vector<512x32xf32>
    %98 = arith.subf %83, %97 : vector<512x32xf32>
    %cst_56 = arith.constant 9.99999974E-6 : f32
    %99 = vector.broadcast %cst_56 : f32 to vector<512x1xf32>
    %100 = arith.addf %96, %99 : vector<512x1xf32>
    %101 = math.rsqrt %100 : vector<512x1xf32>
    %102 = vector.broadcast %101 : vector<512x1xf32> to vector<512x32xf32>
    %103 = arith.mulf %98, %102 : vector<512x32xf32>
    %104 = vector.broadcast %84 : vector<1x32xf32> to vector<512x32xf32>
    %105 = arith.mulf %103, %104 : vector<512x32xf32>
    %106 = vector.broadcast %85 : vector<1x32xf32> to vector<512x32xf32>
    %107 = arith.addf %105, %106 : vector<512x32xf32>
    %cst_57 = arith.constant 0.000000e+00 : f32
    %108 = vector.broadcast %cst_57 : f32 to vector<512x32xf32>
    %109 = arith.maximumf %107, %108 : vector<512x32xf32>
    %c0_58 = arith.constant 0 : index
    %c0_59 = arith.constant 0 : index
    %110 = vector.load %arg12[%c0_58, %c0_59] : memref<32x128xf32, #tpu.memory_space<vmem>>, vector<32x128xf32>
    %cst_60 = arith.constant dense<0.000000e+00> : vector<512x128xf32>
    %111 = tpu.matmul %109, %110, %cst_60 {dimension_numbers = #tpu.dot_dimension_numbers<[1], [0], [0], [1], [0, 0, 1, 1], [], []>} : vector<512x32xf32>, vector<32x128xf32>, vector<512x128xf32> -> vector<512x128xf32>
    %c0_61 = arith.constant 0 : index
    %c0_62 = arith.constant 0 : index
    %112 = vector.load %arg13[%c0_61, %c0_62] : memref<1x128xf32, #tpu.memory_space<vmem>>, vector<1x128xf32>
    %113 = vector.broadcast %112 : vector<1x128xf32> to vector<512x128xf32>
    %114 = arith.addf %111, %113 : vector<512x128xf32>
    %115 = arith.truncf %114 : vector<512x128xf32> to vector<512x128xbf16>
    %c0_63 = arith.constant 0 : index
    %c0_64 = arith.constant 0 : index
    %116 = vector.load %arg14[%c0_63, %c0_64] : memref<512x128xbf16, #tpu.memory_space<vmem>>, vector<512x128xbf16>
    tpu.vector_store %arg14[%c0_63, %c0_64], %115 {strides = array<i32>} : memref<512x128xbf16, #tpu.memory_space<vmem>>, vector<512x128xbf16>,
    return
  }
  func.func @transform_0(%arg0: i32) -> (i32, i32) {
    %c0_i32 = arith.constant 0 : i32
    %c0_i32_0 = arith.constant 0 : i32
    return %arg0, %c0_i32 : i32, i32
  }
  func.func @transform_1(%arg0: i32) -> (i32, i32) {
    %c0_i32 = arith.constant 0 : i32
    %c0_i32_0 = arith.constant 0 : i32
    %c0_i32_1 = arith.constant 0 : i32
    return %c0_i32, %c0_i32_0 : i32, i32
  }
  func.func @transform_2(%arg0: i32) -> (i32, i32) {
    %c0_i32 = arith.constant 0 : i32
    %c0_i32_0 = arith.constant 0 : i32
    %c0_i32_1 = arith.constant 0 : i32
    return %c0_i32, %c0_i32_0 : i32, i32
  }
  func.func @transform_3(%arg0: i32) -> (i32, i32) {
    %c0_i32 = arith.constant 0 : i32
    %c0_i32_0 = arith.constant 0 : i32
    %c0_i32_1 = arith.constant 0 : i32
    return %c0_i32, %c0_i32_0 : i32, i32
  }
  func.func @transform_4(%arg0: i32) -> (i32, i32) {
    %c0_i32 = arith.constant 0 : i32
    %c0_i32_0 = arith.constant 0 : i32
    %c0_i32_1 = arith.constant 0 : i32
    return %c0_i32, %c0_i32_0 : i32, i32
  }
  func.func @transform_5(%arg0: i32) -> (i32, i32, i32) {
    %c0_i32 = arith.constant 0 : i32
    %c0_i32_0 = arith.constant 0 : i32
    %c0_i32_1 = arith.constant 0 : i32
    %c0_i32_2 = arith.constant 0 : i32
    return %c0_i32, %c0_i32_0, %c0_i32_1 : i32, i32, i32
  }
  func.func @transform_6(%arg0: i32) -> (i32, i32) {
    %c0_i32 = arith.constant 0 : i32
    %c0_i32_0 = arith.constant 0 : i32
    %c0_i32_1 = arith.constant 0 : i32
    return %c0_i32, %c0_i32_0 : i32, i32
  }
  func.func @transform_7(%arg0: i32) -> (i32, i32, i32) {
    %c0_i32 = arith.constant 0 : i32
    %c0_i32_0 = arith.constant 0 : i32
    %c0_i32_1 = arith.constant 0 : i32
    %c0_i32_2 = arith.constant 0 : i32
    return %c0_i32, %c0_i32_0, %c0_i32_1 : i32, i32, i32
  }
  func.func @transform_8(%arg0: i32) -> (i32, i32) {
    %c0_i32 = arith.constant 0 : i32
    %c0_i32_0 = arith.constant 0 : i32
    %c0_i32_1 = arith.constant 0 : i32
    return %c0_i32, %c0_i32_0 : i32, i32
  }
  func.func @transform_9(%arg0: i32) -> (i32, i32) {
    %c0_i32 = arith.constant 0 : i32
    %c0_i32_0 = arith.constant 0 : i32
    %c0_i32_1 = arith.constant 0 : i32
    return %c0_i32, %c0_i32_0 : i32, i32
  }
  func.func @transform_10(%arg0: i32) -> (i32, i32) {
    %c0_i32 = arith.constant 0 : i32
    %c0_i32_0 = arith.constant 0 : i32
    %c0_i32_1 = arith.constant 0 : i32
    return %c0_i32, %c0_i32_0 : i32, i32
  }
  func.func @transform_11(%arg0: i32) -> (i32, i32) {
    %c0_i32 = arith.constant 0 : i32
    %c0_i32_0 = arith.constant 0 : i32
    %c0_i32_1 = arith.constant 0 : i32
    return %c0_i32, %c0_i32_0 : i32, i32
  }
  func.func @transform_12(%arg0: i32) -> (i32, i32) {
    %c0_i32 = arith.constant 0 : i32
    %c0_i32_0 = arith.constant 0 : i32
    %c0_i32_1 = arith.constant 0 : i32
    return %c0_i32, %c0_i32_0 : i32, i32
  }
  func.func @transform_13(%arg0: i32) -> (i32, i32) {
    %c0_i32 = arith.constant 0 : i32
    %c0_i32_0 = arith.constant 0 : i32
    return %arg0, %c0_i32 : i32, i32
  }
}

</mosaic_0001>

<llo_original>
// kernel: resnet_forward.1
$region0: #{resnet_forward.1}
  #allocation0 [shape = 'u32[]', space=smem, size = 0x4, offset = 0x4, fixed_abs, tag = 'smem constant byte address 0x4 - core index']
  #allocation1 [shape = 'u32[144,128]{1,0:T(1,128)}', space=vmem, size = 0x12000, scoped, tag = 'internal scratch']
  %s0 = inlined_call_operand.vmem [shape: bf16[1024,16], index: 0, kind: input, shape index: {}]
  %s1 = inlined_call_operand.vmem [shape: bf16[16,32], index: 1, kind: input, shape index: {}]
  %s2 = inlined_call_operand.vmem [shape: f32[1,32], index: 2, kind: input, shape index: {}]
  %s3 = inlined_call_operand.vmem [shape: f32[2,32], index: 3, kind: input, shape index: {}]
  %s4 = inlined_call_operand.vmem [shape: f32[2,32], index: 4, kind: input, shape index: {}]
  %s5 = inlined_call_operand.vmem [shape: f32[2,32,64], index: 5, kind: input, shape index: {}]
  %s6 = inlined_call_operand.vmem [shape: f32[2,64], index: 6, kind: input, shape index: {}]
  %s7 = inlined_call_operand.vmem [shape: f32[2,64,32], index: 7, kind: input, shape index: {}]
  %s8 = inlined_call_operand.vmem [shape: f32[2,32], index: 8, kind: input, shape index: {}]
  %s9 = inlined_call_operand.vmem [shape: f32[1,32], index: 9, kind: input, shape index: {}]
  %s10 = inlined_call_operand.vmem [shape: f32[1,32], index: 10, kind: input, shape index: {}]
  %s11 = inlined_call_operand.vmem [shape: f32[32,128], index: 11, kind: input, shape index: {}]
  %s12 = inlined_call_operand.vmem [shape: f32[1,128], index: 12, kind: input, shape index: {}]
  %s13 = inlined_call_operand.vmem [shape: bf16[1024,128], index: 13, kind: output, shape index: {}]
  %s14 = sld [smem:[#allocation0]]
  $region85: #{resnet_forward.1} parent=0
    _
  %s16 = ssub.s32 1, %s14
  %s17 = scalar_select 0, %s16, %s14
  loop: start=0, step=1, limit=4
  $region2: #{resnet_forward.1} parent=0 // loop_pre_header
    _
  $region3: #{resnet_forward.1} parent=0 // loop_header
    %s19 = sphi 0, %s23
    %p20 = scmp.ge.s32.totalorder %s19, 4
    %s29 = sphi 0, %s31
    %s32 = sphi 0, %s29
    %s33 = sphi 0, %s32
    %s49 = sphi 0, %s33
    %s53 = sphi 0, %s53
    %s55 = sphi 0, %s53
    %s56 = sphi 0, %s55
    %s70 = sphi 0, %s56
    %s74 = sphi 0, %s74
    %s76 = sphi 0, %s74
    %s77 = sphi 0, %s76
    %s91 = sphi 0, %s77
    %s95 = sphi 0, %s95
    %s97 = sphi 0, %s95
    %s98 = sphi 0, %s97
    %s112 = sphi 0, %s98
    %s116 = sphi 0, %s116
    %s118 = sphi 0, %s116
    %s119 = sphi 0, %s118
    %s133 = sphi 0, %s119
    %s137 = sphi 0, %s137
    %s139 = sphi 0, %s137
    %s140 = sphi 0, %s139
    %s154 = sphi 0, %s140
    %s158 = sphi 0, %s158
    %s160 = sphi 0, %s158
    %s161 = sphi 0, %s160
    %s175 = sphi 0, %s161
    %s179 = sphi 0, %s179
    %s181 = sphi 0, %s179
    %s182 = sphi 0, %s181
    %s196 = sphi 0, %s182
    %s200 = sphi 0, %s200
    %s202 = sphi 0, %s200
    %s203 = sphi 0, %s202
    %s217 = sphi 0, %s203
    %s221 = sphi 0, %s221
    %s223 = sphi 0, %s221
    %s224 = sphi 0, %s223
    %s238 = sphi 0, %s224
    %s242 = sphi 0, %s242
    %s244 = sphi 0, %s242
    %s245 = sphi 0, %s244
    %s259 = sphi 0, %s245
    %s263 = sphi 0, %s263
    %s265 = sphi 0, %s263
    %s266 = sphi 0, %s265
    %s280 = sphi 0, %s266
    %s284 = sphi 0, %s284
    %s286 = sphi 0, %s284
    %s287 = sphi 0, %s286
    %s301 = sphi 0, %s287
    %s307 = sphi 0, %s309
    %s310 = sphi 0, %s307
    %s311 = sphi 0, %s310
    %s327 = sphi 0, %s311
  $region4: #{resnet_forward.1} parent=0 // loop_header_branch
    %22 = sbr.rel (%p20) target = $region8
  $region5: #{resnet_forward.1} parent=0 // loop_body
    %s24 = ssub.s32 %s19, 1
    %s25 = ssub.s32 %s19, 2
    %s26 = sadd.s32 %s19, 1
    %s27 = ssub.s32 %s19, %s26
    %p28 = scmp.eq.s32.totalorder %s27, 0
    %s30 = sadd.s32 %s29, 1
    %s31 = scalar_select %p28, %s29, %s30
    %p34 = pneg %p28
    %p35 = scmp.eq.s32.totalorder %s19, 1
    %p36 = por %p34, %p35
    %p37 = scmp.ne.s32.totalorder %s29, %s32
    %p38 = scmp.eq.s32.totalorder %s19, 0
    %p39 = por %p37, %p38
    %p40 = scmp.ne.s32.totalorder %s29, %s32
    %p41 = scmp.eq.s32.totalorder %s24, 1
    %p42 = por %p40, %p41
    %p43 = scmp.ne.s32.totalorder %s32, %s33
    %p44 = scmp.eq.s32.totalorder %s24, 0
    %p45 = por %p43, %p44
    %p46 = scmp.ne.s32.totalorder %s32, %s33
    %p47 = scmp.eq.s32.totalorder %s25, 1
    %p48 = por %p46, %p47
    %p50 = scmp.ne.s32.totalorder %s33, %s49
    %p51 = scmp.eq.s32.totalorder %s25, 0
    %p52 = por %p50, %p51
    %s54 = sadd.s32 %s53, 1
    %p57 = scmp.eq.s32.totalorder %s19, 1
    %p58 = scmp.ne.s32.totalorder %s53, %s55
    %p59 = scmp.eq.s32.totalorder %s19, 0
    %p60 = por %p58, %p59
    %p61 = scmp.ne.s32.totalorder %s53, %s55
    %p62 = scmp.eq.s32.totalorder %s24, 1
    %p63 = por %p61, %p62
    %p64 = scmp.ne.s32.totalorder %s55, %s56
    %p65 = scmp.eq.s32.totalorder %s24, 0
    %p66 = por %p64, %p65
    %p67 = scmp.ne.s32.totalorder %s55, %s56
    %p68 = scmp.eq.s32.totalorder %s25, 1
    %p69 = por %p67, %p68
    %p71 = scmp.ne.s32.totalorder %s56, %s70
    %p72 = scmp.eq.s32.totalorder %s25, 0
    %p73 = por %p71, %p72
    %s75 = sadd.s32 %s74, 1
    %p78 = scmp.eq.s32.totalorder %s19, 1
    %p79 = scmp.ne.s32.totalorder %s74, %s76
    %p80 = scmp.eq.s32.totalorder %s19, 0
    %p81 = por %p79, %p80
    %p82 = scmp.ne.s32.totalorder %s74, %s76
    %p83 = scmp.eq.s32.totalorder %s24, 1
    %p84 = por %p82, %p83
    %p85 = scmp.ne.s32.totalorder %s76, %s77
    %p86 = scmp.eq.s32.totalorder %s24, 0
    %p87 = por %p85, %p86
    %p88 = scmp.ne.s32.totalorder %s76, %s77
    %p89 = scmp.eq.s32.totalorder %s25, 1
    %p90 = por %p88, %p89
    %p92 = scmp.ne.s32.totalorder %s77, %s91
    %p93 = scmp.eq.s32.totalorder %s25, 0
    %p94 = por %p92, %p93
    %s96 = sadd.s32 %s95, 1
    %p99 = scmp.eq.s32.totalorder %s19, 1
    %p100 = scmp.ne.s32.totalorder %s95, %s97
    %p101 = scmp.eq.s32.totalorder %s19, 0
    %p102 = por %p100, %p101
    %p103 = scmp.ne.s32.totalorder %s95, %s97
    %p104 = scmp.eq.s32.totalorder %s24, 1
    %p105 = por %p103, %p104
    %p106 = scmp.ne.s32.totalorder %s97, %s98
    %p107 = scmp.eq.s32.totalorder %s24, 0
    %p108 = por %p106, %p107
    %p109 = scmp.ne.s32.totalorder %s97, %s98
    %p110 = scmp.eq.s32.totalorder %s25, 1
    %p111 = por %p109, %p110
    %p113 = scmp.ne.s32.totalorder %s98, %s112
    %p114 = scmp.eq.s32.totalorder %s25, 0
    %p115 = por %p113, %p114
    %s117 = sadd.s32 %s116, 1
    %p120 = scmp.eq.s32.totalorder %s19, 1
    %p121 = scmp.ne.s32.totalorder %s116, %s118
    %p122 = scmp.eq.s32.totalorder %s19, 0
    %p123 = por %p121, %p122
    %p124 = scmp.ne.s32.totalorder %s116, %s118
    %p125 = scmp.eq.s32.totalorder %s24, 1
    %p126 = por %p124, %p125
    %p127 = scmp.ne.s32.totalorder %s118, %s119
    %p128 = scmp.eq.s32.totalorder %s24, 0
    %p129 = por %p127, %p128
    %p130 = scmp.ne.s32.totalorder %s118, %s119
    %p131 = scmp.eq.s32.totalorder %s25, 1
    %p132 = por %p130, %p131
    %p134 = scmp.ne.s32.totalorder %s119, %s133
    %p135 = scmp.eq.s32.totalorder %s25, 0
    %p136 = por %p134, %p135
    %s138 = sadd.s32 %s137, 1
    %p141 = scmp.eq.s32.totalorder %s19, 1
    %p142 = scmp.ne.s32.totalorder %s137, %s139
    %p143 = scmp.eq.s32.totalorder %s19, 0
    %p144 = por %p142, %p143
    %p145 = scmp.ne.s32.totalorder %s137, %s139
    %p146 = scmp.eq.s32.totalorder %s24, 1
    %p147 = por %p145, %p146
    %p148 = scmp.ne.s32.totalorder %s139, %s140
    %p149 = scmp.eq.s32.totalorder %s24, 0
    %p150 = por %p148, %p149
    %p151 = scmp.ne.s32.totalorder %s139, %s140
    %p152 = scmp.eq.s32.totalorder %s25, 1
    %p153 = por %p151, %p152
    %p155 = scmp.ne.s32.totalorder %s140, %s154
    %p156 = scmp.eq.s32.totalorder %s25, 0
    %p157 = por %p155, %p156
    %s159 = sadd.s32 %s158, 1
    %p162 = scmp.eq.s32.totalorder %s19, 1
    %p163 = scmp.ne.s32.totalorder %s158, %s160
    %p164 = scmp.eq.s32.totalorder %s19, 0
    %p165 = por %p163, %p164
    %p166 = scmp.ne.s32.totalorder %s158, %s160
    %p167 = scmp.eq.s32.totalorder %s24, 1
    %p168 = por %p166, %p167
    %p169 = scmp.ne.s32.totalorder %s160, %s161
    %p170 = scmp.eq.s32.totalorder %s24, 0
    %p171 = por %p169, %p170
    %p172 = scmp.ne.s32.totalorder %s160, %s161
    %p173 = scmp.eq.s32.totalorder %s25, 1
    %p174 = por %p172, %p173
    %p176 = scmp.ne.s32.totalorder %s161, %s175
    %p177 = scmp.eq.s32.totalorder %s25, 0
    %p178 = por %p176, %p177
    %s180 = sadd.s32 %s179, 1
    %p183 = scmp.eq.s32.totalorder %s19, 1
    %p184 = scmp.ne.s32.totalorder %s179, %s181
    %p185 = scmp.eq.s32.totalorder %s19, 0
    %p186 = por %p184, %p185
    %p187 = scmp.ne.s32.totalorder %s179, %s181
    %p188 = scmp.eq.s32.totalorder %s24, 1
    %p189 = por %p187, %p188
    %p190 = scmp.ne.s32.totalorder %s181, %s182
    %p191 = scmp.eq.s32.totalorder %s24, 0
    %p192 = por %p190, %p191
    %p193 = scmp.ne.s32.totalorder %s181, %s182
    %p194 = scmp.eq.s32.totalorder %s25, 1
    %p195 = por %p193, %p194
    %p197 = scmp.ne.s32.totalorder %s182, %s196
    %p198 = scmp.eq.s32.totalorder %s25, 0
    %p199 = por %p197, %p198
    %s201 = sadd.s32 %s200, 1
    %p204 = scmp.eq.s32.totalorder %s19, 1
    %p205 = scmp.ne.s32.totalorder %s200, %s202
    %p206 = scmp.eq.s32.totalorder %s19, 0
    %p207 = por %p205, %p206
    %p208 = scmp.ne.s32.totalorder %s200, %s202
    %p209 = scmp.eq.s32.totalorder %s24, 1
    %p210 = por %p208, %p209
    %p211 = scmp.ne.s32.totalorder %s202, %s203
    %p212 = scmp.eq.s32.totalorder %s24, 0
    %p213 = por %p211, %p212
    %p214 = scmp.ne.s32.totalorder %s202, %s203
    %p215 = scmp.eq.s32.totalorder %s25, 1
    %p216 = por %p214, %p215
    %p218 = scmp.ne.s32.totalorder %s203, %s217
    %p219 = scmp.eq.s32.totalorder %s25, 0
    %p220 = por %p218, %p219
    %s222 = sadd.s32 %s221, 1
    %p225 = scmp.eq.s32.totalorder %s19, 1
    %p226 = scmp.ne.s32.totalorder %s221, %s223
    %p227 = scmp.eq.s32.totalorder %s19, 0
    %p228 = por %p226, %p227
    %p229 = scmp.ne.s32.totalorder %s221, %s223
    %p230 = scmp.eq.s32.totalorder %s24, 1
    %p231 = por %p229, %p230
    %p232 = scmp.ne.s32.totalorder %s223, %s224
    %p233 = scmp.eq.s32.totalorder %s24, 0
    %p234 = por %p232, %p233
    %p235 = scmp.ne.s32.totalorder %s223, %s224
    %p236 = scmp.eq.s32.totalorder %s25, 1
    %p237 = por %p235, %p236
    %p239 = scmp.ne.s32.totalorder %s224, %s238
    %p240 = scmp.eq.s32.totalorder %s25, 0
    %p241 = por %p239, %p240
    %s243 = sadd.s32 %s242, 1
    %p246 = scmp.eq.s32.totalorder %s19, 1
    %p247 = scmp.ne.s32.totalorder %s242, %s244
    %p248 = scmp.eq.s32.totalorder %s19, 0
    %p249 = por %p247, %p248
    %p250 = scmp.ne.s32.totalorder %s242, %s244
    %p251 = scmp.eq.s32.totalorder %s24, 1
    %p252 = por %p250, %p251
    %p253 = scmp.ne.s32.totalorder %s244, %s245
    %p254 = scmp.eq.s32.totalorder %s24, 0
    %p255 = por %p253, %p254
    %p256 = scmp.ne.s32.totalorder %s244, %s245
    %p257 = scmp.eq.s32.totalorder %s25, 1
    %p258 = por %p256, %p257
    %p260 = scmp.ne.s32.totalorder %s245, %s259
    %p261 = scmp.eq.s32.totalorder %s25, 0
    %p262 = por %p260, %p261
    %s264 = sadd.s32 %s263, 1
    %p267 = scmp.eq.s32.totalorder %s19, 1
    %p268 = scmp.ne.s32.totalorder %s263, %s265
    %p269 = scmp.eq.s32.totalorder %s19, 0
    %p270 = por %p268, %p269
    %p271 = scmp.ne.s32.totalorder %s263, %s265
    %p272 = scmp.eq.s32.totalorder %s24, 1
    %p273 = por %p271, %p272
    %p274 = scmp.ne.s32.totalorder %s265, %s266
    %p275 = scmp.eq.s32.totalorder %s24, 0
    %p276 = por %p274, %p275
    %p277 = scmp.ne.s32.totalorder %s265, %s266
    %p278 = scmp.eq.s32.totalorder %s25, 1
    %p279 = por %p277, %p278
    %p281 = scmp.ne.s32.totalorder %s266, %s280
    %p282 = scmp.eq.s32.totalorder %s25, 0
    %p283 = por %p281, %p282
    %s285 = sadd.s32 %s284, 1
    %p288 = scmp.eq.s32.totalorder %s19, 1
    %p289 = scmp.ne.s32.totalorder %s284, %s286
    %p290 = scmp.eq.s32.totalorder %s19, 0
    %p291 = por %p289, %p290
    %p292 = scmp.ne.s32.totalorder %s284, %s286
    %p293 = scmp.eq.s32.totalorder %s24, 1
    %p294 = por %p292, %p293
    %p295 = scmp.ne.s32.totalorder %s286, %s287
    %p296 = scmp.eq.s32.totalorder %s24, 0
    %p297 = por %p295, %p296
    %p298 = scmp.ne.s32.totalorder %s286, %s287
    %p299 = scmp.eq.s32.totalorder %s25, 1
    %p300 = por %p298, %p299
    %p302 = scmp.ne.s32.totalorder %s287, %s301
    %p303 = scmp.eq.s32.totalorder %s25, 0
    %p304 = por %p302, %p303
    %s305 = ssub.s32 %s19, %s26
    %p306 = scmp.eq.s32.totalorder %s305, 0
    %s308 = sadd.s32 %s307, 1
    %s309 = scalar_select %p306, %s307, %s308
    %p312 = pneg %p306
    %p313 = scmp.eq.s32.totalorder %s19, 1
    %p314 = por %p312, %p313
    %p315 = scmp.ne.s32.totalorder %s307, %s310
    %p316 = scmp.eq.s32.totalorder %s19, 0
    %p317 = por %p315, %p316
    %p318 = scmp.ne.s32.totalorder %s307, %s310
    %p319 = scmp.eq.s32.totalorder %s24, 1
    %p320 = por %p318, %p319
    %p321 = scmp.ne.s32.totalorder %s310, %s311
    %p322 = scmp.eq.s32.totalorder %s24, 0
    %p323 = por %p321, %p322
    %p324 = scmp.ne.s32.totalorder %s310, %s311
    %p325 = scmp.eq.s32.totalorder %s25, 1
    %p326 = por %p324, %p325
    %p328 = scmp.ne.s32.totalorder %s311, %s327
    %p329 = scmp.eq.s32.totalorder %s25, 0
    %p330 = por %p328, %p329
    %p331 = scmp.le.s32.totalorder 1, %s19
    %p332 = scmp.lt.s32.totalorder %s19, 3
    %p333 = pnand %p331, %p332
    %p334 = pneg %p333
    // Predicated region
    $region9: #{resnet_forward.1} parent=5 // pred_check
      _
    $region10: #{resnet_forward.1} parent=5 // pred_check_branch
      %336 = sbr.rel (%p333) target = $region12
    $region11: #{resnet_forward.1} parent=5 // pred_region
      %s337 = ssub.s32 %s19, 1
      // Predicated region
      $region13: #{resnet_forward.1} parent=11 // pred_check
        %p338 = pneg %p66
      $region14: #{resnet_forward.1} parent=11 // pred_check_branch
        %340 = sbr.rel (%p338) target = $region16
      $region15: #{resnet_forward.1} parent=11 // pred_region
        _
      $region16: #{resnet_forward.1} parent=11 // pred_fallthru
        _
      // Predicated region
      $region17: #{resnet_forward.1} parent=11 // pred_check
        %p341 = pneg %p87
      $region18: #{resnet_forward.1} parent=11 // pred_check_branch
        %343 = sbr.rel (%p341) target = $region20
      $region19: #{resnet_forward.1} parent=11 // pred_region
        _
      $region20: #{resnet_forward.1} parent=11 // pred_fallthru
        _
      // Predicated region
      $region21: #{resnet_forward.1} parent=11 // pred_check
        %p344 = pneg %p108
      $region22: #{resnet_forward.1} parent=11 // pred_check_branch
        %346 = sbr.rel (%p344) target = $region24
      $region23: #{resnet_forward.1} parent=11 // pred_region
        _
      $region24: #{resnet_forward.1} parent=11 // pred_fallthru
        _
      // Predicated region
      $region25: #{resnet_forward.1} parent=11 // pred_check
        %p347 = pneg %p129
      $region26: #{resnet_forward.1} parent=11 // pred_check_branch
        %349 = sbr.rel (%p347) target = $region28
      $region27: #{resnet_forward.1} parent=11 // pred_region
        _
      $region28: #{resnet_forward.1} parent=11 // pred_fallthru
        _
      // Predicated region
      $region29: #{resnet_forward.1} parent=11 // pred_check
        %p350 = pneg %p150
      $region30: #{resnet_forward.1} parent=11 // pred_check_branch
        %352 = sbr.rel (%p350) target = $region32
      $region31: #{resnet_forward.1} parent=11 // pred_region
        _
      $region32: #{resnet_forward.1} parent=11 // pred_fallthru
        _
      // Predicated region
      $region33: #{resnet_forward.1} parent=11 // pred_check
        %p353 = pneg %p171
      $region34: #{resnet_forward.1} parent=11 // pred_check_branch
        %355 = sbr.rel (%p353) target = $region36
      $region35: #{resnet_forward.1} parent=11 // pred_region
        _
      $region36: #{resnet_forward.1} parent=11 // pred_fallthru
        _
      // Predicated region
      $region37: #{resnet_forward.1} parent=11 // pred_check
        %p356 = pneg %p192
      $region38: #{resnet_forward.1} parent=11 // pred_check_branch
        %358 = sbr.rel (%p356) target = $region40
      $region39: #{resnet_forward.1} parent=11 // pred_region
        _
      $region40: #{resnet_forward.1} parent=11 // pred_fallthru
        _
      // Predicated region
      $region41: #{resnet_forward.1} parent=11 // pred_check
        %p359 = pneg %p213
      $region42: #{resnet_forward.1} parent=11 // pred_check_branch
        %361 = sbr.rel (%p359) target = $region44
      $region43: #{resnet_forward.1} parent=11 // pred_region
        _
      $region44: #{resnet_forward.1} parent=11 // pred_fallthru
        _
      // Predicated region
      $region45: #{resnet_forward.1} parent=11 // pred_check
        %p362 = pneg %p234
      $region46: #{resnet_forward.1} parent=11 // pred_check_branch
        %364 = sbr.rel (%p362) target = $region48
      $region47: #{resnet_forward.1} parent=11 // pred_region
        _
      $region48: #{resnet_forward.1} parent=11 // pred_fallthru
        _
      // Predicated region
      $region49: #{resnet_forward.1} parent=11 // pred_check
        %p365 = pneg %p255
      $region50: #{resnet_forward.1} parent=11 // pred_check_branch
        %367 = sbr.rel (%p365) target = $region52
      $region51: #{resnet_forward.1} parent=11 // pred_region
        _
      $region52: #{resnet_forward.1} parent=11 // pred_fallthru
        _
      // Predicated region
      $region53: #{resnet_forward.1} parent=11 // pred_check
        %p368 = pneg %p276
      $region54: #{resnet_forward.1} parent=11 // pred_check_branch
        %370 = sbr.rel (%p368) target = $region56
      $region55: #{resnet_forward.1} parent=11 // pred_region
        _
      $region56: #{resnet_forward.1} parent=11 // pred_fallthru
        _
      // Predicated region
      $region57: #{resnet_forward.1} parent=11 // pred_check
        %p371 = pneg %p297
      $region58: #{resnet_forward.1} parent=11 // pred_check_branch
        %373 = sbr.rel (%p371) target = $region60
      $region59: #{resnet_forward.1} parent=11 // pred_region
        _
      $region60: #{resnet_forward.1} parent=11 // pred_fallthru
        _
    $region12: #{resnet_forward.1} parent=5 // pred_fallthru
      _
    %p374 = scmp.lt.s32.totalorder %s19, 2
    // Predicated region
    $region61: #{resnet_forward.1} parent=5 // pred_check
      %p375 = pneg %p374
    $region62: #{resnet_forward.1} parent=5 // pred_check_branch
      %377 = sbr.rel (%p375) target = $region64
    $region63: #{resnet_forward.1} parent=5 // pred_region
      // Predicated region
      $region65: #{resnet_forward.1} parent=63 // pred_check
        %p378 = pneg %p39
      $region66: #{resnet_forward.1} parent=63 // pred_check_branch
        %380 = sbr.rel (%p378) target = $region68
      $region67: #{resnet_forward.1} parent=63 // pred_region
        %s381 = smul.u32 64, %s19
        %p382 = scmp.lt.s32.totalorder %s381, 127
        %s383 = scalar_select %p382, %s381, 127
        %s384 = smul.addr %s383, 4
        %s385 = scalar_lea.vmem %s0, %s384
        %s386 = smul.u32 64, %s19
      $region68: #{resnet_forward.1} parent=63 // pred_fallthru
        _
    $region64: #{resnet_forward.1} parent=5 // pred_fallthru
      _
    %p387 = scmp.le.s32.totalorder 1, %s19
    %p388 = scmp.lt.s32.totalorder %s19, 3
    %p389 = pnand %p387, %p388
    %p390 = pneg %p389
    // Predicated region
    $region69: #{resnet_forward.1} parent=5 // pred_check
      _
    $region70: #{resnet_forward.1} parent=5 // pred_check_branch
      %392 = sbr.rel (%p389) target = $region72
    $region71: #{resnet_forward.1} parent=5 // pred_region
      %s393 = ssub.s32 %s19, 1
      %s394 = smul.u32 64, %s24
      %p395 = scmp.lt.s32.totalorder %s394, 127
      %s396 = scalar_select %p395, %s394, 127
      %s397 = smul.addr %s396, 4
      %s398 = scalar_lea.vmem %s0, %s397
      %p399 = pneg %p45
      %p400 = pneg %p42
      %p401 = pneg %p66
      %p402 = pneg %p63
      %p403 = pneg %p87
      %p404 = pneg %p84
      %p405 = pneg %p108
      %p406 = pneg %p105
      %p407 = pneg %p129
      %p408 = pneg %p126
      %p409 = pneg %p150
      %p410 = pneg %p147
      %p411 = pneg %p171
      %p412 = pneg %p168
      %p413 = pneg %p192
      %p414 = pneg %p189
      %p415 = pneg %p213
      %p416 = pneg %p210
      %p417 = pneg %p234
      %p418 = pneg %p231
      %p419 = pneg %p255
      %p420 = pneg %p252
      %p421 = pneg %p276
      %p422 = pneg %p273
      %p423 = pneg %p297
      %p424 = pneg %p294
      %p425 = pneg %p323
      %p426 = pneg %p320
      %s427 = smul.u32 64, %s24
      %p428 = scmp.lt.s32.totalorder %s427, 127
      %s429 = scalar_select %p428, %s427, 127
      %s430 = smul.addr %s429, 4
      %s431 = scalar_lea.vmem %s13, %s430
      %s432 = smul.u32 64, %s24
      %p433 = scmp.lt.s32.totalorder %s432, 127
      %s434 = scalar_select %p433, %s432, 127
      %s435 = smul.addr %s434, 4
      %s436 = scalar_lea.vmem %s0, %s435
      %s437 = smul.u32 64, %s24
      %s438 = smul.u32 64, %s24
      %p439 = scmp.lt.s32.totalorder %s438, 127
      %s440 = scalar_select %p439, %s438, 127
      %s441 = smul.addr %s440, 4
      %s442 = scalar_lea.vmem %s13, %s441
      %s443 = smul.u32 64, %s24
      %v445 = vld [vmem:[%s436] sm:$0xf]
      %v446 = vld [vmem:[%s436 + $0x4] sm:$0xf]
      %v447 = vld [vmem:[%s436 + $0x8] sm:$0xf]
      %v448 = vld [vmem:[%s436 + $0xc] sm:$0xf]
      %v449 = vld [vmem:[%s436 + $0x10] sm:$0xf]
      %v450 = vld [vmem:[%s436 + $0x14] sm:$0xf]
      %v451 = vld [vmem:[%s436 + $0x18] sm:$0xf]
      %v452 = vld [vmem:[%s436 + $0x1c] sm:$0xf]
      %v453 = vld [vmem:[%s436 + $0x20] sm:$0xf]
      %v454 = vld [vmem:[%s436 + $0x24] sm:$0xf]
      %v455 = vld [vmem:[%s436 + $0x28] sm:$0xf]
      %v456 = vld [vmem:[%s436 + $0x2c] sm:$0xf]
      %v457 = vld [vmem:[%s436 + $0x30] sm:$0xf]
      %v458 = vld [vmem:[%s436 + $0x34] sm:$0xf]
      %v459 = vld [vmem:[%s436 + $0x38] sm:$0xf]
      %v460 = vld [vmem:[%s436 + $0x3c] sm:$0xf]
      %v461 = vld [vmem:[%s436 + $0x40] sm:$0xf]
      %v462 = vld [vmem:[%s436 + $0x44] sm:$0xf]
      %v463 = vld [vmem:[%s436 + $0x48] sm:$0xf]
      %v464 = vld [vmem:[%s436 + $0x4c] sm:$0xf]
      %v465 = vld [vmem:[%s436 + $0x50] sm:$0xf]
      %v466 = vld [vmem:[%s436 + $0x54] sm:$0xf]
      %v467 = vld [vmem:[%s436 + $0x58] sm:$0xf]
      %v468 = vld [vmem:[%s436 + $0x5c] sm:$0xf]
      %v469 = vld [vmem:[%s436 + $0x60] sm:$0xf]
      %v470 = vld [vmem:[%s436 + $0x64] sm:$0xf]
      %v471 = vld [vmem:[%s436 + $0x68] sm:$0xf]
      %v472 = vld [vmem:[%s436 + $0x6c] sm:$0xf]
      %v473 = vld [vmem:[%s436 + $0x70] sm:$0xf]
      %v474 = vld [vmem:[%s436 + $0x74] sm:$0xf]
      %v475 = vld [vmem:[%s436 + $0x78] sm:$0xf]
      %v476 = vld [vmem:[%s436 + $0x7c] sm:$0xf]
      %v477 = vld [vmem:[%s436 + $0x80] sm:$0xf]
      %v478 = vld [vmem:[%s436 + $0x84] sm:$0xf]
      %v479 = vld [vmem:[%s436 + $0x88] sm:$0xf]
      %v480 = vld [vmem:[%s436 + $0x8c] sm:$0xf]
      %v481 = vld [vmem:[%s436 + $0x90] sm:$0xf]
      %v482 = vld [vmem:[%s436 + $0x94] sm:$0xf]
      %v483 = vld [vmem:[%s436 + $0x98] sm:$0xf]
      %v484 = vld [vmem:[%s436 + $0x9c] sm:$0xf]
      %v485 = vld [vmem:[%s436 + $0xa0] sm:$0xf]
      %v486 = vld [vmem:[%s436 + $0xa4] sm:$0xf]
      %v487 = vld [vmem:[%s436 + $0xa8] sm:$0xf]
      %v488 = vld [vmem:[%s436 + $0xac] sm:$0xf]
      %v489 = vld [vmem:[%s436 + $0xb0] sm:$0xf]
      %v490 = vld [vmem:[%s436 + $0xb4] sm:$0xf]
      %v491 = vld [vmem:[%s436 + $0xb8] sm:$0xf]
      %v492 = vld [vmem:[%s436 + $0xbc] sm:$0xf]
      %v493 = vld [vmem:[%s436 + $0xc0] sm:$0xf]
      %v494 = vld [vmem:[%s436 + $0xc4] sm:$0xf]
      %v495 = vld [vmem:[%s436 + $0xc8] sm:$0xf]
      %v496 = vld [vmem:[%s436 + $0xcc] sm:$0xf]
      %v497 = vld [vmem:[%s436 + $0xd0] sm:$0xf]
      %v498 = vld [vmem:[%s436 + $0xd4] sm:$0xf]
      %v499 = vld [vmem:[%s436 + $0xd8] sm:$0xf]
      %v500 = vld [vmem:[%s436 + $0xdc] sm:$0xf]
      %v501 = vld [vmem:[%s436 + $0xe0] sm:$0xf]
      %v502 = vld [vmem:[%s436 + $0xe4] sm:$0xf]
      %v503 = vld [vmem:[%s436 + $0xe8] sm:$0xf]
      %v504 = vld [vmem:[%s436 + $0xec] sm:$0xf]
      %v505 = vld [vmem:[%s436 + $0xf0] sm:$0xf]
      %v506 = vld [vmem:[%s436 + $0xf4] sm:$0xf]
      %v507 = vld [vmem:[%s436 + $0xf8] sm:$0xf]
      %v508 = vld [vmem:[%s436 + $0xfc] sm:$0xf]
      %v509 = vld [vmem:[%s1] sm:$0xf]
      %v510 = vld [vmem:[%s1 + $0x4] sm:$0xf]
      %v511 = vld [vmem:[%s2] sm:$0x1]
      %v513 = vlaneseq
      %v514 = vshrl.u32 %v513, 7
      %v515 = vsub.s32 0, %v514
      %v516 = vrot.slane %v511, %v515
      %v582 = vunpack.c.l.b16 %v445
      %v583 = vunpack.c.l.b16 %v446
      %v584 = vunpack.c.l.b16 %v447
      %v585 = vunpack.c.l.b16 %v448
      %v586 = vunpack.c.l.b16 %v449
      %v587 = vunpack.c.l.b16 %v450
      %v588 = vunpack.c.l.b16 %v451
      %v589 = vunpack.c.l.b16 %v452
      %v590 = vunpack.c.l.b16 %v453
      %v591 = vunpack.c.l.b16 %v454
      %v592 = vunpack.c.l.b16 %v455
      %v593 = vunpack.c.l.b16 %v456
      %v594 = vunpack.c.l.b16 %v457
      %v595 = vunpack.c.l.b16 %v458
      %v596 = vunpack.c.l.b16 %v459
      %v597 = vunpack.c.l.b16 %v460
      %v598 = vunpack.c.l.b16 %v461
      %v599 = vunpack.c.l.b16 %v462
      %v600 = vunpack.c.l.b16 %v463
      %v601 = vunpack.c.l.b16 %v464
      %v602 = vunpack.c.l.b16 %v465
      %v603 = vunpack.c.l.b16 %v466
      %v604 = vunpack.c.l.b16 %v467
      %v605 = vunpack.c.l.b16 %v468
      %v606 = vunpack.c.l.b16 %v469
      %v607 = vunpack.c.l.b16 %v470
      %v608 = vunpack.c.l.b16 %v471
      %v609 = vunpack.c.l.b16 %v472
      %v610 = vunpack.c.l.b16 %v473
      %v611 = vunpack.c.l.b16 %v474
      %v612 = vunpack.c.l.b16 %v475
      %v613 = vunpack.c.l.b16 %v476
      %v614 = vunpack.c.l.b16 %v477
      %v615 = vunpack.c.l.b16 %v478
      %v616 = vunpack.c.l.b16 %v479
      %v617 = vunpack.c.l.b16 %v480
      %v618 = vunpack.c.l.b16 %v481
      %v619 = vunpack.c.l.b16 %v482
      %v620 = vunpack.c.l.b16 %v483
      %v621 = vunpack.c.l.b16 %v484
      %v622 = vunpack.c.l.b16 %v485
      %v623 = vunpack.c.l.b16 %v486
      %v624 = vunpack.c.l.b16 %v487
      %v625 = vunpack.c.l.b16 %v488
      %v626 = vunpack.c.l.b16 %v489
      %v627 = vunpack.c.l.b16 %v490
      %v628 = vunpack.c.l.b16 %v491
      %v629 = vunpack.c.l.b16 %v492
      %v630 = vunpack.c.l.b16 %v493
      %v631 = vunpack.c.l.b16 %v494
      %v632 = vunpack.c.l.b16 %v495
      %v633 = vunpack.c.l.b16 %v496
      %v634 = vunpack.c.l.b16 %v497
      %v635 = vunpack.c.l.b16 %v498
      %v636 = vunpack.c.l.b16 %v499
      %v637 = vunpack.c.l.b16 %v500
      %v638 = vunpack.c.l.b16 %v501
      %v639 = vunpack.c.l.b16 %v502
      %v640 = vunpack.c.l.b16 %v503
      %v641 = vunpack.c.l.b16 %v504
      %v642 = vunpack.c.l.b16 %v505
      %v643 = vunpack.c.l.b16 %v506
      %v644 = vunpack.c.l.b16 %v507
      %v645 = vunpack.c.l.b16 %v508
      %v646 = vpack.c.b16 %v583, %v582
      %v647 = vpack.c.b16 %v585, %v584
      %v648 = vpack.c.b16 %v587, %v586
      %v649 = vpack.c.b16 %v589, %v588
      %v650 = vpack.c.b16 %v591, %v590
      %v651 = vpack.c.b16 %v593, %v592
      %v652 = vpack.c.b16 %v595, %v594
      %v653 = vpack.c.b16 %v597, %v596
      %v654 = vpack.c.b16 %v599, %v598
      %v655 = vpack.c.b16 %v601, %v600
      %v656 = vpack.c.b16 %v603, %v602
      %v657 = vpack.c.b16 %v605, %v604
      %v658 = vpack.c.b16 %v607, %v606
      %v659 = vpack.c.b16 %v609, %v608
      %v660 = vpack.c.b16 %v611, %v610
      %v661 = vpack.c.b16 %v613, %v612
      %v662 = vpack.c.b16 %v615, %v614
      %v663 = vpack.c.b16 %v617, %v616
      %v664 = vpack.c.b16 %v619, %v618
      %v665 = vpack.c.b16 %v621, %v620
      %v666 = vpack.c.b16 %v623, %v622
      %v667 = vpack.c.b16 %v625, %v624
      %v668 = vpack.c.b16 %v627, %v626
      %v669 = vpack.c.b16 %v629, %v628
      %v670 = vpack.c.b16 %v631, %v630
      %v671 = vpack.c.b16 %v633, %v632
      %v672 = vpack.c.b16 %v635, %v634
      %v673 = vpack.c.b16 %v637, %v636
      %v674 = vpack.c.b16 %v639, %v638
      %v675 = vpack.c.b16 %v641, %v640
      %v676 = vpack.c.b16 %v643, %v642
      %v677 = vpack.c.b16 %v645, %v644
      %v680 = vunpack.c.l.b16 %v509
      %v681 = vunpack.c.l.b16 %v510
      %v682 = vpack.c.b16 %v681, %v680
      %vm684 = vcmask 130048
      %v686 = vsel %vm684, %v646, 0
      %v689 = vsel %vm684, %v647, 0
      %v692 = vsel %vm684, %v648, 0
      %v695 = vsel %vm684, %v649, 0
      %v698 = vsel %vm684, %v650, 0
      %v701 = vsel %vm684, %v651, 0
      %v704 = vsel %vm684, %v652, 0
      %v707 = vsel %vm684, %v653, 0
      %v710 = vsel %vm684, %v654, 0
      %v713 = vsel %vm684, %v655, 0
      %v716 = vsel %vm684, %v656, 0
      %v719 = vsel %vm684, %v657, 0
      %v722 = vsel %vm684, %v658, 0
      %v725 = vsel %vm684, %v659, 0
      %v728 = vsel %vm684, %v660, 0
      %v731 = vsel %vm684, %v661, 0
      %v734 = vsel %vm684, %v662, 0
      %v737 = vsel %vm684, %v663, 0
      %v740 = vsel %vm684, %v664, 0
      %v743 = vsel %vm684, %v665, 0
      %v746 = vsel %vm684, %v666, 0
      %v749 = vsel %vm684, %v667, 0
      %v752 = vsel %vm684, %v668, 0
      %v755 = vsel %vm684, %v669, 0
      %v758 = vsel %vm684, %v670, 0
      %v761 = vsel %vm684, %v671, 0
      %v764 = vsel %vm684, %v672, 0
      %v767 = vsel %vm684, %v673, 0
      %v770 = vsel %vm684, %v674, 0
      %v773 = vsel %vm684, %v675, 0
      %v776 = vsel %vm684, %v676, 0
      %v779 = vsel %vm684, %v677, 0
      %781 = vmatprep.subr.bf16.mxu0 0
      %782 = vmatpush1.bf16.msra.mxu0 %v682
      %783 = vmatprep.subr.bf16.mxu0 0
      %784 = vmatpush1.bf16.msra.mxu0 0
      %785 = vmatprep.subr.bf16.mxu0 0
      %786 = vmatpush1.bf16.msra.mxu0 0
      %787 = vmatprep.subr.bf16.mxu0 0
      %788 = vmatpush1.bf16.msra.mxu0 0
      %789 = vmatprep.subr.bf16.mxu0 0
      %790 = vmatpush1.bf16.msra.mxu0 0
      %791 = vmatprep.subr.bf16.mxu0 0
      %792 = vmatpush1.bf16.msra.mxu0 0
      %793 = vmatprep.subr.bf16.mxu0 0
      %794 = vmatpush1.bf16.msra.mxu0 0
      %795 = vmatprep.subr.bf16.mxu0 0
      %796 = vmatpush1.bf16.msra.mxu0 0
      %797 = vmatprep.subr.bf16.mxu0 0
      %798 = vmatpush1.bf16.msra.mxu0 0
      %799 = vmatprep.subr.bf16.mxu0 0
      %800 = vmatpush1.bf16.msra.mxu0 0
      %801 = vmatprep.subr.bf16.mxu0 0
      %802 = vmatpush1.bf16.msra.mxu0 0
      %803 = vmatprep.subr.bf16.mxu0 0
      %804 = vmatpush1.bf16.msra.mxu0 0
      %805 = vmatprep.subr.bf16.mxu0 0
      %806 = vmatpush1.bf16.msra.mxu0 0
      %807 = vmatprep.subr.bf16.mxu0 0
      %808 = vmatpush1.bf16.msra.mxu0 0
      %809 = vmatprep.subr.bf16.mxu0 0
      %810 = vmatpush1.bf16.msra.mxu0 0
      %811 = vmatprep.subr.bf16.mxu0 0
      %812 = vmatpush1.bf16.msra.mxu0 0
      %813 = vmatprep.mubr.bf16.mxu0 0
      %814 = vmatmul.mubr.bf16.gmra.mrb[0].mxu0 %v686
      %v815 = vpop.f32.mrb[0].mxu0
      %v816 = vadd.f32 %v516, %v815
      %v817 = vpop.f32.mrb[0].mxu0
      %v818 = vpop.f32.mrb[0].mxu0
      %v819 = vadd.f32 %v516, %v818
      %v820 = vpop.f32.mrb[0].mxu0
      %821 = vmatprep.mubr.bf16.mxu0 0
      %822 = vmatmul.mubr.bf16.gmra.mrb[0].mxu0 %v689
      %v823 = vpop.f32.mrb[0].mxu0
      %v824 = vadd.f32 %v516, %v823
      %v825 = vpop.f32.mrb[0].mxu0
      %v826 = vpop.f32.mrb[0].mxu0
      %v827 = vadd.f32 %v516, %v826
      %v828 = vpop.f32.mrb[0].mxu0
      %829 = vmatprep.mubr.bf16.mxu0 0
      %830 = vmatmul.mubr.bf16.gmra.mrb[0].mxu0 %v692
      %v831 = vpop.f32.mrb[0].mxu0
      %v832 = vadd.f32 %v516, %v831
      %v833 = vpop.f32.mrb[0].mxu0
      %v834 = vpop.f32.mrb[0].mxu0
      %v835 = vadd.f32 %v516, %v834
      %v836 = vpop.f32.mrb[0].mxu0
      %837 = vmatprep.mubr.bf16.mxu0 0
      %838 = vmatmul.mubr.bf16.gmra.mrb[0].mxu0 %v695
      %v839 = vpop.f32.mrb[0].mxu0
      %v840 = vadd.f32 %v516, %v839
      %v841 = vpop.f32.mrb[0].mxu0
      %v842 = vpop.f32.mrb[0].mxu0
      %v843 = vadd.f32 %v516, %v842
      %v844 = vpop.f32.mrb[0].mxu0
      %845 = vmatprep.mubr.bf16.mxu0 0
      %846 = vmatmul.mubr.bf16.gmra.mrb[0].mxu0 %v698
      %v847 = vpop.f32.mrb[0].mxu0
      %v848 = vadd.f32 %v516, %v847
      %v849 = vpop.f32.mrb[0].mxu0
      %v850 = vpop.f32.mrb[0].mxu0
      %v851 = vadd.f32 %v516, %v850
      %v852 = vpop.f32.mrb[0].mxu0
      %853 = vmatprep.mubr.bf16.mxu0 0
      %854 = vmatmul.mubr.bf16.gmra.mrb[0].mxu0 %v701
      %v855 = vpop.f32.mrb[0].mxu0
      %v856 = vadd.f32 %v516, %v855
      %v857 = vpop.f32.mrb[0].mxu0
      %v858 = vpop.f32.mrb[0].mxu0
      %v859 = vadd.f32 %v516, %v858
      %v860 = vpop.f32.mrb[0].mxu0
      %861 = vmatprep.mubr.bf16.mxu0 0
      %862 = vmatmul.mubr.bf16.gmra.mrb[0].mxu0 %v704
      %v863 = vpop.f32.mrb[0].mxu0
      %v864 = vadd.f32 %v516, %v863
      %v865 = vpop.f32.mrb[0].mxu0
      %v866 = vpop.f32.mrb[0].mxu0
      %v867 = vadd.f32 %v516, %v866
      %v868 = vpop.f32.mrb[0].mxu0
      %869 = vmatprep.mubr.bf16.mxu0 0
      %870 = vmatmul.mubr.bf16.gmra.mrb[0].mxu0 %v707
      %v871 = vpop.f32.mrb[0].mxu0
      %v872 = vadd.f32 %v516, %v871
      %v873 = vpop.f32.mrb[0].mxu0
      %v874 = vpop.f32.mrb[0].mxu0
      %v875 = vadd.f32 %v516, %v874
      %v876 = vpop.f32.mrb[0].mxu0
      %877 = vmatprep.mubr.bf16.mxu0 0
      %878 = vmatmul.mubr.bf16.gmra.mrb[0].mxu0 %v710
      %v879 = vpop.f32.mrb[0].mxu0
      %v880 = vadd.f32 %v516, %v879
      %v881 = vpop.f32.mrb[0].mxu0
      %v882 = vpop.f32.mrb[0].mxu0
      %v883 = vadd.f32 %v516, %v882
      %v884 = vpop.f32.mrb[0].mxu0
      %885 = vmatprep.mubr.bf16.mxu0 0
      %886 = vmatmul.mubr.bf16.gmra.mrb[0].mxu0 %v713
      %v887 = vpop.f32.mrb[0].mxu0
      %v888 = vadd.f32 %v516, %v887
      %v889 = vpop.f32.mrb[0].mxu0
      %v890 = vpop.f32.mrb[0].mxu0
      %v891 = vadd.f32 %v516, %v890
      %v892 = vpop.f32.mrb[0].mxu0
      %893 = vmatprep.mubr.bf16.mxu0 0
      %894 = vmatmul.mubr.bf16.gmra.mrb[0].mxu0 %v716
      %v895 = vpop.f32.mrb[0].mxu0
      %v896 = vadd.f32 %v516, %v895
      %v897 = vpop.f32.mrb[0].mxu0
      %v898 = vpop.f32.mrb[0].mxu0
      %v899 = vadd.f32 %v516, %v898
      %v900 = vpop.f32.mrb[0].mxu0
      %901 = vmatprep.mubr.bf16.mxu0 0
      %902 = vmatmul.mubr.bf16.gmra.mrb[0].mxu0 %v719
      %v903 = vpop.f32.mrb[0].mxu0
      %v904 = vadd.f32 %v516, %v903
      %v905 = vpop.f32.mrb[0].mxu0
      %v906 = vpop.f32.mrb[0].mxu0
      %v907 = vadd.f32 %v516, %v906
      %v908 = vpop.f32.mrb[0].mxu0
      %909 = vmatprep.mubr.bf16.mxu0 0
      %910 = vmatmul.mubr.bf16.gmra.mrb[0].mxu0 %v722
      %v911 = vpop.f32.mrb[0].mxu0
      %v912 = vadd.f32 %v516, %v911
      %v913 = vpop.f32.mrb[0].mxu0
      %v914 = vpop.f32.mrb[0].mxu0
      %v915 = vadd.f32 %v516, %v914
      %v916 = vpop.f32.mrb[0].mxu0
      %917 = vmatprep.mubr.bf16.mxu0 0
      %918 = vmatmul.mubr.bf16.gmra.mrb[0].mxu0 %v725
      %v919 = vpop.f32.mrb[0].mxu0
      %v920 = vadd.f32 %v516, %v919
      %v921 = vpop.f32.mrb[0].mxu0
      %v922 = vpop.f32.mrb[0].mxu0
      %v923 = vadd.f32 %v516, %v922
      %v924 = vpop.f32.mrb[0].mxu0
      %925 = vmatprep.mubr.bf16.mxu0 0
      %926 = vmatmul.mubr.bf16.gmra.mrb[0].mxu0 %v728
      %v927 = vpop.f32.mrb[0].mxu0
      %v928 = vadd.f32 %v516, %v927
      %v929 = vpop.f32.mrb[0].mxu0
      %v930 = vpop.f32.mrb[0].mxu0
      %v931 = vadd.f32 %v516, %v930
      %v932 = vpop.f32.mrb[0].mxu0
      %933 = vmatprep.mubr.bf16.mxu0 0
      %934 = vmatmul.mubr.bf16.gmra.mrb[0].mxu0 %v731
      %v935 = vpop.f32.mrb[0].mxu0
      %v936 = vadd.f32 %v516, %v935
      %v937 = vpop.f32.mrb[0].mxu0
      %v938 = vpop.f32.mrb[0].mxu0
      %v939 = vadd.f32 %v516, %v938
      %v940 = vpop.f32.mrb[0].mxu0
      %941 = vmatprep.mubr.bf16.mxu0 0
      %942 = vmatmul.mubr.bf16.gmra.mrb[0].mxu0 %v734
      %v943 = vpop.f32.mrb[0].mxu0
      %v944 = vadd.f32 %v516, %v943
      %v945 = vpop.f32.mrb[0].mxu0
      %v946 = vpop.f32.mrb[0].mxu0
      %v947 = vadd.f32 %v516, %v946
      %v948 = vpop.f32.mrb[0].mxu0
      %949 = vmatprep.mubr.bf16.mxu0 0
      %950 = vmatmul.mubr.bf16.gmra.mrb[0].mxu0 %v737
      %v951 = vpop.f32.mrb[0].mxu0
      %v952 = vadd.f32 %v516, %v951
      %v953 = vpop.f32.mrb[0].mxu0
      %v954 = vpop.f32.mrb[0].mxu0
      %v955 = vadd.f32 %v516, %v954
      %v956 = vpop.f32.mrb[0].mxu0
      %957 = vmatprep.mubr.bf16.mxu0 0
      %958 = vmatmul.mubr.bf16.gmra.mrb[0].mxu0 %v740
      %v959 = vpop.f32.mrb[0].mxu0
      %v960 = vadd.f32 %v516, %v959
      %v961 = vpop.f32.mrb[0].mxu0
      %v962 = vpop.f32.mrb[0].mxu0
      %v963 = vadd.f32 %v516, %v962
      %v964 = vpop.f32.mrb[0].mxu0
      %965 = vmatprep.mubr.bf16.mxu0 0
      %966 = vmatmul.mubr.bf16.gmra.mrb[0].mxu0 %v743
      %v967 = vpop.f32.mrb[0].mxu0
      %v968 = vadd.f32 %v516, %v967
      %v969 = vpop.f32.mrb[0].mxu0
      %v970 = vpop.f32.mrb[0].mxu0
      %v971 = vadd.f32 %v516, %v970
      %v972 = vpop.f32.mrb[0].mxu0
      %973 = vmatprep.mubr.bf16.mxu0 0
      %974 = vmatmul.mubr.bf16.gmra.mrb[0].mxu0 %v746
      %v975 = vpop.f32.mrb[0].mxu0
      %v976 = vadd.f32 %v516, %v975
      %v977 = vpop.f32.mrb[0].mxu0
      %v978 = vpop.f32.mrb[0].mxu0
      %v979 = vadd.f32 %v516, %v978
      %v980 = vpop.f32.mrb[0].mxu0
      %981 = vmatprep.mubr.bf16.mxu0 0
      %982 = vmatmul.mubr.bf16.gmra.mrb[0].mxu0 %v749
      %v983 = vpop.f32.mrb[0].mxu0
      %v984 = vadd.f32 %v516, %v983
      %v985 = vpop.f32.mrb[0].mxu0
      %v986 = vpop.f32.mrb[0].mxu0
      %v987 = vadd.f32 %v516, %v986
      %v988 = vpop.f32.mrb[0].mxu0
      %989 = vmatprep.mubr.bf16.mxu0 0
      %990 = vmatmul.mubr.bf16.gmra.mrb[0].mxu0 %v752
      %v991 = vpop.f32.mrb[0].mxu0
      %v992 = vadd.f32 %v516, %v991
      %v993 = vpop.f32.mrb[0].mxu0
      %v994 = vpop.f32.mrb[0].mxu0
      %v995 = vadd.f32 %v516, %v994
      %v996 = vpop.f32.mrb[0].mxu0
      %997 = vmatprep.mubr.bf16.mxu0 0
      %998 = vmatmul.mubr.bf16.gmra.mrb[0].mxu0 %v755
      %v999 = vpop.f32.mrb[0].mxu0
      %v1000 = vadd.f32 %v516, %v999
      %v1001 = vpop.f32.mrb[0].mxu0
      %v1002 = vpop.f32.mrb[0].mxu0
      %v1003 = vadd.f32 %v516, %v1002
      %v1004 = vpop.f32.mrb[0].mxu0
      %1005 = vmatprep.mubr.bf16.mxu0 0
      %1006 = vmatmul.mubr.bf16.gmra.mrb[0].mxu0 %v758
      %v1007 = vpop.f32.mrb[0].mxu0
      %v1008 = vadd.f32 %v516, %v1007
      %v1009 = vpop.f32.mrb[0].mxu0
      %v1010 = vpop.f32.mrb[0].mxu0
      %v1011 = vadd.f32 %v516, %v1010
      %v1012 = vpop.f32.mrb[0].mxu0
      %1013 = vmatprep.mubr.bf16.mxu0 0
      %1014 = vmatmul.mubr.bf16.gmra.mrb[0].mxu0 %v761
      %v1015 = vpop.f32.mrb[0].mxu0
      %v1016 = vadd.f32 %v516, %v1015
      %v1017 = vpop.f32.mrb[0].mxu0
      %v1018 = vpop.f32.mrb[0].mxu0
      %v1019 = vadd.f32 %v516, %v1018
      %v1020 = vpop.f32.mrb[0].mxu0
      %1021 = vmatprep.mubr.bf16.mxu0 0
      %1022 = vmatmul.mubr.bf16.gmra.mrb[0].mxu0 %v764
      %v1023 = vpop.f32.mrb[0].mxu0
      %v1024 = vadd.f32 %v516, %v1023
      %v1025 = vpop.f32.mrb[0].mxu0
      %v1026 = vpop.f32.mrb[0].mxu0
      %v1027 = vadd.f32 %v516, %v1026
      %v1028 = vpop.f32.mrb[0].mxu0
      %1029 = vmatprep.mubr.bf16.mxu0 0
      %1030 = vmatmul.mubr.bf16.gmra.mrb[0].mxu0 %v767
      %v1031 = vpop.f32.mrb[0].mxu0
      %v1032 = vadd.f32 %v516, %v1031
      %v1033 = vpop.f32.mrb[0].mxu0
      %v1034 = vpop.f32.mrb[0].mxu0
      %v1035 = vadd.f32 %v516, %v1034
      %v1036 = vpop.f32.mrb[0].mxu0
      %1037 = vmatprep.mubr.bf16.mxu0 0
      %1038 = vmatmul.mubr.bf16.gmra.mrb[0].mxu0 %v770
      %v1039 = vpop.f32.mrb[0].mxu0
      %v1040 = vadd.f32 %v516, %v1039
      %v1041 = vpop.f32.mrb[0].mxu0
      %v1042 = vpop.f32.mrb[0].mxu0
      %v1043 = vadd.f32 %v516, %v1042
      %v1044 = vpop.f32.mrb[0].mxu0
      %1045 = vmatprep.mubr.bf16.mxu0 0
      %1046 = vmatmul.mubr.bf16.gmra.mrb[0].mxu0 %v773
      %v1047 = vpop.f32.mrb[0].mxu0
      %v1048 = vadd.f32 %v516, %v1047
      %v1049 = vpop.f32.mrb[0].mxu0
      %v1050 = vpop.f32.mrb[0].mxu0
      %v1051 = vadd.f32 %v516, %v1050
      %v1052 = vpop.f32.mrb[0].mxu0
      %1053 = vmatprep.mubr.bf16.mxu0 0
      %1054 = vmatmul.mubr.bf16.gmra.mrb[0].mxu0 %v776
      %v1055 = vpop.f32.mrb[0].mxu0
      %v1056 = vadd.f32 %v516, %v1055
      %v1057 = vpop.f32.mrb[0].mxu0
      %v1058 = vpop.f32.mrb[0].mxu0
      %v1059 = vadd.f32 %v516, %v1058
      %v1060 = vpop.f32.mrb[0].mxu0
      %1061 = vmatprep.mubr.bf16.mxu0 0
      %1062 = vmatmul.mubr.bf16.gmra.mrb[0].mxu0 %v779
      %v1063 = vpop.f32.mrb[0].mxu0
      %v1064 = vadd.f32 %v516, %v1063
      %v1065 = vpop.f32.mrb[0].mxu0
      %v1066 = vpop.f32.mrb[0].mxu0
      %v1067 = vadd.f32 %v516, %v1066
      %v1068 = vpop.f32.mrb[0].mxu0
      %1069 = vdwg.mxu0
      %v1070 = vld [vmem:[%s3] sm:$0x1]
      %v1071 = vld [vmem:[%s4] sm:$0x1]
      %vm1072 = vcmask 261120
      %v1073 = vsel %vm1072, %v816, 0.0
      %1074 = vadd.xlane.f32.xlu0 %v1073
      %v1075 = vpop.xlane.xlu0 %1074
      %v1076 = vsel %vm1072, %v819, 0.0
      %1077 = vadd.xlane.f32.xlu0 %v1076
      %v1078 = vpop.xlane.xlu0 %1077
      %v1079 = vsel %vm1072, %v824, 0.0
      %1080 = vadd.xlane.f32.xlu0 %v1079
      %v1081 = vpop.xlane.xlu0 %1080
      %v1082 = vsel %vm1072, %v827, 0.0
      %1083 = vadd.xlane.f32.xlu0 %v1082
      %v1084 = vpop.xlane.xlu0 %1083
      %v1085 = vsel %vm1072, %v832, 0.0
      %1086 = vadd.xlane.f32.xlu0 %v1085
      %v1087 = vpop.xlane.xlu0 %1086
      %v1088 = vsel %vm1072, %v835, 0.0
      %1089 = vadd.xlane.f32.xlu0 %v1088
      %v1090 = vpop.xlane.xlu0 %1089
      %v1091 = vsel %vm1072, %v840, 0.0
      %1092 = vadd.xlane.f32.xlu0 %v1091
      %v1093 = vpop.xlane.xlu0 %1092
      %v1094 = vsel %vm1072, %v843, 0.0
      %1095 = vadd.xlane.f32.xlu0 %v1094
      %v1096 = vpop.xlane.xlu0 %1095
      %v1097 = vsel %vm1072, %v848, 0.0
      %1098 = vadd.xlane.f32.xlu0 %v1097
      %v1099 = vpop.xlane.xlu0 %1098
      %v1100 = vsel %vm1072, %v851, 0.0
      %1101 = vadd.xlane.f32.xlu0 %v1100
      %v1102 = vpop.xlane.xlu0 %1101
      %v1103 = vsel %vm1072, %v856, 0.0
      %1104 = vadd.xlane.f32.xlu0 %v1103
      %v1105 = vpop.xlane.xlu0 %1104
      %v1106 = vsel %vm1072, %v859, 0.0
      %1107 = vadd.xlane.f32.xlu0 %v1106
      %v1108 = vpop.xlane.xlu0 %1107
      %v1109 = vsel %vm1072, %v864, 0.0
      %1110 = vadd.xlane.f32.xlu0 %v1109
      %v1111 = vpop.xlane.xlu0 %1110
      %v1112 = vsel %vm1072, %v867, 0.0
      %1113 = vadd.xlane.f32.xlu0 %v1112
      %v1114 = vpop.xlane.xlu0 %1113
      %v1115 = vsel %vm1072, %v872, 0.0
      %1116 = vadd.xlane.f32.xlu0 %v1115
      %v1117 = vpop.xlane.xlu0 %1116
      %v1118 = vsel %vm1072, %v875, 0.0
      %1119 = vadd.xlane.f32.xlu0 %v1118
      %v1120 = vpop.xlane.xlu0 %1119
      %v1121 = vsel %vm1072, %v880, 0.0
      %1122 = vadd.xlane.f32.xlu0 %v1121
      %v1123 = vpop.xlane.xlu0 %1122
      %v1124 = vsel %vm1072, %v883, 0.0
      %1125 = vadd.xlane.f32.xlu0 %v1124
      %v1126 = vpop.xlane.xlu0 %1125
      %v1127 = vsel %vm1072, %v888, 0.0
      %1128 = vadd.xlane.f32.xlu0 %v1127
      %v1129 = vpop.xlane.xlu0 %1128
      %v1130 = vsel %vm1072, %v891, 0.0
      %1131 = vadd.xlane.f32.xlu0 %v1130
      %v1132 = vpop.xlane.xlu0 %1131
      %v1133 = vsel %vm1072, %v896, 0.0
      %1134 = vadd.xlane.f32.xlu0 %v1133
      %v1135 = vpop.xlane.xlu0 %1134
      %v1136 = vsel %vm1072, %v899, 0.0
      %1137 = vadd.xlane.f32.xlu0 %v1136
      %v1138 = vpop.xlane.xlu0 %1137
      %v1139 = vsel %vm1072, %v904, 0.0
      %1140 = vadd.xlane.f32.xlu0 %v1139
      %v1141 = vpop.xlane.xlu0 %1140
      %v1142 = vsel %vm1072, %v907, 0.0
      %1143 = vadd.xlane.f32.xlu0 %v1142
      %v1144 = vpop.xlane.xlu0 %1143
      %v1145 = vsel %vm1072, %v912, 0.0
      %1146 = vadd.xlane.f32.xlu0 %v1145
      %v1147 = vpop.xlane.xlu0 %1146
      %v1148 = vsel %vm1072, %v915, 0.0
      %1149 = vadd.xlane.f32.xlu0 %v1148
      %v1150 = vpop.xlane.xlu0 %1149
      %v1151 = vsel %vm1072, %v920, 0.0
      %1152 = vadd.xlane.f32.xlu0 %v1151
      %v1153 = vpop.xlane.xlu0 %1152
      %v1154 = vsel %vm1072, %v923, 0.0
      %1155 = vadd.xlane.f32.xlu0 %v1154
      %v1156 = vpop.xlane.xlu0 %1155
      %v1157 = vsel %vm1072, %v928, 0.0
      %1158 = vadd.xlane.f32.xlu0 %v1157
      %v1159 = vpop.xlane.xlu0 %1158
      %v1160 = vsel %vm1072, %v931, 0.0
      %1161 = vadd.xlane.f32.xlu0 %v1160
      %v1162 = vpop.xlane.xlu0 %1161
      %v1163 = vsel %vm1072, %v936, 0.0
      %1164 = vadd.xlane.f32.xlu0 %v1163
      %v1165 = vpop.xlane.xlu0 %1164
      %v1166 = vsel %vm1072, %v939, 0.0
      %1167 = vadd.xlane.f32.xlu0 %v1166
      %v1168 = vpop.xlane.xlu0 %1167
      %v1169 = vsel %vm1072, %v944, 0.0
      %1170 = vadd.xlane.f32.xlu0 %v1169
      %v1171 = vpop.xlane.xlu0 %1170
      %v1172 = vsel %vm1072, %v947, 0.0
      %1173 = vadd.xlane.f32.xlu0 %v1172
      %v1174 = vpop.xlane.xlu0 %1173
      %v1175 = vsel %vm1072, %v952, 0.0
      %1176 = vadd.xlane.f32.xlu0 %v1175
      %v1177 = vpop.xlane.xlu0 %1176
      %v1178 = vsel %vm1072, %v955, 0.0
      %1179 = vadd.xlane.f32.xlu0 %v1178
      %v1180 = vpop.xlane.xlu0 %1179
      %v1181 = vsel %vm1072, %v960, 0.0
      %1182 = vadd.xlane.f32.xlu0 %v1181
      %v1183 = vpop.xlane.xlu0 %1182
      %v1184 = vsel %vm1072, %v963, 0.0
      %1185 = vadd.xlane.f32.xlu0 %v1184
      %v1186 = vpop.xlane.xlu0 %1185
      %v1187 = vsel %vm1072, %v968, 0.0
      %1188 = vadd.xlane.f32.xlu0 %v1187
      %v1189 = vpop.xlane.xlu0 %1188
      %v1190 = vsel %vm1072, %v971, 0.0
      %1191 = vadd.xlane.f32.xlu0 %v1190
      %v1192 = vpop.xlane.xlu0 %1191
      %v1193 = vsel %vm1072, %v976, 0.0
      %1194 = vadd.xlane.f32.xlu0 %v1193
      %v1195 = vpop.xlane.xlu0 %1194
      %v1196 = vsel %vm1072, %v979, 0.0
      %1197 = vadd.xlane.f32.xlu0 %v1196
      %v1198 = vpop.xlane.xlu0 %1197
      %v1199 = vsel %vm1072, %v984, 0.0
      %1200 = vadd.xlane.f32.xlu0 %v1199
      %v1201 = vpop.xlane.xlu0 %1200
      %v1202 = vsel %vm1072, %v987, 0.0
      %1203 = vadd.xlane.f32.xlu0 %v1202
      %v1204 = vpop.xlane.xlu0 %1203
      %v1205 = vsel %vm1072, %v992, 0.0
      %1206 = vadd.xlane.f32.xlu0 %v1205
      %v1207 = vpop.xlane.xlu0 %1206
      %v1208 = vsel %vm1072, %v995, 0.0
      %1209 = vadd.xlane.f32.xlu0 %v1208
      %v1210 = vpop.xlane.xlu0 %1209
      %v1211 = vsel %vm1072, %v1000, 0.0
      %1212 = vadd.xlane.f32.xlu0 %v1211
      %v1213 = vpop.xlane.xlu0 %1212
      %v1214 = vsel %vm1072, %v1003, 0.0
      %1215 = vadd.xlane.f32.xlu0 %v1214
      %v1216 = vpop.xlane.xlu0 %1215
      %v1217 = vsel %vm1072, %v1008, 0.0
      %1218 = vadd.xlane.f32.xlu0 %v1217
      %v1219 = vpop.xlane.xlu0 %1218
      %v1220 = vsel %vm1072, %v1011, 0.0
      %1221 = vadd.xlane.f32.xlu0 %v1220
      %v1222 = vpop.xlane.xlu0 %1221
      %v1223 = vsel %vm1072, %v1016, 0.0
      %1224 = vadd.xlane.f32.xlu0 %v1223
      %v1225 = vpop.xlane.xlu0 %1224
      %v1226 = vsel %vm1072, %v1019, 0.0
      %1227 = vadd.xlane.f32.xlu0 %v1226
      %v1228 = vpop.xlane.xlu0 %1227
      %v1229 = vsel %vm1072, %v1024, 0.0
      %1230 = vadd.xlane.f32.xlu0 %v1229
      %v1231 = vpop.xlane.xlu0 %1230
      %v1232 = vsel %vm1072, %v1027, 0.0
      %1233 = vadd.xlane.f32.xlu0 %v1232
      %v1234 = vpop.xlane.xlu0 %1233
      %v1235 = vsel %vm1072, %v1032, 0.0
      %1236 = vadd.xlane.f32.xlu0 %v1235
      %v1237 = vpop.xlane.xlu0 %1236
      %v1238 = vsel %vm1072, %v1035, 0.0
      %1239 = vadd.xlane.f32.xlu0 %v1238
      %v1240 = vpop.xlane.xlu0 %1239
      %v1241 = vsel %vm1072, %v1040, 0.0
      %1242 = vadd.xlane.f32.xlu0 %v1241
      %v1243 = vpop.xlane.xlu0 %1242
      %v1244 = vsel %vm1072, %v1043, 0.0
      %1245 = vadd.xlane.f32.xlu0 %v1244
      %v1246 = vpop.xlane.xlu0 %1245
      %v1247 = vsel %vm1072, %v1048, 0.0
      %1248 = vadd.xlane.f32.xlu0 %v1247
      %v1249 = vpop.xlane.xlu0 %1248
      %v1250 = vsel %vm1072, %v1051, 0.0
      %1251 = vadd.xlane.f32.xlu0 %v1250
      %v1252 = vpop.xlane.xlu0 %1251
      %v1253 = vsel %vm1072, %v1056, 0.0
      %1254 = vadd.xlane.f32.xlu0 %v1253
      %v1255 = vpop.xlane.xlu0 %1254
      %v1256 = vsel %vm1072, %v1059, 0.0
      %1257 = vadd.xlane.f32.xlu0 %v1256
      %v1258 = vpop.xlane.xlu0 %1257
      %v1259 = vsel %vm1072, %v1064, 0.0
      %1260 = vadd.xlane.f32.xlu0 %v1259
      %v1261 = vpop.xlane.xlu0 %1260
      %v1262 = vsel %vm1072, %v1067, 0.0
      %1263 = vadd.xlane.f32.xlu0 %v1262
      %v1264 = vpop.xlane.xlu0 %1263
      %v1265 = vrcp.pop 32.0
      %v1266 = vmul.f32 %v1075, %v1265
      %v1267 = vmul.f32 %v1078, %v1265
      %v1268 = vmul.f32 %v1081, %v1265
      %v1269 = vmul.f32 %v1084, %v1265
      %v1270 = vmul.f32 %v1087, %v1265
      %v1271 = vmul.f32 %v1090, %v1265
      %v1272 = vmul.f32 %v1093, %v1265
      %v1273 = vmul.f32 %v1096, %v1265
      %v1274 = vmul.f32 %v1099, %v1265
      %v1275 = vmul.f32 %v1102, %v1265
      %v1276 = vmul.f32 %v1105, %v1265
      %v1277 = vmul.f32 %v1108, %v1265
      %v1278 = vmul.f32 %v1111, %v1265
      %v1279 = vmul.f32 %v1114, %v1265
      %v1280 = vmul.f32 %v1117, %v1265
      %v1281 = vmul.f32 %v1120, %v1265
      %v1282 = vmul.f32 %v1123, %v1265
      %v1283 = vmul.f32 %v1126, %v1265
      %v1284 = vmul.f32 %v1129, %v1265
      %v1285 = vmul.f32 %v1132, %v1265
      %v1286 = vmul.f32 %v1135, %v1265
      %v1287 = vmul.f32 %v1138, %v1265
      %v1288 = vmul.f32 %v1141, %v1265
      %v1289 = vmul.f32 %v1144, %v1265
      %v1290 = vmul.f32 %v1147, %v1265
      %v1291 = vmul.f32 %v1150, %v1265
      %v1292 = vmul.f32 %v1153, %v1265
      %v1293 = vmul.f32 %v1156, %v1265
      %v1294 = vmul.f32 %v1159, %v1265
      %v1295 = vmul.f32 %v1162, %v1265
      %v1296 = vmul.f32 %v1165, %v1265
      %v1297 = vmul.f32 %v1168, %v1265
      %v1298 = vmul.f32 %v1171, %v1265
      %v1299 = vmul.f32 %v1174, %v1265
      %v1300 = vmul.f32 %v1177, %v1265
      %v1301 = vmul.f32 %v1180, %v1265
      %v1302 = vmul.f32 %v1183, %v1265
      %v1303 = vmul.f32 %v1186, %v1265
      %v1304 = vmul.f32 %v1189, %v1265
      %v1305 = vmul.f32 %v1192, %v1265
      %v1306 = vmul.f32 %v1195, %v1265
      %v1307 = vmul.f32 %v1198, %v1265
      %v1308 = vmul.f32 %v1201, %v1265
      %v1309 = vmul.f32 %v1204, %v1265
      %v1310 = vmul.f32 %v1207, %v1265
      %v1311 = vmul.f32 %v1210, %v1265
      %v1312 = vmul.f32 %v1213, %v1265
      %v1313 = vmul.f32 %v1216, %v1265
      %v1314 = vmul.f32 %v1219, %v1265
      %v1315 = vmul.f32 %v1222, %v1265
      %v1316 = vmul.f32 %v1225, %v1265
      %v1317 = vmul.f32 %v1228, %v1265
      %v1318 = vmul.f32 %v1231, %v1265
      %v1319 = vmul.f32 %v1234, %v1265
      %v1320 = vmul.f32 %v1237, %v1265
      %v1321 = vmul.f32 %v1240, %v1265
      %v1322 = vmul.f32 %v1243, %v1265
      %v1323 = vmul.f32 %v1246, %v1265
      %v1324 = vmul.f32 %v1249, %v1265
      %v1325 = vmul.f32 %v1252, %v1265
      %v1326 = vmul.f32 %v1255, %v1265
      %v1327 = vmul.f32 %v1258, %v1265
      %v1328 = vmul.f32 %v1261, %v1265
      %v1329 = vmul.f32 %v1264, %v1265
      %v1330 = vsub.f32 %v816, %v1266
      %v1331 = vsub.f32 %v819, %v1267
      %v1332 = vsub.f32 %v824, %v1268
      %v1333 = vsub.f32 %v827, %v1269
      %v1334 = vsub.f32 %v832, %v1270
      %v1335 = vsub.f32 %v835, %v1271
      %v1336 = vsub.f32 %v840, %v1272
      %v1337 = vsub.f32 %v843, %v1273
      %v1338 = vsub.f32 %v848, %v1274
      %v1339 = vsub.f32 %v851, %v1275
      %v1340 = vsub.f32 %v856, %v1276
      %v1341 = vsub.f32 %v859, %v1277
      %v1342 = vsub.f32 %v864, %v1278
      %v1343 = vsub.f32 %v867, %v1279
      %v1344 = vsub.f32 %v872, %v1280
      %v1345 = vsub.f32 %v875, %v1281
      %v1346 = vsub.f32 %v880, %v1282
      %v1347 = vsub.f32 %v883, %v1283
      %v1348 = vsub.f32 %v888, %v1284
      %v1349 = vsub.f32 %v891, %v1285
      %v1350 = vsub.f32 %v896, %v1286
      %v1351 = vsub.f32 %v899, %v1287
      %v1352 = vsub.f32 %v904, %v1288
      %v1353 = vsub.f32 %v907, %v1289
      %v1354 = vsub.f32 %v912, %v1290
      %v1355 = vsub.f32 %v915, %v1291
      %v1356 = vsub.f32 %v920, %v1292
      %v1357 = vsub.f32 %v923, %v1293
      %v1358 = vsub.f32 %v928, %v1294
      %v1359 = vsub.f32 %v931, %v1295
      %v1360 = vsub.f32 %v936, %v1296
      %v1361 = vsub.f32 %v939, %v1297
      %v1362 = vsub.f32 %v944, %v1298
      %v1363 = vsub.f32 %v947, %v1299
      %v1364 = vsub.f32 %v952, %v1300
      %v1365 = vsub.f32 %v955, %v1301
      %v1366 = vsub.f32 %v960, %v1302
      %v1367 = vsub.f32 %v963, %v1303
      %v1368 = vsub.f32 %v968, %v1304
      %v1369 = vsub.f32 %v971, %v1305
      %v1370 = vsub.f32 %v976, %v1306
      %v1371 = vsub.f32 %v979, %v1307
      %v1372 = vsub.f32 %v984, %v1308
      %v1373 = vsub.f32 %v987, %v1309
      %v1374 = vsub.f32 %v992, %v1310
      %v1375 = vsub.f32 %v995, %v1311
      %v1376 = vsub.f32 %v1000, %v1312
      %v1377 = vsub.f32 %v1003, %v1313
      %v1378 = vsub.f32 %v1008, %v1314
      %v1379 = vsub.f32 %v1011, %v1315
      %v1380 = vsub.f32 %v1016, %v1316
      %v1381 = vsub.f32 %v1019, %v1317
      %v1382 = vsub.f32 %v1024, %v1318
      %v1383 = vsub.f32 %v1027, %v1319
      %v1384 = vsub.f32 %v1032, %v1320
      %v1385 = vsub.f32 %v1035, %v1321
      %v1386 = vsub.f32 %v1040, %v1322
      %v1387 = vsub.f32 %v1043, %v1323
      %v1388 = vsub.f32 %v1048, %v1324
      %v1389 = vsub.f32 %v1051, %v1325
      %v1390 = vsub.f32 %v1056, %v1326
      %v1391 = vsub.f32 %v1059, %v1327
      %v1392 = vsub.f32 %v1064, %v1328
      %v1393 = vsub.f32 %v1067, %v1329
      %v1394 = vmul.f32 %v1330, %v1330
      %v1395 = vmul.f32 %v1331, %v1331
      %v1396 = vmul.f32 %v1332, %v1332
      %v1397 = vmul.f32 %v1333, %v1333
      %v1398 = vmul.f32 %v1334, %v1334
      %v1399 = vmul.f32 %v1335, %v1335
      %v1400 = vmul.f32 %v1336, %v1336
      %v1401 = vmul.f32 %v1337, %v1337
      %v1402 = vmul.f32 %v1338, %v1338
      %v1403 = vmul.f32 %v1339, %v1339
      %v1404 = vmul.f32 %v1340, %v1340
      %v1405 = vmul.f32 %v1341, %v1341
      %v1406 = vmul.f32 %v1342, %v1342
      %v1407 = vmul.f32 %v1343, %v1343
      %v1408 = vmul.f32 %v1344, %v1344
      %v1409 = vmul.f32 %v1345, %v1345
      %v1410 = vmul.f32 %v1346, %v1346
      %v1411 = vmul.f32 %v1347, %v1347
      %v1412 = vmul.f32 %v1348, %v1348
      %v1413 = vmul.f32 %v1349, %v1349
      %v1414 = vmul.f32 %v1350, %v1350
      %v1415 = vmul.f32 %v1351, %v1351
      %v1416 = vmul.f32 %v1352, %v1352
      %v1417 = vmul.f32 %v1353, %v1353
      %v1418 = vmul.f32 %v1354, %v1354
      %v1419 = vmul.f32 %v1355, %v1355
      %v1420 = vmul.f32 %v1356, %v1356
      %v1421 = vmul.f32 %v1357, %v1357
      %v1422 = vmul.f32 %v1358, %v1358
      %v1423 = vmul.f32 %v1359, %v1359
      %v1424 = vmul.f32 %v1360, %v1360
      %v1425 = vmul.f32 %v1361, %v1361
      %v1426 = vmul.f32 %v1362, %v1362
      %v1427 = vmul.f32 %v1363, %v1363
      %v1428 = vmul.f32 %v1364, %v1364
      %v1429 = vmul.f32 %v1365, %v1365
      %v1430 = vmul.f32 %v1366, %v1366
      %v1431 = vmul.f32 %v1367, %v1367
      %v1432 = vmul.f32 %v1368, %v1368
      %v1433 = vmul.f32 %v1369, %v1369
      %v1434 = vmul.f32 %v1370, %v1370
      %v1435 = vmul.f32 %v1371, %v1371
      %v1436 = vmul.f32 %v1372, %v1372
      %v1437 = vmul.f32 %v1373, %v1373
      %v1438 = vmul.f32 %v1374, %v1374
      %v1439 = vmul.f32 %v1375, %v1375
      %v1440 = vmul.f32 %v1376, %v1376
      %v1441 = vmul.f32 %v1377, %v1377
      %v1442 = vmul.f32 %v1378, %v1378
      %v1443 = vmul.f32 %v1379, %v1379
      %v1444 = vmul.f32 %v1380, %v1380
      %v1445 = vmul.f32 %v1381, %v1381
      %v1446 = vmul.f32 %v1382, %v1382
      %v1447 = vmul.f32 %v1383, %v1383
      %v1448 = vmul.f32 %v1384, %v1384
      %v1449 = vmul.f32 %v1385, %v1385
      %v1450 = vmul.f32 %v1386, %v1386
      %v1451 = vmul.f32 %v1387, %v1387
      %v1452 = vmul.f32 %v1388, %v1388
      %v1453 = vmul.f32 %v1389, %v1389
      %v1454 = vmul.f32 %v1390, %v1390
      %v1455 = vmul.f32 %v1391, %v1391
      %v1456 = vmul.f32 %v1392, %v1392
      %v1457 = vmul.f32 %v1393, %v1393
      %v1458 = vsel %vm1072, %v1394, 0.0
      %1459 = vadd.xlane.f32.xlu0 %v1458
      %v1460 = vpop.xlane.xlu0 %1459
      %v1461 = vsel %vm1072, %v1395, 0.0
      %1462 = vadd.xlane.f32.xlu0 %v1461
      %v1463 = vpop.xlane.xlu0 %1462
      %v1464 = vsel %vm1072, %v1396, 0.0
      %1465 = vadd.xlane.f32.xlu0 %v1464
      %v1466 = vpop.xlane.xlu0 %1465
      %v1467 = vsel %vm1072, %v1397, 0.0
      %1468 = vadd.xlane.f32.xlu0 %v1467
      %v1469 = vpop.xlane.xlu0 %1468
      %v1470 = vsel %vm1072, %v1398, 0.0
      %1471 = vadd.xlane.f32.xlu0 %v1470
      %v1472 = vpop.xlane.xlu0 %1471
      %v1473 = vsel %vm1072, %v1399, 0.0
      %1474 = vadd.xlane.f32.xlu0 %v1473
      %v1475 = vpop.xlane.xlu0 %1474
      %v1476 = vsel %vm1072, %v1400, 0.0
      %1477 = vadd.xlane.f32.xlu0 %v1476
      %v1478 = vpop.xlane.xlu0 %1477
      %v1479 = vsel %vm1072, %v1401, 0.0
      %1480 = vadd.xlane.f32.xlu0 %v1479
      %v1481 = vpop.xlane.xlu0 %1480
      %v1482 = vsel %vm1072, %v1402, 0.0
      %1483 = vadd.xlane.f32.xlu0 %v1482
      %v1484 = vpop.xlane.xlu0 %1483
      %v1485 = vsel %vm1072, %v1403, 0.0
      %1486 = vadd.xlane.f32.xlu0 %v1485
      %v1487 = vpop.xlane.xlu0 %1486
      %v1488 = vsel %vm1072, %v1404, 0.0
      %1489 = vadd.xlane.f32.xlu0 %v1488
      %v1490 = vpop.xlane.xlu0 %1489
      %v1491 = vsel %vm1072, %v1405, 0.0
      %1492 = vadd.xlane.f32.xlu0 %v1491
      %v1493 = vpop.xlane.xlu0 %1492
      %v1494 = vsel %vm1072, %v1406, 0.0
      %1495 = vadd.xlane.f32.xlu0 %v1494
      %v1496 = vpop.xlane.xlu0 %1495
      %v1497 = vsel %vm1072, %v1407, 0.0
      %1498 = vadd.xlane.f32.xlu0 %v1497
      %v1499 = vpop.xlane.xlu0 %1498
      %v1500 = vsel %vm1072, %v1408, 0.0
      %1501 = vadd.xlane.f32.xlu0 %v1500
      %v1502 = vpop.xlane.xlu0 %1501
      %v1503 = vsel %vm1072, %v1409, 0.0
      %1504 = vadd.xlane.f32.xlu0 %v1503
      %v1505 = vpop.xlane.xlu0 %1504
      %v1506 = vsel %vm1072, %v1410, 0.0
      %1507 = vadd.xlane.f32.xlu0 %v1506
      %v1508 = vpop.xlane.xlu0 %1507
      %v1509 = vsel %vm1072, %v1411, 0.0
      %1510 = vadd.xlane.f32.xlu0 %v1509
      %v1511 = vpop.xlane.xlu0 %1510
      %v1512 = vsel %vm1072, %v1412, 0.0
      %1513 = vadd.xlane.f32.xlu0 %v1512
      %v1514 = vpop.xlane.xlu0 %1513
      %v1515 = vsel %vm1072, %v1413, 0.0
      %1516 = vadd.xlane.f32.xlu0 %v1515
      %v1517 = vpop.xlane.xlu0 %1516
      %v1518 = vsel %vm1072, %v1414, 0.0
      %1519 = vadd.xlane.f32.xlu0 %v1518
      %v1520 = vpop.xlane.xlu0 %1519
      %v1521 = vsel %vm1072, %v1415, 0.0
      %1522 = vadd.xlane.f32.xlu0 %v1521
      %v1523 = vpop.xlane.xlu0 %1522
      %v1524 = vsel %vm1072, %v1416, 0.0
      %1525 = vadd.xlane.f32.xlu0 %v1524
      %v1526 = vpop.xlane.xlu0 %1525
      %v1527 = vsel %vm1072, %v1417, 0.0
      %1528 = vadd.xlane.f32.xlu0 %v1527
      %v1529 = vpop.xlane.xlu0 %1528
      %v1530 = vsel %vm1072, %v1418, 0.0
      %1531 = vadd.xlane.f32.xlu0 %v1530
      %v1532 = vpop.xlane.xlu0 %1531
      %v1533 = vsel %vm1072, %v1419, 0.0
      %1534 = vadd.xlane.f32.xlu0 %v1533
      %v1535 = vpop.xlane.xlu0 %1534
      %v1536 = vsel %vm1072, %v1420, 0.0
      %1537 = vadd.xlane.f32.xlu0 %v1536
      %v1538 = vpop.xlane.xlu0 %1537
      %v1539 = vsel %vm1072, %v1421, 0.0
      %1540 = vadd.xlane.f32.xlu0 %v1539
      %v1541 = vpop.xlane.xlu0 %1540
      %v1542 = vsel %vm1072, %v1422, 0.0
      %1543 = vadd.xlane.f32.xlu0 %v1542
      %v1544 = vpop.xlane.xlu0 %1543
      %v1545 = vsel %vm1072, %v1423, 0.0
      %1546 = vadd.xlane.f32.xlu0 %v1545
      %v1547 = vpop.xlane.xlu0 %1546
      %v1548 = vsel %vm1072, %v1424, 0.0
      %1549 = vadd.xlane.f32.xlu0 %v1548
      %v1550 = vpop.xlane.xlu0 %1549
      %v1551 = vsel %vm1072, %v1425, 0.0
      %1552 = vadd.xlane.f32.xlu0 %v1551
      %v1553 = vpop.xlane.xlu0 %1552
      %v1554 = vsel %vm1072, %v1426, 0.0
      %1555 = vadd.xlane.f32.xlu0 %v1554
      %v1556 = vpop.xlane.xlu0 %1555
      %v1557 = vsel %vm1072, %v1427, 0.0
      %1558 = vadd.xlane.f32.xlu0 %v1557
      %v1559 = vpop.xlane.xlu0 %1558
      %v1560 = vsel %vm1072, %v1428, 0.0
      %1561 = vadd.xlane.f32.xlu0 %v1560
      %v1562 = vpop.xlane.xlu0 %1561
      %v1563 = vsel %vm1072, %v1429, 0.0
      %1564 = vadd.xlane.f32.xlu0 %v1563
      %v1565 = vpop.xlane.xlu0 %1564
      %v1566 = vsel %vm1072, %v1430, 0.0
      %1567 = vadd.xlane.f32.xlu0 %v1566
      %v1568 = vpop.xlane.xlu0 %1567
      %v1569 = vsel %vm1072, %v1431, 0.0
      %1570 = vadd.xlane.f32.xlu0 %v1569
      %v1571 = vpop.xlane.xlu0 %1570
      %v1572 = vsel %vm1072, %v1432, 0.0
      %1573 = vadd.xlane.f32.xlu0 %v1572
      %v1574 = vpop.xlane.xlu0 %1573
      %v1575 = vsel %vm1072, %v1433, 0.0
      %1576 = vadd.xlane.f32.xlu0 %v1575
      %v1577 = vpop.xlane.xlu0 %1576
      %v1578 = vsel %vm1072, %v1434, 0.0
      %1579 = vadd.xlane.f32.xlu0 %v1578
      %v1580 = vpop.xlane.xlu0 %1579
      %v1581 = vsel %vm1072, %v1435, 0.0
      %1582 = vadd.xlane.f32.xlu0 %v1581
      %v1583 = vpop.xlane.xlu0 %1582
      %v1584 = vsel %vm1072, %v1436, 0.0
      %1585 = vadd.xlane.f32.xlu0 %v1584
      %v1586 = vpop.xlane.xlu0 %1585
      %v1587 = vsel %vm1072, %v1437, 0.0
      %1588 = vadd.xlane.f32.xlu0 %v1587
      %v1589 = vpop.xlane.xlu0 %1588
      %v1590 = vsel %vm1072, %v1438, 0.0
      %1591 = vadd.xlane.f32.xlu0 %v1590
      %v1592 = vpop.xlane.xlu0 %1591
      %v1593 = vsel %vm1072, %v1439, 0.0
      %1594 = vadd.xlane.f32.xlu0 %v1593
      %v1595 = vpop.xlane.xlu0 %1594
      %v1596 = vsel %vm1072, %v1440, 0.0
      %1597 = vadd.xlane.f32.xlu0 %v1596
      %v1598 = vpop.xlane.xlu0 %1597
      %v1599 = vsel %vm1072, %v1441, 0.0
      %1600 = vadd.xlane.f32.xlu0 %v1599
      %v1601 = vpop.xlane.xlu0 %1600
      %v1602 = vsel %vm1072, %v1442, 0.0
      %1603 = vadd.xlane.f32.xlu0 %v1602
      %v1604 = vpop.xlane.xlu0 %1603
      %v1605 = vsel %vm1072, %v1443, 0.0
      %1606 = vadd.xlane.f32.xlu0 %v1605
      %v1607 = vpop.xlane.xlu0 %1606
      %v1608 = vsel %vm1072, %v1444, 0.0
      %1609 = vadd.xlane.f32.xlu0 %v1608
      %v1610 = vpop.xlane.xlu0 %1609
      %v1611 = vsel %vm1072, %v1445, 0.0
      %1612 = vadd.xlane.f32.xlu0 %v1611
      %v1613 = vpop.xlane.xlu0 %1612
      %v1614 = vsel %vm1072, %v1446, 0.0
      %1615 = vadd.xlane.f32.xlu0 %v1614
      %v1616 = vpop.xlane.xlu0 %1615
      %v1617 = vsel %vm1072, %v1447, 0.0
      %1618 = vadd.xlane.f32.xlu0 %v1617
      %v1619 = vpop.xlane.xlu0 %1618
      %v1620 = vsel %vm1072, %v1448, 0.0
      %1621 = vadd.xlane.f32.xlu0 %v1620
      %v1622 = vpop.xlane.xlu0 %1621
      %v1623 = vsel %vm1072, %v1449, 0.0
      %1624 = vadd.xlane.f32.xlu0 %v1623
      %v1625 = vpop.xlane.xlu0 %1624
      %v1626 = vsel %vm1072, %v1450, 0.0
      %1627 = vadd.xlane.f32.xlu0 %v1626
      %v1628 = vpop.xlane.xlu0 %1627
      %v1629 = vsel %vm1072, %v1451, 0.0
      %1630 = vadd.xlane.f32.xlu0 %v1629
      %v1631 = vpop.xlane.xlu0 %1630
      %v1632 = vsel %vm1072, %v1452, 0.0
      %1633 = vadd.xlane.f32.xlu0 %v1632
      %v1634 = vpop.xlane.xlu0 %1633
      %v1635 = vsel %vm1072, %v1453, 0.0
      %1636 = vadd.xlane.f32.xlu0 %v1635
      %v1637 = vpop.xlane.xlu0 %1636
      %v1638 = vsel %vm1072, %v1454, 0.0
      %1639 = vadd.xlane.f32.xlu0 %v1638
      %v1640 = vpop.xlane.xlu0 %1639
      %v1641 = vsel %vm1072, %v1455, 0.0
      %1642 = vadd.xlane.f32.xlu0 %v1641
      %v1643 = vpop.xlane.xlu0 %1642
      %v1644 = vsel %vm1072, %v1456, 0.0
      %1645 = vadd.xlane.f32.xlu0 %v1644
      %v1646 = vpop.xlane.xlu0 %1645
      %v1647 = vsel %vm1072, %v1457, 0.0
      %1648 = vadd.xlane.f32.xlu0 %v1647
      %v1649 = vpop.xlane.xlu0 %1648
      %v1650 = vmul.f32 %v1460, %v1265
      %v1651 = vmul.f32 %v1463, %v1265
      %v1652 = vmul.f32 %v1466, %v1265
      %v1653 = vmul.f32 %v1469, %v1265
      %v1654 = vmul.f32 %v1472, %v1265
      %v1655 = vmul.f32 %v1475, %v1265
      %v1656 = vmul.f32 %v1478, %v1265
      %v1657 = vmul.f32 %v1481, %v1265
      %v1658 = vmul.f32 %v1484, %v1265
      %v1659 = vmul.f32 %v1487, %v1265
      %v1660 = vmul.f32 %v1490, %v1265
      %v1661 = vmul.f32 %v1493, %v1265
      %v1662 = vmul.f32 %v1496, %v1265
      %v1663 = vmul.f32 %v1499, %v1265
      %v1664 = vmul.f32 %v1502, %v1265
      %v1665 = vmul.f32 %v1505, %v1265
      %v1666 = vmul.f32 %v1508, %v1265
      %v1667 = vmul.f32 %v1511, %v1265
      %v1668 = vmul.f32 %v1514, %v1265
      %v1669 = vmul.f32 %v1517, %v1265
      %v1670 = vmul.f32 %v1520, %v1265
      %v1671 = vmul.f32 %v1523, %v1265
      %v1672 = vmul.f32 %v1526, %v1265
      %v1673 = vmul.f32 %v1529, %v1265
      %v1674 = vmul.f32 %v1532, %v1265
      %v1675 = vmul.f32 %v1535, %v1265
      %v1676 = vmul.f32 %v1538, %v1265
      %v1677 = vmul.f32 %v1541, %v1265
      %v1678 = vmul.f32 %v1544, %v1265
      %v1679 = vmul.f32 %v1547, %v1265
      %v1680 = vmul.f32 %v1550, %v1265
      %v1681 = vmul.f32 %v1553, %v1265
      %v1682 = vmul.f32 %v1556, %v1265
      %v1683 = vmul.f32 %v1559, %v1265
      %v1684 = vmul.f32 %v1562, %v1265
      %v1685 = vmul.f32 %v1565, %v1265
      %v1686 = vmul.f32 %v1568, %v1265
      %v1687 = vmul.f32 %v1571, %v1265
      %v1688 = vmul.f32 %v1574, %v1265
      %v1689 = vmul.f32 %v1577, %v1265
      %v1690 = vmul.f32 %v1580, %v1265
      %v1691 = vmul.f32 %v1583, %v1265
      %v1692 = vmul.f32 %v1586, %v1265
      %v1693 = vmul.f32 %v1589, %v1265
      %v1694 = vmul.f32 %v1592, %v1265
      %v1695 = vmul.f32 %v1595, %v1265
      %v1696 = vmul.f32 %v1598, %v1265
      %v1697 = vmul.f32 %v1601, %v1265
      %v1698 = vmul.f32 %v1604, %v1265
      %v1699 = vmul.f32 %v1607, %v1265
      %v1700 = vmul.f32 %v1610, %v1265
      %v1701 = vmul.f32 %v1613, %v1265
      %v1702 = vmul.f32 %v1616, %v1265
      %v1703 = vmul.f32 %v1619, %v1265
      %v1704 = vmul.f32 %v1622, %v1265
      %v1705 = vmul.f32 %v1625, %v1265
      %v1706 = vmul.f32 %v1628, %v1265
      %v1707 = vmul.f32 %v1631, %v1265
      %v1708 = vmul.f32 %v1634, %v1265
      %v1709 = vmul.f32 %v1637, %v1265
      %v1710 = vmul.f32 %v1640, %v1265
      %v1711 = vmul.f32 %v1643, %v1265
      %v1712 = vmul.f32 %v1646, %v1265
      %v1713 = vmul.f32 %v1649, %v1265
      %v1714 = vadd.f32 %v1650, 1e-05
      %v1715 = vadd.f32 %v1651, 1e-05
      %v1716 = vadd.f32 %v1652, 1e-05
      %v1717 = vadd.f32 %v1653, 1e-05
      %v1718 = vadd.f32 %v1654, 1e-05
      %v1719 = vadd.f32 %v1655, 1e-05
      %v1720 = vadd.f32 %v1656, 1e-05
      %v1721 = vadd.f32 %v1657, 1e-05
      %v1722 = vadd.f32 %v1658, 1e-05
      %v1723 = vadd.f32 %v1659, 1e-05
      %v1724 = vadd.f32 %v1660, 1e-05
      %v1725 = vadd.f32 %v1661, 1e-05
      %v1726 = vadd.f32 %v1662, 1e-05
      %v1727 = vadd.f32 %v1663, 1e-05
      %v1728 = vadd.f32 %v1664, 1e-05
      %v1729 = vadd.f32 %v1665, 1e-05
      %v1730 = vadd.f32 %v1666, 1e-05
      %v1731 = vadd.f32 %v1667, 1e-05
      %v1732 = vadd.f32 %v1668, 1e-05
      %v1733 = vadd.f32 %v1669, 1e-05
      %v1734 = vadd.f32 %v1670, 1e-05
      %v1735 = vadd.f32 %v1671, 1e-05
      %v1736 = vadd.f32 %v1672, 1e-05
      %v1737 = vadd.f32 %v1673, 1e-05
      %v1738 = vadd.f32 %v1674, 1e-05
      %v1739 = vadd.f32 %v1675, 1e-05
      %v1740 = vadd.f32 %v1676, 1e-05
      %v1741 = vadd.f32 %v1677, 1e-05
      %v1742 = vadd.f32 %v1678, 1e-05
      %v1743 = vadd.f32 %v1679, 1e-05
      %v1744 = vadd.f32 %v1680, 1e-05
      %v1745 = vadd.f32 %v1681, 1e-05
      %v1746 = vadd.f32 %v1682, 1e-05
      %v1747 = vadd.f32 %v1683, 1e-05
      %v1748 = vadd.f32 %v1684, 1e-05
      %v1749 = vadd.f32 %v1685, 1e-05
      %v1750 = vadd.f32 %v1686, 1e-05
      %v1751 = vadd.f32 %v1687, 1e-05
      %v1752 = vadd.f32 %v1688, 1e-05
      %v1753 = vadd.f32 %v1689, 1e-05
      %v1754 = vadd.f32 %v1690, 1e-05
      %v1755 = vadd.f32 %v1691, 1e-05
      %v1756 = vadd.f32 %v1692, 1e-05
      %v1757 = vadd.f32 %v1693, 1e-05
      %v1758 = vadd.f32 %v1694, 1e-05
      %v1759 = vadd.f32 %v1695, 1e-05
      %v1760 = vadd.f32 %v1696, 1e-05
      %v1761 = vadd.f32 %v1697, 1e-05
      %v1762 = vadd.f32 %v1698, 1e-05
      %v1763 = vadd.f32 %v1699, 1e-05
      %v1764 = vadd.f32 %v1700, 1e-05
      %v1765 = vadd.f32 %v1701, 1e-05
      %v1766 = vadd.f32 %v1702, 1e-05
      %v1767 = vadd.f32 %v1703, 1e-05
      %v1768 = vadd.f32 %v1704, 1e-05
      %v1769 = vadd.f32 %v1705, 1e-05
      %v1770 = vadd.f32 %v1706, 1e-05
      %v1771 = vadd.f32 %v1707, 1e-05
      %v1772 = vadd.f32 %v1708, 1e-05
      %v1773 = vadd.f32 %v1709, 1e-05
      %v1774 = vadd.f32 %v1710, 1e-05
      %v1775 = vadd.f32 %v1711, 1e-05
      %v1776 = vadd.f32 %v1712, 1e-05
      %v1777 = vadd.f32 %v1713, 1e-05
      %v1778 = vrsqrt.pop %v1714
      %v1779 = vrsqrt.pop %v1715
      %v1780 = vrsqrt.pop %v1716
      %v1781 = vrsqrt.pop %v1717
      %v1782 = vrsqrt.pop %v1718
      %v1783 = vrsqrt.pop %v1719
      %v1784 = vrsqrt.pop %v1720
      %v1785 = vrsqrt.pop %v1721
      %v1786 = vrsqrt.pop %v1722
      %v1787 = vrsqrt.pop %v1723
      %v1788 = vrsqrt.pop %v1724
      %v1789 = vrsqrt.pop %v1725
      %v1790 = vrsqrt.pop %v1726
      %v1791 = vrsqrt.pop %v1727
      %v1792 = vrsqrt.pop %v1728
      %v1793 = vrsqrt.pop %v1729
      %v1794 = vrsqrt.pop %v1730
      %v1795 = vrsqrt.pop %v1731
      %v1796 = vrsqrt.pop %v1732
      %v1797 = vrsqrt.pop %v1733
      %v1798 = vrsqrt.pop %v1734
      %v1799 = vrsqrt.pop %v1735
      %v1800 = vrsqrt.pop %v1736
      %v1801 = vrsqrt.pop %v1737
      %v1802 = vrsqrt.pop %v1738
      %v1803 = vrsqrt.pop %v1739
      %v1804 = vrsqrt.pop %v1740
      %v1805 = vrsqrt.pop %v1741
      %v1806 = vrsqrt.pop %v1742
      %v1807 = vrsqrt.pop %v1743
      %v1808 = vrsqrt.pop %v1744
      %v1809 = vrsqrt.pop %v1745
      %v1810 = vrsqrt.pop %v1746
      %v1811 = vrsqrt.pop %v1747
      %v1812 = vrsqrt.pop %v1748
      %v1813 = vrsqrt.pop %v1749
      %v1814 = vrsqrt.pop %v1750
      %v1815 = vrsqrt.pop %v1751
      %v1816 = vrsqrt.pop %v1752
      %v1817 = vrsqrt.pop %v1753
      %v1818 = vrsqrt.pop %v1754
      %v1819 = vrsqrt.pop %v1755
      %v1820 = vrsqrt.pop %v1756
      %v1821 = vrsqrt.pop %v1757
      %v1822 = vrsqrt.pop %v1758
      %v1823 = vrsqrt.pop %v1759
      %v1824 = vrsqrt.pop %v1760
      %v1825 = vrsqrt.pop %v1761
      %v1826 = vrsqrt.pop %v1762
      %v1827 = vrsqrt.pop %v1763
      %v1828 = vrsqrt.pop %v1764
      %v1829 = vrsqrt.pop %v1765
      %v1830 = vrsqrt.pop %v1766
      %v1831 = vrsqrt.pop %v1767
      %v1832 = vrsqrt.pop %v1768
      %v1833 = vrsqrt.pop %v1769
      %v1834 = vrsqrt.pop %v1770
      %v1835 = vrsqrt.pop %v1771
      %v1836 = vrsqrt.pop %v1772
      %v1837 = vrsqrt.pop %v1773
      %v1838 = vrsqrt.pop %v1774
      %v1839 = vrsqrt.pop %v1775
      %v1840 = vrsqrt.pop %v1776
      %v1841 = vrsqrt.pop %v1777
      %v1842 = vmul.f32 %v1330, %v1778
      %v1843 = vmul.f32 %v1331, %v1779
      %v1844 = vmul.f32 %v1332, %v1780
      %v1845 = vmul.f32 %v1333, %v1781
      %v1846 = vmul.f32 %v1334, %v1782
      %v1847 = vmul.f32 %v1335, %v1783
      %v1848 = vmul.f32 %v1336, %v1784
      %v1849 = vmul.f32 %v1337, %v1785
      %v1850 = vmul.f32 %v1338, %v1786
      %v1851 = vmul.f32 %v1339, %v1787
      %v1852 = vmul.f32 %v1340, %v1788
      %v1853 = vmul.f32 %v1341, %v1789
      %v1854 = vmul.f32 %v1342, %v1790
      %v1855 = vmul.f32 %v1343, %v1791
      %v1856 = vmul.f32 %v1344, %v1792
      %v1857 = vmul.f32 %v1345, %v1793
      %v1858 = vmul.f32 %v1346, %v1794
      %v1859 = vmul.f32 %v1347, %v1795
      %v1860 = vmul.f32 %v1348, %v1796
      %v1861 = vmul.f32 %v1349, %v1797
      %v1862 = vmul.f32 %v1350, %v1798
      %v1863 = vmul.f32 %v1351, %v1799
      %v1864 = vmul.f32 %v1352, %v1800
      %v1865 = vmul.f32 %v1353, %v1801
      %v1866 = vmul.f32 %v1354, %v1802
      %v1867 = vmul.f32 %v1355, %v1803
      %v1868 = vmul.f32 %v1356, %v1804
      %v1869 = vmul.f32 %v1357, %v1805
      %v1870 = vmul.f32 %v1358, %v1806
      %v1871 = vmul.f32 %v1359, %v1807
      %v1872 = vmul.f32 %v1360, %v1808
      %v1873 = vmul.f32 %v1361, %v1809
      %v1874 = vmul.f32 %v1362, %v1810
      %v1875 = vmul.f32 %v1363, %v1811
      %v1876 = vmul.f32 %v1364, %v1812
      %v1877 = vmul.f32 %v1365, %v1813
      %v1878 = vmul.f32 %v1366, %v1814
      %v1879 = vmul.f32 %v1367, %v1815
      %v1880 = vmul.f32 %v1368, %v1816
      %v1881 = vmul.f32 %v1369, %v1817
      %v1882 = vmul.f32 %v1370, %v1818
      %v1883 = vmul.f32 %v1371, %v1819
      %v1884 = vmul.f32 %v1372, %v1820
      %v1885 = vmul.f32 %v1373, %v1821
      %v1886 = vmul.f32 %v1374, %v1822
      %v1887 = vmul.f32 %v1375, %v1823
      %v1888 = vmul.f32 %v1376, %v1824
      %v1889 = vmul.f32 %v1377, %v1825
      %v1890 = vmul.f32 %v1378, %v1826
      %v1891 = vmul.f32 %v1379, %v1827
      %v1892 = vmul.f32 %v1380, %v1828
      %v1893 = vmul.f32 %v1381, %v1829
      %v1894 = vmul.f32 %v1382, %v1830
      %v1895 = vmul.f32 %v1383, %v1831
      %v1896 = vmul.f32 %v1384, %v1832
      %v1897 = vmul.f32 %v1385, %v1833
      %v1898 = vmul.f32 %v1386, %v1834
      %v1899 = vmul.f32 %v1387, %v1835
      %v1900 = vmul.f32 %v1388, %v1836
      %v1901 = vmul.f32 %v1389, %v1837
      %v1902 = vmul.f32 %v1390, %v1838
      %v1903 = vmul.f32 %v1391, %v1839
      %v1904 = vmul.f32 %v1392, %v1840
      %v1905 = vmul.f32 %v1393, %v1841
      %v1906 = vlaneseq
      %v1907 = vshrl.u32 %v1906, 7
      %v1908 = vsub.s32 0, %v1907
      %v1909 = vrot.slane %v1070, %v1908
      %v1910 = vmul.f32 %v1842, %v1909
      %v1911 = vmul.f32 %v1843, %v1909
      %v1912 = vmul.f32 %v1844, %v1909
      %v1913 = vmul.f32 %v1845, %v1909
      %v1914 = vmul.f32 %v1846, %v1909
      %v1915 = vmul.f32 %v1847, %v1909
      %v1916 = vmul.f32 %v1848, %v1909
      %v1917 = vmul.f32 %v1849, %v1909
      %v1918 = vmul.f32 %v1850, %v1909
      %v1919 = vmul.f32 %v1851, %v1909
      %v1920 = vmul.f32 %v1852, %v1909
      %v1921 = vmul.f32 %v1853, %v1909
      %v1922 = vmul.f32 %v1854, %v1909
      %v1923 = vmul.f32 %v1855, %v1909
      %v1924 = vmul.f32 %v1856, %v1909
      %v1925 = vmul.f32 %v1857, %v1909
      %v1926 = vmul.f32 %v1858, %v1909
      %v1927 = vmul.f32 %v1859, %v1909
      %v1928 = vmul.f32 %v1860, %v1909
      %v1929 = vmul.f32 %v1861, %v1909
      %v1930 = vmul.f32 %v1862, %v1909
      %v1931 = vmul.f32 %v1863, %v1909
      %v1932 = vmul.f32 %v1864, %v1909
      %v1933 = vmul.f32 %v1865, %v1909
      %v1934 = vmul.f32 %v1866, %v1909
      %v1935 = vmul.f32 %v1867, %v1909
      %v1936 = vmul.f32 %v1868, %v1909
      %v1937 = vmul.f32 %v1869, %v1909
      %v1938 = vmul.f32 %v1870, %v1909
      %v1939 = vmul.f32 %v1871, %v1909
      %v1940 = vmul.f32 %v1872, %v1909
      %v1941 = vmul.f32 %v1873, %v1909
      %v1942 = vmul.f32 %v1874, %v1909
      %v1943 = vmul.f32 %v1875, %v1909
      %v1944 = vmul.f32 %v1876, %v1909
      %v1945 = vmul.f32 %v1877, %v1909
      %v1946 = vmul.f32 %v1878, %v1909
      %v1947 = vmul.f32 %v1879, %v1909
      %v1948 = vmul.f32 %v1880, %v1909
      %v1949 = vmul.f32 %v1881, %v1909
      %v1950 = vmul.f32 %v1882, %v1909
      %v1951 = vmul.f32 %v1883, %v1909
      %v1952 = vmul.f32 %v1884, %v1909
      %v1953 = vmul.f32 %v1885, %v1909
      %v1954 = vmul.f32 %v1886, %v1909
      %v1955 = vmul.f32 %v1887, %v1909
      %v1956 = vmul.f32 %v1888, %v1909
      %v1957 = vmul.f32 %v1889, %v1909
      %v1958 = vmul.f32 %v1890, %v1909
      %v1959 = vmul.f32 %v1891, %v1909
      %v1960 = vmul.f32 %v1892, %v1909
      %v1961 = vmul.f32 %v1893, %v1909
      %v1962 = vmul.f32 %v1894, %v1909
      %v1963 = vmul.f32 %v1895, %v1909
      %v1964 = vmul.f32 %v1896, %v1909
      %v1965 = vmul.f32 %v1897, %v1909
      %v1966 = vmul.f32 %v1898, %v1909
      %v1967 = vmul.f32 %v1899, %v1909
      %v1968 = vmul.f32 %v1900, %v1909
      %v1969 = vmul.f32 %v1901, %v1909
      %v1970 = vmul.f32 %v1902, %v1909
      %v1971 = vmul.f32 %v1903, %v1909
      %v1972 = vmul.f32 %v1904, %v1909
      %v1973 = vmul.f32 %v1905, %v1909
      %v1974 = vlaneseq
      %v1975 = vshrl.u32 %v1974, 7
      %v1976 = vsub.s32 0, %v1975
      %v1977 = vrot.slane %v1071, %v1976
      %v1978 = vadd.f32 %v1910, %v1977
      %v1979 = vadd.f32 %v1911, %v1977
      %v1980 = vadd.f32 %v1912, %v1977
      %v1981 = vadd.f32 %v1913, %v1977
      %v1982 = vadd.f32 %v1914, %v1977
      %v1983 = vadd.f32 %v1915, %v1977
      %v1984 = vadd.f32 %v1916, %v1977
      %v1985 = vadd.f32 %v1917, %v1977
      %v1986 = vadd.f32 %v1918, %v1977
      %v1987 = vadd.f32 %v1919, %v1977
      %v1988 = vadd.f32 %v1920, %v1977
      %v1989 = vadd.f32 %v1921, %v1977
      %v1990 = vadd.f32 %v1922, %v1977
      %v1991 = vadd.f32 %v1923, %v1977
      %v1992 = vadd.f32 %v1924, %v1977
      %v1993 = vadd.f32 %v1925, %v1977
      %v1994 = vadd.f32 %v1926, %v1977
      %v1995 = vadd.f32 %v1927, %v1977
      %v1996 = vadd.f32 %v1928, %v1977
      %v1997 = vadd.f32 %v1929, %v1977
      %v1998 = vadd.f32 %v1930, %v1977
      %v1999 = vadd.f32 %v1931, %v1977
      %v2000 = vadd.f32 %v1932, %v1977
      %v2001 = vadd.f32 %v1933, %v1977
      %v2002 = vadd.f32 %v1934, %v1977
      %v2003 = vadd.f32 %v1935, %v1977
      %v2004 = vadd.f32 %v1936, %v1977
      %v2005 = vadd.f32 %v1937, %v1977
      %v2006 = vadd.f32 %v1938, %v1977
      %v2007 = vadd.f32 %v1939, %v1977
      %v2008 = vadd.f32 %v1940, %v1977
      %v2009 = vadd.f32 %v1941, %v1977
      %v2010 = vadd.f32 %v1942, %v1977
      %v2011 = vadd.f32 %v1943, %v1977
      %v2012 = vadd.f32 %v1944, %v1977
      %v2013 = vadd.f32 %v1945, %v1977
      %v2014 = vadd.f32 %v1946, %v1977
      %v2015 = vadd.f32 %v1947, %v1977
      %v2016 = vadd.f32 %v1948, %v1977
      %v2017 = vadd.f32 %v1949, %v1977
      %v2018 = vadd.f32 %v1950, %v1977
      %v2019 = vadd.f32 %v1951, %v1977
      %v2020 = vadd.f32 %v1952, %v1977
      %v2021 = vadd.f32 %v1953, %v1977
      %v2022 = vadd.f32 %v1954, %v1977
      %v2023 = vadd.f32 %v1955, %v1977
      %v2024 = vadd.f32 %v1956, %v1977
      %v2025 = vadd.f32 %v1957, %v1977
      %v2026 = vadd.f32 %v1958, %v1977
      %v2027 = vadd.f32 %v1959, %v1977
      %v2028 = vadd.f32 %v1960, %v1977
      %v2029 = vadd.f32 %v1961, %v1977
      %v2030 = vadd.f32 %v1962, %v1977
      %v2031 = vadd.f32 %v1963, %v1977
      %v2032 = vadd.f32 %v1964, %v1977
      %v2033 = vadd.f32 %v1965, %v1977
      %v2034 = vadd.f32 %v1966, %v1977
      %v2035 = vadd.f32 %v1967, %v1977
      %v2036 = vadd.f32 %v1968, %v1977
      %v2037 = vadd.f32 %v1969, %v1977
      %v2038 = vadd.f32 %v1970, %v1977
      %v2039 = vadd.f32 %v1971, %v1977
      %v2040 = vadd.f32 %v1972, %v1977
      %v2041 = vadd.f32 %v1973, %v1977
      %v2042 = vld [vmem:[%s5] sm:$0xff]
      %v2043 = vld [vmem:[%s5 + $0x8] sm:$0xff]
      %v2044 = vld [vmem:[%s5 + $0x10] sm:$0xff]
      %v2045 = vld [vmem:[%s5 + $0x18] sm:$0xff]
      %v2046 = vld [vmem:[%s6] sm:$0x1]
      %v2047 = vlaneseq
      %v2048 = vshrl.u32 %v2047, 7
      %v2049 = vsub.s32 0, %v2048
      %v2050 = vrot.slane %v2046, %v2049
      %v2052 = vsel %vm1072, %v1978, 0
      %v2055 = vsel %vm1072, %v1979, 0
      %v2058 = vsel %vm1072, %v1980, 0
      %v2061 = vsel %vm1072, %v1981, 0
      %v2064 = vsel %vm1072, %v1982, 0
      %v2067 = vsel %vm1072, %v1983, 0
      %v2070 = vsel %vm1072, %v1984, 0
      %v2073 = vsel %vm1072, %v1985, 0
      %v2076 = vsel %vm1072, %v1986, 0
      %v2079 = vsel %vm1072, %v1987, 0
      %v2082 = vsel %vm1072, %v1988, 0
      %v2085 = vsel %vm1072, %v1989, 0
      %v2088 = vsel %vm1072, %v1990, 0
      %v2091 = vsel %vm1072, %v1991, 0
      %v2094 = vsel %vm1072, %v1992, 0
      %v2097 = vsel %vm1072, %v1993, 0
      %v2100 = vsel %vm1072, %v1994, 0
      %v2103 = vsel %vm1072, %v1995, 0
      %v2106 = vsel %vm1072, %v1996, 0
      %v2109 = vsel %vm1072, %v1997, 0
      %v2112 = vsel %vm1072, %v1998, 0
      %v2115 = vsel %vm1072, %v1999, 0
      %v2118 = vsel %vm1072, %v2000, 0
      %v2121 = vsel %vm1072, %v2001, 0
      %v2124 = vsel %vm1072, %v2002, 0
      %v2127 = vsel %vm1072, %v2003, 0
      %v2130 = vsel %vm1072, %v2004, 0
      %v2133 = vsel %vm1072, %v2005, 0
      %v2136 = vsel %vm1072, %v2006, 0
      %v2139 = vsel %vm1072, %v2007, 0
      %v2142 = vsel %vm1072, %v2008, 0
      %v2145 = vsel %vm1072, %v2009, 0
      %v2148 = vsel %vm1072, %v2010, 0
      %v2151 = vsel %vm1072, %v2011, 0
      %v2154 = vsel %vm1072, %v2012, 0
      %v2157 = vsel %vm1072, %v2013, 0
      %v2160 = vsel %vm1072, %v2014, 0
      %v2163 = vsel %vm1072, %v2015, 0
      %v2166 = vsel %vm1072, %v2016, 0
      %v2169 = vsel %vm1072, %v2017, 0
      %v2172 = vsel %vm1072, %v2018, 0
      %v2175 = vsel %vm1072, %v2019, 0
      %v2178 = vsel %vm1072, %v2020, 0
      %v2181 = vsel %vm1072, %v2021, 0
      %v2184 = vsel %vm1072, %v2022, 0
      %v2187 = vsel %vm1072, %v2023, 0
      %v2190 = vsel %vm1072, %v2024, 0
      %v2193 = vsel %vm1072, %v2025, 0
      %v2196 = vsel %vm1072, %v2026, 0
      %v2199 = vsel %vm1072, %v2027, 0
      %v2202 = vsel %vm1072, %v2028, 0
      %v2205 = vsel %vm1072, %v2029, 0
      %v2208 = vsel %vm1072, %v2030, 0
      %v2211 = vsel %vm1072, %v2031, 0
      %v2214 = vsel %vm1072, %v2032, 0
      %v2217 = vsel %vm1072, %v2033, 0
      %v2220 = vsel %vm1072, %v2034, 0
      %v2223 = vsel %vm1072, %v2035, 0
      %v2226 = vsel %vm1072, %v2036, 0
      %v2229 = vsel %vm1072, %v2037, 0
      %v2232 = vsel %vm1072, %v2038, 0
      %v2235 = vsel %vm1072, %v2039, 0
      %v2238 = vsel %vm1072, %v2040, 0
      %v2241 = vsel %vm1072, %v2041, 0
      %2243 = vmatprep.subr.mxu0 0.0
      %2244 = vmatpush1.msra.mxu0 %v2042
      %2245 = vmatprep.subr.mxu0 0.0
      %2246 = vmatpush1.msra.mxu0 %v2043
      %2247 = vmatprep.subr.mxu0 0.0
      %2248 = vmatpush1.msra.mxu0 %v2044
      %2249 = vmatprep.subr.mxu0 0.0
      %2250 = vmatpush1.msra.mxu0 %v2045
      %2251 = vmatprep.subr.mxu0 0.0
      %2252 = vmatpush1.msra.mxu0 0.0
      %2253 = vmatprep.subr.mxu0 0.0
      %2254 = vmatpush1.msra.mxu0 0.0
      %2255 = vmatprep.subr.mxu0 0.0
      %2256 = vmatpush1.msra.mxu0 0.0
      %2257 = vmatprep.subr.mxu0 0.0
      %2258 = vmatpush1.msra.mxu0 0.0
      %2259 = vmatprep.subr.mxu0 0.0
      %2260 = vmatpush1.msra.mxu0 0.0
      %2261 = vmatprep.subr.mxu0 0.0
      %2262 = vmatpush1.msra.mxu0 0.0
      %2263 = vmatprep.subr.mxu0 0.0
      %2264 = vmatpush1.msra.mxu0 0.0
      %2265 = vmatprep.subr.mxu0 0.0
      %2266 = vmatpush1.msra.mxu0 0.0
      %2267 = vmatprep.subr.mxu0 0.0
      %2268 = vmatpush1.msra.mxu0 0.0
      %2269 = vmatprep.subr.mxu0 0.0
      %2270 = vmatpush1.msra.mxu0 0.0
      %2271 = vmatprep.subr.mxu0 0.0
      %2272 = vmatpush1.msra.mxu0 0.0
      %2273 = vmatprep.subr.mxu0 0.0
      %2274 = vmatpush1.msra.mxu0 0.0
      %2275 = vmatprep.subr.mxu0 0.0
      %2276 = vmatpush1.msra.mxu0 0.0
      %2277 = vmatprep.subr.mxu0 0.0
      %2278 = vmatpush1.msra.mxu0 0.0
      %2279 = vmatprep.subr.mxu0 0.0
      %2280 = vmatpush1.msra.mxu0 0.0
      %2281 = vmatprep.subr.mxu0 0.0
      %2282 = vmatpush1.msra.mxu0 0.0
      %2283 = vmatprep.subr.mxu0 0.0
      %2284 = vmatpush1.msra.mxu0 0.0
      %2285 = vmatprep.subr.mxu0 0.0
      %2286 = vmatpush1.msra.mxu0 0.0
      %2287 = vmatprep.subr.mxu0 0.0
      %2288 = vmatpush1.msra.mxu0 0.0
      %2289 = vmatprep.subr.mxu0 0.0
      %2290 = vmatpush1.msra.mxu0 0.0
      %2291 = vmatprep.subr.mxu0 0.0
      %2292 = vmatpush1.msra.mxu0 0.0
      %2293 = vmatprep.subr.mxu0 0.0
      %2294 = vmatpush1.msra.mxu0 0.0
      %2295 = vmatprep.subr.mxu0 0.0
      %2296 = vmatpush1.msra.mxu0 0.0
      %2297 = vmatprep.subr.mxu0 0.0
      %2298 = vmatpush1.msra.mxu0 0.0
      %2299 = vmatprep.subr.mxu0 0.0
      %2300 = vmatpush1.msra.mxu0 0.0
      %2301 = vmatprep.subr.mxu0 0.0
      %2302 = vmatpush1.msra.mxu0 0.0
      %2303 = vmatprep.subr.mxu0 0.0
      %2304 = vmatpush1.msra.mxu0 0.0
      %2305 = vmatprep.subr.mxu0 0.0
      %2306 = vmatpush1.msra.mxu0 0.0
      %2307 = vmatprep.mubr.f32.mxu0 0.0
      %2308 = vmatmul.mubr.f32.gmra.mrb[0].mxu0 %v2052
      %v2309 = vpop.f32.mrb[0].mxu0
      %v2310 = vadd.f32 %v2050, %v2309
      %v2311 = vpop.f32.mrb[0].mxu0
      %2312 = vmatprep.mubr.f32.mxu0 0.0
      %2313 = vmatmul.mubr.f32.gmra.mrb[0].mxu0 %v2055
      %v2314 = vpop.f32.mrb[0].mxu0
      %v2315 = vadd.f32 %v2050, %v2314
      %v2316 = vpop.f32.mrb[0].mxu0
      %2317 = vmatprep.mubr.f32.mxu0 0.0
      %2318 = vmatmul.mubr.f32.gmra.mrb[0].mxu0 %v2058
      %v2319 = vpop.f32.mrb[0].mxu0
      %v2320 = vadd.f32 %v2050, %v2319
      %v2321 = vpop.f32.mrb[0].mxu0
      %2322 = vmatprep.mubr.f32.mxu0 0.0
      %2323 = vmatmul.mubr.f32.gmra.mrb[0].mxu0 %v2061
      %v2324 = vpop.f32.mrb[0].mxu0
      %v2325 = vadd.f32 %v2050, %v2324
      %v2326 = vpop.f32.mrb[0].mxu0
      %2327 = vmatprep.mubr.f32.mxu0 0.0
      %2328 = vmatmul.mubr.f32.gmra.mrb[0].mxu0 %v2064
      %v2329 = vpop.f32.mrb[0].mxu0
      %v2330 = vadd.f32 %v2050, %v2329
      %v2331 = vpop.f32.mrb[0].mxu0
      %2332 = vmatprep.mubr.f32.mxu0 0.0
      %2333 = vmatmul.mubr.f32.gmra.mrb[0].mxu0 %v2067
      %v2334 = vpop.f32.mrb[0].mxu0
      %v2335 = vadd.f32 %v2050, %v2334
      %v2336 = vpop.f32.mrb[0].mxu0
      %2337 = vmatprep.mubr.f32.mxu0 0.0
      %2338 = vmatmul.mubr.f32.gmra.mrb[0].mxu0 %v2070
      %v2339 = vpop.f32.mrb[0].mxu0
      %v2340 = vadd.f32 %v2050, %v2339
      %v2341 = vpop.f32.mrb[0].mxu0
      %2342 = vmatprep.mubr.f32.mxu0 0.0
      %2343 = vmatmul.mubr.f32.gmra.mrb[0].mxu0 %v2073
      %v2344 = vpop.f32.mrb[0].mxu0
      %v2345 = vadd.f32 %v2050, %v2344
      %v2346 = vpop.f32.mrb[0].mxu0
      %2347 = vmatprep.mubr.f32.mxu0 0.0
      %2348 = vmatmul.mubr.f32.gmra.mrb[0].mxu0 %v2076
      %v2349 = vpop.f32.mrb[0].mxu0
      %v2350 = vadd.f32 %v2050, %v2349
      %v2351 = vpop.f32.mrb[0].mxu0
      %2352 = vmatprep.mubr.f32.mxu0 0.0
      %2353 = vmatmul.mubr.f32.gmra.mrb[0].mxu0 %v2079
      %v2354 = vpop.f32.mrb[0].mxu0
      %v2355 = vadd.f32 %v2050, %v2354
      %v2356 = vpop.f32.mrb[0].mxu0
      %2357 = vmatprep.mubr.f32.mxu0 0.0
      %2358 = vmatmul.mubr.f32.gmra.mrb[0].mxu0 %v2082
      %v2359 = vpop.f32.mrb[0].mxu0
      %v2360 = vadd.f32 %v2050, %v2359
      %v2361 = vpop.f32.mrb[0].mxu0
      %2362 = vmatprep.mubr.f32.mxu0 0.0
      %2363 = vmatmul.mubr.f32.gmra.mrb[0].mxu0 %v2085
      %v2364 = vpop.f32.mrb[0].mxu0
      %v2365 = vadd.f32 %v2050, %v2364
      %v2366 = vpop.f32.mrb[0].mxu0
      %2367 = vmatprep.mubr.f32.mxu0 0.0
      %2368 = vmatmul.mubr.f32.gmra.mrb[0].mxu0 %v2088
      %v2369 = vpop.f32.mrb[0].mxu0
      %v2370 = vadd.f32 %v2050, %v2369
      %v2371 = vpop.f32.mrb[0].mxu0
      %2372 = vmatprep.mubr.f32.mxu0 0.0
      %2373 = vmatmul.mubr.f32.gmra.mrb[0].mxu0 %v2091
      %v2374 = vpop.f32.mrb[0].mxu0
      %v2375 = vadd.f32 %v2050, %v2374
      %v2376 = vpop.f32.mrb[0].mxu0
      %2377 = vmatprep.mubr.f32.mxu0 0.0
      %2378 = vmatmul.mubr.f32.gmra.mrb[0].mxu0 %v2094
      %v2379 = vpop.f32.mrb[0].mxu0
      %v2380 = vadd.f32 %v2050, %v2379
      %v2381 = vpop.f32.mrb[0].mxu0
      %2382 = vmatprep.mubr.f32.mxu0 0.0
      %2383 = vmatmul.mubr.f32.gmra.mrb[0].mxu0 %v2097
      %v2384 = vpop.f32.mrb[0].mxu0
      %v2385 = vadd.f32 %v2050, %v2384
      %v2386 = vpop.f32.mrb[0].mxu0
      %2387 = vmatprep.mubr.f32.mxu0 0.0
      %2388 = vmatmul.mubr.f32.gmra.mrb[0].mxu0 %v2100
      %v2389 = vpop.f32.mrb[0].mxu0
      %v2390 = vadd.f32 %v2050, %v2389
      %v2391 = vpop.f32.mrb[0].mxu0
      %2392 = vmatprep.mubr.f32.mxu0 0.0
      %2393 = vmatmul.mubr.f32.gmra.mrb[0].mxu0 %v2103
      %v2394 = vpop.f32.mrb[0].mxu0
      %v2395 = vadd.f32 %v2050, %v2394
      %v2396 = vpop.f32.mrb[0].mxu0
      %2397 = vmatprep.mubr.f32.mxu0 0.0
      %2398 = vmatmul.mubr.f32.gmra.mrb[0].mxu0 %v2106
      %v2399 = vpop.f32.mrb[0].mxu0
      %v2400 = vadd.f32 %v2050, %v2399
      %v2401 = vpop.f32.mrb[0].mxu0
      %2402 = vmatprep.mubr.f32.mxu0 0.0
      %2403 = vmatmul.mubr.f32.gmra.mrb[0].mxu0 %v2109
      %v2404 = vpop.f32.mrb[0].mxu0
      %v2405 = vadd.f32 %v2050, %v2404
      %v2406 = vpop.f32.mrb[0].mxu0
      %2407 = vmatprep.mubr.f32.mxu0 0.0
      %2408 = vmatmul.mubr.f32.gmra.mrb[0].mxu0 %v2112
      %v2409 = vpop.f32.mrb[0].mxu0
      %v2410 = vadd.f32 %v2050, %v2409
      %v2411 = vpop.f32.mrb[0].mxu0
      %2412 = vmatprep.mubr.f32.mxu0 0.0
      %2413 = vmatmul.mubr.f32.gmra.mrb[0].mxu0 %v2115
      %v2414 = vpop.f32.mrb[0].mxu0
      %v2415 = vadd.f32 %v2050, %v2414
      %v2416 = vpop.f32.mrb[0].mxu0
      %2417 = vmatprep.mubr.f32.mxu0 0.0
      %2418 = vmatmul.mubr.f32.gmra.mrb[0].mxu0 %v2118
      %v2419 = vpop.f32.mrb[0].mxu0
      %v2420 = vadd.f32 %v2050, %v2419
      %v2421 = vpop.f32.mrb[0].mxu0
      %2422 = vmatprep.mubr.f32.mxu0 0.0
      %2423 = vmatmul.mubr.f32.gmra.mrb[0].mxu0 %v2121
      %v2424 = vpop.f32.mrb[0].mxu0
      %v2425 = vadd.f32 %v2050, %v2424
      %v2426 = vpop.f32.mrb[0].mxu0
      %2427 = vmatprep.mubr.f32.mxu0 0.0
      %2428 = vmatmul.mubr.f32.gmra.mrb[0].mxu0 %v2124
      %v2429 = vpop.f32.mrb[0].mxu0
      %v2430 = vadd.f32 %v2050, %v2429
      %v2431 = vpop.f32.mrb[0].mxu0
      %2432 = vmatprep.mubr.f32.mxu0 0.0
      %2433 = vmatmul.mubr.f32.gmra.mrb[0].mxu0 %v2127
      %v2434 = vpop.f32.mrb[0].mxu0
      %v2435 = vadd.f32 %v2050, %v2434
      %v2436 = vpop.f32.mrb[0].mxu0
      %2437 = vmatprep.mubr.f32.mxu0 0.0
      %2438 = vmatmul.mubr.f32.gmra.mrb[0].mxu0 %v2130
      %v2439 = vpop.f32.mrb[0].mxu0
      %v2440 = vadd.f32 %v2050, %v2439
      %v2441 = vpop.f32.mrb[0].mxu0
      %2442 = vmatprep.mubr.f32.mxu0 0.0
      %2443 = vmatmul.mubr.f32.gmra.mrb[0].mxu0 %v2133
      %v2444 = vpop.f32.mrb[0].mxu0
      %v2445 = vadd.f32 %v2050, %v2444
      %v2446 = vpop.f32.mrb[0].mxu0
      %2447 = vmatprep.mubr.f32.mxu0 0.0
      %2448 = vmatmul.mubr.f32.gmra.mrb[0].mxu0 %v2136
      %v2449 = vpop.f32.mrb[0].mxu0
      %v2450 = vadd.f32 %v2050, %v2449
      %v2451 = vpop.f32.mrb[0].mxu0
      %2452 = vmatprep.mubr.f32.mxu0 0.0
      %2453 = vmatmul.mubr.f32.gmra.mrb[0].mxu0 %v2139
      %v2454 = vpop.f32.mrb[0].mxu0
      %v2455 = vadd.f32 %v2050, %v2454
      %v2456 = vpop.f32.mrb[0].mxu0
      %2457 = vmatprep.mubr.f32.mxu0 0.0
      %2458 = vmatmul.mubr.f32.gmra.mrb[0].mxu0 %v2142
      %v2459 = vpop.f32.mrb[0].mxu0
      %v2460 = vadd.f32 %v2050, %v2459
      %v2461 = vpop.f32.mrb[0].mxu0
      %2462 = vmatprep.mubr.f32.mxu0 0.0
      %2463 = vmatmul.mubr.f32.gmra.mrb[0].mxu0 %v2145
      %v2464 = vpop.f32.mrb[0].mxu0
      %v2465 = vadd.f32 %v2050, %v2464
      %v2466 = vpop.f32.mrb[0].mxu0
      %2467 = vmatprep.mubr.f32.mxu0 0.0
      %2468 = vmatmul.mubr.f32.gmra.mrb[0].mxu0 %v2148
      %v2469 = vpop.f32.mrb[0].mxu0
      %v2470 = vadd.f32 %v2050, %v2469
      %v2471 = vpop.f32.mrb[0].mxu0
      %2472 = vmatprep.mubr.f32.mxu0 0.0
      %2473 = vmatmul.mubr.f32.gmra.mrb[0].mxu0 %v2151
      %v2474 = vpop.f32.mrb[0].mxu0
      %v2475 = vadd.f32 %v2050, %v2474
      %v2476 = vpop.f32.mrb[0].mxu0
      %2477 = vmatprep.mubr.f32.mxu0 0.0
      %2478 = vmatmul.mubr.f32.gmra.mrb[0].mxu0 %v2154
      %v2479 = vpop.f32.mrb[0].mxu0
      %v2480 = vadd.f32 %v2050, %v2479
      %v2481 = vpop.f32.mrb[0].mxu0
      %2482 = vmatprep.mubr.f32.mxu0 0.0
      %2483 = vmatmul.mubr.f32.gmra.mrb[0].mxu0 %v2157
      %v2484 = vpop.f32.mrb[0].mxu0
      %v2485 = vadd.f32 %v2050, %v2484
      %v2486 = vpop.f32.mrb[0].mxu0
      %2487 = vmatprep.mubr.f32.mxu0 0.0
      %2488 = vmatmul.mubr.f32.gmra.mrb[0].mxu0 %v2160
      %v2489 = vpop.f32.mrb[0].mxu0
      %v2490 = vadd.f32 %v2050, %v2489
      %v2491 = vpop.f32.mrb[0].mxu0
      %2492 = vmatprep.mubr.f32.mxu0 0.0
      %2493 = vmatmul.mubr.f32.gmra.mrb[0].mxu0 %v2163
      %v2494 = vpop.f32.mrb[0].mxu0
      %v2495 = vadd.f32 %v2050, %v2494
      %v2496 = vpop.f32.mrb[0].mxu0
      %2497 = vmatprep.mubr.f32.mxu0 0.0
      %2498 = vmatmul.mubr.f32.gmra.mrb[0].mxu0 %v2166
      %v2499 = vpop.f32.mrb[0].mxu0
      %v2500 = vadd.f32 %v2050, %v2499
      %v2501 = vpop.f32.mrb[0].mxu0
      %2502 = vmatprep.mubr.f32.mxu0 0.0
      %2503 = vmatmul.mubr.f32.gmra.mrb[0].mxu0 %v2169
      %v2504 = vpop.f32.mrb[0].mxu0
      %v2505 = vadd.f32 %v2050, %v2504
      %v2506 = vpop.f32.mrb[0].mxu0
      %2507 = vmatprep.mubr.f32.mxu0 0.0
      %2508 = vmatmul.mubr.f32.gmra.mrb[0].mxu0 %v2172
      %v2509 = vpop.f32.mrb[0].mxu0
      %v2510 = vadd.f32 %v2050, %v2509
      %v2511 = vpop.f32.mrb[0].mxu0
      %2512 = vmatprep.mubr.f32.mxu0 0.0
      %2513 = vmatmul.mubr.f32.gmra.mrb[0].mxu0 %v2175
      %v2514 = vpop.f32.mrb[0].mxu0
      %v2515 = vadd.f32 %v2050, %v2514
      %v2516 = vpop.f32.mrb[0].mxu0
      %2517 = vmatprep.mubr.f32.mxu0 0.0
      %2518 = vmatmul.mubr.f32.gmra.mrb[0].mxu0 %v2178
      %v2519 = vpop.f32.mrb[0].mxu0
      %v2520 = vadd.f32 %v2050, %v2519
      %v2521 = vpop.f32.mrb[0].mxu0
      %2522 = vmatprep.mubr.f32.mxu0 0.0
      %2523 = vmatmul.mubr.f32.gmra.mrb[0].mxu0 %v2181
      %v2524 = vpop.f32.mrb[0].mxu0
      %v2525 = vadd.f32 %v2050, %v2524
      %v2526 = vpop.f32.mrb[0].mxu0
      %2527 = vmatprep.mubr.f32.mxu0 0.0
      %2528 = vmatmul.mubr.f32.gmra.mrb[0].mxu0 %v2184
      %v2529 = vpop.f32.mrb[0].mxu0
      %v2530 = vadd.f32 %v2050, %v2529
      %v2531 = vpop.f32.mrb[0].mxu0
      %2532 = vmatprep.mubr.f32.mxu0 0.0
      %2533 = vmatmul.mubr.f32.gmra.mrb[0].mxu0 %v2187
      %v2534 = vpop.f32.mrb[0].mxu0
      %v2535 = vadd.f32 %v2050, %v2534
      %v2536 = vpop.f32.mrb[0].mxu0
      %2537 = vmatprep.mubr.f32.mxu0 0.0
      %2538 = vmatmul.mubr.f32.gmra.mrb[0].mxu0 %v2190
      %v2539 = vpop.f32.mrb[0].mxu0
      %v2540 = vadd.f32 %v2050, %v2539
      %v2541 = vpop.f32.mrb[0].mxu0
      %2542 = vmatprep.mubr.f32.mxu0 0.0
      %2543 = vmatmul.mubr.f32.gmra.mrb[0].mxu0 %v2193
      %v2544 = vpop.f32.mrb[0].mxu0
      %v2545 = vadd.f32 %v2050, %v2544
      %v2546 = vpop.f32.mrb[0].mxu0
      %2547 = vmatprep.mubr.f32.mxu0 0.0
      %2548 = vmatmul.mubr.f32.gmra.mrb[0].mxu0 %v2196
      %v2549 = vpop.f32.mrb[0].mxu0
      %v2550 = vadd.f32 %v2050, %v2549
      %v2551 = vpop.f32.mrb[0].mxu0
      %2552 = vmatprep.mubr.f32.mxu0 0.0
      %2553 = vmatmul.mubr.f32.gmra.mrb[0].mxu0 %v2199
      %v2554 = vpop.f32.mrb[0].mxu0
      %v2555 = vadd.f32 %v2050, %v2554
      %v2556 = vpop.f32.mrb[0].mxu0
      %2557 = vmatprep.mubr.f32.mxu0 0.0
      %2558 = vmatmul.mubr.f32.gmra.mrb[0].mxu0 %v2202
      %v2559 = vpop.f32.mrb[0].mxu0
      %v2560 = vadd.f32 %v2050, %v2559
      %v2561 = vpop.f32.mrb[0].mxu0
      %2562 = vmatprep.mubr.f32.mxu0 0.0
      %2563 = vmatmul.mubr.f32.gmra.mrb[0].mxu0 %v2205
      %v2564 = vpop.f32.mrb[0].mxu0
      %v2565 = vadd.f32 %v2050, %v2564
      %v2566 = vpop.f32.mrb[0].mxu0
      %2567 = vmatprep.mubr.f32.mxu0 0.0
      %2568 = vmatmul.mubr.f32.gmra.mrb[0].mxu0 %v2208
      %v2569 = vpop.f32.mrb[0].mxu0
      %v2570 = vadd.f32 %v2050, %v2569
      %v2571 = vpop.f32.mrb[0].mxu0
      %2572 = vmatprep.mubr.f32.mxu0 0.0
      %2573 = vmatmul.mubr.f32.gmra.mrb[0].mxu0 %v2211
      %v2574 = vpop.f32.mrb[0].mxu0
      %v2575 = vadd.f32 %v2050, %v2574
      %v2576 = vpop.f32.mrb[0].mxu0
      %2577 = vmatprep.mubr.f32.mxu0 0.0
      %2578 = vmatmul.mubr.f32.gmra.mrb[0].mxu0 %v2214
      %v2579 = vpop.f32.mrb[0].mxu0
      %v2580 = vadd.f32 %v2050, %v2579
      %v2581 = vpop.f32.mrb[0].mxu0
      %2582 = vmatprep.mubr.f32.mxu0 0.0
      %2583 = vmatmul.mubr.f32.gmra.mrb[0].mxu0 %v2217
      %v2584 = vpop.f32.mrb[0].mxu0
      %v2585 = vadd.f32 %v2050, %v2584
      %v2586 = vpop.f32.mrb[0].mxu0
      %2587 = vmatprep.mubr.f32.mxu0 0.0
      %2588 = vmatmul.mubr.f32.gmra.mrb[0].mxu0 %v2220
      %v2589 = vpop.f32.mrb[0].mxu0
      %v2590 = vadd.f32 %v2050, %v2589
      %v2591 = vpop.f32.mrb[0].mxu0
      %2592 = vmatprep.mubr.f32.mxu0 0.0
      %2593 = vmatmul.mubr.f32.gmra.mrb[0].mxu0 %v2223
      %v2594 = vpop.f32.mrb[0].mxu0
      %v2595 = vadd.f32 %v2050, %v2594
      %v2596 = vpop.f32.mrb[0].mxu0
      %2597 = vmatprep.mubr.f32.mxu0 0.0
      %2598 = vmatmul.mubr.f32.gmra.mrb[0].mxu0 %v2226
      %v2599 = vpop.f32.mrb[0].mxu0
      %v2600 = vadd.f32 %v2050, %v2599
      %v2601 = vpop.f32.mrb[0].mxu0
      %2602 = vmatprep.mubr.f32.mxu0 0.0
      %2603 = vmatmul.mubr.f32.gmra.mrb[0].mxu0 %v2229
      %v2604 = vpop.f32.mrb[0].mxu0
      %v2605 = vadd.f32 %v2050, %v2604
      %v2606 = vpop.f32.mrb[0].mxu0
      %2607 = vmatprep.mubr.f32.mxu0 0.0
      %2608 = vmatmul.mubr.f32.gmra.mrb[0].mxu0 %v2232
      %v2609 = vpop.f32.mrb[0].mxu0
      %v2610 = vadd.f32 %v2050, %v2609
      %v2611 = vpop.f32.mrb[0].mxu0
      %2612 = vmatprep.mubr.f32.mxu0 0.0
      %2613 = vmatmul.mubr.f32.gmra.mrb[0].mxu0 %v2235
      %v2614 = vpop.f32.mrb[0].mxu0
      %v2615 = vadd.f32 %v2050, %v2614
      %v2616 = vpop.f32.mrb[0].mxu0
      %2617 = vmatprep.mubr.f32.mxu0 0.0
      %2618 = vmatmul.mubr.f32.gmra.mrb[0].mxu0 %v2238
      %v2619 = vpop.f32.mrb[0].mxu0
      %v2620 = vadd.f32 %v2050, %v2619
      %v2621 = vpop.f32.mrb[0].mxu0
      %2622 = vmatprep.mubr.f32.mxu0 0.0
      %2623 = vmatmul.mubr.f32.gmra.mrb[0].mxu0 %v2241
      %v2624 = vpop.f32.mrb[0].mxu0
      %v2625 = vadd.f32 %v2050, %v2624
      %v2626 = vpop.f32.mrb[0].mxu0
      %2627 = vdwg.mxu0
      %v2628 = vmax.f32 %v2310, 0.0
      %v2629 = vmax.f32 %v2315, 0.0
      %v2630 = vmax.f32 %v2320, 0.0
      %v2631 = vmax.f32 %v2325, 0.0
      %v2632 = vmax.f32 %v2330, 0.0
      %v2633 = vmax.f32 %v2335, 0.0
      %v2634 = vmax.f32 %v2340, 0.0
      %v2635 = vmax.f32 %v2345, 0.0
      %v2636 = vmax.f32 %v2350, 0.0
      %v2637 = vmax.f32 %v2355, 0.0
      %v2638 = vmax.f32 %v2360, 0.0
      %v2639 = vmax.f32 %v2365, 0.0
      %v2640 = vmax.f32 %v2370, 0.0
      %v2641 = vmax.f32 %v2375, 0.0
      %v2642 = vmax.f32 %v2380, 0.0
      %v2643 = vmax.f32 %v2385, 0.0
      %v2644 = vmax.f32 %v2390, 0.0
      %v2645 = vmax.f32 %v2395, 0.0
      %v2646 = vmax.f32 %v2400, 0.0
      %v2647 = vmax.f32 %v2405, 0.0
      %v2648 = vmax.f32 %v2410, 0.0
      %v2649 = vmax.f32 %v2415, 0.0
      %v2650 = vmax.f32 %v2420, 0.0
      %v2651 = vmax.f32 %v2425, 0.0
      %v2652 = vmax.f32 %v2430, 0.0
      %v2653 = vmax.f32 %v2435, 0.0
      %v2654 = vmax.f32 %v2440, 0.0
      %v2655 = vmax.f32 %v2445, 0.0
      %v2656 = vmax.f32 %v2450, 0.0
      %v2657 = vmax.f32 %v2455, 0.0
      %v2658 = vmax.f32 %v2460, 0.0
      %v2659 = vmax.f32 %v2465, 0.0
      %v2660 = vmax.f32 %v2470, 0.0
      %v2661 = vmax.f32 %v2475, 0.0
      %v2662 = vmax.f32 %v2480, 0.0
      %v2663 = vmax.f32 %v2485, 0.0
      %v2664 = vmax.f32 %v2490, 0.0
      %v2665 = vmax.f32 %v2495, 0.0
      %v2666 = vmax.f32 %v2500, 0.0
      %v2667 = vmax.f32 %v2505, 0.0
      %v2668 = vmax.f32 %v2510, 0.0
      %v2669 = vmax.f32 %v2515, 0.0
      %v2670 = vmax.f32 %v2520, 0.0
      %v2671 = vmax.f32 %v2525, 0.0
      %v2672 = vmax.f32 %v2530, 0.0
      %v2673 = vmax.f32 %v2535, 0.0
      %v2674 = vmax.f32 %v2540, 0.0
      %v2675 = vmax.f32 %v2545, 0.0
      %v2676 = vmax.f32 %v2550, 0.0
      %v2677 = vmax.f32 %v2555, 0.0
      %v2678 = vmax.f32 %v2560, 0.0
      %v2679 = vmax.f32 %v2565, 0.0
      %v2680 = vmax.f32 %v2570, 0.0
      %v2681 = vmax.f32 %v2575, 0.0
      %v2682 = vmax.f32 %v2580, 0.0
      %v2683 = vmax.f32 %v2585, 0.0
      %v2684 = vmax.f32 %v2590, 0.0
      %v2685 = vmax.f32 %v2595, 0.0
      %v2686 = vmax.f32 %v2600, 0.0
      %v2687 = vmax.f32 %v2605, 0.0
      %v2688 = vmax.f32 %v2610, 0.0
      %v2689 = vmax.f32 %v2615, 0.0
      %v2690 = vmax.f32 %v2620, 0.0
      %v2691 = vmax.f32 %v2625, 0.0
      %v2692 = vld [vmem:[%s7] sm:$0xff]
      %v2693 = vld [vmem:[%s7 + $0x8] sm:$0xff]
      %v2694 = vld [vmem:[%s7 + $0x10] sm:$0xff]
      %v2695 = vld [vmem:[%s7 + $0x18] sm:$0xff]
      %v2696 = vld [vmem:[%s7 + $0x20] sm:$0xff]
      %v2697 = vld [vmem:[%s7 + $0x28] sm:$0xff]
      %v2698 = vld [vmem:[%s7 + $0x30] sm:$0xff]
      %v2699 = vld [vmem:[%s7 + $0x38] sm:$0xff]
      %v2700 = vld [vmem:[%s8] sm:$0x1]
      %v2701 = vlaneseq
      %v2702 = vshrl.u32 %v2701, 7
      %v2703 = vsub.s32 0, %v2702
      %v2704 = vrot.slane %v2700, %v2703
      %vm2705 = vcmask 523264
      %v2707 = vsel %vm2705, %v2628, 0
      %v2710 = vsel %vm2705, %v2629, 0
      %v2713 = vsel %vm2705, %v2630, 0
      %v2716 = vsel %vm2705, %v2631, 0
      %v2719 = vsel %vm2705, %v2632, 0
      %v2722 = vsel %vm2705, %v2633, 0
      %v2725 = vsel %vm2705, %v2634, 0
      %v2728 = vsel %vm2705, %v2635, 0
      %v2731 = vsel %vm2705, %v2636, 0
      %v2734 = vsel %vm2705, %v2637, 0
      %v2737 = vsel %vm2705, %v2638, 0
      %v2740 = vsel %vm2705, %v2639, 0
      %v2743 = vsel %vm2705, %v2640, 0
      %v2746 = vsel %vm2705, %v2641, 0
      %v2749 = vsel %vm2705, %v2642, 0
      %v2752 = vsel %vm2705, %v2643, 0
      %v2755 = vsel %vm2705, %v2644, 0
      %v2758 = vsel %vm2705, %v2645, 0
      %v2761 = vsel %vm2705, %v2646, 0
      %v2764 = vsel %vm2705, %v2647, 0
      %v2767 = vsel %vm2705, %v2648, 0
      %v2770 = vsel %vm2705, %v2649, 0
      %v2773 = vsel %vm2705, %v2650, 0
      %v2776 = vsel %vm2705, %v2651, 0
      %v2779 = vsel %vm2705, %v2652, 0
      %v2782 = vsel %vm2705, %v2653, 0
      %v2785 = vsel %vm2705, %v2654, 0
      %v2788 = vsel %vm2705, %v2655, 0
      %v2791 = vsel %vm2705, %v2656, 0
      %v2794 = vsel %vm2705, %v2657, 0
      %v2797 = vsel %vm2705, %v2658, 0
      %v2800 = vsel %vm2705, %v2659, 0
      %v2803 = vsel %vm2705, %v2660, 0
      %v2806 = vsel %vm2705, %v2661, 0
      %v2809 = vsel %vm2705, %v2662, 0
      %v2812 = vsel %vm2705, %v2663, 0
      %v2815 = vsel %vm2705, %v2664, 0
      %v2818 = vsel %vm2705, %v2665, 0
      %v2821 = vsel %vm2705, %v2666, 0
      %v2824 = vsel %vm2705, %v2667, 0
      %v2827 = vsel %vm2705, %v2668, 0
      %v2830 = vsel %vm2705, %v2669, 0
      %v2833 = vsel %vm2705, %v2670, 0
      %v2836 = vsel %vm2705, %v2671, 0
      %v2839 = vsel %vm2705, %v2672, 0
      %v2842 = vsel %vm2705, %v2673, 0
      %v2845 = vsel %vm2705, %v2674, 0
      %v2848 = vsel %vm2705, %v2675, 0
      %v2851 = vsel %vm2705, %v2676, 0
      %v2854 = vsel %vm2705, %v2677, 0
      %v2857 = vsel %vm2705, %v2678, 0
      %v2860 = vsel %vm2705, %v2679, 0
      %v2863 = vsel %vm2705, %v2680, 0
      %v2866 = vsel %vm2705, %v2681, 0
      %v2869 = vsel %vm2705, %v2682, 0
      %v2872 = vsel %vm2705, %v2683, 0
      %v2875 = vsel %vm2705, %v2684, 0
      %v2878 = vsel %vm2705, %v2685, 0
      %v2881 = vsel %vm2705, %v2686, 0
      %v2884 = vsel %vm2705, %v2687, 0
      %v2887 = vsel %vm2705, %v2688, 0
      %v2890 = vsel %vm2705, %v2689, 0
      %v2893 = vsel %vm2705, %v2690, 0
      %v2896 = vsel %vm2705, %v2691, 0
      %2898 = vmatprep.subr.mxu0 0.0
      %2899 = vmatpush1.msra.mxu0 %v2692
      %2900 = vmatprep.subr.mxu0 0.0
      %2901 = vmatpush1.msra.mxu0 %v2693
      %2902 = vmatprep.subr.mxu0 0.0
      %2903 = vmatpush1.msra.mxu0 %v2694
      %2904 = vmatprep.subr.mxu0 0.0
      %2905 = vmatpush1.msra.mxu0 %v2695
      %2906 = vmatprep.subr.mxu0 0.0
      %2907 = vmatpush1.msra.mxu0 %v2696
      %2908 = vmatprep.subr.mxu0 0.0
      %2909 = vmatpush1.msra.mxu0 %v2697
      %2910 = vmatprep.subr.mxu0 0.0
      %2911 = vmatpush1.msra.mxu0 %v2698
      %2912 = vmatprep.subr.mxu0 0.0
      %2913 = vmatpush1.msra.mxu0 %v2699
      %2914 = vmatprep.subr.mxu0 0.0
      %2915 = vmatpush1.msra.mxu0 0.0
      %2916 = vmatprep.subr.mxu0 0.0
      %2917 = vmatpush1.msra.mxu0 0.0
      %2918 = vmatprep.subr.mxu0 0.0
      %2919 = vmatpush1.msra.mxu0 0.0
      %2920 = vmatprep.subr.mxu0 0.0
      %2921 = vmatpush1.msra.mxu0 0.0
      %2922 = vmatprep.subr.mxu0 0.0
      %2923 = vmatpush1.msra.mxu0 0.0
      %2924 = vmatprep.subr.mxu0 0.0
      %2925 = vmatpush1.msra.mxu0 0.0
      %2926 = vmatprep.subr.mxu0 0.0
      %2927 = vmatpush1.msra.mxu0 0.0
      %2928 = vmatprep.subr.mxu0 0.0
      %2929 = vmatpush1.msra.mxu0 0.0
      %2930 = vmatprep.subr.mxu0 0.0
      %2931 = vmatpush1.msra.mxu0 0.0
      %2932 = vmatprep.subr.mxu0 0.0
      %2933 = vmatpush1.msra.mxu0 0.0
      %2934 = vmatprep.subr.mxu0 0.0
      %2935 = vmatpush1.msra.mxu0 0.0
      %2936 = vmatprep.subr.mxu0 0.0
      %2937 = vmatpush1.msra.mxu0 0.0
      %2938 = vmatprep.subr.mxu0 0.0
      %2939 = vmatpush1.msra.mxu0 0.0
      %2940 = vmatprep.subr.mxu0 0.0
      %2941 = vmatpush1.msra.mxu0 0.0
      %2942 = vmatprep.subr.mxu0 0.0
      %2943 = vmatpush1.msra.mxu0 0.0
      %2944 = vmatprep.subr.mxu0 0.0
      %2945 = vmatpush1.msra.mxu0 0.0
      %2946 = vmatprep.subr.mxu0 0.0
      %2947 = vmatpush1.msra.mxu0 0.0
      %2948 = vmatprep.subr.mxu0 0.0
      %2949 = vmatpush1.msra.mxu0 0.0
      %2950 = vmatprep.subr.mxu0 0.0
      %2951 = vmatpush1.msra.mxu0 0.0
      %2952 = vmatprep.subr.mxu0 0.0
      %2953 = vmatpush1.msra.mxu0 0.0
      %2954 = vmatprep.subr.mxu0 0.0
      %2955 = vmatpush1.msra.mxu0 0.0
      %2956 = vmatprep.subr.mxu0 0.0
      %2957 = vmatpush1.msra.mxu0 0.0
      %2958 = vmatprep.subr.mxu0 0.0
      %2959 = vmatpush1.msra.mxu0 0.0
      %2960 = vmatprep.subr.mxu0 0.0
      %2961 = vmatpush1.msra.mxu0 0.0
      %2962 = vmatprep.mubr.f32.mxu0 0.0
      %2963 = vmatmul.mubr.f32.gmra.mrb[0].mxu0 %v2707
      %v2964 = vpop.f32.mrb[0].mxu0
      %v2965 = vadd.f32 %v2704, %v2964
      %v2966 = vpop.f32.mrb[0].mxu0
      %2967 = vmatprep.mubr.f32.mxu0 0.0
      %2968 = vmatmul.mubr.f32.gmra.mrb[0].mxu0 %v2710
      %v2969 = vpop.f32.mrb[0].mxu0
      %v2970 = vadd.f32 %v2704, %v2969
      %v2971 = vpop.f32.mrb[0].mxu0
      %2972 = vmatprep.mubr.f32.mxu0 0.0
      %2973 = vmatmul.mubr.f32.gmra.mrb[0].mxu0 %v2713
      %v2974 = vpop.f32.mrb[0].mxu0
      %v2975 = vadd.f32 %v2704, %v2974
      %v2976 = vpop.f32.mrb[0].mxu0
      %2977 = vmatprep.mubr.f32.mxu0 0.0
      %2978 = vmatmul.mubr.f32.gmra.mrb[0].mxu0 %v2716
      %v2979 = vpop.f32.mrb[0].mxu0
      %v2980 = vadd.f32 %v2704, %v2979
      %v2981 = vpop.f32.mrb[0].mxu0
      %2982 = vmatprep.mubr.f32.mxu0 0.0
      %2983 = vmatmul.mubr.f32.gmra.mrb[0].mxu0 %v2719
      %v2984 = vpop.f32.mrb[0].mxu0
      %v2985 = vadd.f32 %v2704, %v2984
      %v2986 = vpop.f32.mrb[0].mxu0
      %2987 = vmatprep.mubr.f32.mxu0 0.0
      %2988 = vmatmul.mubr.f32.gmra.mrb[0].mxu0 %v2722
      %v2989 = vpop.f32.mrb[0].mxu0
      %v2990 = vadd.f32 %v2704, %v2989
      %v2991 = vpop.f32.mrb[0].mxu0
      %2992 = vmatprep.mubr.f32.mxu0 0.0
      %2993 = vmatmul.mubr.f32.gmra.mrb[0].mxu0 %v2725
      %v2994 = vpop.f32.mrb[0].mxu0
      %v2995 = vadd.f32 %v2704, %v2994
      %v2996 = vpop.f32.mrb[0].mxu0
      %2997 = vmatprep.mubr.f32.mxu0 0.0
      %2998 = vmatmul.mubr.f32.gmra.mrb[0].mxu0 %v2728
      %v2999 = vpop.f32.mrb[0].mxu0
      %v3000 = vadd.f32 %v2704, %v2999
      %v3001 = vpop.f32.mrb[0].mxu0
      %3002 = vmatprep.mubr.f32.mxu0 0.0
      %3003 = vmatmul.mubr.f32.gmra.mrb[0].mxu0 %v2731
      %v3004 = vpop.f32.mrb[0].mxu0
      %v3005 = vadd.f32 %v2704, %v3004
      %v3006 = vpop.f32.mrb[0].mxu0
      %3007 = vmatprep.mubr.f32.mxu0 0.0
      %3008 = vmatmul.mubr.f32.gmra.mrb[0].mxu0 %v2734
      %v3009 = vpop.f32.mrb[0].mxu0
      %v3010 = vadd.f32 %v2704, %v3009
      %v3011 = vpop.f32.mrb[0].mxu0
      %3012 = vmatprep.mubr.f32.mxu0 0.0
      %3013 = vmatmul.mubr.f32.gmra.mrb[0].mxu0 %v2737
      %v3014 = vpop.f32.mrb[0].mxu0
      %v3015 = vadd.f32 %v2704, %v3014
      %v3016 = vpop.f32.mrb[0].mxu0
      %3017 = vmatprep.mubr.f32.mxu0 0.0
      %3018 = vmatmul.mubr.f32.gmra.mrb[0].mxu0 %v2740
      %v3019 = vpop.f32.mrb[0].mxu0
      %v3020 = vadd.f32 %v2704, %v3019
      %v3021 = vpop.f32.mrb[0].mxu0
      %3022 = vmatprep.mubr.f32.mxu0 0.0
      %3023 = vmatmul.mubr.f32.gmra.mrb[0].mxu0 %v2743
      %v3024 = vpop.f32.mrb[0].mxu0
      %v3025 = vadd.f32 %v2704, %v3024
      %v3026 = vpop.f32.mrb[0].mxu0
      %3027 = vmatprep.mubr.f32.mxu0 0.0
      %3028 = vmatmul.mubr.f32.gmra.mrb[0].mxu0 %v2746
      %v3029 = vpop.f32.mrb[0].mxu0
      %v3030 = vadd.f32 %v2704, %v3029
      %v3031 = vpop.f32.mrb[0].mxu0
      %3032 = vmatprep.mubr.f32.mxu0 0.0
      %3033 = vmatmul.mubr.f32.gmra.mrb[0].mxu0 %v2749
      %v3034 = vpop.f32.mrb[0].mxu0
      %v3035 = vadd.f32 %v2704, %v3034
      %v3036 = vpop.f32.mrb[0].mxu0
      %3037 = vmatprep.mubr.f32.mxu0 0.0
      %3038 = vmatmul.mubr.f32.gmra.mrb[0].mxu0 %v2752
      %v3039 = vpop.f32.mrb[0].mxu0
      %v3040 = vadd.f32 %v2704, %v3039
      %v3041 = vpop.f32.mrb[0].mxu0
      %3042 = vmatprep.mubr.f32.mxu0 0.0
      %3043 = vmatmul.mubr.f32.gmra.mrb[0].mxu0 %v2755
      %v3044 = vpop.f32.mrb[0].mxu0
      %v3045 = vadd.f32 %v2704, %v3044
      %v3046 = vpop.f32.mrb[0].mxu0
      %3047 = vmatprep.mubr.f32.mxu0 0.0
      %3048 = vmatmul.mubr.f32.gmra.mrb[0].mxu0 %v2758
      %v3049 = vpop.f32.mrb[0].mxu0
      %v3050 = vadd.f32 %v2704, %v3049
      %v3051 = vpop.f32.mrb[0].mxu0
      %3052 = vmatprep.mubr.f32.mxu0 0.0
      %3053 = vmatmul.mubr.f32.gmra.mrb[0].mxu0 %v2761
      %v3054 = vpop.f32.mrb[0].mxu0
      %v3055 = vadd.f32 %v2704, %v3054
      %v3056 = vpop.f32.mrb[0].mxu0
      %3057 = vmatprep.mubr.f32.mxu0 0.0
      %3058 = vmatmul.mubr.f32.gmra.mrb[0].mxu0 %v2764
      %v3059 = vpop.f32.mrb[0].mxu0
      %v3060 = vadd.f32 %v2704, %v3059
      %v3061 = vpop.f32.mrb[0].mxu0
      %3062 = vmatprep.mubr.f32.mxu0 0.0
      %3063 = vmatmul.mubr.f32.gmra.mrb[0].mxu0 %v2767
      %v3064 = vpop.f32.mrb[0].mxu0
      %v3065 = vadd.f32 %v2704, %v3064
      %v3066 = vpop.f32.mrb[0].mxu0
      %3067 = vmatprep.mubr.f32.mxu0 0.0
      %3068 = vmatmul.mubr.f32.gmra.mrb[0].mxu0 %v2770
      %v3069 = vpop.f32.mrb[0].mxu0
      %v3070 = vadd.f32 %v2704, %v3069
      %v3071 = vpop.f32.mrb[0].mxu0
      %3072 = vmatprep.mubr.f32.mxu0 0.0
      %3073 = vmatmul.mubr.f32.gmra.mrb[0].mxu0 %v2773
      %v3074 = vpop.f32.mrb[0].mxu0
      %v3075 = vadd.f32 %v2704, %v3074
      %v3076 = vpop.f32.mrb[0].mxu0
      %3077 = vmatprep.mubr.f32.mxu0 0.0
      %3078 = vmatmul.mubr.f32.gmra.mrb[0].mxu0 %v2776
      %v3079 = vpop.f32.mrb[0].mxu0
      %v3080 = vadd.f32 %v2704, %v3079
      %v3081 = vpop.f32.mrb[0].mxu0
      %3082 = vmatprep.mubr.f32.mxu0 0.0
      %3083 = vmatmul.mubr.f32.gmra.mrb[0].mxu0 %v2779
      %v3084 = vpop.f32.mrb[0].mxu0
      %v3085 = vadd.f32 %v2704, %v3084
      %v3086 = vpop.f32.mrb[0].mxu0
      %3087 = vmatprep.mubr.f32.mxu0 0.0
      %3088 = vmatmul.mubr.f32.gmra.mrb[0].mxu0 %v2782
      %v3089 = vpop.f32.mrb[0].mxu0
      %v3090 = vadd.f32 %v2704, %v3089
      %v3091 = vpop.f32.mrb[0].mxu0
      %3092 = vmatprep.mubr.f32.mxu0 0.0
      %3093 = vmatmul.mubr.f32.gmra.mrb[0].mxu0 %v2785
      %v3094 = vpop.f32.mrb[0].mxu0
      %v3095 = vadd.f32 %v2704, %v3094
      %v3096 = vpop.f32.mrb[0].mxu0
      %3097 = vmatprep.mubr.f32.mxu0 0.0
      %3098 = vmatmul.mubr.f32.gmra.mrb[0].mxu0 %v2788
      %v3099 = vpop.f32.mrb[0].mxu0
      %v3100 = vadd.f32 %v2704, %v3099
      %v3101 = vpop.f32.mrb[0].mxu0
      %3102 = vmatprep.mubr.f32.mxu0 0.0
      %3103 = vmatmul.mubr.f32.gmra.mrb[0].mxu0 %v2791
      %v3104 = vpop.f32.mrb[0].mxu0
      %v3105 = vadd.f32 %v2704, %v3104
      %v3106 = vpop.f32.mrb[0].mxu0
      %3107 = vmatprep.mubr.f32.mxu0 0.0
      %3108 = vmatmul.mubr.f32.gmra.mrb[0].mxu0 %v2794
      %v3109 = vpop.f32.mrb[0].mxu0
      %v3110 = vadd.f32 %v2704, %v3109
      %v3111 = vpop.f32.mrb[0].mxu0
      %3112 = vmatprep.mubr.f32.mxu0 0.0
      %3113 = vmatmul.mubr.f32.gmra.mrb[0].mxu0 %v2797
      %v3114 = vpop.f32.mrb[0].mxu0
      %v3115 = vadd.f32 %v2704, %v3114
      %v3116 = vpop.f32.mrb[0].mxu0
      %3117 = vmatprep.mubr.f32.mxu0 0.0
      %3118 = vmatmul.mubr.f32.gmra.mrb[0].mxu0 %v2800
      %v3119 = vpop.f32.mrb[0].mxu0
      %v3120 = vadd.f32 %v2704, %v3119
      %v3121 = vpop.f32.mrb[0].mxu0
      %3122 = vmatprep.mubr.f32.mxu0 0.0
      %3123 = vmatmul.mubr.f32.gmra.mrb[0].mxu0 %v2803
      %v3124 = vpop.f32.mrb[0].mxu0
      %v3125 = vadd.f32 %v2704, %v3124
      %v3126 = vpop.f32.mrb[0].mxu0
      %3127 = vmatprep.mubr.f32.mxu0 0.0
      %3128 = vmatmul.mubr.f32.gmra.mrb[0].mxu0 %v2806
      %v3129 = vpop.f32.mrb[0].mxu0
      %v3130 = vadd.f32 %v2704, %v3129
      %v3131 = vpop.f32.mrb[0].mxu0
      %3132 = vmatprep.mubr.f32.mxu0 0.0
      %3133 = vmatmul.mubr.f32.gmra.mrb[0].mxu0 %v2809
      %v3134 = vpop.f32.mrb[0].mxu0
      %v3135 = vadd.f32 %v2704, %v3134
      %v3136 = vpop.f32.mrb[0].mxu0
      %3137 = vmatprep.mubr.f32.mxu0 0.0
      %3138 = vmatmul.mubr.f32.gmra.mrb[0].mxu0 %v2812
      %v3139 = vpop.f32.mrb[0].mxu0
      %v3140 = vadd.f32 %v2704, %v3139
      %v3141 = vpop.f32.mrb[0].mxu0
      %3142 = vmatprep.mubr.f32.mxu0 0.0
      %3143 = vmatmul.mubr.f32.gmra.mrb[0].mxu0 %v2815
      %v3144 = vpop.f32.mrb[0].mxu0
      %v3145 = vadd.f32 %v2704, %v3144
      %v3146 = vpop.f32.mrb[0].mxu0
      %3147 = vmatprep.mubr.f32.mxu0 0.0
      %3148 = vmatmul.mubr.f32.gmra.mrb[0].mxu0 %v2818
      %v3149 = vpop.f32.mrb[0].mxu0
      %v3150 = vadd.f32 %v2704, %v3149
      %v3151 = vpop.f32.mrb[0].mxu0
      %3152 = vmatprep.mubr.f32.mxu0 0.0
      %3153 = vmatmul.mubr.f32.gmra.mrb[0].mxu0 %v2821
      %v3154 = vpop.f32.mrb[0].mxu0
      %v3155 = vadd.f32 %v2704, %v3154
      %v3156 = vpop.f32.mrb[0].mxu0
      %3157 = vmatprep.mubr.f32.mxu0 0.0
      %3158 = vmatmul.mubr.f32.gmra.mrb[0].mxu0 %v2824
      %v3159 = vpop.f32.mrb[0].mxu0
      %v3160 = vadd.f32 %v2704, %v3159
      %v3161 = vpop.f32.mrb[0].mxu0
      %3162 = vmatprep.mubr.f32.mxu0 0.0
      %3163 = vmatmul.mubr.f32.gmra.mrb[0].mxu0 %v2827
      %v3164 = vpop.f32.mrb[0].mxu0
      %v3165 = vadd.f32 %v2704, %v3164
      %v3166 = vpop.f32.mrb[0].mxu0
      %3167 = vmatprep.mubr.f32.mxu0 0.0
      %3168 = vmatmul.mubr.f32.gmra.mrb[0].mxu0 %v2830
      %v3169 = vpop.f32.mrb[0].mxu0
      %v3170 = vadd.f32 %v2704, %v3169
      %v3171 = vpop.f32.mrb[0].mxu0
      %3172 = vmatprep.mubr.f32.mxu0 0.0
      %3173 = vmatmul.mubr.f32.gmra.mrb[0].mxu0 %v2833
      %v3174 = vpop.f32.mrb[0].mxu0
      %v3175 = vadd.f32 %v2704, %v3174
      %v3176 = vpop.f32.mrb[0].mxu0
      %3177 = vmatprep.mubr.f32.mxu0 0.0
      %3178 = vmatmul.mubr.f32.gmra.mrb[0].mxu0 %v2836
      %v3179 = vpop.f32.mrb[0].mxu0
      %v3180 = vadd.f32 %v2704, %v3179
      %v3181 = vpop.f32.mrb[0].mxu0
      %3182 = vmatprep.mubr.f32.mxu0 0.0
      %3183 = vmatmul.mubr.f32.gmra.mrb[0].mxu0 %v2839
      %v3184 = vpop.f32.mrb[0].mxu0
      %v3185 = vadd.f32 %v2704, %v3184
      %v3186 = vpop.f32.mrb[0].mxu0
      %3187 = vmatprep.mubr.f32.mxu0 0.0
      %3188 = vmatmul.mubr.f32.gmra.mrb[0].mxu0 %v2842
      %v3189 = vpop.f32.mrb[0].mxu0
      %v3190 = vadd.f32 %v2704, %v3189
      %v3191 = vpop.f32.mrb[0].mxu0
      %3192 = vmatprep.mubr.f32.mxu0 0.0
      %3193 = vmatmul.mubr.f32.gmra.mrb[0].mxu0 %v2845
      %v3194 = vpop.f32.mrb[0].mxu0
      %v3195 = vadd.f32 %v2704, %v3194
      %v3196 = vpop.f32.mrb[0].mxu0
      %3197 = vmatprep.mubr.f32.mxu0 0.0
      %3198 = vmatmul.mubr.f32.gmra.mrb[0].mxu0 %v2848
      %v3199 = vpop.f32.mrb[0].mxu0
      %v3200 = vadd.f32 %v2704, %v3199
      %v3201 = vpop.f32.mrb[0].mxu0
      %3202 = vmatprep.mubr.f32.mxu0 0.0
      %3203 = vmatmul.mubr.f32.gmra.mrb[0].mxu0 %v2851
      %v3204 = vpop.f32.mrb[0].mxu0
      %v3205 = vadd.f32 %v2704, %v3204
      %v3206 = vpop.f32.mrb[0].mxu0
      %3207 = vmatprep.mubr.f32.mxu0 0.0
      %3208 = vmatmul.mubr.f32.gmra.mrb[0].mxu0 %v2854
      %v3209 = vpop.f32.mrb[0].mxu0
      %v3210 = vadd.f32 %v2704, %v3209
      %v3211 = vpop.f32.mrb[0].mxu0
      %3212 = vmatprep.mubr.f32.mxu0 0.0
      %3213 = vmatmul.mubr.f32.gmra.mrb[0].mxu0 %v2857
      %v3214 = vpop.f32.mrb[0].mxu0
      %v3215 = vadd.f32 %v2704, %v3214
      %v3216 = vpop.f32.mrb[0].mxu0
      %3217 = vmatprep.mubr.f32.mxu0 0.0
      %3218 = vmatmul.mubr.f32.gmra.mrb[0].mxu0 %v2860
      %v3219 = vpop.f32.mrb[0].mxu0
      %v3220 = vadd.f32 %v2704, %v3219
      %v3221 = vpop.f32.mrb[0].mxu0
      %3222 = vmatprep.mubr.f32.mxu0 0.0
      %3223 = vmatmul.mubr.f32.gmra.mrb[0].mxu0 %v2863
      %v3224 = vpop.f32.mrb[0].mxu0
      %v3225 = vadd.f32 %v2704, %v3224
      %v3226 = vpop.f32.mrb[0].mxu0
      %3227 = vmatprep.mubr.f32.mxu0 0.0
      %3228 = vmatmul.mubr.f32.gmra.mrb[0].mxu0 %v2866
      %v3229 = vpop.f32.mrb[0].mxu0
      %v3230 = vadd.f32 %v2704, %v3229
      %v3231 = vpop.f32.mrb[0].mxu0
      %3232 = vmatprep.mubr.f32.mxu0 0.0
      %3233 = vmatmul.mubr.f32.gmra.mrb[0].mxu0 %v2869
      %v3234 = vpop.f32.mrb[0].mxu0
      %v3235 = vadd.f32 %v2704, %v3234
      %v3236 = vpop.f32.mrb[0].mxu0
      %3237 = vmatprep.mubr.f32.mxu0 0.0
      %3238 = vmatmul.mubr.f32.gmra.mrb[0].mxu0 %v2872
      %v3239 = vpop.f32.mrb[0].mxu0
      %v3240 = vadd.f32 %v2704, %v3239
      %v3241 = vpop.f32.mrb[0].mxu0
      %3242 = vmatprep.mubr.f32.mxu0 0.0
      %3243 = vmatmul.mubr.f32.gmra.mrb[0].mxu0 %v2875
      %v3244 = vpop.f32.mrb[0].mxu0
      %v3245 = vadd.f32 %v2704, %v3244
      %v3246 = vpop.f32.mrb[0].mxu0
      %3247 = vmatprep.mubr.f32.mxu0 0.0
      %3248 = vmatmul.mubr.f32.gmra.mrb[0].mxu0 %v2878
      %v3249 = vpop.f32.mrb[0].mxu0
      %v3250 = vadd.f32 %v2704, %v3249
      %v3251 = vpop.f32.mrb[0].mxu0
      %3252 = vmatprep.mubr.f32.mxu0 0.0
      %3253 = vmatmul.mubr.f32.gmra.mrb[0].mxu0 %v2881
      %v3254 = vpop.f32.mrb[0].mxu0
      %v3255 = vadd.f32 %v2704, %v3254
      %v3256 = vpop.f32.mrb[0].mxu0
      %3257 = vmatprep.mubr.f32.mxu0 0.0
      %3258 = vmatmul.mubr.f32.gmra.mrb[0].mxu0 %v2884
      %v3259 = vpop.f32.mrb[0].mxu0
      %v3260 = vadd.f32 %v2704, %v3259
      %v3261 = vpop.f32.mrb[0].mxu0
      %3262 = vmatprep.mubr.f32.mxu0 0.0
      %3263 = vmatmul.mubr.f32.gmra.mrb[0].mxu0 %v2887
      %v3264 = vpop.f32.mrb[0].mxu0
      %v3265 = vadd.f32 %v2704, %v3264
      %v3266 = vpop.f32.mrb[0].mxu0
      %3267 = vmatprep.mubr.f32.mxu0 0.0
      %3268 = vmatmul.mubr.f32.gmra.mrb[0].mxu0 %v2890
      %v3269 = vpop.f32.mrb[0].mxu0
      %v3270 = vadd.f32 %v2704, %v3269
      %v3271 = vpop.f32.mrb[0].mxu0
      %3272 = vmatprep.mubr.f32.mxu0 0.0
      %3273 = vmatmul.mubr.f32.gmra.mrb[0].mxu0 %v2893
      %v3274 = vpop.f32.mrb[0].mxu0
      %v3275 = vadd.f32 %v2704, %v3274
      %v3276 = vpop.f32.mrb[0].mxu0
      %3277 = vmatprep.mubr.f32.mxu0 0.0
      %3278 = vmatmul.mubr.f32.gmra.mrb[0].mxu0 %v2896
      %v3279 = vpop.f32.mrb[0].mxu0
      %v3280 = vadd.f32 %v2704, %v3279
      %v3281 = vpop.f32.mrb[0].mxu0
      %3282 = vdwg.mxu0
      %v3283 = vadd.f32 %v816, %v2965
      %v3284 = vadd.f32 %v819, %v2970
      %v3285 = vadd.f32 %v824, %v2975
      %v3286 = vadd.f32 %v827, %v2980
      %v3287 = vadd.f32 %v832, %v2985
      %v3288 = vadd.f32 %v835, %v2990
      %v3289 = vadd.f32 %v840, %v2995
      %v3290 = vadd.f32 %v843, %v3000
      %v3291 = vadd.f32 %v848, %v3005
      %v3292 = vadd.f32 %v851, %v3010
      %v3293 = vadd.f32 %v856, %v3015
      %v3294 = vadd.f32 %v859, %v3020
      %v3295 = vadd.f32 %v864, %v3025
      %v3296 = vadd.f32 %v867, %v3030
      %v3297 = vadd.f32 %v872, %v3035
      %v3298 = vadd.f32 %v875, %v3040
      %v3299 = vadd.f32 %v880, %v3045
      %v3300 = vadd.f32 %v883, %v3050
      %v3301 = vadd.f32 %v888, %v3055
      %v3302 = vadd.f32 %v891, %v3060
      %v3303 = vadd.f32 %v896, %v3065
      %v3304 = vadd.f32 %v899, %v3070
      %v3305 = vadd.f32 %v904, %v3075
      %v3306 = vadd.f32 %v907, %v3080
      %v3307 = vadd.f32 %v912, %v3085
      %v3308 = vadd.f32 %v915, %v3090
      %v3309 = vadd.f32 %v920, %v3095
      %v3310 = vadd.f32 %v923, %v3100
      %v3311 = vadd.f32 %v928, %v3105
      %v3312 = vadd.f32 %v931, %v3110
      %v3313 = vadd.f32 %v936, %v3115
      %v3314 = vadd.f32 %v939, %v3120
      %v3315 = vadd.f32 %v944, %v3125
      %v3316 = vadd.f32 %v947, %v3130
      %v3317 = vadd.f32 %v952, %v3135
      %v3318 = vadd.f32 %v955, %v3140
      %v3319 = vadd.f32 %v960, %v3145
      %v3320 = vadd.f32 %v963, %v3150
      %v3321 = vadd.f32 %v968, %v3155
      %v3322 = vadd.f32 %v971, %v3160
      %v3323 = vadd.f32 %v976, %v3165
      %v3324 = vadd.f32 %v979, %v3170
      %v3325 = vadd.f32 %v984, %v3175
      %v3326 = vadd.f32 %v987, %v3180
      %v3327 = vadd.f32 %v992, %v3185
      %v3328 = vadd.f32 %v995, %v3190
      %v3329 = vadd.f32 %v1000, %v3195
      %v3330 = vadd.f32 %v1003, %v3200
      %v3331 = vadd.f32 %v1008, %v3205
      %v3332 = vadd.f32 %v1011, %v3210
      %v3333 = vadd.f32 %v1016, %v3215
      %v3334 = vadd.f32 %v1019, %v3220
      %v3335 = vadd.f32 %v1024, %v3225
      %v3336 = vadd.f32 %v1027, %v3230
      %v3337 = vadd.f32 %v1032, %v3235
      %v3338 = vadd.f32 %v1035, %v3240
      %v3339 = vadd.f32 %v1040, %v3245
      %v3340 = vadd.f32 %v1043, %v3250
      %v3341 = vadd.f32 %v1048, %v3255
      %v3342 = vadd.f32 %v1051, %v3260
      %v3343 = vadd.f32 %v1056, %v3265
      %v3344 = vadd.f32 %v1059, %v3270
      %v3345 = vadd.f32 %v1064, %v3275
      %v3346 = vadd.f32 %v1067, %v3280
      %v3347 = vld [vmem:[%s3 + $0x1] sm:$0x1]
      %v3348 = vld [vmem:[%s4 + $0x1] sm:$0x1]
      %v3349 = vsel %vm1072, %v3283, 0.0
      %3350 = vadd.xlane.f32.xlu0 %v3349
      %v3351 = vpop.xlane.xlu0 %3350
      %v3352 = vsel %vm1072, %v3284, 0.0
      %3353 = vadd.xlane.f32.xlu0 %v3352
      %v3354 = vpop.xlane.xlu0 %3353
      %v3355 = vsel %vm1072, %v3285, 0.0
      %3356 = vadd.xlane.f32.xlu0 %v3355
      %v3357 = vpop.xlane.xlu0 %3356
      %v3358 = vsel %vm1072, %v3286, 0.0
      %3359 = vadd.xlane.f32.xlu0 %v3358
      %v3360 = vpop.xlane.xlu0 %3359
      %v3361 = vsel %vm1072, %v3287, 0.0
      %3362 = vadd.xlane.f32.xlu0 %v3361
      %v3363 = vpop.xlane.xlu0 %3362
      %v3364 = vsel %vm1072, %v3288, 0.0
      %3365 = vadd.xlane.f32.xlu0 %v3364
      %v3366 = vpop.xlane.xlu0 %3365
      %v3367 = vsel %vm1072, %v3289, 0.0
      %3368 = vadd.xlane.f32.xlu0 %v3367
      %v3369 = vpop.xlane.xlu0 %3368
      %v3370 = vsel %vm1072, %v3290, 0.0
      %3371 = vadd.xlane.f32.xlu0 %v3370
      %v3372 = vpop.xlane.xlu0 %3371
      %v3373 = vsel %vm1072, %v3291, 0.0
      %3374 = vadd.xlane.f32.xlu0 %v3373
      %v3375 = vpop.xlane.xlu0 %3374
      %v3376 = vsel %vm1072, %v3292, 0.0
      %3377 = vadd.xlane.f32.xlu0 %v3376
      %v3378 = vpop.xlane.xlu0 %3377
      %v3379 = vsel %vm1072, %v3293, 0.0
      %3380 = vadd.xlane.f32.xlu0 %v3379
      %v3381 = vpop.xlane.xlu0 %3380
      %v3382 = vsel %vm1072, %v3294, 0.0
      %3383 = vadd.xlane.f32.xlu0 %v3382
      %v3384 = vpop.xlane.xlu0 %3383
      %v3385 = vsel %vm1072, %v3295, 0.0
      %3386 = vadd.xlane.f32.xlu0 %v3385
      %v3387 = vpop.xlane.xlu0 %3386
      %v3388 = vsel %vm1072, %v3296, 0.0
      %3389 = vadd.xlane.f32.xlu0 %v3388
      %v3390 = vpop.xlane.xlu0 %3389
      %v3391 = vsel %vm1072, %v3297, 0.0
      %3392 = vadd.xlane.f32.xlu0 %v3391
      %v3393 = vpop.xlane.xlu0 %3392
      %v3394 = vsel %vm1072, %v3298, 0.0
      %3395 = vadd.xlane.f32.xlu0 %v3394
      %v3396 = vpop.xlane.xlu0 %3395
      %v3397 = vsel %vm1072, %v3299, 0.0
      %3398 = vadd.xlane.f32.xlu0 %v3397
      %v3399 = vpop.xlane.xlu0 %3398
      %v3400 = vsel %vm1072, %v3300, 0.0
      %3401 = vadd.xlane.f32.xlu0 %v3400
      %v3402 = vpop.xlane.xlu0 %3401
      %v3403 = vsel %vm1072, %v3301, 0.0
      %3404 = vadd.xlane.f32.xlu0 %v3403
      %v3405 = vpop.xlane.xlu0 %3404
      %v3406 = vsel %vm1072, %v3302, 0.0
      %3407 = vadd.xlane.f32.xlu0 %v3406
      %v3408 = vpop.xlane.xlu0 %3407
      %v3409 = vsel %vm1072, %v3303, 0.0
      %3410 = vadd.xlane.f32.xlu0 %v3409
      %v3411 = vpop.xlane.xlu0 %3410
      %v3412 = vsel %vm1072, %v3304, 0.0
      %3413 = vadd.xlane.f32.xlu0 %v3412
      %v3414 = vpop.xlane.xlu0 %3413
      %v3415 = vsel %vm1072, %v3305, 0.0
      %3416 = vadd.xlane.f32.xlu0 %v3415
      %v3417 = vpop.xlane.xlu0 %3416
      %v3418 = vsel %vm1072, %v3306, 0.0
      %3419 = vadd.xlane.f32.xlu0 %v3418
      %v3420 = vpop.xlane.xlu0 %3419
      %v3421 = vsel %vm1072, %v3307, 0.0
      %3422 = vadd.xlane.f32.xlu0 %v3421
      %v3423 = vpop.xlane.xlu0 %3422
      %v3424 = vsel %vm1072, %v3308, 0.0
      %3425 = vadd.xlane.f32.xlu0 %v3424
      %v3426 = vpop.xlane.xlu0 %3425
      %v3427 = vsel %vm1072, %v3309, 0.0
      %3428 = vadd.xlane.f32.xlu0 %v3427
      %v3429 = vpop.xlane.xlu0 %3428
      %v3430 = vsel %vm1072, %v3310, 0.0
      %3431 = vadd.xlane.f32.xlu0 %v3430
      %v3432 = vpop.xlane.xlu0 %3431
      %v3433 = vsel %vm1072, %v3311, 0.0
      %3434 = vadd.xlane.f32.xlu0 %v3433
      %v3435 = vpop.xlane.xlu0 %3434
      %v3436 = vsel %vm1072, %v3312, 0.0
      %3437 = vadd.xlane.f32.xlu0 %v3436
      %v3438 = vpop.xlane.xlu0 %3437
      %v3439 = vsel %vm1072, %v3313, 0.0
      %3440 = vadd.xlane.f32.xlu0 %v3439
      %v3441 = vpop.xlane.xlu0 %3440
      %v3442 = vsel %vm1072, %v3314, 0.0
      %3443 = vadd.xlane.f32.xlu0 %v3442
      %v3444 = vpop.xlane.xlu0 %3443
      %v3445 = vsel %vm1072, %v3315, 0.0
      %3446 = vadd.xlane.f32.xlu0 %v3445
      %v3447 = vpop.xlane.xlu0 %3446
      %v3448 = vsel %vm1072, %v3316, 0.0
      %3449 = vadd.xlane.f32.xlu0 %v3448
      %v3450 = vpop.xlane.xlu0 %3449
      %v3451 = vsel %vm1072, %v3317, 0.0
      %3452 = vadd.xlane.f32.xlu0 %v3451
      %v3453 = vpop.xlane.xlu0 %3452
      %v3454 = vsel %vm1072, %v3318, 0.0
      %3455 = vadd.xlane.f32.xlu0 %v3454
      %v3456 = vpop.xlane.xlu0 %3455
      %v3457 = vsel %vm1072, %v3319, 0.0
      %3458 = vadd.xlane.f32.xlu0 %v3457
      %v3459 = vpop.xlane.xlu0 %3458
      %v3460 = vsel %vm1072, %v3320, 0.0
      %3461 = vadd.xlane.f32.xlu0 %v3460
      %v3462 = vpop.xlane.xlu0 %3461
      %v3463 = vsel %vm1072, %v3321, 0.0
      %3464 = vadd.xlane.f32.xlu0 %v3463
      %v3465 = vpop.xlane.xlu0 %3464
      %v3466 = vsel %vm1072, %v3322, 0.0
      %3467 = vadd.xlane.f32.xlu0 %v3466
      %v3468 = vpop.xlane.xlu0 %3467
      %v3469 = vsel %vm1072, %v3323, 0.0
      %3470 = vadd.xlane.f32.xlu0 %v3469
      %v3471 = vpop.xlane.xlu0 %3470
      %v3472 = vsel %vm1072, %v3324, 0.0
      %3473 = vadd.xlane.f32.xlu0 %v3472
      %v3474 = vpop.xlane.xlu0 %3473
      %v3475 = vsel %vm1072, %v3325, 0.0
      %3476 = vadd.xlane.f32.xlu0 %v3475
      %v3477 = vpop.xlane.xlu0 %3476
      %v3478 = vsel %vm1072, %v3326, 0.0
      %3479 = vadd.xlane.f32.xlu0 %v3478
      %v3480 = vpop.xlane.xlu0 %3479
      %v3481 = vsel %vm1072, %v3327, 0.0
      %3482 = vadd.xlane.f32.xlu0 %v3481
      %v3483 = vpop.xlane.xlu0 %3482
      %v3484 = vsel %vm1072, %v3328, 0.0
      %3485 = vadd.xlane.f32.xlu0 %v3484
      %v3486 = vpop.xlane.xlu0 %3485
      %v3487 = vsel %vm1072, %v3329, 0.0
      %3488 = vadd.xlane.f32.xlu0 %v3487
      %v3489 = vpop.xlane.xlu0 %3488
      %v3490 = vsel %vm1072, %v3330, 0.0
      %3491 = vadd.xlane.f32.xlu0 %v3490
      %v3492 = vpop.xlane.xlu0 %3491
      %v3493 = vsel %vm1072, %v3331, 0.0
      %3494 = vadd.xlane.f32.xlu0 %v3493
      %v3495 = vpop.xlane.xlu0 %3494
      %v3496 = vsel %vm1072, %v3332, 0.0
      %3497 = vadd.xlane.f32.xlu0 %v3496
      %v3498 = vpop.xlane.xlu0 %3497
      %v3499 = vsel %vm1072, %v3333, 0.0
      %3500 = vadd.xlane.f32.xlu0 %v3499
      %v3501 = vpop.xlane.xlu0 %3500
      %v3502 = vsel %vm1072, %v3334, 0.0
      %3503 = vadd.xlane.f32.xlu0 %v3502
      %v3504 = vpop.xlane.xlu0 %3503
      %v3505 = vsel %vm1072, %v3335, 0.0
      %3506 = vadd.xlane.f32.xlu0 %v3505
      %v3507 = vpop.xlane.xlu0 %3506
      %v3508 = vsel %vm1072, %v3336, 0.0
      %3509 = vadd.xlane.f32.xlu0 %v3508
      %v3510 = vpop.xlane.xlu0 %3509
      %v3511 = vsel %vm1072, %v3337, 0.0
      %3512 = vadd.xlane.f32.xlu0 %v3511
      %v3513 = vpop.xlane.xlu0 %3512
      %v3514 = vsel %vm1072, %v3338, 0.0
      %3515 = vadd.xlane.f32.xlu0 %v3514
      %v3516 = vpop.xlane.xlu0 %3515
      %v3517 = vsel %vm1072, %v3339, 0.0
      %3518 = vadd.xlane.f32.xlu0 %v3517
      %v3519 = vpop.xlane.xlu0 %3518
      %v3520 = vsel %vm1072, %v3340, 0.0
      %3521 = vadd.xlane.f32.xlu0 %v3520
      %v3522 = vpop.xlane.xlu0 %3521
      %v3523 = vsel %vm1072, %v3341, 0.0
      %3524 = vadd.xlane.f32.xlu0 %v3523
      %v3525 = vpop.xlane.xlu0 %3524
      %v3526 = vsel %vm1072, %v3342, 0.0
      %3527 = vadd.xlane.f32.xlu0 %v3526
      %v3528 = vpop.xlane.xlu0 %3527
      %v3529 = vsel %vm1072, %v3343, 0.0
      %3530 = vadd.xlane.f32.xlu0 %v3529
      %v3531 = vpop.xlane.xlu0 %3530
      %v3532 = vsel %vm1072, %v3344, 0.0
      %3533 = vadd.xlane.f32.xlu0 %v3532
      %v3534 = vpop.xlane.xlu0 %3533
      %v3535 = vsel %vm1072, %v3345, 0.0
      %3536 = vadd.xlane.f32.xlu0 %v3535
      %v3537 = vpop.xlane.xlu0 %3536
      %v3538 = vsel %vm1072, %v3346, 0.0
      %3539 = vadd.xlane.f32.xlu0 %v3538
      %v3540 = vpop.xlane.xlu0 %3539
      %v3541 = vmul.f32 %v3351, %v1265
      %v3542 = vmul.f32 %v3354, %v1265
      %v3543 = vmul.f32 %v3357, %v1265
      %v3544 = vmul.f32 %v3360, %v1265
      %v3545 = vmul.f32 %v3363, %v1265
      %v3546 = vmul.f32 %v3366, %v1265
      %v3547 = vmul.f32 %v3369, %v1265
      %v3548 = vmul.f32 %v3372, %v1265
      %v3549 = vmul.f32 %v3375, %v1265
      %v3550 = vmul.f32 %v3378, %v1265
      %v3551 = vmul.f32 %v3381, %v1265
      %v3552 = vmul.f32 %v3384, %v1265
      %v3553 = vmul.f32 %v3387, %v1265
      %v3554 = vmul.f32 %v3390, %v1265
      %v3555 = vmul.f32 %v3393, %v1265
      %v3556 = vmul.f32 %v3396, %v1265
      %v3557 = vmul.f32 %v3399, %v1265
      %v3558 = vmul.f32 %v3402, %v1265
      %v3559 = vmul.f32 %v3405, %v1265
      %v3560 = vmul.f32 %v3408, %v1265
      %v3561 = vmul.f32 %v3411, %v1265
      %v3562 = vmul.f32 %v3414, %v1265
      %v3563 = vmul.f32 %v3417, %v1265
      %v3564 = vmul.f32 %v3420, %v1265
      %v3565 = vmul.f32 %v3423, %v1265
      %v3566 = vmul.f32 %v3426, %v1265
      %v3567 = vmul.f32 %v3429, %v1265
      %v3568 = vmul.f32 %v3432, %v1265
      %v3569 = vmul.f32 %v3435, %v1265
      %v3570 = vmul.f32 %v3438, %v1265
      %v3571 = vmul.f32 %v3441, %v1265
      %v3572 = vmul.f32 %v3444, %v1265
      %v3573 = vmul.f32 %v3447, %v1265
      %v3574 = vmul.f32 %v3450, %v1265
      %v3575 = vmul.f32 %v3453, %v1265
      %v3576 = vmul.f32 %v3456, %v1265
      %v3577 = vmul.f32 %v3459, %v1265
      %v3578 = vmul.f32 %v3462, %v1265
      %v3579 = vmul.f32 %v3465, %v1265
      %v3580 = vmul.f32 %v3468, %v1265
      %v3581 = vmul.f32 %v3471, %v1265
      %v3582 = vmul.f32 %v3474, %v1265
      %v3583 = vmul.f32 %v3477, %v1265
      %v3584 = vmul.f32 %v3480, %v1265
      %v3585 = vmul.f32 %v3483, %v1265
      %v3586 = vmul.f32 %v3486, %v1265
      %v3587 = vmul.f32 %v3489, %v1265
      %v3588 = vmul.f32 %v3492, %v1265
      %v3589 = vmul.f32 %v3495, %v1265
      %v3590 = vmul.f32 %v3498, %v1265
      %v3591 = vmul.f32 %v3501, %v1265
      %v3592 = vmul.f32 %v3504, %v1265
      %v3593 = vmul.f32 %v3507, %v1265
      %v3594 = vmul.f32 %v3510, %v1265
      %v3595 = vmul.f32 %v3513, %v1265
      %v3596 = vmul.f32 %v3516, %v1265
      %v3597 = vmul.f32 %v3519, %v1265
      %v3598 = vmul.f32 %v3522, %v1265
      %v3599 = vmul.f32 %v3525, %v1265
      %v3600 = vmul.f32 %v3528, %v1265
      %v3601 = vmul.f32 %v3531, %v1265
      %v3602 = vmul.f32 %v3534, %v1265
      %v3603 = vmul.f32 %v3537, %v1265
      %v3604 = vmul.f32 %v3540, %v1265
      %v3605 = vsub.f32 %v3283, %v3541
      %v3606 = vsub.f32 %v3284, %v3542
      %v3607 = vsub.f32 %v3285, %v3543
      %v3608 = vsub.f32 %v3286, %v3544
      %v3609 = vsub.f32 %v3287, %v3545
      %v3610 = vsub.f32 %v3288, %v3546
      %v3611 = vsub.f32 %v3289, %v3547
      %v3612 = vsub.f32 %v3290, %v3548
      %v3613 = vsub.f32 %v3291, %v3549
      %v3614 = vsub.f32 %v3292, %v3550
      %v3615 = vsub.f32 %v3293, %v3551
      %v3616 = vsub.f32 %v3294, %v3552
      %v3617 = vsub.f32 %v3295, %v3553
      %v3618 = vsub.f32 %v3296, %v3554
      %v3619 = vsub.f32 %v3297, %v3555
      %v3620 = vsub.f32 %v3298, %v3556
      %v3621 = vsub.f32 %v3299, %v3557
      %v3622 = vsub.f32 %v3300, %v3558
      %v3623 = vsub.f32 %v3301, %v3559
      %v3624 = vsub.f32 %v3302, %v3560
      %v3625 = vsub.f32 %v3303, %v3561
      %v3626 = vsub.f32 %v3304, %v3562
      %v3627 = vsub.f32 %v3305, %v3563
      %v3628 = vsub.f32 %v3306, %v3564
      %v3629 = vsub.f32 %v3307, %v3565
      %v3630 = vsub.f32 %v3308, %v3566
      %v3631 = vsub.f32 %v3309, %v3567
      %v3632 = vsub.f32 %v3310, %v3568
      %v3633 = vsub.f32 %v3311, %v3569
      %v3634 = vsub.f32 %v3312, %v3570
      %v3635 = vsub.f32 %v3313, %v3571
      %v3636 = vsub.f32 %v3314, %v3572
      %v3637 = vsub.f32 %v3315, %v3573
      %v3638 = vsub.f32 %v3316, %v3574
      %v3639 = vsub.f32 %v3317, %v3575
      %v3640 = vsub.f32 %v3318, %v3576
      %v3641 = vsub.f32 %v3319, %v3577
      %v3642 = vsub.f32 %v3320, %v3578
      %v3643 = vsub.f32 %v3321, %v3579
      %v3644 = vsub.f32 %v3322, %v3580
      %v3645 = vsub.f32 %v3323, %v3581
      %v3646 = vsub.f32 %v3324, %v3582
      %v3647 = vsub.f32 %v3325, %v3583
      %v3648 = vsub.f32 %v3326, %v3584
      %v3649 = vsub.f32 %v3327, %v3585
      %v3650 = vsub.f32 %v3328, %v3586
      %v3651 = vsub.f32 %v3329, %v3587
      %v3652 = vsub.f32 %v3330, %v3588
      %v3653 = vsub.f32 %v3331, %v3589
      %v3654 = vsub.f32 %v3332, %v3590
      %v3655 = vsub.f32 %v3333, %v3591
      %v3656 = vsub.f32 %v3334, %v3592
      %v3657 = vsub.f32 %v3335, %v3593
      %v3658 = vsub.f32 %v3336, %v3594
      %v3659 = vsub.f32 %v3337, %v3595
      %v3660 = vsub.f32 %v3338, %v3596
      %v3661 = vsub.f32 %v3339, %v3597
      %v3662 = vsub.f32 %v3340, %v3598
      %v3663 = vsub.f32 %v3341, %v3599
      %v3664 = vsub.f32 %v3342, %v3600
      %v3665 = vsub.f32 %v3343, %v3601
      %v3666 = vsub.f32 %v3344, %v3602
      %v3667 = vsub.f32 %v3345, %v3603
      %v3668 = vsub.f32 %v3346, %v3604
      %v3669 = vmul.f32 %v3605, %v3605
      %v3670 = vmul.f32 %v3606, %v3606
      %v3671 = vmul.f32 %v3607, %v3607
      %v3672 = vmul.f32 %v3608, %v3608
      %v3673 = vmul.f32 %v3609, %v3609
      %v3674 = vmul.f32 %v3610, %v3610
      %v3675 = vmul.f32 %v3611, %v3611
      %v3676 = vmul.f32 %v3612, %v3612
      %v3677 = vmul.f32 %v3613, %v3613
      %v3678 = vmul.f32 %v3614, %v3614
      %v3679 = vmul.f32 %v3615, %v3615
      %v3680 = vmul.f32 %v3616, %v3616
      %v3681 = vmul.f32 %v3617, %v3617
      %v3682 = vmul.f32 %v3618, %v3618
      %v3683 = vmul.f32 %v3619, %v3619
      %v3684 = vmul.f32 %v3620, %v3620
      %v3685 = vmul.f32 %v3621, %v3621
      %v3686 = vmul.f32 %v3622, %v3622
      %v3687 = vmul.f32 %v3623, %v3623
      %v3688 = vmul.f32 %v3624, %v3624
      %v3689 = vmul.f32 %v3625, %v3625
      %v3690 = vmul.f32 %v3626, %v3626
      %v3691 = vmul.f32 %v3627, %v3627
      %v3692 = vmul.f32 %v3628, %v3628
      %v3693 = vmul.f32 %v3629, %v3629
      %v3694 = vmul.f32 %v3630, %v3630
      %v3695 = vmul.f32 %v3631, %v3631
      %v3696 = vmul.f32 %v3632, %v3632
      %v3697 = vmul.f32 %v3633, %v3633
      %v3698 = vmul.f32 %v3634, %v3634
      %v3699 = vmul.f32 %v3635, %v3635
      %v3700 = vmul.f32 %v3636, %v3636
      %v3701 = vmul.f32 %v3637, %v3637
      %v3702 = vmul.f32 %v3638, %v3638
      %v3703 = vmul.f32 %v3639, %v3639
      %v3704 = vmul.f32 %v3640, %v3640
      %v3705 = vmul.f32 %v3641, %v3641
      %v3706 = vmul.f32 %v3642, %v3642
      %v3707 = vmul.f32 %v3643, %v3643
      %v3708 = vmul.f32 %v3644, %v3644
      %v3709 = vmul.f32 %v3645, %v3645
      %v3710 = vmul.f32 %v3646, %v3646
      %v3711 = vmul.f32 %v3647, %v3647
      %v3712 = vmul.f32 %v3648, %v3648
      %v3713 = vmul.f32 %v3649, %v3649
      %v3714 = vmul.f32 %v3650, %v3650
      %v3715 = vmul.f32 %v3651, %v3651
      %v3716 = vmul.f32 %v3652, %v3652
      %v3717 = vmul.f32 %v3653, %v3653
      %v3718 = vmul.f32 %v3654, %v3654
      %v3719 = vmul.f32 %v3655, %v3655
      %v3720 = vmul.f32 %v3656, %v3656
      %v3721 = vmul.f32 %v3657, %v3657
      %v3722 = vmul.f32 %v3658, %v3658
      %v3723 = vmul.f32 %v3659, %v3659
      %v3724 = vmul.f32 %v3660, %v3660
      %v3725 = vmul.f32 %v3661, %v3661
      %v3726 = vmul.f32 %v3662, %v3662
      %v3727 = vmul.f32 %v3663, %v3663
      %v3728 = vmul.f32 %v3664, %v3664
      %v3729 = vmul.f32 %v3665, %v3665
      %v3730 = vmul.f32 %v3666, %v3666
      %v3731 = vmul.f32 %v3667, %v3667
      %v3732 = vmul.f32 %v3668, %v3668
      %v3733 = vsel %vm1072, %v3669, 0.0
      %3734 = vadd.xlane.f32.xlu0 %v3733
      %v3735 = vpop.xlane.xlu0 %3734
      %v3736 = vsel %vm1072, %v3670, 0.0
      %3737 = vadd.xlane.f32.xlu0 %v3736
      %v3738 = vpop.xlane.xlu0 %3737
      %v3739 = vsel %vm1072, %v3671, 0.0
      %3740 = vadd.xlane.f32.xlu0 %v3739
      %v3741 = vpop.xlane.xlu0 %3740
      %v3742 = vsel %vm1072, %v3672, 0.0
      %3743 = vadd.xlane.f32.xlu0 %v3742
      %v3744 = vpop.xlane.xlu0 %3743
      %v3745 = vsel %vm1072, %v3673, 0.0
      %3746 = vadd.xlane.f32.xlu0 %v3745
      %v3747 = vpop.xlane.xlu0 %3746
      %v3748 = vsel %vm1072, %v3674, 0.0
      %3749 = vadd.xlane.f32.xlu0 %v3748
      %v3750 = vpop.xlane.xlu0 %3749
      %v3751 = vsel %vm1072, %v3675, 0.0
      %3752 = vadd.xlane.f32.xlu0 %v3751
      %v3753 = vpop.xlane.xlu0 %3752
      %v3754 = vsel %vm1072, %v3676, 0.0
      %3755 = vadd.xlane.f32.xlu0 %v3754
      %v3756 = vpop.xlane.xlu0 %3755
      %v3757 = vsel %vm1072, %v3677, 0.0
      %3758 = vadd.xlane.f32.xlu0 %v3757
      %v3759 = vpop.xlane.xlu0 %3758
      %v3760 = vsel %vm1072, %v3678, 0.0
      %3761 = vadd.xlane.f32.xlu0 %v3760
      %v3762 = vpop.xlane.xlu0 %3761
      %v3763 = vsel %vm1072, %v3679, 0.0
      %3764 = vadd.xlane.f32.xlu0 %v3763
      %v3765 = vpop.xlane.xlu0 %3764
      %v3766 = vsel %vm1072, %v3680, 0.0
      %3767 = vadd.xlane.f32.xlu0 %v3766
      %v3768 = vpop.xlane.xlu0 %3767
      %v3769 = vsel %vm1072, %v3681, 0.0
      %3770 = vadd.xlane.f32.xlu0 %v3769
      %v3771 = vpop.xlane.xlu0 %3770
      %v3772 = vsel %vm1072, %v3682, 0.0
      %3773 = vadd.xlane.f32.xlu0 %v3772
      %v3774 = vpop.xlane.xlu0 %3773
      %v3775 = vsel %vm1072, %v3683, 0.0
      %3776 = vadd.xlane.f32.xlu0 %v3775
      %v3777 = vpop.xlane.xlu0 %3776
      %v3778 = vsel %vm1072, %v3684, 0.0
      %3779 = vadd.xlane.f32.xlu0 %v3778
      %v3780 = vpop.xlane.xlu0 %3779
      %v3781 = vsel %vm1072, %v3685, 0.0
      %3782 = vadd.xlane.f32.xlu0 %v3781
      %v3783 = vpop.xlane.xlu0 %3782
      %v3784 = vsel %vm1072, %v3686, 0.0
      %3785 = vadd.xlane.f32.xlu0 %v3784
      %v3786 = vpop.xlane.xlu0 %3785
      %v3787 = vsel %vm1072, %v3687, 0.0
      %3788 = vadd.xlane.f32.xlu0 %v3787
      %v3789 = vpop.xlane.xlu0 %3788
      %v3790 = vsel %vm1072, %v3688, 0.0
      %3791 = vadd.xlane.f32.xlu0 %v3790
      %v3792 = vpop.xlane.xlu0 %3791
      %v3793 = vsel %vm1072, %v3689, 0.0
      %3794 = vadd.xlane.f32.xlu0 %v3793
      %v3795 = vpop.xlane.xlu0 %3794
      %v3796 = vsel %vm1072, %v3690, 0.0
      %3797 = vadd.xlane.f32.xlu0 %v3796
      %v3798 = vpop.xlane.xlu0 %3797
      %v3799 = vsel %vm1072, %v3691, 0.0
      %3800 = vadd.xlane.f32.xlu0 %v3799
      %v3801 = vpop.xlane.xlu0 %3800
      %v3802 = vsel %vm1072, %v3692, 0.0
      %3803 = vadd.xlane.f32.xlu0 %v3802
      %v3804 = vpop.xlane.xlu0 %3803
      %v3805 = vsel %vm1072, %v3693, 0.0
      %3806 = vadd.xlane.f32.xlu0 %v3805
      %v3807 = vpop.xlane.xlu0 %3806
      %v3808 = vsel %vm1072, %v3694, 0.0
      %3809 = vadd.xlane.f32.xlu0 %v3808
      %v3810 = vpop.xlane.xlu0 %3809
      %v3811 = vsel %vm1072, %v3695, 0.0
      %3812 = vadd.xlane.f32.xlu0 %v3811
      %v3813 = vpop.xlane.xlu0 %3812
      %v3814 = vsel %vm1072, %v3696, 0.0
      %3815 = vadd.xlane.f32.xlu0 %v3814
      %v3816 = vpop.xlane.xlu0 %3815
      %v3817 = vsel %vm1072, %v3697, 0.0
      %3818 = vadd.xlane.f32.xlu0 %v3817
      %v3819 = vpop.xlane.xlu0 %3818
      %v3820 = vsel %vm1072, %v3698, 0.0
      %3821 = vadd.xlane.f32.xlu0 %v3820
      %v3822 = vpop.xlane.xlu0 %3821
      %v3823 = vsel %vm1072, %v3699, 0.0
      %3824 = vadd.xlane.f32.xlu0 %v3823
      %v3825 = vpop.xlane.xlu0 %3824
      %v3826 = vsel %vm1072, %v3700, 0.0
      %3827 = vadd.xlane.f32.xlu0 %v3826
      %v3828 = vpop.xlane.xlu0 %3827
      %v3829 = vsel %vm1072, %v3701, 0.0
      %3830 = vadd.xlane.f32.xlu0 %v3829
      %v3831 = vpop.xlane.xlu0 %3830
      %v3832 = vsel %vm1072, %v3702, 0.0
      %3833 = vadd.xlane.f32.xlu0 %v3832
      %v3834 = vpop.xlane.xlu0 %3833
      %v3835 = vsel %vm1072, %v3703, 0.0
      %3836 = vadd.xlane.f32.xlu0 %v3835
      %v3837 = vpop.xlane.xlu0 %3836
      %v3838 = vsel %vm1072, %v3704, 0.0
      %3839 = vadd.xlane.f32.xlu0 %v3838
      %v3840 = vpop.xlane.xlu0 %3839
      %v3841 = vsel %vm1072, %v3705, 0.0
      %3842 = vadd.xlane.f32.xlu0 %v3841
      %v3843 = vpop.xlane.xlu0 %3842
      %v3844 = vsel %vm1072, %v3706, 0.0
      %3845 = vadd.xlane.f32.xlu0 %v3844
      %v3846 = vpop.xlane.xlu0 %3845
      %v3847 = vsel %vm1072, %v3707, 0.0
      %3848 = vadd.xlane.f32.xlu0 %v3847
      %v3849 = vpop.xlane.xlu0 %3848
      %v3850 = vsel %vm1072, %v3708, 0.0
      %3851 = vadd.xlane.f32.xlu0 %v3850
      %v3852 = vpop.xlane.xlu0 %3851
      %v3853 = vsel %vm1072, %v3709, 0.0
      %3854 = vadd.xlane.f32.xlu0 %v3853
      %v3855 = vpop.xlane.xlu0 %3854
      %v3856 = vsel %vm1072, %v3710, 0.0
      %3857 = vadd.xlane.f32.xlu0 %v3856
      %v3858 = vpop.xlane.xlu0 %3857
      %v3859 = vsel %vm1072, %v3711, 0.0
      %3860 = vadd.xlane.f32.xlu0 %v3859
      %v3861 = vpop.xlane.xlu0 %3860
      %v3862 = vsel %vm1072, %v3712, 0.0
      %3863 = vadd.xlane.f32.xlu0 %v3862
      %v3864 = vpop.xlane.xlu0 %3863
      %v3865 = vsel %vm1072, %v3713, 0.0
      %3866 = vadd.xlane.f32.xlu0 %v3865
      %v3867 = vpop.xlane.xlu0 %3866
      %v3868 = vsel %vm1072, %v3714, 0.0
      %3869 = vadd.xlane.f32.xlu0 %v3868
      %v3870 = vpop.xlane.xlu0 %3869
      %v3871 = vsel %vm1072, %v3715, 0.0
      %3872 = vadd.xlane.f32.xlu0 %v3871
      %v3873 = vpop.xlane.xlu0 %3872
      %v3874 = vsel %vm1072, %v3716, 0.0
      %3875 = vadd.xlane.f32.xlu0 %v3874
      %v3876 = vpop.xlane.xlu0 %3875
      %v3877 = vsel %vm1072, %v3717, 0.0
      %3878 = vadd.xlane.f32.xlu0 %v3877
      %v3879 = vpop.xlane.xlu0 %3878
      %v3880 = vsel %vm1072, %v3718, 0.0
      %3881 = vadd.xlane.f32.xlu0 %v3880
      %v3882 = vpop.xlane.xlu0 %3881
      %v3883 = vsel %vm1072, %v3719, 0.0
      %3884 = vadd.xlane.f32.xlu0 %v3883
      %v3885 = vpop.xlane.xlu0 %3884
      %v3886 = vsel %vm1072, %v3720, 0.0
      %3887 = vadd.xlane.f32.xlu0 %v3886
      %v3888 = vpop.xlane.xlu0 %3887
      %v3889 = vsel %vm1072, %v3721, 0.0
      %3890 = vadd.xlane.f32.xlu0 %v3889
      %v3891 = vpop.xlane.xlu0 %3890
      %v3892 = vsel %vm1072, %v3722, 0.0
      %3893 = vadd.xlane.f32.xlu0 %v3892
      %v3894 = vpop.xlane.xlu0 %3893
      %v3895 = vsel %vm1072, %v3723, 0.0
      %3896 = vadd.xlane.f32.xlu0 %v3895
      %v3897 = vpop.xlane.xlu0 %3896
      %v3898 = vsel %vm1072, %v3724, 0.0
      %3899 = vadd.xlane.f32.xlu0 %v3898
      %v3900 = vpop.xlane.xlu0 %3899
      %v3901 = vsel %vm1072, %v3725, 0.0
      %3902 = vadd.xlane.f32.xlu0 %v3901
      %v3903 = vpop.xlane.xlu0 %3902
      %v3904 = vsel %vm1072, %v3726, 0.0
      %3905 = vadd.xlane.f32.xlu0 %v3904
      %v3906 = vpop.xlane.xlu0 %3905
      %v3907 = vsel %vm1072, %v3727, 0.0
      %3908 = vadd.xlane.f32.xlu0 %v3907
      %v3909 = vpop.xlane.xlu0 %3908
      %v3910 = vsel %vm1072, %v3728, 0.0
      %3911 = vadd.xlane.f32.xlu0 %v3910
      %v3912 = vpop.xlane.xlu0 %3911
      %v3913 = vsel %vm1072, %v3729, 0.0
      %3914 = vadd.xlane.f32.xlu0 %v3913
      %v3915 = vpop.xlane.xlu0 %3914
      %v3916 = vsel %vm1072, %v3730, 0.0
      %3917 = vadd.xlane.f32.xlu0 %v3916
      %v3918 = vpop.xlane.xlu0 %3917
      %v3919 = vsel %vm1072, %v3731, 0.0
      %3920 = vadd.xlane.f32.xlu0 %v3919
      %v3921 = vpop.xlane.xlu0 %3920
      %v3922 = vsel %vm1072, %v3732, 0.0
      %3923 = vadd.xlane.f32.xlu0 %v3922
      %v3924 = vpop.xlane.xlu0 %3923
      %v3925 = vmul.f32 %v3735, %v1265
      %v3926 = vmul.f32 %v3738, %v1265
      %v3927 = vmul.f32 %v3741, %v1265
      %v3928 = vmul.f32 %v3744, %v1265
      %v3929 = vmul.f32 %v3747, %v1265
      %v3930 = vmul.f32 %v3750, %v1265
      %v3931 = vmul.f32 %v3753, %v1265
      %v3932 = vmul.f32 %v3756, %v1265
      %v3933 = vmul.f32 %v3759, %v1265
      %v3934 = vmul.f32 %v3762, %v1265
      %v3935 = vmul.f32 %v3765, %v1265
      %v3936 = vmul.f32 %v3768, %v1265
      %v3937 = vmul.f32 %v3771, %v1265
      %v3938 = vmul.f32 %v3774, %v1265
      %v3939 = vmul.f32 %v3777, %v1265
      %v3940 = vmul.f32 %v3780, %v1265
      %v3941 = vmul.f32 %v3783, %v1265
      %v3942 = vmul.f32 %v3786, %v1265
      %v3943 = vmul.f32 %v3789, %v1265
      %v3944 = vmul.f32 %v3792, %v1265
      %v3945 = vmul.f32 %v3795, %v1265
      %v3946 = vmul.f32 %v3798, %v1265
      %v3947 = vmul.f32 %v3801, %v1265
      %v3948 = vmul.f32 %v3804, %v1265
      %v3949 = vmul.f32 %v3807, %v1265
      %v3950 = vmul.f32 %v3810, %v1265
      %v3951 = vmul.f32 %v3813, %v1265
      %v3952 = vmul.f32 %v3816, %v1265
      %v3953 = vmul.f32 %v3819, %v1265
      %v3954 = vmul.f32 %v3822, %v1265
      %v3955 = vmul.f32 %v3825, %v1265
      %v3956 = vmul.f32 %v3828, %v1265
      %v3957 = vmul.f32 %v3831, %v1265
      %v3958 = vmul.f32 %v3834, %v1265
      %v3959 = vmul.f32 %v3837, %v1265
      %v3960 = vmul.f32 %v3840, %v1265
      %v3961 = vmul.f32 %v3843, %v1265
      %v3962 = vmul.f32 %v3846, %v1265
      %v3963 = vmul.f32 %v3849, %v1265
      %v3964 = vmul.f32 %v3852, %v1265
      %v3965 = vmul.f32 %v3855, %v1265
      %v3966 = vmul.f32 %v3858, %v1265
      %v3967 = vmul.f32 %v3861, %v1265
      %v3968 = vmul.f32 %v3864, %v1265
      %v3969 = vmul.f32 %v3867, %v1265
      %v3970 = vmul.f32 %v3870, %v1265
      %v3971 = vmul.f32 %v3873, %v1265
      %v3972 = vmul.f32 %v3876, %v1265
      %v3973 = vmul.f32 %v3879, %v1265
      %v3974 = vmul.f32 %v3882, %v1265
      %v3975 = vmul.f32 %v3885, %v1265
      %v3976 = vmul.f32 %v3888, %v1265
      %v3977 = vmul.f32 %v3891, %v1265
      %v3978 = vmul.f32 %v3894, %v1265
      %v3979 = vmul.f32 %v3897, %v1265
      %v3980 = vmul.f32 %v3900, %v1265
      %v3981 = vmul.f32 %v3903, %v1265
      %v3982 = vmul.f32 %v3906, %v1265
      %v3983 = vmul.f32 %v3909, %v1265
      %v3984 = vmul.f32 %v3912, %v1265
      %v3985 = vmul.f32 %v3915, %v1265
      %v3986 = vmul.f32 %v3918, %v1265
      %v3987 = vmul.f32 %v3921, %v1265
      %v3988 = vmul.f32 %v3924, %v1265
      %v3989 = vadd.f32 %v3925, 1e-05
      %v3990 = vadd.f32 %v3926, 1e-05
      %v3991 = vadd.f32 %v3927, 1e-05
      %v3992 = vadd.f32 %v3928, 1e-05
      %v3993 = vadd.f32 %v3929, 1e-05
      %v3994 = vadd.f32 %v3930, 1e-05
      %v3995 = vadd.f32 %v3931, 1e-05
      %v3996 = vadd.f32 %v3932, 1e-05
      %v3997 = vadd.f32 %v3933, 1e-05
      %v3998 = vadd.f32 %v3934, 1e-05
      %v3999 = vadd.f32 %v3935, 1e-05
      %v4000 = vadd.f32 %v3936, 1e-05
      %v4001 = vadd.f32 %v3937, 1e-05
      %v4002 = vadd.f32 %v3938, 1e-05
      %v4003 = vadd.f32 %v3939, 1e-05
      %v4004 = vadd.f32 %v3940, 1e-05
      %v4005 = vadd.f32 %v3941, 1e-05
      %v4006 = vadd.f32 %v3942, 1e-05
      %v4007 = vadd.f32 %v3943, 1e-05
      %v4008 = vadd.f32 %v3944, 1e-05
      %v4009 = vadd.f32 %v3945, 1e-05
      %v4010 = vadd.f32 %v3946, 1e-05
      %v4011 = vadd.f32 %v3947, 1e-05
      %v4012 = vadd.f32 %v3948, 1e-05
      %v4013 = vadd.f32 %v3949, 1e-05
      %v4014 = vadd.f32 %v3950, 1e-05
      %v4015 = vadd.f32 %v3951, 1e-05
      %v4016 = vadd.f32 %v3952, 1e-05
      %v4017 = vadd.f32 %v3953, 1e-05
      %v4018 = vadd.f32 %v3954, 1e-05
      %v4019 = vadd.f32 %v3955, 1e-05
      %v4020 = vadd.f32 %v3956, 1e-05
      %v4021 = vadd.f32 %v3957, 1e-05
      %v4022 = vadd.f32 %v3958, 1e-05
      %v4023 = vadd.f32 %v3959, 1e-05
      %v4024 = vadd.f32 %v3960, 1e-05
      %v4025 = vadd.f32 %v3961, 1e-05
      %v4026 = vadd.f32 %v3962, 1e-05
      %v4027 = vadd.f32 %v3963, 1e-05
      %v4028 = vadd.f32 %v3964, 1e-05
      %v4029 = vadd.f32 %v3965, 1e-05
      %v4030 = vadd.f32 %v3966, 1e-05
      %v4031 = vadd.f32 %v3967, 1e-05
      %v4032 = vadd.f32 %v3968, 1e-05
      %v4033 = vadd.f32 %v3969, 1e-05
      %v4034 = vadd.f32 %v3970, 1e-05
      %v4035 = vadd.f32 %v3971, 1e-05
      %v4036 = vadd.f32 %v3972, 1e-05
      %v4037 = vadd.f32 %v3973, 1e-05
      %v4038 = vadd.f32 %v3974, 1e-05
      %v4039 = vadd.f32 %v3975, 1e-05
      %v4040 = vadd.f32 %v3976, 1e-05
      %v4041 = vadd.f32 %v3977, 1e-05
      %v4042 = vadd.f32 %v3978, 1e-05
      %v4043 = vadd.f32 %v3979, 1e-05
      %v4044 = vadd.f32 %v3980, 1e-05
      %v4045 = vadd.f32 %v3981, 1e-05
      %v4046 = vadd.f32 %v3982, 1e-05
      %v4047 = vadd.f32 %v3983, 1e-05
      %v4048 = vadd.f32 %v3984, 1e-05
      %v4049 = vadd.f32 %v3985, 1e-05
      %v4050 = vadd.f32 %v3986, 1e-05
      %v4051 = vadd.f32 %v3987, 1e-05
      %v4052 = vadd.f32 %v3988, 1e-05
      %v4053 = vrsqrt.pop %v3989
      %v4054 = vrsqrt.pop %v3990
      %v4055 = vrsqrt.pop %v3991
      %v4056 = vrsqrt.pop %v3992
      %v4057 = vrsqrt.pop %v3993
      %v4058 = vrsqrt.pop %v3994
      %v4059 = vrsqrt.pop %v3995
      %v4060 = vrsqrt.pop %v3996
      %v4061 = vrsqrt.pop %v3997
      %v4062 = vrsqrt.pop %v3998
      %v4063 = vrsqrt.pop %v3999
      %v4064 = vrsqrt.pop %v4000
      %v4065 = vrsqrt.pop %v4001
      %v4066 = vrsqrt.pop %v4002
      %v4067 = vrsqrt.pop %v4003
      %v4068 = vrsqrt.pop %v4004
      %v4069 = vrsqrt.pop %v4005
      %v4070 = vrsqrt.pop %v4006
      %v4071 = vrsqrt.pop %v4007
      %v4072 = vrsqrt.pop %v4008
      %v4073 = vrsqrt.pop %v4009
      %v4074 = vrsqrt.pop %v4010
      %v4075 = vrsqrt.pop %v4011
      %v4076 = vrsqrt.pop %v4012
      %v4077 = vrsqrt.pop %v4013
      %v4078 = vrsqrt.pop %v4014
      %v4079 = vrsqrt.pop %v4015
      %v4080 = vrsqrt.pop %v4016
      %v4081 = vrsqrt.pop %v4017
      %v4082 = vrsqrt.pop %v4018
      %v4083 = vrsqrt.pop %v4019
      %v4084 = vrsqrt.pop %v4020
      %v4085 = vrsqrt.pop %v4021
      %v4086 = vrsqrt.pop %v4022
      %v4087 = vrsqrt.pop %v4023
      %v4088 = vrsqrt.pop %v4024
      %v4089 = vrsqrt.pop %v4025
      %v4090 = vrsqrt.pop %v4026
      %v4091 = vrsqrt.pop %v4027
      %v4092 = vrsqrt.pop %v4028
      %v4093 = vrsqrt.pop %v4029
      %v4094 = vrsqrt.pop %v4030
      %v4095 = vrsqrt.pop %v4031
      %v4096 = vrsqrt.pop %v4032
      %v4097 = vrsqrt.pop %v4033
      %v4098 = vrsqrt.pop %v4034
      %v4099 = vrsqrt.pop %v4035
      %v4100 = vrsqrt.pop %v4036
      %v4101 = vrsqrt.pop %v4037
      %v4102 = vrsqrt.pop %v4038
      %v4103 = vrsqrt.pop %v4039
      %v4104 = vrsqrt.pop %v4040
      %v4105 = vrsqrt.pop %v4041
      %v4106 = vrsqrt.pop %v4042
      %v4107 = vrsqrt.pop %v4043
      %v4108 = vrsqrt.pop %v4044
      %v4109 = vrsqrt.pop %v4045
      %v4110 = vrsqrt.pop %v4046
      %v4111 = vrsqrt.pop %v4047
      %v4112 = vrsqrt.pop %v4048
      %v4113 = vrsqrt.pop %v4049
      %v4114 = vrsqrt.pop %v4050
      %v4115 = vrsqrt.pop %v4051
      %v4116 = vrsqrt.pop %v4052
      %v4117 = vmul.f32 %v3605, %v4053
      %v4118 = vmul.f32 %v3606, %v4054
      %v4119 = vmul.f32 %v3607, %v4055
      %v4120 = vmul.f32 %v3608, %v4056
      %v4121 = vmul.f32 %v3609, %v4057
      %v4122 = vmul.f32 %v3610, %v4058
      %v4123 = vmul.f32 %v3611, %v4059
      %v4124 = vmul.f32 %v3612, %v4060
      %v4125 = vmul.f32 %v3613, %v4061
      %v4126 = vmul.f32 %v3614, %v4062
      %v4127 = vmul.f32 %v3615, %v4063
      %v4128 = vmul.f32 %v3616, %v4064
      %v4129 = vmul.f32 %v3617, %v4065
      %v4130 = vmul.f32 %v3618, %v4066
      %v4131 = vmul.f32 %v3619, %v4067
      %v4132 = vmul.f32 %v3620, %v4068
      %v4133 = vmul.f32 %v3621, %v4069
      %v4134 = vmul.f32 %v3622, %v4070
      %v4135 = vmul.f32 %v3623, %v4071
      %v4136 = vmul.f32 %v3624, %v4072
      %v4137 = vmul.f32 %v3625, %v4073
      %v4138 = vmul.f32 %v3626, %v4074
      %v4139 = vmul.f32 %v3627, %v4075
      %v4140 = vmul.f32 %v3628, %v4076
      %v4141 = vmul.f32 %v3629, %v4077
      %v4142 = vmul.f32 %v3630, %v4078
      %v4143 = vmul.f32 %v3631, %v4079
      %v4144 = vmul.f32 %v3632, %v4080
      %v4145 = vmul.f32 %v3633, %v4081
      %v4146 = vmul.f32 %v3634, %v4082
      %v4147 = vmul.f32 %v3635, %v4083
      %v4148 = vmul.f32 %v3636, %v4084
      %v4149 = vmul.f32 %v3637, %v4085
      %v4150 = vmul.f32 %v3638, %v4086
      %v4151 = vmul.f32 %v3639, %v4087
      %v4152 = vmul.f32 %v3640, %v4088
      %v4153 = vmul.f32 %v3641, %v4089
      %v4154 = vmul.f32 %v3642, %v4090
      %v4155 = vmul.f32 %v3643, %v4091
      %v4156 = vmul.f32 %v3644, %v4092
      %v4157 = vmul.f32 %v3645, %v4093
      %v4158 = vmul.f32 %v3646, %v4094
      %v4159 = vmul.f32 %v3647, %v4095
      %v4160 = vmul.f32 %v3648, %v4096
      %v4161 = vmul.f32 %v3649, %v4097
      %v4162 = vmul.f32 %v3650, %v4098
      %v4163 = vmul.f32 %v3651, %v4099
      %v4164 = vmul.f32 %v3652, %v4100
      %v4165 = vmul.f32 %v3653, %v4101
      %v4166 = vmul.f32 %v3654, %v4102
      %v4167 = vmul.f32 %v3655, %v4103
      %v4168 = vmul.f32 %v3656, %v4104
      %v4169 = vmul.f32 %v3657, %v4105
      %v4170 = vmul.f32 %v3658, %v4106
      %v4171 = vmul.f32 %v3659, %v4107
      %v4172 = vmul.f32 %v3660, %v4108
      %v4173 = vmul.f32 %v3661, %v4109
      %v4174 = vmul.f32 %v3662, %v4110
      %v4175 = vmul.f32 %v3663, %v4111
      %v4176 = vmul.f32 %v3664, %v4112
      %v4177 = vmul.f32 %v3665, %v4113
      %v4178 = vmul.f32 %v3666, %v4114
      %v4179 = vmul.f32 %v3667, %v4115
      %v4180 = vmul.f32 %v3668, %v4116
      %v4181 = vlaneseq
      %v4182 = vshrl.u32 %v4181, 7
      %v4183 = vsub.s32 0, %v4182
      %v4184 = vrot.slane %v3347, %v4183
      %v4185 = vmul.f32 %v4117, %v4184
      %v4186 = vmul.f32 %v4118, %v4184
      %v4187 = vmul.f32 %v4119, %v4184
      %v4188 = vmul.f32 %v4120, %v4184
      %v4189 = vmul.f32 %v4121, %v4184
      %v4190 = vmul.f32 %v4122, %v4184
      %v4191 = vmul.f32 %v4123, %v4184
      %v4192 = vmul.f32 %v4124, %v4184
      %v4193 = vmul.f32 %v4125, %v4184
      %v4194 = vmul.f32 %v4126, %v4184
      %v4195 = vmul.f32 %v4127, %v4184
      %v4196 = vmul.f32 %v4128, %v4184
      %v4197 = vmul.f32 %v4129, %v4184
      %v4198 = vmul.f32 %v4130, %v4184
      %v4199 = vmul.f32 %v4131, %v4184
      %v4200 = vmul.f32 %v4132, %v4184
      %v4201 = vmul.f32 %v4133, %v4184
      %v4202 = vmul.f32 %v4134, %v4184
      %v4203 = vmul.f32 %v4135, %v4184
      %v4204 = vmul.f32 %v4136, %v4184
      %v4205 = vmul.f32 %v4137, %v4184
      %v4206 = vmul.f32 %v4138, %v4184
      %v4207 = vmul.f32 %v4139, %v4184
      %v4208 = vmul.f32 %v4140, %v4184
      %v4209 = vmul.f32 %v4141, %v4184
      %v4210 = vmul.f32 %v4142, %v4184
      %v4211 = vmul.f32 %v4143, %v4184
      %v4212 = vmul.f32 %v4144, %v4184
      %v4213 = vmul.f32 %v4145, %v4184
      %v4214 = vmul.f32 %v4146, %v4184
      %v4215 = vmul.f32 %v4147, %v4184
      %v4216 = vmul.f32 %v4148, %v4184
      %v4217 = vmul.f32 %v4149, %v4184
      %v4218 = vmul.f32 %v4150, %v4184
      %v4219 = vmul.f32 %v4151, %v4184
      %v4220 = vmul.f32 %v4152, %v4184
      %v4221 = vmul.f32 %v4153, %v4184
      %v4222 = vmul.f32 %v4154, %v4184
      %v4223 = vmul.f32 %v4155, %v4184
      %v4224 = vmul.f32 %v4156, %v4184
      %v4225 = vmul.f32 %v4157, %v4184
      %v4226 = vmul.f32 %v4158, %v4184
      %v4227 = vmul.f32 %v4159, %v4184
      %v4228 = vmul.f32 %v4160, %v4184
      %v4229 = vmul.f32 %v4161, %v4184
      %v4230 = vmul.f32 %v4162, %v4184
      %v4231 = vmul.f32 %v4163, %v4184
      %v4232 = vmul.f32 %v4164, %v4184
      %v4233 = vmul.f32 %v4165, %v4184
      %v4234 = vmul.f32 %v4166, %v4184
      %v4235 = vmul.f32 %v4167, %v4184
      %v4236 = vmul.f32 %v4168, %v4184
      %v4237 = vmul.f32 %v4169, %v4184
      %v4238 = vmul.f32 %v4170, %v4184
      %v4239 = vmul.f32 %v4171, %v4184
      %v4240 = vmul.f32 %v4172, %v4184
      %v4241 = vmul.f32 %v4173, %v4184
      %v4242 = vmul.f32 %v4174, %v4184
      %v4243 = vmul.f32 %v4175, %v4184
      %v4244 = vmul.f32 %v4176, %v4184
      %v4245 = vmul.f32 %v4177, %v4184
      %v4246 = vmul.f32 %v4178, %v4184
      %v4247 = vmul.f32 %v4179, %v4184
      %v4248 = vmul.f32 %v4180, %v4184
      %v4249 = vlaneseq
      %v4250 = vshrl.u32 %v4249, 7
      %v4251 = vsub.s32 0, %v4250
      %v4252 = vrot.slane %v3348, %v4251
      %v4253 = vadd.f32 %v4185, %v4252
      %v4254 = vadd.f32 %v4186, %v4252
      %v4255 = vadd.f32 %v4187, %v4252
      %v4256 = vadd.f32 %v4188, %v4252
      %v4257 = vadd.f32 %v4189, %v4252
      %v4258 = vadd.f32 %v4190, %v4252
      %v4259 = vadd.f32 %v4191, %v4252
      %v4260 = vadd.f32 %v4192, %v4252
      %v4261 = vadd.f32 %v4193, %v4252
      %v4262 = vadd.f32 %v4194, %v4252
      %v4263 = vadd.f32 %v4195, %v4252
      %v4264 = vadd.f32 %v4196, %v4252
      %v4265 = vadd.f32 %v4197, %v4252
      %v4266 = vadd.f32 %v4198, %v4252
      %v4267 = vadd.f32 %v4199, %v4252
      %v4268 = vadd.f32 %v4200, %v4252
      %v4269 = vadd.f32 %v4201, %v4252
      %v4270 = vadd.f32 %v4202, %v4252
      %v4271 = vadd.f32 %v4203, %v4252
      %v4272 = vadd.f32 %v4204, %v4252
      %v4273 = vadd.f32 %v4205, %v4252
      %v4274 = vadd.f32 %v4206, %v4252
      %v4275 = vadd.f32 %v4207, %v4252
      %v4276 = vadd.f32 %v4208, %v4252
      %v4277 = vadd.f32 %v4209, %v4252
      %v4278 = vadd.f32 %v4210, %v4252
      %v4279 = vadd.f32 %v4211, %v4252
      %v4280 = vadd.f32 %v4212, %v4252
      %v4281 = vadd.f32 %v4213, %v4252
      %v4282 = vadd.f32 %v4214, %v4252
      %v4283 = vadd.f32 %v4215, %v4252
      %v4284 = vadd.f32 %v4216, %v4252
      %v4285 = vadd.f32 %v4217, %v4252
      %v4286 = vadd.f32 %v4218, %v4252
      %v4287 = vadd.f32 %v4219, %v4252
      %v4288 = vadd.f32 %v4220, %v4252
      %v4289 = vadd.f32 %v4221, %v4252
      %v4290 = vadd.f32 %v4222, %v4252
      %v4291 = vadd.f32 %v4223, %v4252
      %v4292 = vadd.f32 %v4224, %v4252
      %v4293 = vadd.f32 %v4225, %v4252
      %v4294 = vadd.f32 %v4226, %v4252
      %v4295 = vadd.f32 %v4227, %v4252
      %v4296 = vadd.f32 %v4228, %v4252
      %v4297 = vadd.f32 %v4229, %v4252
      %v4298 = vadd.f32 %v4230, %v4252
      %v4299 = vadd.f32 %v4231, %v4252
      %v4300 = vadd.f32 %v4232, %v4252
      %v4301 = vadd.f32 %v4233, %v4252
      %v4302 = vadd.f32 %v4234, %v4252
      %v4303 = vadd.f32 %v4235, %v4252
      %v4304 = vadd.f32 %v4236, %v4252
      %v4305 = vadd.f32 %v4237, %v4252
      %v4306 = vadd.f32 %v4238, %v4252
      %v4307 = vadd.f32 %v4239, %v4252
      %v4308 = vadd.f32 %v4240, %v4252
      %v4309 = vadd.f32 %v4241, %v4252
      %v4310 = vadd.f32 %v4242, %v4252
      %v4311 = vadd.f32 %v4243, %v4252
      %v4312 = vadd.f32 %v4244, %v4252
      %v4313 = vadd.f32 %v4245, %v4252
      %v4314 = vadd.f32 %v4246, %v4252
      %v4315 = vadd.f32 %v4247, %v4252
      %v4316 = vadd.f32 %v4248, %v4252
      %s4317 = scalar_lea.vmem %s5, 32
      %v4318 = vld [vmem:[%s4317] sm:$0xff]
      %v4319 = vld [vmem:[%s4317 + $0x8] sm:$0xff]
      %v4320 = vld [vmem:[%s4317 + $0x10] sm:$0xff]
      %v4321 = vld [vmem:[%s4317 + $0x18] sm:$0xff]
      %v4322 = vld [vmem:[%s6 + $0x1] sm:$0x1]
      %v4323 = vlaneseq
      %v4324 = vshrl.u32 %v4323, 7
      %v4325 = vsub.s32 0, %v4324
      %v4326 = vrot.slane %v4322, %v4325
      %v4328 = vsel %vm1072, %v4253, 0
      %v4331 = vsel %vm1072, %v4254, 0
      %v4334 = vsel %vm1072, %v4255, 0
      %v4337 = vsel %vm1072, %v4256, 0
      %v4340 = vsel %vm1072, %v4257, 0
      %v4343 = vsel %vm1072, %v4258, 0
      %v4346 = vsel %vm1072, %v4259, 0
      %v4349 = vsel %vm1072, %v4260, 0
      %v4352 = vsel %vm1072, %v4261, 0
      %v4355 = vsel %vm1072, %v4262, 0
      %v4358 = vsel %vm1072, %v4263, 0
      %v4361 = vsel %vm1072, %v4264, 0
      %v4364 = vsel %vm1072, %v4265, 0
      %v4367 = vsel %vm1072, %v4266, 0
      %v4370 = vsel %vm1072, %v4267, 0
      %v4373 = vsel %vm1072, %v4268, 0
      %v4376 = vsel %vm1072, %v4269, 0
      %v4379 = vsel %vm1072, %v4270, 0
      %v4382 = vsel %vm1072, %v4271, 0
      %v4385 = vsel %vm1072, %v4272, 0
      %v4388 = vsel %vm1072, %v4273, 0
      %v4391 = vsel %vm1072, %v4274, 0
      %v4394 = vsel %vm1072, %v4275, 0
      %v4397 = vsel %vm1072, %v4276, 0
      %v4400 = vsel %vm1072, %v4277, 0
      %v4403 = vsel %vm1072, %v4278, 0
      %v4406 = vsel %vm1072, %v4279, 0
      %v4409 = vsel %vm1072, %v4280, 0
      %v4412 = vsel %vm1072, %v4281, 0
      %v4415 = vsel %vm1072, %v4282, 0
      %v4418 = vsel %vm1072, %v4283, 0
      %v4421 = vsel %vm1072, %v4284, 0
      %v4424 = vsel %vm1072, %v4285, 0
      %v4427 = vsel %vm1072, %v4286, 0
      %v4430 = vsel %vm1072, %v4287, 0
      %v4433 = vsel %vm1072, %v4288, 0
      %v4436 = vsel %vm1072, %v4289, 0
      %v4439 = vsel %vm1072, %v4290, 0
      %v4442 = vsel %vm1072, %v4291, 0
      %v4445 = vsel %vm1072, %v4292, 0
      %v4448 = vsel %vm1072, %v4293, 0
      %v4451 = vsel %vm1072, %v4294, 0
      %v4454 = vsel %vm1072, %v4295, 0
      %v4457 = vsel %vm1072, %v4296, 0
      %v4460 = vsel %vm1072, %v4297, 0
      %v4463 = vsel %vm1072, %v4298, 0
      %v4466 = vsel %vm1072, %v4299, 0
      %v4469 = vsel %vm1072, %v4300, 0
      %v4472 = vsel %vm1072, %v4301, 0
      %v4475 = vsel %vm1072, %v4302, 0
      %v4478 = vsel %vm1072, %v4303, 0
      %v4481 = vsel %vm1072, %v4304, 0
      %v4484 = vsel %vm1072, %v4305, 0
      %v4487 = vsel %vm1072, %v4306, 0
      %v4490 = vsel %vm1072, %v4307, 0
      %v4493 = vsel %vm1072, %v4308, 0
      %v4496 = vsel %vm1072, %v4309, 0
      %v4499 = vsel %vm1072, %v4310, 0
      %v4502 = vsel %vm1072, %v4311, 0
      %v4505 = vsel %vm1072, %v4312, 0
      %v4508 = vsel %vm1072, %v4313, 0
      %v4511 = vsel %vm1072, %v4314, 0
      %v4514 = vsel %vm1072, %v4315, 0
      %v4517 = vsel %vm1072, %v4316, 0
      %4519 = vmatprep.subr.mxu0 0.0
      %4520 = vmatpush1.msra.mxu0 %v4318
      %4521 = vmatprep.subr.mxu0 0.0
      %4522 = vmatpush1.msra.mxu0 %v4319
      %4523 = vmatprep.subr.mxu0 0.0
      %4524 = vmatpush1.msra.mxu0 %v4320
      %4525 = vmatprep.subr.mxu0 0.0
      %4526 = vmatpush1.msra.mxu0 %v4321
      %4527 = vmatprep.subr.mxu0 0.0
      %4528 = vmatpush1.msra.mxu0 0.0
      %4529 = vmatprep.subr.mxu0 0.0
      %4530 = vmatpush1.msra.mxu0 0.0
      %4531 = vmatprep.subr.mxu0 0.0
      %4532 = vmatpush1.msra.mxu0 0.0
      %4533 = vmatprep.subr.mxu0 0.0
      %4534 = vmatpush1.msra.mxu0 0.0
      %4535 = vmatprep.subr.mxu0 0.0
      %4536 = vmatpush1.msra.mxu0 0.0
      %4537 = vmatprep.subr.mxu0 0.0
      %4538 = vmatpush1.msra.mxu0 0.0
      %4539 = vmatprep.subr.mxu0 0.0
      %4540 = vmatpush1.msra.mxu0 0.0
      %4541 = vmatprep.subr.mxu0 0.0
      %4542 = vmatpush1.msra.mxu0 0.0
      %4543 = vmatprep.subr.mxu0 0.0
      %4544 = vmatpush1.msra.mxu0 0.0
      %4545 = vmatprep.subr.mxu0 0.0
      %4546 = vmatpush1.msra.mxu0 0.0
      %4547 = vmatprep.subr.mxu0 0.0
      %4548 = vmatpush1.msra.mxu0 0.0
      %4549 = vmatprep.subr.mxu0 0.0
      %4550 = vmatpush1.msra.mxu0 0.0
      %4551 = vmatprep.subr.mxu0 0.0
      %4552 = vmatpush1.msra.mxu0 0.0
      %4553 = vmatprep.subr.mxu0 0.0
      %4554 = vmatpush1.msra.mxu0 0.0
      %4555 = vmatprep.subr.mxu0 0.0
      %4556 = vmatpush1.msra.mxu0 0.0
      %4557 = vmatprep.subr.mxu0 0.0
      %4558 = vmatpush1.msra.mxu0 0.0
      %4559 = vmatprep.subr.mxu0 0.0
      %4560 = vmatpush1.msra.mxu0 0.0
      %4561 = vmatprep.subr.mxu0 0.0
      %4562 = vmatpush1.msra.mxu0 0.0
      %4563 = vmatprep.subr.mxu0 0.0
      %4564 = vmatpush1.msra.mxu0 0.0
      %4565 = vmatprep.subr.mxu0 0.0
      %4566 = vmatpush1.msra.mxu0 0.0
      %4567 = vmatprep.subr.mxu0 0.0
      %4568 = vmatpush1.msra.mxu0 0.0
      %4569 = vmatprep.subr.mxu0 0.0
      %4570 = vmatpush1.msra.mxu0 0.0
      %4571 = vmatprep.subr.mxu0 0.0
      %4572 = vmatpush1.msra.mxu0 0.0
      %4573 = vmatprep.subr.mxu0 0.0
      %4574 = vmatpush1.msra.mxu0 0.0
      %4575 = vmatprep.subr.mxu0 0.0
      %4576 = vmatpush1.msra.mxu0 0.0
      %4577 = vmatprep.subr.mxu0 0.0
      %4578 = vmatpush1.msra.mxu0 0.0
      %4579 = vmatprep.subr.mxu0 0.0
      %4580 = vmatpush1.msra.mxu0 0.0
      %4581 = vmatprep.subr.mxu0 0.0
      %4582 = vmatpush1.msra.mxu0 0.0
      %4583 = vmatprep.mubr.f32.mxu0 0.0
      %4584 = vmatmul.mubr.f32.gmra.mrb[0].mxu0 %v4328
      %v4585 = vpop.f32.mrb[0].mxu0
      %v4586 = vadd.f32 %v4326, %v4585
      %v4587 = vpop.f32.mrb[0].mxu0
      %4588 = vmatprep.mubr.f32.mxu0 0.0
      %4589 = vmatmul.mubr.f32.gmra.mrb[0].mxu0 %v4331
      %v4590 = vpop.f32.mrb[0].mxu0
      %v4591 = vadd.f32 %v4326, %v4590
      %v4592 = vpop.f32.mrb[0].mxu0
      %4593 = vmatprep.mubr.f32.mxu0 0.0
      %4594 = vmatmul.mubr.f32.gmra.mrb[0].mxu0 %v4334
      %v4595 = vpop.f32.mrb[0].mxu0
      %v4596 = vadd.f32 %v4326, %v4595
      %v4597 = vpop.f32.mrb[0].mxu0
      %4598 = vmatprep.mubr.f32.mxu0 0.0
      %4599 = vmatmul.mubr.f32.gmra.mrb[0].mxu0 %v4337
      %v4600 = vpop.f32.mrb[0].mxu0
      %v4601 = vadd.f32 %v4326, %v4600
      %v4602 = vpop.f32.mrb[0].mxu0
      %4603 = vmatprep.mubr.f32.mxu0 0.0
      %4604 = vmatmul.mubr.f32.gmra.mrb[0].mxu0 %v4340
      %v4605 = vpop.f32.mrb[0].mxu0
      %v4606 = vadd.f32 %v4326, %v4605
      %v4607 = vpop.f32.mrb[0].mxu0
      %4608 = vmatprep.mubr.f32.mxu0 0.0
      %4609 = vmatmul.mubr.f32.gmra.mrb[0].mxu0 %v4343
      %v4610 = vpop.f32.mrb[0].mxu0
      %v4611 = vadd.f32 %v4326, %v4610
      %v4612 = vpop.f32.mrb[0].mxu0
      %4613 = vmatprep.mubr.f32.mxu0 0.0
      %4614 = vmatmul.mubr.f32.gmra.mrb[0].mxu0 %v4346
      %v4615 = vpop.f32.mrb[0].mxu0
      %v4616 = vadd.f32 %v4326, %v4615
      %v4617 = vpop.f32.mrb[0].mxu0
      %4618 = vmatprep.mubr.f32.mxu0 0.0
      %4619 = vmatmul.mubr.f32.gmra.mrb[0].mxu0 %v4349
      %v4620 = vpop.f32.mrb[0].mxu0
      %v4621 = vadd.f32 %v4326, %v4620
      %v4622 = vpop.f32.mrb[0].mxu0
      %4623 = vmatprep.mubr.f32.mxu0 0.0
      %4624 = vmatmul.mubr.f32.gmra.mrb[0].mxu0 %v4352
      %v4625 = vpop.f32.mrb[0].mxu0
      %v4626 = vadd.f32 %v4326, %v4625
      %v4627 = vpop.f32.mrb[0].mxu0
      %4628 = vmatprep.mubr.f32.mxu0 0.0
      %4629 = vmatmul.mubr.f32.gmra.mrb[0].mxu0 %v4355
      %v4630 = vpop.f32.mrb[0].mxu0
      %v4631 = vadd.f32 %v4326, %v4630
      %v4632 = vpop.f32.mrb[0].mxu0
      %4633 = vmatprep.mubr.f32.mxu0 0.0
      %4634 = vmatmul.mubr.f32.gmra.mrb[0].mxu0 %v4358
      %v4635 = vpop.f32.mrb[0].mxu0
      %v4636 = vadd.f32 %v4326, %v4635
      %v4637 = vpop.f32.mrb[0].mxu0
      %4638 = vmatprep.mubr.f32.mxu0 0.0
      %4639 = vmatmul.mubr.f32.gmra.mrb[0].mxu0 %v4361
      %v4640 = vpop.f32.mrb[0].mxu0
      %v4641 = vadd.f32 %v4326, %v4640
      %v4642 = vpop.f32.mrb[0].mxu0
      %4643 = vmatprep.mubr.f32.mxu0 0.0
      %4644 = vmatmul.mubr.f32.gmra.mrb[0].mxu0 %v4364
      %v4645 = vpop.f32.mrb[0].mxu0
      %v4646 = vadd.f32 %v4326, %v4645
      %v4647 = vpop.f32.mrb[0].mxu0
      %4648 = vmatprep.mubr.f32.mxu0 0.0
      %4649 = vmatmul.mubr.f32.gmra.mrb[0].mxu0 %v4367
      %v4650 = vpop.f32.mrb[0].mxu0
      %v4651 = vadd.f32 %v4326, %v4650
      %v4652 = vpop.f32.mrb[0].mxu0
      %4653 = vmatprep.mubr.f32.mxu0 0.0
      %4654 = vmatmul.mubr.f32.gmra.mrb[0].mxu0 %v4370
      %v4655 = vpop.f32.mrb[0].mxu0
      %v4656 = vadd.f32 %v4326, %v4655
      %v4657 = vpop.f32.mrb[0].mxu0
      %4658 = vmatprep.mubr.f32.mxu0 0.0
      %4659 = vmatmul.mubr.f32.gmra.mrb[0].mxu0 %v4373
      %v4660 = vpop.f32.mrb[0].mxu0
      %v4661 = vadd.f32 %v4326, %v4660
      %v4662 = vpop.f32.mrb[0].mxu0
      %4663 = vmatprep.mubr.f32.mxu0 0.0
      %4664 = vmatmul.mubr.f32.gmra.mrb[0].mxu0 %v4376
      %v4665 = vpop.f32.mrb[0].mxu0
      %v4666 = vadd.f32 %v4326, %v4665
      %v4667 = vpop.f32.mrb[0].mxu0
      %4668 = vmatprep.mubr.f32.mxu0 0.0
      %4669 = vmatmul.mubr.f32.gmra.mrb[0].mxu0 %v4379
      %v4670 = vpop.f32.mrb[0].mxu0
      %v4671 = vadd.f32 %v4326, %v4670
      %v4672 = vpop.f32.mrb[0].mxu0
      %4673 = vmatprep.mubr.f32.mxu0 0.0
      %4674 = vmatmul.mubr.f32.gmra.mrb[0].mxu0 %v4382
      %v4675 = vpop.f32.mrb[0].mxu0
      %v4676 = vadd.f32 %v4326, %v4675
      %v4677 = vpop.f32.mrb[0].mxu0
      %4678 = vmatprep.mubr.f32.mxu0 0.0
      %4679 = vmatmul.mubr.f32.gmra.mrb[0].mxu0 %v4385
      %v4680 = vpop.f32.mrb[0].mxu0
      %v4681 = vadd.f32 %v4326, %v4680
      %v4682 = vpop.f32.mrb[0].mxu0
      %4683 = vmatprep.mubr.f32.mxu0 0.0
      %4684 = vmatmul.mubr.f32.gmra.mrb[0].mxu0 %v4388
      %v4685 = vpop.f32.mrb[0].mxu0
      %v4686 = vadd.f32 %v4326, %v4685
      %v4687 = vpop.f32.mrb[0].mxu0
      %4688 = vmatprep.mubr.f32.mxu0 0.0
      %4689 = vmatmul.mubr.f32.gmra.mrb[0].mxu0 %v4391
      %v4690 = vpop.f32.mrb[0].mxu0
      %v4691 = vadd.f32 %v4326, %v4690
      %v4692 = vpop.f32.mrb[0].mxu0
      %4693 = vmatprep.mubr.f32.mxu0 0.0
      %4694 = vmatmul.mubr.f32.gmra.mrb[0].mxu0 %v4394
      %v4695 = vpop.f32.mrb[0].mxu0
      %v4696 = vadd.f32 %v4326, %v4695
      %v4697 = vpop.f32.mrb[0].mxu0
      %4698 = vmatprep.mubr.f32.mxu0 0.0
      %4699 = vmatmul.mubr.f32.gmra.mrb[0].mxu0 %v4397
      %v4700 = vpop.f32.mrb[0].mxu0
      %v4701 = vadd.f32 %v4326, %v4700
      %v4702 = vpop.f32.mrb[0].mxu0
      %4703 = vmatprep.mubr.f32.mxu0 0.0
      %4704 = vmatmul.mubr.f32.gmra.mrb[0].mxu0 %v4400
      %v4705 = vpop.f32.mrb[0].mxu0
      %v4706 = vadd.f32 %v4326, %v4705
      %v4707 = vpop.f32.mrb[0].mxu0
      %4708 = vmatprep.mubr.f32.mxu0 0.0
      %4709 = vmatmul.mubr.f32.gmra.mrb[0].mxu0 %v4403
      %v4710 = vpop.f32.mrb[0].mxu0
      %v4711 = vadd.f32 %v4326, %v4710
      %v4712 = vpop.f32.mrb[0].mxu0
      %4713 = vmatprep.mubr.f32.mxu0 0.0
      %4714 = vmatmul.mubr.f32.gmra.mrb[0].mxu0 %v4406
      %v4715 = vpop.f32.mrb[0].mxu0
      %v4716 = vadd.f32 %v4326, %v4715
      %v4717 = vpop.f32.mrb[0].mxu0
      %4718 = vmatprep.mubr.f32.mxu0 0.0
      %4719 = vmatmul.mubr.f32.gmra.mrb[0].mxu0 %v4409
      %v4720 = vpop.f32.mrb[0].mxu0
      %v4721 = vadd.f32 %v4326, %v4720
      %v4722 = vpop.f32.mrb[0].mxu0
      %4723 = vmatprep.mubr.f32.mxu0 0.0
      %4724 = vmatmul.mubr.f32.gmra.mrb[0].mxu0 %v4412
      %v4725 = vpop.f32.mrb[0].mxu0
      %v4726 = vadd.f32 %v4326, %v4725
      %v4727 = vpop.f32.mrb[0].mxu0
      %4728 = vmatprep.mubr.f32.mxu0 0.0
      %4729 = vmatmul.mubr.f32.gmra.mrb[0].mxu0 %v4415
      %v4730 = vpop.f32.mrb[0].mxu0
      %v4731 = vadd.f32 %v4326, %v4730
      %v4732 = vpop.f32.mrb[0].mxu0
      %4733 = vmatprep.mubr.f32.mxu0 0.0
      %4734 = vmatmul.mubr.f32.gmra.mrb[0].mxu0 %v4418
      %v4735 = vpop.f32.mrb[0].mxu0
      %v4736 = vadd.f32 %v4326, %v4735
      %v4737 = vpop.f32.mrb[0].mxu0
      %4738 = vmatprep.mubr.f32.mxu0 0.0
      %4739 = vmatmul.mubr.f32.gmra.mrb[0].mxu0 %v4421
      %v4740 = vpop.f32.mrb[0].mxu0
      %v4741 = vadd.f32 %v4326, %v4740
      %v4742 = vpop.f32.mrb[0].mxu0
      %4743 = vmatprep.mubr.f32.mxu0 0.0
      %4744 = vmatmul.mubr.f32.gmra.mrb[0].mxu0 %v4424
      %v4745 = vpop.f32.mrb[0].mxu0
      %v4746 = vadd.f32 %v4326, %v4745
      %v4747 = vpop.f32.mrb[0].mxu0
      %4748 = vmatprep.mubr.f32.mxu0 0.0
      %4749 = vmatmul.mubr.f32.gmra.mrb[0].mxu0 %v4427
      %v4750 = vpop.f32.mrb[0].mxu0
      %v4751 = vadd.f32 %v4326, %v4750
      %v4752 = vpop.f32.mrb[0].mxu0
      %4753 = vmatprep.mubr.f32.mxu0 0.0
      %4754 = vmatmul.mubr.f32.gmra.mrb[0].mxu0 %v4430
      %v4755 = vpop.f32.mrb[0].mxu0
      %v4756 = vadd.f32 %v4326, %v4755
      %v4757 = vpop.f32.mrb[0].mxu0
      %4758 = vmatprep.mubr.f32.mxu0 0.0
      %4759 = vmatmul.mubr.f32.gmra.mrb[0].mxu0 %v4433
      %v4760 = vpop.f32.mrb[0].mxu0
      %v4761 = vadd.f32 %v4326, %v4760
      %v4762 = vpop.f32.mrb[0].mxu0
      %4763 = vmatprep.mubr.f32.mxu0 0.0
      %4764 = vmatmul.mubr.f32.gmra.mrb[0].mxu0 %v4436
      %v4765 = vpop.f32.mrb[0].mxu0
      %v4766 = vadd.f32 %v4326, %v4765
      %v4767 = vpop.f32.mrb[0].mxu0
      %4768 = vmatprep.mubr.f32.mxu0 0.0
      %4769 = vmatmul.mubr.f32.gmra.mrb[0].mxu0 %v4439
      %v4770 = vpop.f32.mrb[0].mxu0
      %v4771 = vadd.f32 %v4326, %v4770
      %v4772 = vpop.f32.mrb[0].mxu0
      %4773 = vmatprep.mubr.f32.mxu0 0.0
      %4774 = vmatmul.mubr.f32.gmra.mrb[0].mxu0 %v4442
      %v4775 = vpop.f32.mrb[0].mxu0
      %v4776 = vadd.f32 %v4326, %v4775
      %v4777 = vpop.f32.mrb[0].mxu0
      %4778 = vmatprep.mubr.f32.mxu0 0.0
      %4779 = vmatmul.mubr.f32.gmra.mrb[0].mxu0 %v4445
      %v4780 = vpop.f32.mrb[0].mxu0
      %v4781 = vadd.f32 %v4326, %v4780
      %v4782 = vpop.f32.mrb[0].mxu0
      %4783 = vmatprep.mubr.f32.mxu0 0.0
      %4784 = vmatmul.mubr.f32.gmra.mrb[0].mxu0 %v4448
      %v4785 = vpop.f32.mrb[0].mxu0
      %v4786 = vadd.f32 %v4326, %v4785
      %v4787 = vpop.f32.mrb[0].mxu0
      %4788 = vmatprep.mubr.f32.mxu0 0.0
      %4789 = vmatmul.mubr.f32.gmra.mrb[0].mxu0 %v4451
      %v4790 = vpop.f32.mrb[0].mxu0
      %v4791 = vadd.f32 %v4326, %v4790
      %v4792 = vpop.f32.mrb[0].mxu0
      %4793 = vmatprep.mubr.f32.mxu0 0.0
      %4794 = vmatmul.mubr.f32.gmra.mrb[0].mxu0 %v4454
      %v4795 = vpop.f32.mrb[0].mxu0
      %v4796 = vadd.f32 %v4326, %v4795
      %v4797 = vpop.f32.mrb[0].mxu0
      %4798 = vmatprep.mubr.f32.mxu0 0.0
      %4799 = vmatmul.mubr.f32.gmra.mrb[0].mxu0 %v4457
      %v4800 = vpop.f32.mrb[0].mxu0
      %v4801 = vadd.f32 %v4326, %v4800
      %v4802 = vpop.f32.mrb[0].mxu0
      %4803 = vmatprep.mubr.f32.mxu0 0.0
      %4804 = vmatmul.mubr.f32.gmra.mrb[0].mxu0 %v4460
      %v4805 = vpop.f32.mrb[0].mxu0
      %v4806 = vadd.f32 %v4326, %v4805
      %v4807 = vpop.f32.mrb[0].mxu0
      %4808 = vmatprep.mubr.f32.mxu0 0.0
      %4809 = vmatmul.mubr.f32.gmra.mrb[0].mxu0 %v4463
      %v4810 = vpop.f32.mrb[0].mxu0
      %v4811 = vadd.f32 %v4326, %v4810
      %v4812 = vpop.f32.mrb[0].mxu0
      %4813 = vmatprep.mubr.f32.mxu0 0.0
      %4814 = vmatmul.mubr.f32.gmra.mrb[0].mxu0 %v4466
      %v4815 = vpop.f32.mrb[0].mxu0
      %v4816 = vadd.f32 %v4326, %v4815
      %v4817 = vpop.f32.mrb[0].mxu0
      %4818 = vmatprep.mubr.f32.mxu0 0.0
      %4819 = vmatmul.mubr.f32.gmra.mrb[0].mxu0 %v4469
      %v4820 = vpop.f32.mrb[0].mxu0
      %v4821 = vadd.f32 %v4326, %v4820
      %v4822 = vpop.f32.mrb[0].mxu0
      %4823 = vmatprep.mubr.f32.mxu0 0.0
      %4824 = vmatmul.mubr.f32.gmra.mrb[0].mxu0 %v4472
      %v4825 = vpop.f32.mrb[0].mxu0
      %v4826 = vadd.f32 %v4326, %v4825
      %v4827 = vpop.f32.mrb[0].mxu0
      %4828 = vmatprep.mubr.f32.mxu0 0.0
      %4829 = vmatmul.mubr.f32.gmra.mrb[0].mxu0 %v4475
      %v4830 = vpop.f32.mrb[0].mxu0
      %v4831 = vadd.f32 %v4326, %v4830
      %v4832 = vpop.f32.mrb[0].mxu0
      %4833 = vmatprep.mubr.f32.mxu0 0.0
      %4834 = vmatmul.mubr.f32.gmra.mrb[0].mxu0 %v4478
      %v4835 = vpop.f32.mrb[0].mxu0
      %v4836 = vadd.f32 %v4326, %v4835
      %v4837 = vpop.f32.mrb[0].mxu0
      %4838 = vmatprep.mubr.f32.mxu0 0.0
      %4839 = vmatmul.mubr.f32.gmra.mrb[0].mxu0 %v4481
      %v4840 = vpop.f32.mrb[0].mxu0
      %v4841 = vadd.f32 %v4326, %v4840
      %v4842 = vpop.f32.mrb[0].mxu0
      %4843 = vmatprep.mubr.f32.mxu0 0.0
      %4844 = vmatmul.mubr.f32.gmra.mrb[0].mxu0 %v4484
      %v4845 = vpop.f32.mrb[0].mxu0
      %v4846 = vadd.f32 %v4326, %v4845
      %v4847 = vpop.f32.mrb[0].mxu0
      %4848 = vmatprep.mubr.f32.mxu0 0.0
      %4849 = vmatmul.mubr.f32.gmra.mrb[0].mxu0 %v4487
      %v4850 = vpop.f32.mrb[0].mxu0
      %v4851 = vadd.f32 %v4326, %v4850
      %v4852 = vpop.f32.mrb[0].mxu0
      %4853 = vmatprep.mubr.f32.mxu0 0.0
      %4854 = vmatmul.mubr.f32.gmra.mrb[0].mxu0 %v4490
      %v4855 = vpop.f32.mrb[0].mxu0
      %v4856 = vadd.f32 %v4326, %v4855
      %v4857 = vpop.f32.mrb[0].mxu0
      %4858 = vmatprep.mubr.f32.mxu0 0.0
      %4859 = vmatmul.mubr.f32.gmra.mrb[0].mxu0 %v4493
      %v4860 = vpop.f32.mrb[0].mxu0
      %v4861 = vadd.f32 %v4326, %v4860
      %v4862 = vpop.f32.mrb[0].mxu0
      %4863 = vmatprep.mubr.f32.mxu0 0.0
      %4864 = vmatmul.mubr.f32.gmra.mrb[0].mxu0 %v4496
      %v4865 = vpop.f32.mrb[0].mxu0
      %v4866 = vadd.f32 %v4326, %v4865
      %v4867 = vpop.f32.mrb[0].mxu0
      %4868 = vmatprep.mubr.f32.mxu0 0.0
      %4869 = vmatmul.mubr.f32.gmra.mrb[0].mxu0 %v4499
      %v4870 = vpop.f32.mrb[0].mxu0
      %v4871 = vadd.f32 %v4326, %v4870
      %v4872 = vpop.f32.mrb[0].mxu0
      %4873 = vmatprep.mubr.f32.mxu0 0.0
      %4874 = vmatmul.mubr.f32.gmra.mrb[0].mxu0 %v4502
      %v4875 = vpop.f32.mrb[0].mxu0
      %v4876 = vadd.f32 %v4326, %v4875
      %v4877 = vpop.f32.mrb[0].mxu0
      %4878 = vmatprep.mubr.f32.mxu0 0.0
      %4879 = vmatmul.mubr.f32.gmra.mrb[0].mxu0 %v4505
      %v4880 = vpop.f32.mrb[0].mxu0
      %v4881 = vadd.f32 %v4326, %v4880
      %v4882 = vpop.f32.mrb[0].mxu0
      %4883 = vmatprep.mubr.f32.mxu0 0.0
      %4884 = vmatmul.mubr.f32.gmra.mrb[0].mxu0 %v4508
      %v4885 = vpop.f32.mrb[0].mxu0
      %v4886 = vadd.f32 %v4326, %v4885
      %v4887 = vpop.f32.mrb[0].mxu0
      %4888 = vmatprep.mubr.f32.mxu0 0.0
      %4889 = vmatmul.mubr.f32.gmra.mrb[0].mxu0 %v4511
      %v4890 = vpop.f32.mrb[0].mxu0
      %v4891 = vadd.f32 %v4326, %v4890
      %v4892 = vpop.f32.mrb[0].mxu0
      %4893 = vmatprep.mubr.f32.mxu0 0.0
      %4894 = vmatmul.mubr.f32.gmra.mrb[0].mxu0 %v4514
      %v4895 = vpop.f32.mrb[0].mxu0
      %v4896 = vadd.f32 %v4326, %v4895
      %v4897 = vpop.f32.mrb[0].mxu0
      %4898 = vmatprep.mubr.f32.mxu0 0.0
      %4899 = vmatmul.mubr.f32.gmra.mrb[0].mxu0 %v4517
      %v4900 = vpop.f32.mrb[0].mxu0
      %v4901 = vadd.f32 %v4326, %v4900
      %v4902 = vpop.f32.mrb[0].mxu0
      %4903 = vdwg.mxu0
      %v4904 = vmax.f32 %v4586, 0.0
      %v4905 = vmax.f32 %v4591, 0.0
      %v4906 = vmax.f32 %v4596, 0.0
      %v4907 = vmax.f32 %v4601, 0.0
      %v4908 = vmax.f32 %v4606, 0.0
      %v4909 = vmax.f32 %v4611, 0.0
      %v4910 = vmax.f32 %v4616, 0.0
      %v4911 = vmax.f32 %v4621, 0.0
      %v4912 = vmax.f32 %v4626, 0.0
      %v4913 = vmax.f32 %v4631, 0.0
      %v4914 = vmax.f32 %v4636, 0.0
      %v4915 = vmax.f32 %v4641, 0.0
      %v4916 = vmax.f32 %v4646, 0.0
      %v4917 = vmax.f32 %v4651, 0.0
      %v4918 = vmax.f32 %v4656, 0.0
      %v4919 = vmax.f32 %v4661, 0.0
      %v4920 = vmax.f32 %v4666, 0.0
      %v4921 = vmax.f32 %v4671, 0.0
      %v4922 = vmax.f32 %v4676, 0.0
      %v4923 = vmax.f32 %v4681, 0.0
      %v4924 = vmax.f32 %v4686, 0.0
      %v4925 = vmax.f32 %v4691, 0.0
      %v4926 = vmax.f32 %v4696, 0.0
      %v4927 = vmax.f32 %v4701, 0.0
      %v4928 = vmax.f32 %v4706, 0.0
      %v4929 = vmax.f32 %v4711, 0.0
      %v4930 = vmax.f32 %v4716, 0.0
      %v4931 = vmax.f32 %v4721, 0.0
      %v4932 = vmax.f32 %v4726, 0.0
      %v4933 = vmax.f32 %v4731, 0.0
      %v4934 = vmax.f32 %v4736, 0.0
      %v4935 = vmax.f32 %v4741, 0.0
      %v4936 = vmax.f32 %v4746, 0.0
      %v4937 = vmax.f32 %v4751, 0.0
      %v4938 = vmax.f32 %v4756, 0.0
      %v4939 = vmax.f32 %v4761, 0.0
      %v4940 = vmax.f32 %v4766, 0.0
      %v4941 = vmax.f32 %v4771, 0.0
      %v4942 = vmax.f32 %v4776, 0.0
      %v4943 = vmax.f32 %v4781, 0.0
      %v4944 = vmax.f32 %v4786, 0.0
      %v4945 = vmax.f32 %v4791, 0.0
      %v4946 = vmax.f32 %v4796, 0.0
      %v4947 = vmax.f32 %v4801, 0.0
      %v4948 = vmax.f32 %v4806, 0.0
      %v4949 = vmax.f32 %v4811, 0.0
      %v4950 = vmax.f32 %v4816, 0.0
      %v4951 = vmax.f32 %v4821, 0.0
      %v4952 = vmax.f32 %v4826, 0.0
      %v4953 = vmax.f32 %v4831, 0.0
      %v4954 = vmax.f32 %v4836, 0.0
      %v4955 = vmax.f32 %v4841, 0.0
      %v4956 = vmax.f32 %v4846, 0.0
      %v4957 = vmax.f32 %v4851, 0.0
      %v4958 = vmax.f32 %v4856, 0.0
      %v4959 = vmax.f32 %v4861, 0.0
      %v4960 = vmax.f32 %v4866, 0.0
      %v4961 = vmax.f32 %v4871, 0.0
      %v4962 = vmax.f32 %v4876, 0.0
      %v4963 = vmax.f32 %v4881, 0.0
      %v4964 = vmax.f32 %v4886, 0.0
      %v4965 = vmax.f32 %v4891, 0.0
      %v4966 = vmax.f32 %v4896, 0.0
      %v4967 = vmax.f32 %v4901, 0.0
      %s4968 = scalar_lea.vmem %s7, 64
      %v4969 = vld [vmem:[%s4968] sm:$0xff]
      %v4970 = vld [vmem:[%s4968 + $0x8] sm:$0xff]
      %v4971 = vld [vmem:[%s4968 + $0x10] sm:$0xff]
      %v4972 = vld [vmem:[%s4968 + $0x18] sm:$0xff]
      %v4973 = vld [vmem:[%s4968 + $0x20] sm:$0xff]
      %v4974 = vld [vmem:[%s4968 + $0x28] sm:$0xff]
      %v4975 = vld [vmem:[%s4968 + $0x30] sm:$0xff]
      %v4976 = vld [vmem:[%s4968 + $0x38] sm:$0xff]
      %v4977 = vld [vmem:[%s8 + $0x1] sm:$0x1]
      %v4978 = vlaneseq
      %v4979 = vshrl.u32 %v4978, 7
      %v4980 = vsub.s32 0, %v4979
      %v4981 = vrot.slane %v4977, %v4980
      %v4983 = vsel %vm2705, %v4904, 0
      %v4986 = vsel %vm2705, %v4905, 0
      %v4989 = vsel %vm2705, %v4906, 0
      %v4992 = vsel %vm2705, %v4907, 0
      %v4995 = vsel %vm2705, %v4908, 0
      %v4998 = vsel %vm2705, %v4909, 0
      %v5001 = vsel %vm2705, %v4910, 0
      %v5004 = vsel %vm2705, %v4911, 0
      %v5007 = vsel %vm2705, %v4912, 0
      %v5010 = vsel %vm2705, %v4913, 0
      %v5013 = vsel %vm2705, %v4914, 0
      %v5016 = vsel %vm2705, %v4915, 0
      %v5019 = vsel %vm2705, %v4916, 0
      %v5022 = vsel %vm2705, %v4917, 0
      %v5025 = vsel %vm2705, %v4918, 0
      %v5028 = vsel %vm2705, %v4919, 0
      %v5031 = vsel %vm2705, %v4920, 0
      %v5034 = vsel %vm2705, %v4921, 0
      %v5037 = vsel %vm2705, %v4922, 0
      %v5040 = vsel %vm2705, %v4923, 0
      %v5043 = vsel %vm2705, %v4924, 0
      %v5046 = vsel %vm2705, %v4925, 0
      %v5049 = vsel %vm2705, %v4926, 0
      %v5052 = vsel %vm2705, %v4927, 0
      %v5055 = vsel %vm2705, %v4928, 0
      %v5058 = vsel %vm2705, %v4929, 0
      %v5061 = vsel %vm2705, %v4930, 0
      %v5064 = vsel %vm2705, %v4931, 0
      %v5067 = vsel %vm2705, %v4932, 0
      %v5070 = vsel %vm2705, %v4933, 0
      %v5073 = vsel %vm2705, %v4934, 0
      %v5076 = vsel %vm2705, %v4935, 0
      %v5079 = vsel %vm2705, %v4936, 0
      %v5082 = vsel %vm2705, %v4937, 0
      %v5085 = vsel %vm2705, %v4938, 0
      %v5088 = vsel %vm2705, %v4939, 0
      %v5091 = vsel %vm2705, %v4940, 0
      %v5094 = vsel %vm2705, %v4941, 0
      %v5097 = vsel %vm2705, %v4942, 0
      %v5100 = vsel %vm2705, %v4943, 0
      %v5103 = vsel %vm2705, %v4944, 0
      %v5106 = vsel %vm2705, %v4945, 0
      %v5109 = vsel %vm2705, %v4946, 0
      %v5112 = vsel %vm2705, %v4947, 0
      %v5115 = vsel %vm2705, %v4948, 0
      %v5118 = vsel %vm2705, %v4949, 0
      %v5121 = vsel %vm2705, %v4950, 0
      %v5124 = vsel %vm2705, %v4951, 0
      %v5127 = vsel %vm2705, %v4952, 0
      %v5130 = vsel %vm2705, %v4953, 0
      %v5133 = vsel %vm2705, %v4954, 0
      %v5136 = vsel %vm2705, %v4955, 0
      %v5139 = vsel %vm2705, %v4956, 0
      %v5142 = vsel %vm2705, %v4957, 0
      %v5145 = vsel %vm2705, %v4958, 0
      %v5148 = vsel %vm2705, %v4959, 0
      %v5151 = vsel %vm2705, %v4960, 0
      %v5154 = vsel %vm2705, %v4961, 0
      %v5157 = vsel %vm2705, %v4962, 0
      %v5160 = vsel %vm2705, %v4963, 0
      %v5163 = vsel %vm2705, %v4964, 0
      %v5166 = vsel %vm2705, %v4965, 0
      %v5169 = vsel %vm2705, %v4966, 0
      %v5172 = vsel %vm2705, %v4967, 0
      %5174 = vmatprep.subr.mxu0 0.0
      %5175 = vmatpush1.msra.mxu0 %v4969
      %5176 = vmatprep.subr.mxu0 0.0
      %5177 = vmatpush1.msra.mxu0 %v4970
      %5178 = vmatprep.subr.mxu0 0.0
      %5179 = vmatpush1.msra.mxu0 %v4971
      %5180 = vmatprep.subr.mxu0 0.0
      %5181 = vmatpush1.msra.mxu0 %v4972
      %5182 = vmatprep.subr.mxu0 0.0
      %5183 = vmatpush1.msra.mxu0 %v4973
      %5184 = vmatprep.subr.mxu0 0.0
      %5185 = vmatpush1.msra.mxu0 %v4974
      %5186 = vmatprep.subr.mxu0 0.0
      %5187 = vmatpush1.msra.mxu0 %v4975
      %5188 = vmatprep.subr.mxu0 0.0
      %5189 = vmatpush1.msra.mxu0 %v4976
      %5190 = vmatprep.subr.mxu0 0.0
      %5191 = vmatpush1.msra.mxu0 0.0
      %5192 = vmatprep.subr.mxu0 0.0
      %5193 = vmatpush1.msra.mxu0 0.0
      %5194 = vmatprep.subr.mxu0 0.0
      %5195 = vmatpush1.msra.mxu0 0.0
      %5196 = vmatprep.subr.mxu0 0.0
      %5197 = vmatpush1.msra.mxu0 0.0
      %5198 = vmatprep.subr.mxu0 0.0
      %5199 = vmatpush1.msra.mxu0 0.0
      %5200 = vmatprep.subr.mxu0 0.0
      %5201 = vmatpush1.msra.mxu0 0.0
      %5202 = vmatprep.subr.mxu0 0.0
      %5203 = vmatpush1.msra.mxu0 0.0
      %5204 = vmatprep.subr.mxu0 0.0
      %5205 = vmatpush1.msra.mxu0 0.0
      %5206 = vmatprep.subr.mxu0 0.0
      %5207 = vmatpush1.msra.mxu0 0.0
      %5208 = vmatprep.subr.mxu0 0.0
      %5209 = vmatpush1.msra.mxu0 0.0
      %5210 = vmatprep.subr.mxu0 0.0
      %5211 = vmatpush1.msra.mxu0 0.0
      %5212 = vmatprep.subr.mxu0 0.0
      %5213 = vmatpush1.msra.mxu0 0.0
      %5214 = vmatprep.subr.mxu0 0.0
      %5215 = vmatpush1.msra.mxu0 0.0
      %5216 = vmatprep.subr.mxu0 0.0
      %5217 = vmatpush1.msra.mxu0 0.0
      %5218 = vmatprep.subr.mxu0 0.0
      %5219 = vmatpush1.msra.mxu0 0.0
      %5220 = vmatprep.subr.mxu0 0.0
      %5221 = vmatpush1.msra.mxu0 0.0
      %5222 = vmatprep.subr.mxu0 0.0
      %5223 = vmatpush1.msra.mxu0 0.0
      %5224 = vmatprep.subr.mxu0 0.0
      %5225 = vmatpush1.msra.mxu0 0.0
      %5226 = vmatprep.subr.mxu0 0.0
      %5227 = vmatpush1.msra.mxu0 0.0
      %5228 = vmatprep.subr.mxu0 0.0
      %5229 = vmatpush1.msra.mxu0 0.0
      %5230 = vmatprep.subr.mxu0 0.0
      %5231 = vmatpush1.msra.mxu0 0.0
      %5232 = vmatprep.subr.mxu0 0.0
      %5233 = vmatpush1.msra.mxu0 0.0
      %5234 = vmatprep.subr.mxu0 0.0
      %5235 = vmatpush1.msra.mxu0 0.0
      %5236 = vmatprep.subr.mxu0 0.0
      %5237 = vmatpush1.msra.mxu0 0.0
      %5238 = vmatprep.mubr.f32.mxu0 0.0
      %5239 = vmatmul.mubr.f32.gmra.mrb[0].mxu0 %v4983
      %v5240 = vpop.f32.mrb[0].mxu0
      %v5241 = vadd.f32 %v4981, %v5240
      %v5242 = vpop.f32.mrb[0].mxu0
      %5243 = vmatprep.mubr.f32.mxu0 0.0
      %5244 = vmatmul.mubr.f32.gmra.mrb[0].mxu0 %v4986
      %v5245 = vpop.f32.mrb[0].mxu0
      %v5246 = vadd.f32 %v4981, %v5245
      %v5247 = vpop.f32.mrb[0].mxu0
      %5248 = vmatprep.mubr.f32.mxu0 0.0
      %5249 = vmatmul.mubr.f32.gmra.mrb[0].mxu0 %v4989
      %v5250 = vpop.f32.mrb[0].mxu0
      %v5251 = vadd.f32 %v4981, %v5250
      %v5252 = vpop.f32.mrb[0].mxu0
      %5253 = vmatprep.mubr.f32.mxu0 0.0
      %5254 = vmatmul.mubr.f32.gmra.mrb[0].mxu0 %v4992
      %v5255 = vpop.f32.mrb[0].mxu0
      %v5256 = vadd.f32 %v4981, %v5255
      %v5257 = vpop.f32.mrb[0].mxu0
      %5258 = vmatprep.mubr.f32.mxu0 0.0
      %5259 = vmatmul.mubr.f32.gmra.mrb[0].mxu0 %v4995
      %v5260 = vpop.f32.mrb[0].mxu0
      %v5261 = vadd.f32 %v4981, %v5260
      %v5262 = vpop.f32.mrb[0].mxu0
      %5263 = vmatprep.mubr.f32.mxu0 0.0
      %5264 = vmatmul.mubr.f32.gmra.mrb[0].mxu0 %v4998
      %v5265 = vpop.f32.mrb[0].mxu0
      %v5266 = vadd.f32 %v4981, %v5265
      %v5267 = vpop.f32.mrb[0].mxu0
      %5268 = vmatprep.mubr.f32.mxu0 0.0
      %5269 = vmatmul.mubr.f32.gmra.mrb[0].mxu0 %v5001
      %v5270 = vpop.f32.mrb[0].mxu0
      %v5271 = vadd.f32 %v4981, %v5270
      %v5272 = vpop.f32.mrb[0].mxu0
      %5273 = vmatprep.mubr.f32.mxu0 0.0
      %5274 = vmatmul.mubr.f32.gmra.mrb[0].mxu0 %v5004
      %v5275 = vpop.f32.mrb[0].mxu0
      %v5276 = vadd.f32 %v4981, %v5275
      %v5277 = vpop.f32.mrb[0].mxu0
      %5278 = vmatprep.mubr.f32.mxu0 0.0
      %5279 = vmatmul.mubr.f32.gmra.mrb[0].mxu0 %v5007
      %v5280 = vpop.f32.mrb[0].mxu0
      %v5281 = vadd.f32 %v4981, %v5280
      %v5282 = vpop.f32.mrb[0].mxu0
      %5283 = vmatprep.mubr.f32.mxu0 0.0
      %5284 = vmatmul.mubr.f32.gmra.mrb[0].mxu0 %v5010
      %v5285 = vpop.f32.mrb[0].mxu0
      %v5286 = vadd.f32 %v4981, %v5285
      %v5287 = vpop.f32.mrb[0].mxu0
      %5288 = vmatprep.mubr.f32.mxu0 0.0
      %5289 = vmatmul.mubr.f32.gmra.mrb[0].mxu0 %v5013
      %v5290 = vpop.f32.mrb[0].mxu0
      %v5291 = vadd.f32 %v4981, %v5290
      %v5292 = vpop.f32.mrb[0].mxu0
      %5293 = vmatprep.mubr.f32.mxu0 0.0
      %5294 = vmatmul.mubr.f32.gmra.mrb[0].mxu0 %v5016
      %v5295 = vpop.f32.mrb[0].mxu0
      %v5296 = vadd.f32 %v4981, %v5295
      %v5297 = vpop.f32.mrb[0].mxu0
      %5298 = vmatprep.mubr.f32.mxu0 0.0
      %5299 = vmatmul.mubr.f32.gmra.mrb[0].mxu0 %v5019
      %v5300 = vpop.f32.mrb[0].mxu0
      %v5301 = vadd.f32 %v4981, %v5300
      %v5302 = vpop.f32.mrb[0].mxu0
      %5303 = vmatprep.mubr.f32.mxu0 0.0
      %5304 = vmatmul.mubr.f32.gmra.mrb[0].mxu0 %v5022
      %v5305 = vpop.f32.mrb[0].mxu0
      %v5306 = vadd.f32 %v4981, %v5305
      %v5307 = vpop.f32.mrb[0].mxu0
      %5308 = vmatprep.mubr.f32.mxu0 0.0
      %5309 = vmatmul.mubr.f32.gmra.mrb[0].mxu0 %v5025
      %v5310 = vpop.f32.mrb[0].mxu0
      %v5311 = vadd.f32 %v4981, %v5310
      %v5312 = vpop.f32.mrb[0].mxu0
      %5313 = vmatprep.mubr.f32.mxu0 0.0
      %5314 = vmatmul.mubr.f32.gmra.mrb[0].mxu0 %v5028
      %v5315 = vpop.f32.mrb[0].mxu0
      %v5316 = vadd.f32 %v4981, %v5315
      %v5317 = vpop.f32.mrb[0].mxu0
      %5318 = vmatprep.mubr.f32.mxu0 0.0
      %5319 = vmatmul.mubr.f32.gmra.mrb[0].mxu0 %v5031
      %v5320 = vpop.f32.mrb[0].mxu0
      %v5321 = vadd.f32 %v4981, %v5320
      %v5322 = vpop.f32.mrb[0].mxu0
      %5323 = vmatprep.mubr.f32.mxu0 0.0
      %5324 = vmatmul.mubr.f32.gmra.mrb[0].mxu0 %v5034
      %v5325 = vpop.f32.mrb[0].mxu0
      %v5326 = vadd.f32 %v4981, %v5325
      %v5327 = vpop.f32.mrb[0].mxu0
      %5328 = vmatprep.mubr.f32.mxu0 0.0
      %5329 = vmatmul.mubr.f32.gmra.mrb[0].mxu0 %v5037
      %v5330 = vpop.f32.mrb[0].mxu0
      %v5331 = vadd.f32 %v4981, %v5330
      %v5332 = vpop.f32.mrb[0].mxu0
      %5333 = vmatprep.mubr.f32.mxu0 0.0
      %5334 = vmatmul.mubr.f32.gmra.mrb[0].mxu0 %v5040
      %v5335 = vpop.f32.mrb[0].mxu0
      %v5336 = vadd.f32 %v4981, %v5335
      %v5337 = vpop.f32.mrb[0].mxu0
      %5338 = vmatprep.mubr.f32.mxu0 0.0
      %5339 = vmatmul.mubr.f32.gmra.mrb[0].mxu0 %v5043
      %v5340 = vpop.f32.mrb[0].mxu0
      %v5341 = vadd.f32 %v4981, %v5340
      %v5342 = vpop.f32.mrb[0].mxu0
      %5343 = vmatprep.mubr.f32.mxu0 0.0
      %5344 = vmatmul.mubr.f32.gmra.mrb[0].mxu0 %v5046
      %v5345 = vpop.f32.mrb[0].mxu0
      %v5346 = vadd.f32 %v4981, %v5345
      %v5347 = vpop.f32.mrb[0].mxu0
      %5348 = vmatprep.mubr.f32.mxu0 0.0
      %5349 = vmatmul.mubr.f32.gmra.mrb[0].mxu0 %v5049
      %v5350 = vpop.f32.mrb[0].mxu0
      %v5351 = vadd.f32 %v4981, %v5350
      %v5352 = vpop.f32.mrb[0].mxu0
      %5353 = vmatprep.mubr.f32.mxu0 0.0
      %5354 = vmatmul.mubr.f32.gmra.mrb[0].mxu0 %v5052
      %v5355 = vpop.f32.mrb[0].mxu0
      %v5356 = vadd.f32 %v4981, %v5355
      %v5357 = vpop.f32.mrb[0].mxu0
      %5358 = vmatprep.mubr.f32.mxu0 0.0
      %5359 = vmatmul.mubr.f32.gmra.mrb[0].mxu0 %v5055
      %v5360 = vpop.f32.mrb[0].mxu0
      %v5361 = vadd.f32 %v4981, %v5360
      %v5362 = vpop.f32.mrb[0].mxu0
      %5363 = vmatprep.mubr.f32.mxu0 0.0
      %5364 = vmatmul.mubr.f32.gmra.mrb[0].mxu0 %v5058
      %v5365 = vpop.f32.mrb[0].mxu0
      %v5366 = vadd.f32 %v4981, %v5365
      %v5367 = vpop.f32.mrb[0].mxu0
      %5368 = vmatprep.mubr.f32.mxu0 0.0
      %5369 = vmatmul.mubr.f32.gmra.mrb[0].mxu0 %v5061
      %v5370 = vpop.f32.mrb[0].mxu0
      %v5371 = vadd.f32 %v4981, %v5370
      %v5372 = vpop.f32.mrb[0].mxu0
      %5373 = vmatprep.mubr.f32.mxu0 0.0
      %5374 = vmatmul.mubr.f32.gmra.mrb[0].mxu0 %v5064
      %v5375 = vpop.f32.mrb[0].mxu0
      %v5376 = vadd.f32 %v4981, %v5375
      %v5377 = vpop.f32.mrb[0].mxu0
      %5378 = vmatprep.mubr.f32.mxu0 0.0
      %5379 = vmatmul.mubr.f32.gmra.mrb[0].mxu0 %v5067
      %v5380 = vpop.f32.mrb[0].mxu0
      %v5381 = vadd.f32 %v4981, %v5380
      %v5382 = vpop.f32.mrb[0].mxu0
      %5383 = vmatprep.mubr.f32.mxu0 0.0
      %5384 = vmatmul.mubr.f32.gmra.mrb[0].mxu0 %v5070
      %v5385 = vpop.f32.mrb[0].mxu0
      %v5386 = vadd.f32 %v4981, %v5385
      %v5387 = vpop.f32.mrb[0].mxu0
      %5388 = vmatprep.mubr.f32.mxu0 0.0
      %5389 = vmatmul.mubr.f32.gmra.mrb[0].mxu0 %v5073
      %v5390 = vpop.f32.mrb[0].mxu0
      %v5391 = vadd.f32 %v4981, %v5390
      %v5392 = vpop.f32.mrb[0].mxu0
      %5393 = vmatprep.mubr.f32.mxu0 0.0
      %5394 = vmatmul.mubr.f32.gmra.mrb[0].mxu0 %v5076
      %v5395 = vpop.f32.mrb[0].mxu0
      %v5396 = vadd.f32 %v4981, %v5395
      %v5397 = vpop.f32.mrb[0].mxu0
      %5398 = vmatprep.mubr.f32.mxu0 0.0
      %5399 = vmatmul.mubr.f32.gmra.mrb[0].mxu0 %v5079
      %v5400 = vpop.f32.mrb[0].mxu0
      %v5401 = vadd.f32 %v4981, %v5400
      %v5402 = vpop.f32.mrb[0].mxu0
      %5403 = vmatprep.mubr.f32.mxu0 0.0
      %5404 = vmatmul.mubr.f32.gmra.mrb[0].mxu0 %v5082
      %v5405 = vpop.f32.mrb[0].mxu0
      %v5406 = vadd.f32 %v4981, %v5405
      %v5407 = vpop.f32.mrb[0].mxu0
      %5408 = vmatprep.mubr.f32.mxu0 0.0
      %5409 = vmatmul.mubr.f32.gmra.mrb[0].mxu0 %v5085
      %v5410 = vpop.f32.mrb[0].mxu0
      %v5411 = vadd.f32 %v4981, %v5410
      %v5412 = vpop.f32.mrb[0].mxu0
      %5413 = vmatprep.mubr.f32.mxu0 0.0
      %5414 = vmatmul.mubr.f32.gmra.mrb[0].mxu0 %v5088
      %v5415 = vpop.f32.mrb[0].mxu0
      %v5416 = vadd.f32 %v4981, %v5415
      %v5417 = vpop.f32.mrb[0].mxu0
      %5418 = vmatprep.mubr.f32.mxu0 0.0
      %5419 = vmatmul.mubr.f32.gmra.mrb[0].mxu0 %v5091
      %v5420 = vpop.f32.mrb[0].mxu0
      %v5421 = vadd.f32 %v4981, %v5420
      %v5422 = vpop.f32.mrb[0].mxu0
      %5423 = vmatprep.mubr.f32.mxu0 0.0
      %5424 = vmatmul.mubr.f32.gmra.mrb[0].mxu0 %v5094
      %v5425 = vpop.f32.mrb[0].mxu0
      %v5426 = vadd.f32 %v4981, %v5425
      %v5427 = vpop.f32.mrb[0].mxu0
      %5428 = vmatprep.mubr.f32.mxu0 0.0
      %5429 = vmatmul.mubr.f32.gmra.mrb[0].mxu0 %v5097
      %v5430 = vpop.f32.mrb[0].mxu0
      %v5431 = vadd.f32 %v4981, %v5430
      %v5432 = vpop.f32.mrb[0].mxu0
      %5433 = vmatprep.mubr.f32.mxu0 0.0
      %5434 = vmatmul.mubr.f32.gmra.mrb[0].mxu0 %v5100
      %v5435 = vpop.f32.mrb[0].mxu0
      %v5436 = vadd.f32 %v4981, %v5435
      %v5437 = vpop.f32.mrb[0].mxu0
      %5438 = vmatprep.mubr.f32.mxu0 0.0
      %5439 = vmatmul.mubr.f32.gmra.mrb[0].mxu0 %v5103
      %v5440 = vpop.f32.mrb[0].mxu0
      %v5441 = vadd.f32 %v4981, %v5440
      %v5442 = vpop.f32.mrb[0].mxu0
      %5443 = vmatprep.mubr.f32.mxu0 0.0
      %5444 = vmatmul.mubr.f32.gmra.mrb[0].mxu0 %v5106
      %v5445 = vpop.f32.mrb[0].mxu0
      %v5446 = vadd.f32 %v4981, %v5445
      %v5447 = vpop.f32.mrb[0].mxu0
      %5448 = vmatprep.mubr.f32.mxu0 0.0
      %5449 = vmatmul.mubr.f32.gmra.mrb[0].mxu0 %v5109
      %v5450 = vpop.f32.mrb[0].mxu0
      %v5451 = vadd.f32 %v4981, %v5450
      %v5452 = vpop.f32.mrb[0].mxu0
      %5453 = vmatprep.mubr.f32.mxu0 0.0
      %5454 = vmatmul.mubr.f32.gmra.mrb[0].mxu0 %v5112
      %v5455 = vpop.f32.mrb[0].mxu0
      %v5456 = vadd.f32 %v4981, %v5455
      %v5457 = vpop.f32.mrb[0].mxu0
      %5458 = vmatprep.mubr.f32.mxu0 0.0
      %5459 = vmatmul.mubr.f32.gmra.mrb[0].mxu0 %v5115
      %v5460 = vpop.f32.mrb[0].mxu0
      %v5461 = vadd.f32 %v4981, %v5460
      %v5462 = vpop.f32.mrb[0].mxu0
      %5463 = vmatprep.mubr.f32.mxu0 0.0
      %5464 = vmatmul.mubr.f32.gmra.mrb[0].mxu0 %v5118
      %v5465 = vpop.f32.mrb[0].mxu0
      %v5466 = vadd.f32 %v4981, %v5465
      %v5467 = vpop.f32.mrb[0].mxu0
      %5468 = vmatprep.mubr.f32.mxu0 0.0
      %5469 = vmatmul.mubr.f32.gmra.mrb[0].mxu0 %v5121
      %v5470 = vpop.f32.mrb[0].mxu0
      %v5471 = vadd.f32 %v4981, %v5470
      %v5472 = vpop.f32.mrb[0].mxu0
      %5473 = vmatprep.mubr.f32.mxu0 0.0
      %5474 = vmatmul.mubr.f32.gmra.mrb[0].mxu0 %v5124
      %v5475 = vpop.f32.mrb[0].mxu0
      %v5476 = vadd.f32 %v4981, %v5475
      %v5477 = vpop.f32.mrb[0].mxu0
      %5478 = vmatprep.mubr.f32.mxu0 0.0
      %5479 = vmatmul.mubr.f32.gmra.mrb[0].mxu0 %v5127
      %v5480 = vpop.f32.mrb[0].mxu0
      %v5481 = vadd.f32 %v4981, %v5480
      %v5482 = vpop.f32.mrb[0].mxu0
      %5483 = vmatprep.mubr.f32.mxu0 0.0
      %5484 = vmatmul.mubr.f32.gmra.mrb[0].mxu0 %v5130
      %v5485 = vpop.f32.mrb[0].mxu0
      %v5486 = vadd.f32 %v4981, %v5485
      %v5487 = vpop.f32.mrb[0].mxu0
      %5488 = vmatprep.mubr.f32.mxu0 0.0
      %5489 = vmatmul.mubr.f32.gmra.mrb[0].mxu0 %v5133
      %v5490 = vpop.f32.mrb[0].mxu0
      %v5491 = vadd.f32 %v4981, %v5490
      %v5492 = vpop.f32.mrb[0].mxu0
      %5493 = vmatprep.mubr.f32.mxu0 0.0
      %5494 = vmatmul.mubr.f32.gmra.mrb[0].mxu0 %v5136
      %v5495 = vpop.f32.mrb[0].mxu0
      %v5496 = vadd.f32 %v4981, %v5495
      %v5497 = vpop.f32.mrb[0].mxu0
      %5498 = vmatprep.mubr.f32.mxu0 0.0
      %5499 = vmatmul.mubr.f32.gmra.mrb[0].mxu0 %v5139
      %v5500 = vpop.f32.mrb[0].mxu0
      %v5501 = vadd.f32 %v4981, %v5500
      %v5502 = vpop.f32.mrb[0].mxu0
      %5503 = vmatprep.mubr.f32.mxu0 0.0
      %5504 = vmatmul.mubr.f32.gmra.mrb[0].mxu0 %v5142
      %v5505 = vpop.f32.mrb[0].mxu0
      %v5506 = vadd.f32 %v4981, %v5505
      %v5507 = vpop.f32.mrb[0].mxu0
      %5508 = vmatprep.mubr.f32.mxu0 0.0
      %5509 = vmatmul.mubr.f32.gmra.mrb[0].mxu0 %v5145
      %v5510 = vpop.f32.mrb[0].mxu0
      %v5511 = vadd.f32 %v4981, %v5510
      %v5512 = vpop.f32.mrb[0].mxu0
      %5513 = vmatprep.mubr.f32.mxu0 0.0
      %5514 = vmatmul.mubr.f32.gmra.mrb[0].mxu0 %v5148
      %v5515 = vpop.f32.mrb[0].mxu0
      %v5516 = vadd.f32 %v4981, %v5515
      %v5517 = vpop.f32.mrb[0].mxu0
      %5518 = vmatprep.mubr.f32.mxu0 0.0
      %5519 = vmatmul.mubr.f32.gmra.mrb[0].mxu0 %v5151
      %v5520 = vpop.f32.mrb[0].mxu0
      %v5521 = vadd.f32 %v4981, %v5520
      %v5522 = vpop.f32.mrb[0].mxu0
      %5523 = vmatprep.mubr.f32.mxu0 0.0
      %5524 = vmatmul.mubr.f32.gmra.mrb[0].mxu0 %v5154
      %v5525 = vpop.f32.mrb[0].mxu0
      %v5526 = vadd.f32 %v4981, %v5525
      %v5527 = vpop.f32.mrb[0].mxu0
      %5528 = vmatprep.mubr.f32.mxu0 0.0
      %5529 = vmatmul.mubr.f32.gmra.mrb[0].mxu0 %v5157
      %v5530 = vpop.f32.mrb[0].mxu0
      %v5531 = vadd.f32 %v4981, %v5530
      %v5532 = vpop.f32.mrb[0].mxu0
      %5533 = vmatprep.mubr.f32.mxu0 0.0
      %5534 = vmatmul.mubr.f32.gmra.mrb[0].mxu0 %v5160
      %v5535 = vpop.f32.mrb[0].mxu0
      %v5536 = vadd.f32 %v4981, %v5535
      %v5537 = vpop.f32.mrb[0].mxu0
      %5538 = vmatprep.mubr.f32.mxu0 0.0
      %5539 = vmatmul.mubr.f32.gmra.mrb[0].mxu0 %v5163
      %v5540 = vpop.f32.mrb[0].mxu0
      %v5541 = vadd.f32 %v4981, %v5540
      %v5542 = vpop.f32.mrb[0].mxu0
      %5543 = vmatprep.mubr.f32.mxu0 0.0
      %5544 = vmatmul.mubr.f32.gmra.mrb[0].mxu0 %v5166
      %v5545 = vpop.f32.mrb[0].mxu0
      %v5546 = vadd.f32 %v4981, %v5545
      %v5547 = vpop.f32.mrb[0].mxu0
      %5548 = vmatprep.mubr.f32.mxu0 0.0
      %5549 = vmatmul.mubr.f32.gmra.mrb[0].mxu0 %v5169
      %v5550 = vpop.f32.mrb[0].mxu0
      %v5551 = vadd.f32 %v4981, %v5550
      %v5552 = vpop.f32.mrb[0].mxu0
      %5553 = vmatprep.mubr.f32.mxu0 0.0
      %5554 = vmatmul.mubr.f32.gmra.mrb[0].mxu0 %v5172
      %v5555 = vpop.f32.mrb[0].mxu0
      %v5556 = vadd.f32 %v4981, %v5555
      %v5557 = vpop.f32.mrb[0].mxu0
      %5558 = vdwg.mxu0
      %v5559 = vadd.f32 %v3283, %v5241
      %v5560 = vadd.f32 %v3284, %v5246
      %v5561 = vadd.f32 %v3285, %v5251
      %v5562 = vadd.f32 %v3286, %v5256
      %v5563 = vadd.f32 %v3287, %v5261
      %v5564 = vadd.f32 %v3288, %v5266
      %v5565 = vadd.f32 %v3289, %v5271
      %v5566 = vadd.f32 %v3290, %v5276
      %v5567 = vadd.f32 %v3291, %v5281
      %v5568 = vadd.f32 %v3292, %v5286
      %v5569 = vadd.f32 %v3293, %v5291
      %v5570 = vadd.f32 %v3294, %v5296
      %v5571 = vadd.f32 %v3295, %v5301
      %v5572 = vadd.f32 %v3296, %v5306
      %v5573 = vadd.f32 %v3297, %v5311
      %v5574 = vadd.f32 %v3298, %v5316
      %v5575 = vadd.f32 %v3299, %v5321
      %v5576 = vadd.f32 %v3300, %v5326
      %v5577 = vadd.f32 %v3301, %v5331
      %v5578 = vadd.f32 %v3302, %v5336
      %v5579 = vadd.f32 %v3303, %v5341
      %v5580 = vadd.f32 %v3304, %v5346
      %v5581 = vadd.f32 %v3305, %v5351
      %v5582 = vadd.f32 %v3306, %v5356
      %v5583 = vadd.f32 %v3307, %v5361
      %v5584 = vadd.f32 %v3308, %v5366
      %v5585 = vadd.f32 %v3309, %v5371
      %v5586 = vadd.f32 %v3310, %v5376
      %v5587 = vadd.f32 %v3311, %v5381
      %v5588 = vadd.f32 %v3312, %v5386
      %v5589 = vadd.f32 %v3313, %v5391
      %v5590 = vadd.f32 %v3314, %v5396
      %v5591 = vadd.f32 %v3315, %v5401
      %v5592 = vadd.f32 %v3316, %v5406
      %v5593 = vadd.f32 %v3317, %v5411
      %v5594 = vadd.f32 %v3318, %v5416
      %v5595 = vadd.f32 %v3319, %v5421
      %v5596 = vadd.f32 %v3320, %v5426
      %v5597 = vadd.f32 %v3321, %v5431
      %v5598 = vadd.f32 %v3322, %v5436
      %v5599 = vadd.f32 %v3323, %v5441
      %v5600 = vadd.f32 %v3324, %v5446
      %v5601 = vadd.f32 %v3325, %v5451
      %v5602 = vadd.f32 %v3326, %v5456
      %v5603 = vadd.f32 %v3327, %v5461
      %v5604 = vadd.f32 %v3328, %v5466
      %v5605 = vadd.f32 %v3329, %v5471
      %v5606 = vadd.f32 %v3330, %v5476
      %v5607 = vadd.f32 %v3331, %v5481
      %v5608 = vadd.f32 %v3332, %v5486
      %v5609 = vadd.f32 %v3333, %v5491
      %v5610 = vadd.f32 %v3334, %v5496
      %v5611 = vadd.f32 %v3335, %v5501
      %v5612 = vadd.f32 %v3336, %v5506
      %v5613 = vadd.f32 %v3337, %v5511
      %v5614 = vadd.f32 %v3338, %v5516
      %v5615 = vadd.f32 %v3339, %v5521
      %v5616 = vadd.f32 %v3340, %v5526
      %v5617 = vadd.f32 %v3341, %v5531
      %v5618 = vadd.f32 %v3342, %v5536
      %v5619 = vadd.f32 %v3343, %v5541
      %v5620 = vadd.f32 %v3344, %v5546
      %v5621 = vadd.f32 %v3345, %v5551
      %v5622 = vadd.f32 %v3346, %v5556
      %v5623 = vld [vmem:[%s9] sm:$0x1]
      %v5624 = vld [vmem:[%s10] sm:$0x1]
      %v5625 = vsel %vm1072, %v5559, 0.0
      %5626 = vadd.xlane.f32.xlu0 %v5625
      %v5627 = vpop.xlane.xlu0 %5626
      %v5628 = vsel %vm1072, %v5560, 0.0
      %5629 = vadd.xlane.f32.xlu0 %v5628
      %v5630 = vpop.xlane.xlu0 %5629
      %v5631 = vsel %vm1072, %v5561, 0.0
      %5632 = vadd.xlane.f32.xlu0 %v5631
      %v5633 = vpop.xlane.xlu0 %5632
      %v5634 = vsel %vm1072, %v5562, 0.0
      %5635 = vadd.xlane.f32.xlu0 %v5634
      %v5636 = vpop.xlane.xlu0 %5635
      %v5637 = vsel %vm1072, %v5563, 0.0
      %5638 = vadd.xlane.f32.xlu0 %v5637
      %v5639 = vpop.xlane.xlu0 %5638
      %v5640 = vsel %vm1072, %v5564, 0.0
      %5641 = vadd.xlane.f32.xlu0 %v5640
      %v5642 = vpop.xlane.xlu0 %5641
      %v5643 = vsel %vm1072, %v5565, 0.0
      %5644 = vadd.xlane.f32.xlu0 %v5643
      %v5645 = vpop.xlane.xlu0 %5644
      %v5646 = vsel %vm1072, %v5566, 0.0
      %5647 = vadd.xlane.f32.xlu0 %v5646
      %v5648 = vpop.xlane.xlu0 %5647
      %v5649 = vsel %vm1072, %v5567, 0.0
      %5650 = vadd.xlane.f32.xlu0 %v5649
      %v5651 = vpop.xlane.xlu0 %5650
      %v5652 = vsel %vm1072, %v5568, 0.0
      %5653 = vadd.xlane.f32.xlu0 %v5652
      %v5654 = vpop.xlane.xlu0 %5653
      %v5655 = vsel %vm1072, %v5569, 0.0
      %5656 = vadd.xlane.f32.xlu0 %v5655
      %v5657 = vpop.xlane.xlu0 %5656
      %v5658 = vsel %vm1072, %v5570, 0.0
      %5659 = vadd.xlane.f32.xlu0 %v5658
      %v5660 = vpop.xlane.xlu0 %5659
      %v5661 = vsel %vm1072, %v5571, 0.0
      %5662 = vadd.xlane.f32.xlu0 %v5661
      %v5663 = vpop.xlane.xlu0 %5662
      %v5664 = vsel %vm1072, %v5572, 0.0
      %5665 = vadd.xlane.f32.xlu0 %v5664
      %v5666 = vpop.xlane.xlu0 %5665
      %v5667 = vsel %vm1072, %v5573, 0.0
      %5668 = vadd.xlane.f32.xlu0 %v5667
      %v5669 = vpop.xlane.xlu0 %5668
      %v5670 = vsel %vm1072, %v5574, 0.0
      %5671 = vadd.xlane.f32.xlu0 %v5670
      %v5672 = vpop.xlane.xlu0 %5671
      %v5673 = vsel %vm1072, %v5575, 0.0
      %5674 = vadd.xlane.f32.xlu0 %v5673
      %v5675 = vpop.xlane.xlu0 %5674
      %v5676 = vsel %vm1072, %v5576, 0.0
      %5677 = vadd.xlane.f32.xlu0 %v5676
      %v5678 = vpop.xlane.xlu0 %5677
      %v5679 = vsel %vm1072, %v5577, 0.0
      %5680 = vadd.xlane.f32.xlu0 %v5679
      %v5681 = vpop.xlane.xlu0 %5680
      %v5682 = vsel %vm1072, %v5578, 0.0
      %5683 = vadd.xlane.f32.xlu0 %v5682
      %v5684 = vpop.xlane.xlu0 %5683
      %v5685 = vsel %vm1072, %v5579, 0.0
      %5686 = vadd.xlane.f32.xlu0 %v5685
      %v5687 = vpop.xlane.xlu0 %5686
      %v5688 = vsel %vm1072, %v5580, 0.0
      %5689 = vadd.xlane.f32.xlu0 %v5688
      %v5690 = vpop.xlane.xlu0 %5689
      %v5691 = vsel %vm1072, %v5581, 0.0
      %5692 = vadd.xlane.f32.xlu0 %v5691
      %v5693 = vpop.xlane.xlu0 %5692
      %v5694 = vsel %vm1072, %v5582, 0.0
      %5695 = vadd.xlane.f32.xlu0 %v5694
      %v5696 = vpop.xlane.xlu0 %5695
      %v5697 = vsel %vm1072, %v5583, 0.0
      %5698 = vadd.xlane.f32.xlu0 %v5697
      %v5699 = vpop.xlane.xlu0 %5698
      %v5700 = vsel %vm1072, %v5584, 0.0
      %5701 = vadd.xlane.f32.xlu0 %v5700
      %v5702 = vpop.xlane.xlu0 %5701
      %v5703 = vsel %vm1072, %v5585, 0.0
      %5704 = vadd.xlane.f32.xlu0 %v5703
      %v5705 = vpop.xlane.xlu0 %5704
      %v5706 = vsel %vm1072, %v5586, 0.0
      %5707 = vadd.xlane.f32.xlu0 %v5706
      %v5708 = vpop.xlane.xlu0 %5707
      %v5709 = vsel %vm1072, %v5587, 0.0
      %5710 = vadd.xlane.f32.xlu0 %v5709
      %v5711 = vpop.xlane.xlu0 %5710
      %v5712 = vsel %vm1072, %v5588, 0.0
      %5713 = vadd.xlane.f32.xlu0 %v5712
      %v5714 = vpop.xlane.xlu0 %5713
      %v5715 = vsel %vm1072, %v5589, 0.0
      %5716 = vadd.xlane.f32.xlu0 %v5715
      %v5717 = vpop.xlane.xlu0 %5716
      %v5718 = vsel %vm1072, %v5590, 0.0
      %5719 = vadd.xlane.f32.xlu0 %v5718
      %v5720 = vpop.xlane.xlu0 %5719
      %v5721 = vsel %vm1072, %v5591, 0.0
      %5722 = vadd.xlane.f32.xlu0 %v5721
      %v5723 = vpop.xlane.xlu0 %5722
      %v5724 = vsel %vm1072, %v5592, 0.0
      %5725 = vadd.xlane.f32.xlu0 %v5724
      %v5726 = vpop.xlane.xlu0 %5725
      %v5727 = vsel %vm1072, %v5593, 0.0
      %5728 = vadd.xlane.f32.xlu0 %v5727
      %v5729 = vpop.xlane.xlu0 %5728
      %v5730 = vsel %vm1072, %v5594, 0.0
      %5731 = vadd.xlane.f32.xlu0 %v5730
      %v5732 = vpop.xlane.xlu0 %5731
      %v5733 = vsel %vm1072, %v5595, 0.0
      %5734 = vadd.xlane.f32.xlu0 %v5733
      %v5735 = vpop.xlane.xlu0 %5734
      %v5736 = vsel %vm1072, %v5596, 0.0
      %5737 = vadd.xlane.f32.xlu0 %v5736
      %v5738 = vpop.xlane.xlu0 %5737
      %v5739 = vsel %vm1072, %v5597, 0.0
      %5740 = vadd.xlane.f32.xlu0 %v5739
      %v5741 = vpop.xlane.xlu0 %5740
      %v5742 = vsel %vm1072, %v5598, 0.0
      %5743 = vadd.xlane.f32.xlu0 %v5742
      %v5744 = vpop.xlane.xlu0 %5743
      %v5745 = vsel %vm1072, %v5599, 0.0
      %5746 = vadd.xlane.f32.xlu0 %v5745
      %v5747 = vpop.xlane.xlu0 %5746
      %v5748 = vsel %vm1072, %v5600, 0.0
      %5749 = vadd.xlane.f32.xlu0 %v5748
      %v5750 = vpop.xlane.xlu0 %5749
      %v5751 = vsel %vm1072, %v5601, 0.0
      %5752 = vadd.xlane.f32.xlu0 %v5751
      %v5753 = vpop.xlane.xlu0 %5752
      %v5754 = vsel %vm1072, %v5602, 0.0
      %5755 = vadd.xlane.f32.xlu0 %v5754
      %v5756 = vpop.xlane.xlu0 %5755
      %v5757 = vsel %vm1072, %v5603, 0.0
      %5758 = vadd.xlane.f32.xlu0 %v5757
      %v5759 = vpop.xlane.xlu0 %5758
      %v5760 = vsel %vm1072, %v5604, 0.0
      %5761 = vadd.xlane.f32.xlu0 %v5760
      %v5762 = vpop.xlane.xlu0 %5761
      %v5763 = vsel %vm1072, %v5605, 0.0
      %5764 = vadd.xlane.f32.xlu0 %v5763
      %v5765 = vpop.xlane.xlu0 %5764
      %v5766 = vsel %vm1072, %v5606, 0.0
      %5767 = vadd.xlane.f32.xlu0 %v5766
      %v5768 = vpop.xlane.xlu0 %5767
      %v5769 = vsel %vm1072, %v5607, 0.0
      %5770 = vadd.xlane.f32.xlu0 %v5769
      %v5771 = vpop.xlane.xlu0 %5770
      %v5772 = vsel %vm1072, %v5608, 0.0
      %5773 = vadd.xlane.f32.xlu0 %v5772
      %v5774 = vpop.xlane.xlu0 %5773
      %v5775 = vsel %vm1072, %v5609, 0.0
      %5776 = vadd.xlane.f32.xlu0 %v5775
      %v5777 = vpop.xlane.xlu0 %5776
      %v5778 = vsel %vm1072, %v5610, 0.0
      %5779 = vadd.xlane.f32.xlu0 %v5778
      %v5780 = vpop.xlane.xlu0 %5779
      %v5781 = vsel %vm1072, %v5611, 0.0
      %5782 = vadd.xlane.f32.xlu0 %v5781
      %v5783 = vpop.xlane.xlu0 %5782
      %v5784 = vsel %vm1072, %v5612, 0.0
      %5785 = vadd.xlane.f32.xlu0 %v5784
      %v5786 = vpop.xlane.xlu0 %5785
      %v5787 = vsel %vm1072, %v5613, 0.0
      %5788 = vadd.xlane.f32.xlu0 %v5787
      %v5789 = vpop.xlane.xlu0 %5788
      %v5790 = vsel %vm1072, %v5614, 0.0
      %5791 = vadd.xlane.f32.xlu0 %v5790
      %v5792 = vpop.xlane.xlu0 %5791
      %v5793 = vsel %vm1072, %v5615, 0.0
      %5794 = vadd.xlane.f32.xlu0 %v5793
      %v5795 = vpop.xlane.xlu0 %5794
      %v5796 = vsel %vm1072, %v5616, 0.0
      %5797 = vadd.xlane.f32.xlu0 %v5796
      %v5798 = vpop.xlane.xlu0 %5797
      %v5799 = vsel %vm1072, %v5617, 0.0
      %5800 = vadd.xlane.f32.xlu0 %v5799
      %v5801 = vpop.xlane.xlu0 %5800
      %v5802 = vsel %vm1072, %v5618, 0.0
      %5803 = vadd.xlane.f32.xlu0 %v5802
      %v5804 = vpop.xlane.xlu0 %5803
      %v5805 = vsel %vm1072, %v5619, 0.0
      %5806 = vadd.xlane.f32.xlu0 %v5805
      %v5807 = vpop.xlane.xlu0 %5806
      %v5808 = vsel %vm1072, %v5620, 0.0
      %5809 = vadd.xlane.f32.xlu0 %v5808
      %v5810 = vpop.xlane.xlu0 %5809
      %v5811 = vsel %vm1072, %v5621, 0.0
      %5812 = vadd.xlane.f32.xlu0 %v5811
      %v5813 = vpop.xlane.xlu0 %5812
      %v5814 = vsel %vm1072, %v5622, 0.0
      %5815 = vadd.xlane.f32.xlu0 %v5814
      %v5816 = vpop.xlane.xlu0 %5815
      %v5817 = vmul.f32 %v5627, %v1265
      %v5818 = vmul.f32 %v5630, %v1265
      %v5819 = vmul.f32 %v5633, %v1265
      %v5820 = vmul.f32 %v5636, %v1265
      %v5821 = vmul.f32 %v5639, %v1265
      %v5822 = vmul.f32 %v5642, %v1265
      %v5823 = vmul.f32 %v5645, %v1265
      %v5824 = vmul.f32 %v5648, %v1265
      %v5825 = vmul.f32 %v5651, %v1265
      %v5826 = vmul.f32 %v5654, %v1265
      %v5827 = vmul.f32 %v5657, %v1265
      %v5828 = vmul.f32 %v5660, %v1265
      %v5829 = vmul.f32 %v5663, %v1265
      %v5830 = vmul.f32 %v5666, %v1265
      %v5831 = vmul.f32 %v5669, %v1265
      %v5832 = vmul.f32 %v5672, %v1265
      %v5833 = vmul.f32 %v5675, %v1265
      %v5834 = vmul.f32 %v5678, %v1265
      %v5835 = vmul.f32 %v5681, %v1265
      %v5836 = vmul.f32 %v5684, %v1265
      %v5837 = vmul.f32 %v5687, %v1265
      %v5838 = vmul.f32 %v5690, %v1265
      %v5839 = vmul.f32 %v5693, %v1265
      %v5840 = vmul.f32 %v5696, %v1265
      %v5841 = vmul.f32 %v5699, %v1265
      %v5842 = vmul.f32 %v5702, %v1265
      %v5843 = vmul.f32 %v5705, %v1265
      %v5844 = vmul.f32 %v5708, %v1265
      %v5845 = vmul.f32 %v5711, %v1265
      %v5846 = vmul.f32 %v5714, %v1265
      %v5847 = vmul.f32 %v5717, %v1265
      %v5848 = vmul.f32 %v5720, %v1265
      %v5849 = vmul.f32 %v5723, %v1265
      %v5850 = vmul.f32 %v5726, %v1265
      %v5851 = vmul.f32 %v5729, %v1265
      %v5852 = vmul.f32 %v5732, %v1265
      %v5853 = vmul.f32 %v5735, %v1265
      %v5854 = vmul.f32 %v5738, %v1265
      %v5855 = vmul.f32 %v5741, %v1265
      %v5856 = vmul.f32 %v5744, %v1265
      %v5857 = vmul.f32 %v5747, %v1265
      %v5858 = vmul.f32 %v5750, %v1265
      %v5859 = vmul.f32 %v5753, %v1265
      %v5860 = vmul.f32 %v5756, %v1265
      %v5861 = vmul.f32 %v5759, %v1265
      %v5862 = vmul.f32 %v5762, %v1265
      %v5863 = vmul.f32 %v5765, %v1265
      %v5864 = vmul.f32 %v5768, %v1265
      %v5865 = vmul.f32 %v5771, %v1265
      %v5866 = vmul.f32 %v5774, %v1265
      %v5867 = vmul.f32 %v5777, %v1265
      %v5868 = vmul.f32 %v5780, %v1265
      %v5869 = vmul.f32 %v5783, %v1265
      %v5870 = vmul.f32 %v5786, %v1265
      %v5871 = vmul.f32 %v5789, %v1265
      %v5872 = vmul.f32 %v5792, %v1265
      %v5873 = vmul.f32 %v5795, %v1265
      %v5874 = vmul.f32 %v5798, %v1265
      %v5875 = vmul.f32 %v5801, %v1265
      %v5876 = vmul.f32 %v5804, %v1265
      %v5877 = vmul.f32 %v5807, %v1265
      %v5878 = vmul.f32 %v5810, %v1265
      %v5879 = vmul.f32 %v5813, %v1265
      %v5880 = vmul.f32 %v5816, %v1265
      %v5881 = vsub.f32 %v5559, %v5817
      %v5882 = vsub.f32 %v5560, %v5818
      %v5883 = vsub.f32 %v5561, %v5819
      %v5884 = vsub.f32 %v5562, %v5820
      %v5885 = vsub.f32 %v5563, %v5821
      %v5886 = vsub.f32 %v5564, %v5822
      %v5887 = vsub.f32 %v5565, %v5823
      %v5888 = vsub.f32 %v5566, %v5824
      %v5889 = vsub.f32 %v5567, %v5825
      %v5890 = vsub.f32 %v5568, %v5826
      %v5891 = vsub.f32 %v5569, %v5827
      %v5892 = vsub.f32 %v5570, %v5828
      %v5893 = vsub.f32 %v5571, %v5829
      %v5894 = vsub.f32 %v5572, %v5830
      %v5895 = vsub.f32 %v5573, %v5831
      %v5896 = vsub.f32 %v5574, %v5832
      %v5897 = vsub.f32 %v5575, %v5833
      %v5898 = vsub.f32 %v5576, %v5834
      %v5899 = vsub.f32 %v5577, %v5835
      %v5900 = vsub.f32 %v5578, %v5836
      %v5901 = vsub.f32 %v5579, %v5837
      %v5902 = vsub.f32 %v5580, %v5838
      %v5903 = vsub.f32 %v5581, %v5839
      %v5904 = vsub.f32 %v5582, %v5840
      %v5905 = vsub.f32 %v5583, %v5841
      %v5906 = vsub.f32 %v5584, %v5842
      %v5907 = vsub.f32 %v5585, %v5843
      %v5908 = vsub.f32 %v5586, %v5844
      %v5909 = vsub.f32 %v5587, %v5845
      %v5910 = vsub.f32 %v5588, %v5846
      %v5911 = vsub.f32 %v5589, %v5847
      %v5912 = vsub.f32 %v5590, %v5848
      %v5913 = vsub.f32 %v5591, %v5849
      %v5914 = vsub.f32 %v5592, %v5850
      %v5915 = vsub.f32 %v5593, %v5851
      %v5916 = vsub.f32 %v5594, %v5852
      %v5917 = vsub.f32 %v5595, %v5853
      %v5918 = vsub.f32 %v5596, %v5854
      %v5919 = vsub.f32 %v5597, %v5855
      %v5920 = vsub.f32 %v5598, %v5856
      %v5921 = vsub.f32 %v5599, %v5857
      %v5922 = vsub.f32 %v5600, %v5858
      %v5923 = vsub.f32 %v5601, %v5859
      %v5924 = vsub.f32 %v5602, %v5860
      %v5925 = vsub.f32 %v5603, %v5861
      %v5926 = vsub.f32 %v5604, %v5862
      %v5927 = vsub.f32 %v5605, %v5863
      %v5928 = vsub.f32 %v5606, %v5864
      %v5929 = vsub.f32 %v5607, %v5865
      %v5930 = vsub.f32 %v5608, %v5866
      %v5931 = vsub.f32 %v5609, %v5867
      %v5932 = vsub.f32 %v5610, %v5868
      %v5933 = vsub.f32 %v5611, %v5869
      %v5934 = vsub.f32 %v5612, %v5870
      %v5935 = vsub.f32 %v5613, %v5871
      %v5936 = vsub.f32 %v5614, %v5872
      %v5937 = vsub.f32 %v5615, %v5873
      %v5938 = vsub.f32 %v5616, %v5874
      %v5939 = vsub.f32 %v5617, %v5875
      %v5940 = vsub.f32 %v5618, %v5876
      %v5941 = vsub.f32 %v5619, %v5877
      %v5942 = vsub.f32 %v5620, %v5878
      %v5943 = vsub.f32 %v5621, %v5879
      %v5944 = vsub.f32 %v5622, %v5880
      %v5945 = vmul.f32 %v5881, %v5881
      %v5946 = vmul.f32 %v5882, %v5882
      %v5947 = vmul.f32 %v5883, %v5883
      %v5948 = vmul.f32 %v5884, %v5884
      %v5949 = vmul.f32 %v5885, %v5885
      %v5950 = vmul.f32 %v5886, %v5886
      %v5951 = vmul.f32 %v5887, %v5887
      %v5952 = vmul.f32 %v5888, %v5888
      %v5953 = vmul.f32 %v5889, %v5889
      %v5954 = vmul.f32 %v5890, %v5890
      %v5955 = vmul.f32 %v5891, %v5891
      %v5956 = vmul.f32 %v5892, %v5892
      %v5957 = vmul.f32 %v5893, %v5893
      %v5958 = vmul.f32 %v5894, %v5894
      %v5959 = vmul.f32 %v5895, %v5895
      %v5960 = vmul.f32 %v5896, %v5896
      %v5961 = vmul.f32 %v5897, %v5897
      %v5962 = vmul.f32 %v5898, %v5898
      %v5963 = vmul.f32 %v5899, %v5899
      %v5964 = vmul.f32 %v5900, %v5900
      %v5965 = vmul.f32 %v5901, %v5901
      %v5966 = vmul.f32 %v5902, %v5902
      %v5967 = vmul.f32 %v5903, %v5903
      %v5968 = vmul.f32 %v5904, %v5904
      %v5969 = vmul.f32 %v5905, %v5905
      %v5970 = vmul.f32 %v5906, %v5906
      %v5971 = vmul.f32 %v5907, %v5907
      %v5972 = vmul.f32 %v5908, %v5908
      %v5973 = vmul.f32 %v5909, %v5909
      %v5974 = vmul.f32 %v5910, %v5910
      %v5975 = vmul.f32 %v5911, %v5911
      %v5976 = vmul.f32 %v5912, %v5912
      %v5977 = vmul.f32 %v5913, %v5913
      %v5978 = vmul.f32 %v5914, %v5914
      %v5979 = vmul.f32 %v5915, %v5915
      %v5980 = vmul.f32 %v5916, %v5916
      %v5981 = vmul.f32 %v5917, %v5917
      %v5982 = vmul.f32 %v5918, %v5918
      %v5983 = vmul.f32 %v5919, %v5919
      %v5984 = vmul.f32 %v5920, %v5920
      %v5985 = vmul.f32 %v5921, %v5921
      %v5986 = vmul.f32 %v5922, %v5922
      %v5987 = vmul.f32 %v5923, %v5923
      %v5988 = vmul.f32 %v5924, %v5924
      %v5989 = vmul.f32 %v5925, %v5925
      %v5990 = vmul.f32 %v5926, %v5926
      %v5991 = vmul.f32 %v5927, %v5927
      %v5992 = vmul.f32 %v5928, %v5928
      %v5993 = vmul.f32 %v5929, %v5929
      %v5994 = vmul.f32 %v5930, %v5930
      %v5995 = vmul.f32 %v5931, %v5931
      %v5996 = vmul.f32 %v5932, %v5932
      %v5997 = vmul.f32 %v5933, %v5933
      %v5998 = vmul.f32 %v5934, %v5934
      %v5999 = vmul.f32 %v5935, %v5935
      %v6000 = vmul.f32 %v5936, %v5936
      %v6001 = vmul.f32 %v5937, %v5937
      %v6002 = vmul.f32 %v5938, %v5938
      %v6003 = vmul.f32 %v5939, %v5939
      %v6004 = vmul.f32 %v5940, %v5940
      %v6005 = vmul.f32 %v5941, %v5941
      %v6006 = vmul.f32 %v5942, %v5942
      %v6007 = vmul.f32 %v5943, %v5943
      %v6008 = vmul.f32 %v5944, %v5944
      %v6009 = vsel %vm1072, %v5945, 0.0
      %6010 = vadd.xlane.f32.xlu0 %v6009
      %v6011 = vpop.xlane.xlu0 %6010
      %v6012 = vsel %vm1072, %v5946, 0.0
      %6013 = vadd.xlane.f32.xlu0 %v6012
      %v6014 = vpop.xlane.xlu0 %6013
      %v6015 = vsel %vm1072, %v5947, 0.0
      %6016 = vadd.xlane.f32.xlu0 %v6015
      %v6017 = vpop.xlane.xlu0 %6016
      %v6018 = vsel %vm1072, %v5948, 0.0
      %6019 = vadd.xlane.f32.xlu0 %v6018
      %v6020 = vpop.xlane.xlu0 %6019
      %v6021 = vsel %vm1072, %v5949, 0.0
      %6022 = vadd.xlane.f32.xlu0 %v6021
      %v6023 = vpop.xlane.xlu0 %6022
      %v6024 = vsel %vm1072, %v5950, 0.0
      %6025 = vadd.xlane.f32.xlu0 %v6024
      %v6026 = vpop.xlane.xlu0 %6025
      %v6027 = vsel %vm1072, %v5951, 0.0
      %6028 = vadd.xlane.f32.xlu0 %v6027
      %v6029 = vpop.xlane.xlu0 %6028
      %v6030 = vsel %vm1072, %v5952, 0.0
      %6031 = vadd.xlane.f32.xlu0 %v6030
      %v6032 = vpop.xlane.xlu0 %6031
      %v6033 = vsel %vm1072, %v5953, 0.0
      %6034 = vadd.xlane.f32.xlu0 %v6033
      %v6035 = vpop.xlane.xlu0 %6034
      %v6036 = vsel %vm1072, %v5954, 0.0
      %6037 = vadd.xlane.f32.xlu0 %v6036
      %v6038 = vpop.xlane.xlu0 %6037
      %v6039 = vsel %vm1072, %v5955, 0.0
      %6040 = vadd.xlane.f32.xlu0 %v6039
      %v6041 = vpop.xlane.xlu0 %6040
      %v6042 = vsel %vm1072, %v5956, 0.0
      %6043 = vadd.xlane.f32.xlu0 %v6042
      %v6044 = vpop.xlane.xlu0 %6043
      %v6045 = vsel %vm1072, %v5957, 0.0
      %6046 = vadd.xlane.f32.xlu0 %v6045
      %v6047 = vpop.xlane.xlu0 %6046
      %v6048 = vsel %vm1072, %v5958, 0.0
      %6049 = vadd.xlane.f32.xlu0 %v6048
      %v6050 = vpop.xlane.xlu0 %6049
      %v6051 = vsel %vm1072, %v5959, 0.0
      %6052 = vadd.xlane.f32.xlu0 %v6051
      %v6053 = vpop.xlane.xlu0 %6052
      %v6054 = vsel %vm1072, %v5960, 0.0
      %6055 = vadd.xlane.f32.xlu0 %v6054
      %v6056 = vpop.xlane.xlu0 %6055
      %v6057 = vsel %vm1072, %v5961, 0.0
      %6058 = vadd.xlane.f32.xlu0 %v6057
      %v6059 = vpop.xlane.xlu0 %6058
      %v6060 = vsel %vm1072, %v5962, 0.0
      %6061 = vadd.xlane.f32.xlu0 %v6060
      %v6062 = vpop.xlane.xlu0 %6061
      %v6063 = vsel %vm1072, %v5963, 0.0
      %6064 = vadd.xlane.f32.xlu0 %v6063
      %v6065 = vpop.xlane.xlu0 %6064
      %v6066 = vsel %vm1072, %v5964, 0.0
      %6067 = vadd.xlane.f32.xlu0 %v6066
      %v6068 = vpop.xlane.xlu0 %6067
      %v6069 = vsel %vm1072, %v5965, 0.0
      %6070 = vadd.xlane.f32.xlu0 %v6069
      %v6071 = vpop.xlane.xlu0 %6070
      %v6072 = vsel %vm1072, %v5966, 0.0
      %6073 = vadd.xlane.f32.xlu0 %v6072
      %v6074 = vpop.xlane.xlu0 %6073
      %v6075 = vsel %vm1072, %v5967, 0.0
      %6076 = vadd.xlane.f32.xlu0 %v6075
      %v6077 = vpop.xlane.xlu0 %6076
      %v6078 = vsel %vm1072, %v5968, 0.0
      %6079 = vadd.xlane.f32.xlu0 %v6078
      %v6080 = vpop.xlane.xlu0 %6079
      %v6081 = vsel %vm1072, %v5969, 0.0
      %6082 = vadd.xlane.f32.xlu0 %v6081
      %v6083 = vpop.xlane.xlu0 %6082
      %v6084 = vsel %vm1072, %v5970, 0.0
      %6085 = vadd.xlane.f32.xlu0 %v6084
      %v6086 = vpop.xlane.xlu0 %6085
      %v6087 = vsel %vm1072, %v5971, 0.0
      %6088 = vadd.xlane.f32.xlu0 %v6087
      %v6089 = vpop.xlane.xlu0 %6088
      %v6090 = vsel %vm1072, %v5972, 0.0
      %6091 = vadd.xlane.f32.xlu0 %v6090
      %v6092 = vpop.xlane.xlu0 %6091
      %v6093 = vsel %vm1072, %v5973, 0.0
      %6094 = vadd.xlane.f32.xlu0 %v6093
      %v6095 = vpop.xlane.xlu0 %6094
      %v6096 = vsel %vm1072, %v5974, 0.0
      %6097 = vadd.xlane.f32.xlu0 %v6096
      %v6098 = vpop.xlane.xlu0 %6097
      %v6099 = vsel %vm1072, %v5975, 0.0
      %6100 = vadd.xlane.f32.xlu0 %v6099
      %v6101 = vpop.xlane.xlu0 %6100
      %v6102 = vsel %vm1072, %v5976, 0.0
      %6103 = vadd.xlane.f32.xlu0 %v6102
      %v6104 = vpop.xlane.xlu0 %6103
      %v6105 = vsel %vm1072, %v5977, 0.0
      %6106 = vadd.xlane.f32.xlu0 %v6105
      %v6107 = vpop.xlane.xlu0 %6106
      %v6108 = vsel %vm1072, %v5978, 0.0
      %6109 = vadd.xlane.f32.xlu0 %v6108
      %v6110 = vpop.xlane.xlu0 %6109
      %v6111 = vsel %vm1072, %v5979, 0.0
      %6112 = vadd.xlane.f32.xlu0 %v6111
      %v6113 = vpop.xlane.xlu0 %6112
      %v6114 = vsel %vm1072, %v5980, 0.0
      %6115 = vadd.xlane.f32.xlu0 %v6114
      %v6116 = vpop.xlane.xlu0 %6115
      %v6117 = vsel %vm1072, %v5981, 0.0
      %6118 = vadd.xlane.f32.xlu0 %v6117
      %v6119 = vpop.xlane.xlu0 %6118
      %v6120 = vsel %vm1072, %v5982, 0.0
      %6121 = vadd.xlane.f32.xlu0 %v6120
      %v6122 = vpop.xlane.xlu0 %6121
      %v6123 = vsel %vm1072, %v5983, 0.0
      %6124 = vadd.xlane.f32.xlu0 %v6123
      %v6125 = vpop.xlane.xlu0 %6124
      %v6126 = vsel %vm1072, %v5984, 0.0
      %6127 = vadd.xlane.f32.xlu0 %v6126
      %v6128 = vpop.xlane.xlu0 %6127
      %v6129 = vsel %vm1072, %v5985, 0.0
      %6130 = vadd.xlane.f32.xlu0 %v6129
      %v6131 = vpop.xlane.xlu0 %6130
      %v6132 = vsel %vm1072, %v5986, 0.0
      %6133 = vadd.xlane.f32.xlu0 %v6132
      %v6134 = vpop.xlane.xlu0 %6133
      %v6135 = vsel %vm1072, %v5987, 0.0
      %6136 = vadd.xlane.f32.xlu0 %v6135
      %v6137 = vpop.xlane.xlu0 %6136
      %v6138 = vsel %vm1072, %v5988, 0.0
      %6139 = vadd.xlane.f32.xlu0 %v6138
      %v6140 = vpop.xlane.xlu0 %6139
      %v6141 = vsel %vm1072, %v5989, 0.0
      %6142 = vadd.xlane.f32.xlu0 %v6141
      %v6143 = vpop.xlane.xlu0 %6142
      %v6144 = vsel %vm1072, %v5990, 0.0
      %6145 = vadd.xlane.f32.xlu0 %v6144
      %v6146 = vpop.xlane.xlu0 %6145
      %v6147 = vsel %vm1072, %v5991, 0.0
      %6148 = vadd.xlane.f32.xlu0 %v6147
      %v6149 = vpop.xlane.xlu0 %6148
      %v6150 = vsel %vm1072, %v5992, 0.0
      %6151 = vadd.xlane.f32.xlu0 %v6150
      %v6152 = vpop.xlane.xlu0 %6151
      %v6153 = vsel %vm1072, %v5993, 0.0
      %6154 = vadd.xlane.f32.xlu0 %v6153
      %v6155 = vpop.xlane.xlu0 %6154
      %v6156 = vsel %vm1072, %v5994, 0.0
      %6157 = vadd.xlane.f32.xlu0 %v6156
      %v6158 = vpop.xlane.xlu0 %6157
      %v6159 = vsel %vm1072, %v5995, 0.0
      %6160 = vadd.xlane.f32.xlu0 %v6159
      %v6161 = vpop.xlane.xlu0 %6160
      %v6162 = vsel %vm1072, %v5996, 0.0
      %6163 = vadd.xlane.f32.xlu0 %v6162
      %v6164 = vpop.xlane.xlu0 %6163
      %v6165 = vsel %vm1072, %v5997, 0.0
      %6166 = vadd.xlane.f32.xlu0 %v6165
      %v6167 = vpop.xlane.xlu0 %6166
      %v6168 = vsel %vm1072, %v5998, 0.0
      %6169 = vadd.xlane.f32.xlu0 %v6168
      %v6170 = vpop.xlane.xlu0 %6169
      %v6171 = vsel %vm1072, %v5999, 0.0
      %6172 = vadd.xlane.f32.xlu0 %v6171
      %v6173 = vpop.xlane.xlu0 %6172
      %v6174 = vsel %vm1072, %v6000, 0.0
      %6175 = vadd.xlane.f32.xlu0 %v6174
      %v6176 = vpop.xlane.xlu0 %6175
      %v6177 = vsel %vm1072, %v6001, 0.0
      %6178 = vadd.xlane.f32.xlu0 %v6177
      %v6179 = vpop.xlane.xlu0 %6178
      %v6180 = vsel %vm1072, %v6002, 0.0
      %6181 = vadd.xlane.f32.xlu0 %v6180
      %v6182 = vpop.xlane.xlu0 %6181
      %v6183 = vsel %vm1072, %v6003, 0.0
      %6184 = vadd.xlane.f32.xlu0 %v6183
      %v6185 = vpop.xlane.xlu0 %6184
      %v6186 = vsel %vm1072, %v6004, 0.0
      %6187 = vadd.xlane.f32.xlu0 %v6186
      %v6188 = vpop.xlane.xlu0 %6187
      %v6189 = vsel %vm1072, %v6005, 0.0
      %6190 = vadd.xlane.f32.xlu0 %v6189
      %v6191 = vpop.xlane.xlu0 %6190
      %v6192 = vsel %vm1072, %v6006, 0.0
      %6193 = vadd.xlane.f32.xlu0 %v6192
      %v6194 = vpop.xlane.xlu0 %6193
      %v6195 = vsel %vm1072, %v6007, 0.0
      %6196 = vadd.xlane.f32.xlu0 %v6195
      %v6197 = vpop.xlane.xlu0 %6196
      %v6198 = vsel %vm1072, %v6008, 0.0
      %6199 = vadd.xlane.f32.xlu0 %v6198
      %v6200 = vpop.xlane.xlu0 %6199
      %v6201 = vmul.f32 %v6011, %v1265
      %v6202 = vmul.f32 %v6014, %v1265
      %v6203 = vmul.f32 %v6017, %v1265
      %v6204 = vmul.f32 %v6020, %v1265
      %v6205 = vmul.f32 %v6023, %v1265
      %v6206 = vmul.f32 %v6026, %v1265
      %v6207 = vmul.f32 %v6029, %v1265
      %v6208 = vmul.f32 %v6032, %v1265
      %v6209 = vmul.f32 %v6035, %v1265
      %v6210 = vmul.f32 %v6038, %v1265
      %v6211 = vmul.f32 %v6041, %v1265
      %v6212 = vmul.f32 %v6044, %v1265
      %v6213 = vmul.f32 %v6047, %v1265
      %v6214 = vmul.f32 %v6050, %v1265
      %v6215 = vmul.f32 %v6053, %v1265
      %v6216 = vmul.f32 %v6056, %v1265
      %v6217 = vmul.f32 %v6059, %v1265
      %v6218 = vmul.f32 %v6062, %v1265
      %v6219 = vmul.f32 %v6065, %v1265
      %v6220 = vmul.f32 %v6068, %v1265
      %v6221 = vmul.f32 %v6071, %v1265
      %v6222 = vmul.f32 %v6074, %v1265
      %v6223 = vmul.f32 %v6077, %v1265
      %v6224 = vmul.f32 %v6080, %v1265
      %v6225 = vmul.f32 %v6083, %v1265
      %v6226 = vmul.f32 %v6086, %v1265
      %v6227 = vmul.f32 %v6089, %v1265
      %v6228 = vmul.f32 %v6092, %v1265
      %v6229 = vmul.f32 %v6095, %v1265
      %v6230 = vmul.f32 %v6098, %v1265
      %v6231 = vmul.f32 %v6101, %v1265
      %v6232 = vmul.f32 %v6104, %v1265
      %v6233 = vmul.f32 %v6107, %v1265
      %v6234 = vmul.f32 %v6110, %v1265
      %v6235 = vmul.f32 %v6113, %v1265
      %v6236 = vmul.f32 %v6116, %v1265
      %v6237 = vmul.f32 %v6119, %v1265
      %v6238 = vmul.f32 %v6122, %v1265
      %v6239 = vmul.f32 %v6125, %v1265
      %v6240 = vmul.f32 %v6128, %v1265
      %v6241 = vmul.f32 %v6131, %v1265
      %v6242 = vmul.f32 %v6134, %v1265
      %v6243 = vmul.f32 %v6137, %v1265
      %v6244 = vmul.f32 %v6140, %v1265
      %v6245 = vmul.f32 %v6143, %v1265
      %v6246 = vmul.f32 %v6146, %v1265
      %v6247 = vmul.f32 %v6149, %v1265
      %v6248 = vmul.f32 %v6152, %v1265
      %v6249 = vmul.f32 %v6155, %v1265
      %v6250 = vmul.f32 %v6158, %v1265
      %v6251 = vmul.f32 %v6161, %v1265
      %v6252 = vmul.f32 %v6164, %v1265
      %v6253 = vmul.f32 %v6167, %v1265
      %v6254 = vmul.f32 %v6170, %v1265
      %v6255 = vmul.f32 %v6173, %v1265
      %v6256 = vmul.f32 %v6176, %v1265
      %v6257 = vmul.f32 %v6179, %v1265
      %v6258 = vmul.f32 %v6182, %v1265
      %v6259 = vmul.f32 %v6185, %v1265
      %v6260 = vmul.f32 %v6188, %v1265
      %v6261 = vmul.f32 %v6191, %v1265
      %v6262 = vmul.f32 %v6194, %v1265
      %v6263 = vmul.f32 %v6197, %v1265
      %v6264 = vmul.f32 %v6200, %v1265
      %v6265 = vadd.f32 %v6201, 1e-05
      %v6266 = vadd.f32 %v6202, 1e-05
      %v6267 = vadd.f32 %v6203, 1e-05
      %v6268 = vadd.f32 %v6204, 1e-05
      %v6269 = vadd.f32 %v6205, 1e-05
      %v6270 = vadd.f32 %v6206, 1e-05
      %v6271 = vadd.f32 %v6207, 1e-05
      %v6272 = vadd.f32 %v6208, 1e-05
      %v6273 = vadd.f32 %v6209, 1e-05
      %v6274 = vadd.f32 %v6210, 1e-05
      %v6275 = vadd.f32 %v6211, 1e-05
      %v6276 = vadd.f32 %v6212, 1e-05
      %v6277 = vadd.f32 %v6213, 1e-05
      %v6278 = vadd.f32 %v6214, 1e-05
      %v6279 = vadd.f32 %v6215, 1e-05
      %v6280 = vadd.f32 %v6216, 1e-05
      %v6281 = vadd.f32 %v6217, 1e-05
      %v6282 = vadd.f32 %v6218, 1e-05
      %v6283 = vadd.f32 %v6219, 1e-05
      %v6284 = vadd.f32 %v6220, 1e-05
      %v6285 = vadd.f32 %v6221, 1e-05
      %v6286 = vadd.f32 %v6222, 1e-05
      %v6287 = vadd.f32 %v6223, 1e-05
      %v6288 = vadd.f32 %v6224, 1e-05
      %v6289 = vadd.f32 %v6225, 1e-05
      %v6290 = vadd.f32 %v6226, 1e-05
      %v6291 = vadd.f32 %v6227, 1e-05
      %v6292 = vadd.f32 %v6228, 1e-05
      %v6293 = vadd.f32 %v6229, 1e-05
      %v6294 = vadd.f32 %v6230, 1e-05
      %v6295 = vadd.f32 %v6231, 1e-05
      %v6296 = vadd.f32 %v6232, 1e-05
      %v6297 = vadd.f32 %v6233, 1e-05
      %v6298 = vadd.f32 %v6234, 1e-05
      %v6299 = vadd.f32 %v6235, 1e-05
      %v6300 = vadd.f32 %v6236, 1e-05
      %v6301 = vadd.f32 %v6237, 1e-05
      %v6302 = vadd.f32 %v6238, 1e-05
      %v6303 = vadd.f32 %v6239, 1e-05
      %v6304 = vadd.f32 %v6240, 1e-05
      %v6305 = vadd.f32 %v6241, 1e-05
      %v6306 = vadd.f32 %v6242, 1e-05
      %v6307 = vadd.f32 %v6243, 1e-05
      %v6308 = vadd.f32 %v6244, 1e-05
      %v6309 = vadd.f32 %v6245, 1e-05
      %v6310 = vadd.f32 %v6246, 1e-05
      %v6311 = vadd.f32 %v6247, 1e-05
      %v6312 = vadd.f32 %v6248, 1e-05
      %v6313 = vadd.f32 %v6249, 1e-05
      %v6314 = vadd.f32 %v6250, 1e-05
      %v6315 = vadd.f32 %v6251, 1e-05
      %v6316 = vadd.f32 %v6252, 1e-05
      %v6317 = vadd.f32 %v6253, 1e-05
      %v6318 = vadd.f32 %v6254, 1e-05
      %v6319 = vadd.f32 %v6255, 1e-05
      %v6320 = vadd.f32 %v6256, 1e-05
      %v6321 = vadd.f32 %v6257, 1e-05
      %v6322 = vadd.f32 %v6258, 1e-05
      %v6323 = vadd.f32 %v6259, 1e-05
      %v6324 = vadd.f32 %v6260, 1e-05
      %v6325 = vadd.f32 %v6261, 1e-05
      %v6326 = vadd.f32 %v6262, 1e-05
      %v6327 = vadd.f32 %v6263, 1e-05
      %v6328 = vadd.f32 %v6264, 1e-05
      %v6329 = vrsqrt.pop %v6265
      %v6330 = vrsqrt.pop %v6266
      %v6331 = vrsqrt.pop %v6267
      %v6332 = vrsqrt.pop %v6268
      %v6333 = vrsqrt.pop %v6269
      %v6334 = vrsqrt.pop %v6270
      %v6335 = vrsqrt.pop %v6271
      %v6336 = vrsqrt.pop %v6272
      %v6337 = vrsqrt.pop %v6273
      %v6338 = vrsqrt.pop %v6274
      %v6339 = vrsqrt.pop %v6275
      %v6340 = vrsqrt.pop %v6276
      %v6341 = vrsqrt.pop %v6277
      %v6342 = vrsqrt.pop %v6278
      %v6343 = vrsqrt.pop %v6279
      %v6344 = vrsqrt.pop %v6280
      %v6345 = vrsqrt.pop %v6281
      %v6346 = vrsqrt.pop %v6282
      %v6347 = vrsqrt.pop %v6283
      %v6348 = vrsqrt.pop %v6284
      %v6349 = vrsqrt.pop %v6285
      %v6350 = vrsqrt.pop %v6286
      %v6351 = vrsqrt.pop %v6287
      %v6352 = vrsqrt.pop %v6288
      %v6353 = vrsqrt.pop %v6289
      %v6354 = vrsqrt.pop %v6290
      %v6355 = vrsqrt.pop %v6291
      %v6356 = vrsqrt.pop %v6292
      %v6357 = vrsqrt.pop %v6293
      %v6358 = vrsqrt.pop %v6294
      %v6359 = vrsqrt.pop %v6295
      %v6360 = vrsqrt.pop %v6296
      %v6361 = vrsqrt.pop %v6297
      %v6362 = vrsqrt.pop %v6298
      %v6363 = vrsqrt.pop %v6299
      %v6364 = vrsqrt.pop %v6300
      %v6365 = vrsqrt.pop %v6301
      %v6366 = vrsqrt.pop %v6302
      %v6367 = vrsqrt.pop %v6303
      %v6368 = vrsqrt.pop %v6304
      %v6369 = vrsqrt.pop %v6305
      %v6370 = vrsqrt.pop %v6306
      %v6371 = vrsqrt.pop %v6307
      %v6372 = vrsqrt.pop %v6308
      %v6373 = vrsqrt.pop %v6309
      %v6374 = vrsqrt.pop %v6310
      %v6375 = vrsqrt.pop %v6311
      %v6376 = vrsqrt.pop %v6312
      %v6377 = vrsqrt.pop %v6313
      %v6378 = vrsqrt.pop %v6314
      %v6379 = vrsqrt.pop %v6315
      %v6380 = vrsqrt.pop %v6316
      %v6381 = vrsqrt.pop %v6317
      %v6382 = vrsqrt.pop %v6318
      %v6383 = vrsqrt.pop %v6319
      %v6384 = vrsqrt.pop %v6320
      %v6385 = vrsqrt.pop %v6321
      %v6386 = vrsqrt.pop %v6322
      %v6387 = vrsqrt.pop %v6323
      %v6388 = vrsqrt.pop %v6324
      %v6389 = vrsqrt.pop %v6325
      %v6390 = vrsqrt.pop %v6326
      %v6391 = vrsqrt.pop %v6327
      %v6392 = vrsqrt.pop %v6328
      %v6393 = vmul.f32 %v5881, %v6329
      %v6394 = vmul.f32 %v5882, %v6330
      %v6395 = vmul.f32 %v5883, %v6331
      %v6396 = vmul.f32 %v5884, %v6332
      %v6397 = vmul.f32 %v5885, %v6333
      %v6398 = vmul.f32 %v5886, %v6334
      %v6399 = vmul.f32 %v5887, %v6335
      %v6400 = vmul.f32 %v5888, %v6336
      %v6401 = vmul.f32 %v5889, %v6337
      %v6402 = vmul.f32 %v5890, %v6338
      %v6403 = vmul.f32 %v5891, %v6339
      %v6404 = vmul.f32 %v5892, %v6340
      %v6405 = vmul.f32 %v5893, %v6341
      %v6406 = vmul.f32 %v5894, %v6342
      %v6407 = vmul.f32 %v5895, %v6343
      %v6408 = vmul.f32 %v5896, %v6344
      %v6409 = vmul.f32 %v5897, %v6345
      %v6410 = vmul.f32 %v5898, %v6346
      %v6411 = vmul.f32 %v5899, %v6347
      %v6412 = vmul.f32 %v5900, %v6348
      %v6413 = vmul.f32 %v5901, %v6349
      %v6414 = vmul.f32 %v5902, %v6350
      %v6415 = vmul.f32 %v5903, %v6351
      %v6416 = vmul.f32 %v5904, %v6352
      %v6417 = vmul.f32 %v5905, %v6353
      %v6418 = vmul.f32 %v5906, %v6354
      %v6419 = vmul.f32 %v5907, %v6355
      %v6420 = vmul.f32 %v5908, %v6356
      %v6421 = vmul.f32 %v5909, %v6357
      %v6422 = vmul.f32 %v5910, %v6358
      %v6423 = vmul.f32 %v5911, %v6359
      %v6424 = vmul.f32 %v5912, %v6360
      %v6425 = vmul.f32 %v5913, %v6361
      %v6426 = vmul.f32 %v5914, %v6362
      %v6427 = vmul.f32 %v5915, %v6363
      %v6428 = vmul.f32 %v5916, %v6364
      %v6429 = vmul.f32 %v5917, %v6365
      %v6430 = vmul.f32 %v5918, %v6366
      %v6431 = vmul.f32 %v5919, %v6367
      %v6432 = vmul.f32 %v5920, %v6368
      %v6433 = vmul.f32 %v5921, %v6369
      %v6434 = vmul.f32 %v5922, %v6370
      %v6435 = vmul.f32 %v5923, %v6371
      %v6436 = vmul.f32 %v5924, %v6372
      %v6437 = vmul.f32 %v5925, %v6373
      %v6438 = vmul.f32 %v5926, %v6374
      %v6439 = vmul.f32 %v5927, %v6375
      %v6440 = vmul.f32 %v5928, %v6376
      %v6441 = vmul.f32 %v5929, %v6377
      %v6442 = vmul.f32 %v5930, %v6378
      %v6443 = vmul.f32 %v5931, %v6379
      %v6444 = vmul.f32 %v5932, %v6380
      %v6445 = vmul.f32 %v5933, %v6381
      %v6446 = vmul.f32 %v5934, %v6382
      %v6447 = vmul.f32 %v5935, %v6383
      %v6448 = vmul.f32 %v5936, %v6384
      %v6449 = vmul.f32 %v5937, %v6385
      %v6450 = vmul.f32 %v5938, %v6386
      %v6451 = vmul.f32 %v5939, %v6387
      %v6452 = vmul.f32 %v5940, %v6388
      %v6453 = vmul.f32 %v5941, %v6389
      %v6454 = vmul.f32 %v5942, %v6390
      %v6455 = vmul.f32 %v5943, %v6391
      %v6456 = vmul.f32 %v5944, %v6392
      %v6458 = vlaneseq
      %v6459 = vshrl.u32 %v6458, 7
      %v6460 = vsub.s32 0, %v6459
      %v6461 = vrot.slane %v5623, %v6460
      %v6463 = vmul.f32 %v6393, %v6461
      %v6464 = vmul.f32 %v6394, %v6461
      %v6465 = vmul.f32 %v6395, %v6461
      %v6466 = vmul.f32 %v6396, %v6461
      %v6467 = vmul.f32 %v6397, %v6461
      %v6468 = vmul.f32 %v6398, %v6461
      %v6469 = vmul.f32 %v6399, %v6461
      %v6470 = vmul.f32 %v6400, %v6461
      %v6471 = vmul.f32 %v6401, %v6461
      %v6472 = vmul.f32 %v6402, %v6461
      %v6473 = vmul.f32 %v6403, %v6461
      %v6474 = vmul.f32 %v6404, %v6461
      %v6475 = vmul.f32 %v6405, %v6461
      %v6476 = vmul.f32 %v6406, %v6461
      %v6477 = vmul.f32 %v6407, %v6461
      %v6478 = vmul.f32 %v6408, %v6461
      %v6479 = vmul.f32 %v6409, %v6461
      %v6480 = vmul.f32 %v6410, %v6461
      %v6481 = vmul.f32 %v6411, %v6461
      %v6482 = vmul.f32 %v6412, %v6461
      %v6483 = vmul.f32 %v6413, %v6461
      %v6484 = vmul.f32 %v6414, %v6461
      %v6485 = vmul.f32 %v6415, %v6461
      %v6486 = vmul.f32 %v6416, %v6461
      %v6487 = vmul.f32 %v6417, %v6461
      %v6488 = vmul.f32 %v6418, %v6461
      %v6489 = vmul.f32 %v6419, %v6461
      %v6490 = vmul.f32 %v6420, %v6461
      %v6491 = vmul.f32 %v6421, %v6461
      %v6492 = vmul.f32 %v6422, %v6461
      %v6493 = vmul.f32 %v6423, %v6461
      %v6494 = vmul.f32 %v6424, %v6461
      %v6495 = vmul.f32 %v6425, %v6461
      %v6496 = vmul.f32 %v6426, %v6461
      %v6497 = vmul.f32 %v6427, %v6461
      %v6498 = vmul.f32 %v6428, %v6461
      %v6499 = vmul.f32 %v6429, %v6461
      %v6500 = vmul.f32 %v6430, %v6461
      %v6501 = vmul.f32 %v6431, %v6461
      %v6502 = vmul.f32 %v6432, %v6461
      %v6503 = vmul.f32 %v6433, %v6461
      %v6504 = vmul.f32 %v6434, %v6461
      %v6505 = vmul.f32 %v6435, %v6461
      %v6506 = vmul.f32 %v6436, %v6461
      %v6507 = vmul.f32 %v6437, %v6461
      %v6508 = vmul.f32 %v6438, %v6461
      %v6509 = vmul.f32 %v6439, %v6461
      %v6510 = vmul.f32 %v6440, %v6461
      %v6511 = vmul.f32 %v6441, %v6461
      %v6512 = vmul.f32 %v6442, %v6461
      %v6513 = vmul.f32 %v6443, %v6461
      %v6514 = vmul.f32 %v6444, %v6461
      %v6515 = vmul.f32 %v6445, %v6461
      %v6516 = vmul.f32 %v6446, %v6461
      %v6517 = vmul.f32 %v6447, %v6461
      %v6518 = vmul.f32 %v6448, %v6461
      %v6519 = vmul.f32 %v6449, %v6461
      %v6520 = vmul.f32 %v6450, %v6461
      %v6521 = vmul.f32 %v6451, %v6461
      %v6522 = vmul.f32 %v6452, %v6461
      %v6523 = vmul.f32 %v6453, %v6461
      %v6524 = vmul.f32 %v6454, %v6461
      %v6525 = vmul.f32 %v6455, %v6461
      %v6526 = vmul.f32 %v6456, %v6461
      %v6528 = vlaneseq
      %v6529 = vshrl.u32 %v6528, 7
      %v6530 = vsub.s32 0, %v6529
      %v6531 = vrot.slane %v5624, %v6530
      %v6533 = vadd.f32 %v6463, %v6531
      %v6534 = vadd.f32 %v6464, %v6531
      %v6535 = vadd.f32 %v6465, %v6531
      %v6536 = vadd.f32 %v6466, %v6531
      %v6537 = vadd.f32 %v6467, %v6531
      %v6538 = vadd.f32 %v6468, %v6531
      %v6539 = vadd.f32 %v6469, %v6531
      %v6540 = vadd.f32 %v6470, %v6531
      %v6541 = vadd.f32 %v6471, %v6531
      %v6542 = vadd.f32 %v6472, %v6531
      %v6543 = vadd.f32 %v6473, %v6531
      %v6544 = vadd.f32 %v6474, %v6531
      %v6545 = vadd.f32 %v6475, %v6531
      %v6546 = vadd.f32 %v6476, %v6531
      %v6547 = vadd.f32 %v6477, %v6531
      %v6548 = vadd.f32 %v6478, %v6531
      %v6549 = vadd.f32 %v6479, %v6531
      %v6550 = vadd.f32 %v6480, %v6531
      %v6551 = vadd.f32 %v6481, %v6531
      %v6552 = vadd.f32 %v6482, %v6531
      %v6553 = vadd.f32 %v6483, %v6531
      %v6554 = vadd.f32 %v6484, %v6531
      %v6555 = vadd.f32 %v6485, %v6531
      %v6556 = vadd.f32 %v6486, %v6531
      %v6557 = vadd.f32 %v6487, %v6531
      %v6558 = vadd.f32 %v6488, %v6531
      %v6559 = vadd.f32 %v6489, %v6531
      %v6560 = vadd.f32 %v6490, %v6531
      %v6561 = vadd.f32 %v6491, %v6531
      %v6562 = vadd.f32 %v6492, %v6531
      %v6563 = vadd.f32 %v6493, %v6531
      %v6564 = vadd.f32 %v6494, %v6531
      %v6565 = vadd.f32 %v6495, %v6531
      %v6566 = vadd.f32 %v6496, %v6531
      %v6567 = vadd.f32 %v6497, %v6531
      %v6568 = vadd.f32 %v6498, %v6531
      %v6569 = vadd.f32 %v6499, %v6531
      %v6570 = vadd.f32 %v6500, %v6531
      %v6571 = vadd.f32 %v6501, %v6531
      %v6572 = vadd.f32 %v6502, %v6531
      %v6573 = vadd.f32 %v6503, %v6531
      %v6574 = vadd.f32 %v6504, %v6531
      %v6575 = vadd.f32 %v6505, %v6531
      %v6576 = vadd.f32 %v6506, %v6531
      %v6577 = vadd.f32 %v6507, %v6531
      %v6578 = vadd.f32 %v6508, %v6531
      %v6579 = vadd.f32 %v6509, %v6531
      %v6580 = vadd.f32 %v6510, %v6531
      %v6581 = vadd.f32 %v6511, %v6531
      %v6582 = vadd.f32 %v6512, %v6531
      %v6583 = vadd.f32 %v6513, %v6531
      %v6584 = vadd.f32 %v6514, %v6531
      %v6585 = vadd.f32 %v6515, %v6531
      %v6586 = vadd.f32 %v6516, %v6531
      %v6587 = vadd.f32 %v6517, %v6531
      %v6588 = vadd.f32 %v6518, %v6531
      %v6589 = vadd.f32 %v6519, %v6531
      %v6590 = vadd.f32 %v6520, %v6531
      %v6591 = vadd.f32 %v6521, %v6531
      %v6592 = vadd.f32 %v6522, %v6531
      %v6593 = vadd.f32 %v6523, %v6531
      %v6594 = vadd.f32 %v6524, %v6531
      %v6595 = vadd.f32 %v6525, %v6531
      %v6596 = vadd.f32 %v6526, %v6531
      %v6597 = vmax.f32 %v6533, 0.0
      %v6598 = vmax.f32 %v6534, 0.0
      %v6599 = vmax.f32 %v6535, 0.0
      %v6600 = vmax.f32 %v6536, 0.0
      %v6601 = vmax.f32 %v6537, 0.0
      %v6602 = vmax.f32 %v6538, 0.0
      %v6603 = vmax.f32 %v6539, 0.0
      %v6604 = vmax.f32 %v6540, 0.0
      %v6605 = vmax.f32 %v6541, 0.0
      %v6606 = vmax.f32 %v6542, 0.0
      %v6607 = vmax.f32 %v6543, 0.0
      %v6608 = vmax.f32 %v6544, 0.0
      %v6609 = vmax.f32 %v6545, 0.0
      %v6610 = vmax.f32 %v6546, 0.0
      %v6611 = vmax.f32 %v6547, 0.0
      %v6612 = vmax.f32 %v6548, 0.0
      %v6613 = vmax.f32 %v6549, 0.0
      %v6614 = vmax.f32 %v6550, 0.0
      %v6615 = vmax.f32 %v6551, 0.0
      %v6616 = vmax.f32 %v6552, 0.0
      %v6617 = vmax.f32 %v6553, 0.0
      %v6618 = vmax.f32 %v6554, 0.0
      %v6619 = vmax.f32 %v6555, 0.0
      %v6620 = vmax.f32 %v6556, 0.0
      %v6621 = vmax.f32 %v6557, 0.0
      %v6622 = vmax.f32 %v6558, 0.0
      %v6623 = vmax.f32 %v6559, 0.0
      %v6624 = vmax.f32 %v6560, 0.0
      %v6625 = vmax.f32 %v6561, 0.0
      %v6626 = vmax.f32 %v6562, 0.0
      %v6627 = vmax.f32 %v6563, 0.0
      %v6628 = vmax.f32 %v6564, 0.0
      %v6629 = vmax.f32 %v6565, 0.0
      %v6630 = vmax.f32 %v6566, 0.0
      %v6631 = vmax.f32 %v6567, 0.0
      %v6632 = vmax.f32 %v6568, 0.0
      %v6633 = vmax.f32 %v6569, 0.0
      %v6634 = vmax.f32 %v6570, 0.0
      %v6635 = vmax.f32 %v6571, 0.0
      %v6636 = vmax.f32 %v6572, 0.0
      %v6637 = vmax.f32 %v6573, 0.0
      %v6638 = vmax.f32 %v6574, 0.0
      %v6639 = vmax.f32 %v6575, 0.0
      %v6640 = vmax.f32 %v6576, 0.0
      %v6641 = vmax.f32 %v6577, 0.0
      %v6642 = vmax.f32 %v6578, 0.0
      %v6643 = vmax.f32 %v6579, 0.0
      %v6644 = vmax.f32 %v6580, 0.0
      %v6645 = vmax.f32 %v6581, 0.0
      %v6646 = vmax.f32 %v6582, 0.0
      %v6647 = vmax.f32 %v6583, 0.0
      %v6648 = vmax.f32 %v6584, 0.0
      %v6649 = vmax.f32 %v6585, 0.0
      %v6650 = vmax.f32 %v6586, 0.0
      %v6651 = vmax.f32 %v6587, 0.0
      %v6652 = vmax.f32 %v6588, 0.0
      %v6653 = vmax.f32 %v6589, 0.0
      %v6654 = vmax.f32 %v6590, 0.0
      %v6655 = vmax.f32 %v6591, 0.0
      %v6656 = vmax.f32 %v6592, 0.0
      %v6657 = vmax.f32 %v6593, 0.0
      %v6658 = vmax.f32 %v6594, 0.0
      %v6659 = vmax.f32 %v6595, 0.0
      %v6660 = vmax.f32 %v6596, 0.0
      %v6661 = vld [vmem:[%s11] sm:$0xff]
      %v6662 = vld [vmem:[%s11 + $0x8] sm:$0xff]
      %v6663 = vld [vmem:[%s11 + $0x10] sm:$0xff]
      %v6664 = vld [vmem:[%s11 + $0x18] sm:$0xff]
      %v6665 = vld [vmem:[%s12] sm:$0x1]
      %v6667 = vlaneseq
      %v6668 = vshrl.u32 %v6667, 7
      %v6669 = vsub.s32 0, %v6668
      %v6670 = vrot.slane %v6665, %v6669
      %v6673 = vsel %vm1072, %v6597, 0
      %v6676 = vsel %vm1072, %v6598, 0
      %v6679 = vsel %vm1072, %v6599, 0
      %v6682 = vsel %vm1072, %v6600, 0
      %v6685 = vsel %vm1072, %v6601, 0
      %v6688 = vsel %vm1072, %v6602, 0
      %v6691 = vsel %vm1072, %v6603, 0
      %v6694 = vsel %vm1072, %v6604, 0
      %v6697 = vsel %vm1072, %v6605, 0
      %v6700 = vsel %vm1072, %v6606, 0
      %v6703 = vsel %vm1072, %v6607, 0
      %v6706 = vsel %vm1072, %v6608, 0
      %v6709 = vsel %vm1072, %v6609, 0
      %v6712 = vsel %vm1072, %v6610, 0
      %v6715 = vsel %vm1072, %v6611, 0
      %v6718 = vsel %vm1072, %v6612, 0
      %v6721 = vsel %vm1072, %v6613, 0
      %v6724 = vsel %vm1072, %v6614, 0
      %v6727 = vsel %vm1072, %v6615, 0
      %v6730 = vsel %vm1072, %v6616, 0
      %v6733 = vsel %vm1072, %v6617, 0
      %v6736 = vsel %vm1072, %v6618, 0
      %v6739 = vsel %vm1072, %v6619, 0
      %v6742 = vsel %vm1072, %v6620, 0
      %v6745 = vsel %vm1072, %v6621, 0
      %v6748 = vsel %vm1072, %v6622, 0
      %v6751 = vsel %vm1072, %v6623, 0
      %v6754 = vsel %vm1072, %v6624, 0
      %v6757 = vsel %vm1072, %v6625, 0
      %v6760 = vsel %vm1072, %v6626, 0
      %v6763 = vsel %vm1072, %v6627, 0
      %v6766 = vsel %vm1072, %v6628, 0
      %v6769 = vsel %vm1072, %v6629, 0
      %v6772 = vsel %vm1072, %v6630, 0
      %v6775 = vsel %vm1072, %v6631, 0
      %v6778 = vsel %vm1072, %v6632, 0
      %v6781 = vsel %vm1072, %v6633, 0
      %v6784 = vsel %vm1072, %v6634, 0
      %v6787 = vsel %vm1072, %v6635, 0
      %v6790 = vsel %vm1072, %v6636, 0
      %v6793 = vsel %vm1072, %v6637, 0
      %v6796 = vsel %vm1072, %v6638, 0
      %v6799 = vsel %vm1072, %v6639, 0
      %v6802 = vsel %vm1072, %v6640, 0
      %v6805 = vsel %vm1072, %v6641, 0
      %v6808 = vsel %vm1072, %v6642, 0
      %v6811 = vsel %vm1072, %v6643, 0
      %v6814 = vsel %vm1072, %v6644, 0
      %v6817 = vsel %vm1072, %v6645, 0
      %v6820 = vsel %vm1072, %v6646, 0
      %v6823 = vsel %vm1072, %v6647, 0
      %v6826 = vsel %vm1072, %v6648, 0
      %v6829 = vsel %vm1072, %v6649, 0
      %v6832 = vsel %vm1072, %v6650, 0
      %v6835 = vsel %vm1072, %v6651, 0
      %v6838 = vsel %vm1072, %v6652, 0
      %v6841 = vsel %vm1072, %v6653, 0
      %v6844 = vsel %vm1072, %v6654, 0
      %v6847 = vsel %vm1072, %v6655, 0
      %v6850 = vsel %vm1072, %v6656, 0
      %v6853 = vsel %vm1072, %v6657, 0
      %v6856 = vsel %vm1072, %v6658, 0
      %v6859 = vsel %vm1072, %v6659, 0
      %v6862 = vsel %vm1072, %v6660, 0
      %6864 = vmatprep.subr.mxu0 0.0
      %6865 = vmatpush1.msra.mxu0 %v6661
      %6866 = vmatprep.subr.mxu0 0.0
      %6867 = vmatpush1.msra.mxu0 %v6662
      %6868 = vmatprep.subr.mxu0 0.0
      %6869 = vmatpush1.msra.mxu0 %v6663
      %6870 = vmatprep.subr.mxu0 0.0
      %6871 = vmatpush1.msra.mxu0 %v6664
      %6872 = vmatprep.subr.mxu0 0.0
      %6873 = vmatpush1.msra.mxu0 0.0
      %6874 = vmatprep.subr.mxu0 0.0
      %6875 = vmatpush1.msra.mxu0 0.0
      %6876 = vmatprep.subr.mxu0 0.0
      %6877 = vmatpush1.msra.mxu0 0.0
      %6878 = vmatprep.subr.mxu0 0.0
      %6879 = vmatpush1.msra.mxu0 0.0
      %6880 = vmatprep.subr.mxu0 0.0
      %6881 = vmatpush1.msra.mxu0 0.0
      %6882 = vmatprep.subr.mxu0 0.0
      %6883 = vmatpush1.msra.mxu0 0.0
      %6884 = vmatprep.subr.mxu0 0.0
      %6885 = vmatpush1.msra.mxu0 0.0
      %6886 = vmatprep.subr.mxu0 0.0
      %6887 = vmatpush1.msra.mxu0 0.0
      %6888 = vmatprep.subr.mxu0 0.0
      %6889 = vmatpush1.msra.mxu0 0.0
      %6890 = vmatprep.subr.mxu0 0.0
      %6891 = vmatpush1.msra.mxu0 0.0
      %6892 = vmatprep.subr.mxu0 0.0
      %6893 = vmatpush1.msra.mxu0 0.0
      %6894 = vmatprep.subr.mxu0 0.0
      %6895 = vmatpush1.msra.mxu0 0.0
      %6896 = vmatprep.subr.mxu0 0.0
      %6897 = vmatpush1.msra.mxu0 0.0
      %6898 = vmatprep.subr.mxu0 0.0
      %6899 = vmatpush1.msra.mxu0 0.0
      %6900 = vmatprep.subr.mxu0 0.0
      %6901 = vmatpush1.msra.mxu0 0.0
      %6902 = vmatprep.subr.mxu0 0.0
      %6903 = vmatpush1.msra.mxu0 0.0
      %6904 = vmatprep.subr.mxu0 0.0
      %6905 = vmatpush1.msra.mxu0 0.0
      %6906 = vmatprep.subr.mxu0 0.0
      %6907 = vmatpush1.msra.mxu0 0.0
      %6908 = vmatprep.subr.mxu0 0.0
      %6909 = vmatpush1.msra.mxu0 0.0
      %6910 = vmatprep.subr.mxu0 0.0
      %6911 = vmatpush1.msra.mxu0 0.0
      %6912 = vmatprep.subr.mxu0 0.0
      %6913 = vmatpush1.msra.mxu0 0.0
      %6914 = vmatprep.subr.mxu0 0.0
      %6915 = vmatpush1.msra.mxu0 0.0
      %6916 = vmatprep.subr.mxu0 0.0
      %6917 = vmatpush1.msra.mxu0 0.0
      %6918 = vmatprep.subr.mxu0 0.0
      %6919 = vmatpush1.msra.mxu0 0.0
      %6920 = vmatprep.subr.mxu0 0.0
      %6921 = vmatpush1.msra.mxu0 0.0
      %6922 = vmatprep.subr.mxu0 0.0
      %6923 = vmatpush1.msra.mxu0 0.0
      %6924 = vmatprep.subr.mxu0 0.0
      %6925 = vmatpush1.msra.mxu0 0.0
      %6926 = vmatprep.subr.mxu0 0.0
      %6927 = vmatpush1.msra.mxu0 0.0
      %6928 = vmatprep.mubr.f32.mxu0 0.0
      %6929 = vmatmul.mubr.f32.gmra.mrb[0].mxu0 %v6673
      %v6930 = vpop.f32.mrb[0].mxu0
      %v6931 = vadd.f32 %v6670, %v6930
      %v6932 = vpop.f32.mrb[0].mxu0
      %6933 = vmatprep.mubr.f32.mxu0 0.0
      %6934 = vmatmul.mubr.f32.gmra.mrb[0].mxu0 %v6676
      %v6935 = vpop.f32.mrb[0].mxu0
      %v6936 = vadd.f32 %v6670, %v6935
      %v6937 = vpop.f32.mrb[0].mxu0
      %6938 = vmatprep.mubr.f32.mxu0 0.0
      %6939 = vmatmul.mubr.f32.gmra.mrb[0].mxu0 %v6679
      %v6940 = vpop.f32.mrb[0].mxu0
      %v6941 = vadd.f32 %v6670, %v6940
      %v6942 = vpop.f32.mrb[0].mxu0
      %6943 = vmatprep.mubr.f32.mxu0 0.0
      %6944 = vmatmul.mubr.f32.gmra.mrb[0].mxu0 %v6682
      %v6945 = vpop.f32.mrb[0].mxu0
      %v6946 = vadd.f32 %v6670, %v6945
      %v6947 = vpop.f32.mrb[0].mxu0
      %6948 = vmatprep.mubr.f32.mxu0 0.0
      %6949 = vmatmul.mubr.f32.gmra.mrb[0].mxu0 %v6685
      %v6950 = vpop.f32.mrb[0].mxu0
      %v6951 = vadd.f32 %v6670, %v6950
      %v6952 = vpop.f32.mrb[0].mxu0
      %6953 = vmatprep.mubr.f32.mxu0 0.0
      %6954 = vmatmul.mubr.f32.gmra.mrb[0].mxu0 %v6688
      %v6955 = vpop.f32.mrb[0].mxu0
      %v6956 = vadd.f32 %v6670, %v6955
      %v6957 = vpop.f32.mrb[0].mxu0
      %6958 = vmatprep.mubr.f32.mxu0 0.0
      %6959 = vmatmul.mubr.f32.gmra.mrb[0].mxu0 %v6691
      %v6960 = vpop.f32.mrb[0].mxu0
      %v6961 = vadd.f32 %v6670, %v6960
      %v6962 = vpop.f32.mrb[0].mxu0
      %6963 = vmatprep.mubr.f32.mxu0 0.0
      %6964 = vmatmul.mubr.f32.gmra.mrb[0].mxu0 %v6694
      %v6965 = vpop.f32.mrb[0].mxu0
      %v6966 = vadd.f32 %v6670, %v6965
      %v6967 = vpop.f32.mrb[0].mxu0
      %6968 = vmatprep.mubr.f32.mxu0 0.0
      %6969 = vmatmul.mubr.f32.gmra.mrb[0].mxu0 %v6697
      %v6970 = vpop.f32.mrb[0].mxu0
      %v6971 = vadd.f32 %v6670, %v6970
      %v6972 = vpop.f32.mrb[0].mxu0
      %6973 = vmatprep.mubr.f32.mxu0 0.0
      %6974 = vmatmul.mubr.f32.gmra.mrb[0].mxu0 %v6700
      %v6975 = vpop.f32.mrb[0].mxu0
      %v6976 = vadd.f32 %v6670, %v6975
      %v6977 = vpop.f32.mrb[0].mxu0
      %6978 = vmatprep.mubr.f32.mxu0 0.0
      %6979 = vmatmul.mubr.f32.gmra.mrb[0].mxu0 %v6703
      %v6980 = vpop.f32.mrb[0].mxu0
      %v6981 = vadd.f32 %v6670, %v6980
      %v6982 = vpop.f32.mrb[0].mxu0
      %6983 = vmatprep.mubr.f32.mxu0 0.0
      %6984 = vmatmul.mubr.f32.gmra.mrb[0].mxu0 %v6706
      %v6985 = vpop.f32.mrb[0].mxu0
      %v6986 = vadd.f32 %v6670, %v6985
      %v6987 = vpop.f32.mrb[0].mxu0
      %6988 = vmatprep.mubr.f32.mxu0 0.0
      %6989 = vmatmul.mubr.f32.gmra.mrb[0].mxu0 %v6709
      %v6990 = vpop.f32.mrb[0].mxu0
      %v6991 = vadd.f32 %v6670, %v6990
      %v6992 = vpop.f32.mrb[0].mxu0
      %6993 = vmatprep.mubr.f32.mxu0 0.0
      %6994 = vmatmul.mubr.f32.gmra.mrb[0].mxu0 %v6712
      %v6995 = vpop.f32.mrb[0].mxu0
      %v6996 = vadd.f32 %v6670, %v6995
      %v6997 = vpop.f32.mrb[0].mxu0
      %6998 = vmatprep.mubr.f32.mxu0 0.0
      %6999 = vmatmul.mubr.f32.gmra.mrb[0].mxu0 %v6715
      %v7000 = vpop.f32.mrb[0].mxu0
      %v7001 = vadd.f32 %v6670, %v7000
      %v7002 = vpop.f32.mrb[0].mxu0
      %7003 = vmatprep.mubr.f32.mxu0 0.0
      %7004 = vmatmul.mubr.f32.gmra.mrb[0].mxu0 %v6718
      %v7005 = vpop.f32.mrb[0].mxu0
      %v7006 = vadd.f32 %v6670, %v7005
      %v7007 = vpop.f32.mrb[0].mxu0
      %7008 = vmatprep.mubr.f32.mxu0 0.0
      %7009 = vmatmul.mubr.f32.gmra.mrb[0].mxu0 %v6721
      %v7010 = vpop.f32.mrb[0].mxu0
      %v7011 = vadd.f32 %v6670, %v7010
      %v7012 = vpop.f32.mrb[0].mxu0
      %7013 = vmatprep.mubr.f32.mxu0 0.0
      %7014 = vmatmul.mubr.f32.gmra.mrb[0].mxu0 %v6724
      %v7015 = vpop.f32.mrb[0].mxu0
      %v7016 = vadd.f32 %v6670, %v7015
      %v7017 = vpop.f32.mrb[0].mxu0
      %7018 = vmatprep.mubr.f32.mxu0 0.0
      %7019 = vmatmul.mubr.f32.gmra.mrb[0].mxu0 %v6727
      %v7020 = vpop.f32.mrb[0].mxu0
      %v7021 = vadd.f32 %v6670, %v7020
      %v7022 = vpop.f32.mrb[0].mxu0
      %7023 = vmatprep.mubr.f32.mxu0 0.0
      %7024 = vmatmul.mubr.f32.gmra.mrb[0].mxu0 %v6730
      %v7025 = vpop.f32.mrb[0].mxu0
      %v7026 = vadd.f32 %v6670, %v7025
      %v7027 = vpop.f32.mrb[0].mxu0
      %7028 = vmatprep.mubr.f32.mxu0 0.0
      %7029 = vmatmul.mubr.f32.gmra.mrb[0].mxu0 %v6733
      %v7030 = vpop.f32.mrb[0].mxu0
      %v7031 = vadd.f32 %v6670, %v7030
      %v7032 = vpop.f32.mrb[0].mxu0
      %7033 = vmatprep.mubr.f32.mxu0 0.0
      %7034 = vmatmul.mubr.f32.gmra.mrb[0].mxu0 %v6736
      %v7035 = vpop.f32.mrb[0].mxu0
      %v7036 = vadd.f32 %v6670, %v7035
      %v7037 = vpop.f32.mrb[0].mxu0
      %7038 = vmatprep.mubr.f32.mxu0 0.0
      %7039 = vmatmul.mubr.f32.gmra.mrb[0].mxu0 %v6739
      %v7040 = vpop.f32.mrb[0].mxu0
      %v7041 = vadd.f32 %v6670, %v7040
      %v7042 = vpop.f32.mrb[0].mxu0
      %7043 = vmatprep.mubr.f32.mxu0 0.0
      %7044 = vmatmul.mubr.f32.gmra.mrb[0].mxu0 %v6742
      %v7045 = vpop.f32.mrb[0].mxu0
      %v7046 = vadd.f32 %v6670, %v7045
      %v7047 = vpop.f32.mrb[0].mxu0
      %7048 = vmatprep.mubr.f32.mxu0 0.0
      %7049 = vmatmul.mubr.f32.gmra.mrb[0].mxu0 %v6745
      %v7050 = vpop.f32.mrb[0].mxu0
      %v7051 = vadd.f32 %v6670, %v7050
      %v7052 = vpop.f32.mrb[0].mxu0
      %7053 = vmatprep.mubr.f32.mxu0 0.0
      %7054 = vmatmul.mubr.f32.gmra.mrb[0].mxu0 %v6748
      %v7055 = vpop.f32.mrb[0].mxu0
      %v7056 = vadd.f32 %v6670, %v7055
      %v7057 = vpop.f32.mrb[0].mxu0
      %7058 = vmatprep.mubr.f32.mxu0 0.0
      %7059 = vmatmul.mubr.f32.gmra.mrb[0].mxu0 %v6751
      %v7060 = vpop.f32.mrb[0].mxu0
      %v7061 = vadd.f32 %v6670, %v7060
      %v7062 = vpop.f32.mrb[0].mxu0
      %7063 = vmatprep.mubr.f32.mxu0 0.0
      %7064 = vmatmul.mubr.f32.gmra.mrb[0].mxu0 %v6754
      %v7065 = vpop.f32.mrb[0].mxu0
      %v7066 = vadd.f32 %v6670, %v7065
      %v7067 = vpop.f32.mrb[0].mxu0
      %7068 = vmatprep.mubr.f32.mxu0 0.0
      %7069 = vmatmul.mubr.f32.gmra.mrb[0].mxu0 %v6757
      %v7070 = vpop.f32.mrb[0].mxu0
      %v7071 = vadd.f32 %v6670, %v7070
      %v7072 = vpop.f32.mrb[0].mxu0
      %7073 = vmatprep.mubr.f32.mxu0 0.0
      %7074 = vmatmul.mubr.f32.gmra.mrb[0].mxu0 %v6760
      %v7075 = vpop.f32.mrb[0].mxu0
      %v7076 = vadd.f32 %v6670, %v7075
      %v7077 = vpop.f32.mrb[0].mxu0
      %7078 = vmatprep.mubr.f32.mxu0 0.0
      %7079 = vmatmul.mubr.f32.gmra.mrb[0].mxu0 %v6763
      %v7080 = vpop.f32.mrb[0].mxu0
      %v7081 = vadd.f32 %v6670, %v7080
      %v7082 = vpop.f32.mrb[0].mxu0
      %7083 = vmatprep.mubr.f32.mxu0 0.0
      %7084 = vmatmul.mubr.f32.gmra.mrb[0].mxu0 %v6766
      %v7085 = vpop.f32.mrb[0].mxu0
      %v7086 = vadd.f32 %v6670, %v7085
      %v7087 = vpop.f32.mrb[0].mxu0
      %7088 = vmatprep.mubr.f32.mxu0 0.0
      %7089 = vmatmul.mubr.f32.gmra.mrb[0].mxu0 %v6769
      %v7090 = vpop.f32.mrb[0].mxu0
      %v7091 = vadd.f32 %v6670, %v7090
      %v7092 = vpop.f32.mrb[0].mxu0
      %7093 = vmatprep.mubr.f32.mxu0 0.0
      %7094 = vmatmul.mubr.f32.gmra.mrb[0].mxu0 %v6772
      %v7095 = vpop.f32.mrb[0].mxu0
      %v7096 = vadd.f32 %v6670, %v7095
      %v7097 = vpop.f32.mrb[0].mxu0
      %7098 = vmatprep.mubr.f32.mxu0 0.0
      %7099 = vmatmul.mubr.f32.gmra.mrb[0].mxu0 %v6775
      %v7100 = vpop.f32.mrb[0].mxu0
      %v7101 = vadd.f32 %v6670, %v7100
      %v7102 = vpop.f32.mrb[0].mxu0
      %7103 = vmatprep.mubr.f32.mxu0 0.0
      %7104 = vmatmul.mubr.f32.gmra.mrb[0].mxu0 %v6778
      %v7105 = vpop.f32.mrb[0].mxu0
      %v7106 = vadd.f32 %v6670, %v7105
      %v7107 = vpop.f32.mrb[0].mxu0
      %7108 = vmatprep.mubr.f32.mxu0 0.0
      %7109 = vmatmul.mubr.f32.gmra.mrb[0].mxu0 %v6781
      %v7110 = vpop.f32.mrb[0].mxu0
      %v7111 = vadd.f32 %v6670, %v7110
      %v7112 = vpop.f32.mrb[0].mxu0
      %7113 = vmatprep.mubr.f32.mxu0 0.0
      %7114 = vmatmul.mubr.f32.gmra.mrb[0].mxu0 %v6784
      %v7115 = vpop.f32.mrb[0].mxu0
      %v7116 = vadd.f32 %v6670, %v7115
      %v7117 = vpop.f32.mrb[0].mxu0
      %7118 = vmatprep.mubr.f32.mxu0 0.0
      %7119 = vmatmul.mubr.f32.gmra.mrb[0].mxu0 %v6787
      %v7120 = vpop.f32.mrb[0].mxu0
      %v7121 = vadd.f32 %v6670, %v7120
      %v7122 = vpop.f32.mrb[0].mxu0
      %7123 = vmatprep.mubr.f32.mxu0 0.0
      %7124 = vmatmul.mubr.f32.gmra.mrb[0].mxu0 %v6790
      %v7125 = vpop.f32.mrb[0].mxu0
      %v7126 = vadd.f32 %v6670, %v7125
      %v7127 = vpop.f32.mrb[0].mxu0
      %7128 = vmatprep.mubr.f32.mxu0 0.0
      %7129 = vmatmul.mubr.f32.gmra.mrb[0].mxu0 %v6793
      %v7130 = vpop.f32.mrb[0].mxu0
      %v7131 = vadd.f32 %v6670, %v7130
      %v7132 = vpop.f32.mrb[0].mxu0
      %7133 = vmatprep.mubr.f32.mxu0 0.0
      %7134 = vmatmul.mubr.f32.gmra.mrb[0].mxu0 %v6796
      %v7135 = vpop.f32.mrb[0].mxu0
      %v7136 = vadd.f32 %v6670, %v7135
      %v7137 = vpop.f32.mrb[0].mxu0
      %7138 = vmatprep.mubr.f32.mxu0 0.0
      %7139 = vmatmul.mubr.f32.gmra.mrb[0].mxu0 %v6799
      %v7140 = vpop.f32.mrb[0].mxu0
      %v7141 = vadd.f32 %v6670, %v7140
      %v7142 = vpop.f32.mrb[0].mxu0
      %7143 = vmatprep.mubr.f32.mxu0 0.0
      %7144 = vmatmul.mubr.f32.gmra.mrb[0].mxu0 %v6802
      %v7145 = vpop.f32.mrb[0].mxu0
      %v7146 = vadd.f32 %v6670, %v7145
      %v7147 = vpop.f32.mrb[0].mxu0
      %7148 = vmatprep.mubr.f32.mxu0 0.0
      %7149 = vmatmul.mubr.f32.gmra.mrb[0].mxu0 %v6805
      %v7150 = vpop.f32.mrb[0].mxu0
      %v7151 = vadd.f32 %v6670, %v7150
      %v7152 = vpop.f32.mrb[0].mxu0
      %7153 = vmatprep.mubr.f32.mxu0 0.0
      %7154 = vmatmul.mubr.f32.gmra.mrb[0].mxu0 %v6808
      %v7155 = vpop.f32.mrb[0].mxu0
      %v7156 = vadd.f32 %v6670, %v7155
      %v7157 = vpop.f32.mrb[0].mxu0
      %7158 = vmatprep.mubr.f32.mxu0 0.0
      %7159 = vmatmul.mubr.f32.gmra.mrb[0].mxu0 %v6811
      %v7160 = vpop.f32.mrb[0].mxu0
      %v7161 = vadd.f32 %v6670, %v7160
      %v7162 = vpop.f32.mrb[0].mxu0
      %7163 = vmatprep.mubr.f32.mxu0 0.0
      %7164 = vmatmul.mubr.f32.gmra.mrb[0].mxu0 %v6814
      %v7165 = vpop.f32.mrb[0].mxu0
      %v7166 = vadd.f32 %v6670, %v7165
      %v7167 = vpop.f32.mrb[0].mxu0
      %7168 = vmatprep.mubr.f32.mxu0 0.0
      %7169 = vmatmul.mubr.f32.gmra.mrb[0].mxu0 %v6817
      %v7170 = vpop.f32.mrb[0].mxu0
      %v7171 = vadd.f32 %v6670, %v7170
      %v7172 = vpop.f32.mrb[0].mxu0
      %7173 = vmatprep.mubr.f32.mxu0 0.0
      %7174 = vmatmul.mubr.f32.gmra.mrb[0].mxu0 %v6820
      %v7175 = vpop.f32.mrb[0].mxu0
      %v7176 = vadd.f32 %v6670, %v7175
      %v7177 = vpop.f32.mrb[0].mxu0
      %7178 = vmatprep.mubr.f32.mxu0 0.0
      %7179 = vmatmul.mubr.f32.gmra.mrb[0].mxu0 %v6823
      %v7180 = vpop.f32.mrb[0].mxu0
      %v7181 = vadd.f32 %v6670, %v7180
      %v7182 = vpop.f32.mrb[0].mxu0
      %7183 = vmatprep.mubr.f32.mxu0 0.0
      %7184 = vmatmul.mubr.f32.gmra.mrb[0].mxu0 %v6826
      %v7185 = vpop.f32.mrb[0].mxu0
      %v7186 = vadd.f32 %v6670, %v7185
      %v7187 = vpop.f32.mrb[0].mxu0
      %7188 = vmatprep.mubr.f32.mxu0 0.0
      %7189 = vmatmul.mubr.f32.gmra.mrb[0].mxu0 %v6829
      %v7190 = vpop.f32.mrb[0].mxu0
      %v7191 = vadd.f32 %v6670, %v7190
      %v7192 = vpop.f32.mrb[0].mxu0
      %7193 = vmatprep.mubr.f32.mxu0 0.0
      %7194 = vmatmul.mubr.f32.gmra.mrb[0].mxu0 %v6832
      %v7195 = vpop.f32.mrb[0].mxu0
      %v7196 = vadd.f32 %v6670, %v7195
      %v7197 = vpop.f32.mrb[0].mxu0
      %7198 = vmatprep.mubr.f32.mxu0 0.0
      %7199 = vmatmul.mubr.f32.gmra.mrb[0].mxu0 %v6835
      %v7200 = vpop.f32.mrb[0].mxu0
      %v7201 = vadd.f32 %v6670, %v7200
      %v7202 = vpop.f32.mrb[0].mxu0
      %7203 = vmatprep.mubr.f32.mxu0 0.0
      %7204 = vmatmul.mubr.f32.gmra.mrb[0].mxu0 %v6838
      %v7205 = vpop.f32.mrb[0].mxu0
      %v7206 = vadd.f32 %v6670, %v7205
      %v7207 = vpop.f32.mrb[0].mxu0
      %7208 = vmatprep.mubr.f32.mxu0 0.0
      %7209 = vmatmul.mubr.f32.gmra.mrb[0].mxu0 %v6841
      %v7210 = vpop.f32.mrb[0].mxu0
      %v7211 = vadd.f32 %v6670, %v7210
      %v7212 = vpop.f32.mrb[0].mxu0
      %7213 = vmatprep.mubr.f32.mxu0 0.0
      %7214 = vmatmul.mubr.f32.gmra.mrb[0].mxu0 %v6844
      %v7215 = vpop.f32.mrb[0].mxu0
      %v7216 = vadd.f32 %v6670, %v7215
      %v7217 = vpop.f32.mrb[0].mxu0
      %7218 = vmatprep.mubr.f32.mxu0 0.0
      %7219 = vmatmul.mubr.f32.gmra.mrb[0].mxu0 %v6847
      %v7220 = vpop.f32.mrb[0].mxu0
      %v7221 = vadd.f32 %v6670, %v7220
      %v7222 = vpop.f32.mrb[0].mxu0
      %7223 = vmatprep.mubr.f32.mxu0 0.0
      %7224 = vmatmul.mubr.f32.gmra.mrb[0].mxu0 %v6850
      %v7225 = vpop.f32.mrb[0].mxu0
      %v7226 = vadd.f32 %v6670, %v7225
      %v7227 = vpop.f32.mrb[0].mxu0
      %7228 = vmatprep.mubr.f32.mxu0 0.0
      %7229 = vmatmul.mubr.f32.gmra.mrb[0].mxu0 %v6853
      %v7230 = vpop.f32.mrb[0].mxu0
      %v7231 = vadd.f32 %v6670, %v7230
      %v7232 = vpop.f32.mrb[0].mxu0
      %7233 = vmatprep.mubr.f32.mxu0 0.0
      %7234 = vmatmul.mubr.f32.gmra.mrb[0].mxu0 %v6856
      %v7235 = vpop.f32.mrb[0].mxu0
      %v7236 = vadd.f32 %v6670, %v7235
      %v7237 = vpop.f32.mrb[0].mxu0
      %7238 = vmatprep.mubr.f32.mxu0 0.0
      %7239 = vmatmul.mubr.f32.gmra.mrb[0].mxu0 %v6859
      %v7240 = vpop.f32.mrb[0].mxu0
      %v7241 = vadd.f32 %v6670, %v7240
      %v7242 = vpop.f32.mrb[0].mxu0
      %7243 = vmatprep.mubr.f32.mxu0 0.0
      %7244 = vmatmul.mubr.f32.gmra.mrb[0].mxu0 %v6862
      %v7245 = vpop.f32.mrb[0].mxu0
      %v7246 = vadd.f32 %v6670, %v7245
      %v7247 = vpop.f32.mrb[0].mxu0
      %7248 = vdwg.mxu0
      %v7249 = vpack.c.bf16 %v6936, %v6931
      %v7250 = vpack.c.bf16 %v6946, %v6941
      %v7251 = vpack.c.bf16 %v6956, %v6951
      %v7252 = vpack.c.bf16 %v6966, %v6961
      %v7253 = vpack.c.bf16 %v6976, %v6971
      %v7254 = vpack.c.bf16 %v6986, %v6981
      %v7255 = vpack.c.bf16 %v6996, %v6991
      %v7256 = vpack.c.bf16 %v7006, %v7001
      %v7257 = vpack.c.bf16 %v7016, %v7011
      %v7258 = vpack.c.bf16 %v7026, %v7021
      %v7259 = vpack.c.bf16 %v7036, %v7031
      %v7260 = vpack.c.bf16 %v7046, %v7041
      %v7261 = vpack.c.bf16 %v7056, %v7051
      %v7262 = vpack.c.bf16 %v7066, %v7061
      %v7263 = vpack.c.bf16 %v7076, %v7071
      %v7264 = vpack.c.bf16 %v7086, %v7081
      %v7265 = vpack.c.bf16 %v7096, %v7091
      %v7266 = vpack.c.bf16 %v7106, %v7101
      %v7267 = vpack.c.bf16 %v7116, %v7111
      %v7268 = vpack.c.bf16 %v7126, %v7121
      %v7269 = vpack.c.bf16 %v7136, %v7131
      %v7270 = vpack.c.bf16 %v7146, %v7141
      %v7271 = vpack.c.bf16 %v7156, %v7151
      %v7272 = vpack.c.bf16 %v7166, %v7161
      %v7273 = vpack.c.bf16 %v7176, %v7171
      %v7274 = vpack.c.bf16 %v7186, %v7181
      %v7275 = vpack.c.bf16 %v7196, %v7191
      %v7276 = vpack.c.bf16 %v7206, %v7201
      %v7277 = vpack.c.bf16 %v7216, %v7211
      %v7278 = vpack.c.bf16 %v7226, %v7221
      %v7279 = vpack.c.bf16 %v7236, %v7231
      %v7280 = vpack.c.bf16 %v7246, %v7241
      %v7313 = vunpack.c.l.b16 %v7249
      %v7314 = vunpack.c.h.b16 %v7249
      %v7315 = vunpack.c.l.b16 %v7250
      %v7316 = vunpack.c.h.b16 %v7250
      %v7317 = vunpack.c.l.b16 %v7251
      %v7318 = vunpack.c.h.b16 %v7251
      %v7319 = vunpack.c.l.b16 %v7252
      %v7320 = vunpack.c.h.b16 %v7252
      %v7321 = vunpack.c.l.b16 %v7253
      %v7322 = vunpack.c.h.b16 %v7253
      %v7323 = vunpack.c.l.b16 %v7254
      %v7324 = vunpack.c.h.b16 %v7254
      %v7325 = vunpack.c.l.b16 %v7255
      %v7326 = vunpack.c.h.b16 %v7255
      %v7327 = vunpack.c.l.b16 %v7256
      %v7328 = vunpack.c.h.b16 %v7256
      %v7329 = vunpack.c.l.b16 %v7257
      %v7330 = vunpack.c.h.b16 %v7257
      %v7331 = vunpack.c.l.b16 %v7258
      %v7332 = vunpack.c.h.b16 %v7258
      %v7333 = vunpack.c.l.b16 %v7259
      %v7334 = vunpack.c.h.b16 %v7259
      %v7335 = vunpack.c.l.b16 %v7260
      %v7336 = vunpack.c.h.b16 %v7260
      %v7337 = vunpack.c.l.b16 %v7261
      %v7338 = vunpack.c.h.b16 %v7261
      %v7339 = vunpack.c.l.b16 %v7262
      %v7340 = vunpack.c.h.b16 %v7262
      %v7341 = vunpack.c.l.b16 %v7263
      %v7342 = vunpack.c.h.b16 %v7263
      %v7343 = vunpack.c.l.b16 %v7264
      %v7344 = vunpack.c.h.b16 %v7264
      %v7345 = vunpack.c.l.b16 %v7265
      %v7346 = vunpack.c.h.b16 %v7265
      %v7347 = vunpack.c.l.b16 %v7266
      %v7348 = vunpack.c.h.b16 %v7266
      %v7349 = vunpack.c.l.b16 %v7267
      %v7350 = vunpack.c.h.b16 %v7267
      %v7351 = vunpack.c.l.b16 %v7268
      %v7352 = vunpack.c.h.b16 %v7268
      %v7353 = vunpack.c.l.b16 %v7269
      %v7354 = vunpack.c.h.b16 %v7269
      %v7355 = vunpack.c.l.b16 %v7270
      %v7356 = vunpack.c.h.b16 %v7270
      %v7357 = vunpack.c.l.b16 %v7271
      %v7358 = vunpack.c.h.b16 %v7271
      %v7359 = vunpack.c.l.b16 %v7272
      %v7360 = vunpack.c.h.b16 %v7272
      %v7361 = vunpack.c.l.b16 %v7273
      %v7362 = vunpack.c.h.b16 %v7273
      %v7363 = vunpack.c.l.b16 %v7274
      %v7364 = vunpack.c.h.b16 %v7274
      %v7365 = vunpack.c.l.b16 %v7275
      %v7366 = vunpack.c.h.b16 %v7275
      %v7367 = vunpack.c.l.b16 %v7276
      %v7368 = vunpack.c.h.b16 %v7276
      %v7369 = vunpack.c.l.b16 %v7277
      %v7370 = vunpack.c.h.b16 %v7277
      %v7371 = vunpack.c.l.b16 %v7278
      %v7372 = vunpack.c.h.b16 %v7278
      %v7373 = vunpack.c.l.b16 %v7279
      %v7374 = vunpack.c.h.b16 %v7279
      %v7375 = vunpack.c.l.b16 %v7280
      %v7376 = vunpack.c.h.b16 %v7280
      %v7377 = vpack.c.b16 %v7313, %v7313
      %v7378 = vpack.c.b16 %v7314, %v7314
      %v7379 = vpack.c.b16 %v7315, %v7315
      %v7380 = vpack.c.b16 %v7316, %v7316
      %v7381 = vpack.c.b16 %v7317, %v7317
      %v7382 = vpack.c.b16 %v7318, %v7318
      %v7383 = vpack.c.b16 %v7319, %v7319
      %v7384 = vpack.c.b16 %v7320, %v7320
      %v7385 = vpack.c.b16 %v7321, %v7321
      %v7386 = vpack.c.b16 %v7322, %v7322
      %v7387 = vpack.c.b16 %v7323, %v7323
      %v7388 = vpack.c.b16 %v7324, %v7324
      %v7389 = vpack.c.b16 %v7325, %v7325
      %v7390 = vpack.c.b16 %v7326, %v7326
      %v7391 = vpack.c.b16 %v7327, %v7327
      %v7392 = vpack.c.b16 %v7328, %v7328
      %v7393 = vpack.c.b16 %v7329, %v7329
      %v7394 = vpack.c.b16 %v7330, %v7330
      %v7395 = vpack.c.b16 %v7331, %v7331
      %v7396 = vpack.c.b16 %v7332, %v7332
      %v7397 = vpack.c.b16 %v7333, %v7333
      %v7398 = vpack.c.b16 %v7334, %v7334
      %v7399 = vpack.c.b16 %v7335, %v7335
      %v7400 = vpack.c.b16 %v7336, %v7336
      %v7401 = vpack.c.b16 %v7337, %v7337
      %v7402 = vpack.c.b16 %v7338, %v7338
      %v7403 = vpack.c.b16 %v7339, %v7339
      %v7404 = vpack.c.b16 %v7340, %v7340
      %v7405 = vpack.c.b16 %v7341, %v7341
      %v7406 = vpack.c.b16 %v7342, %v7342
      %v7407 = vpack.c.b16 %v7343, %v7343
      %v7408 = vpack.c.b16 %v7344, %v7344
      %v7409 = vpack.c.b16 %v7345, %v7345
      %v7410 = vpack.c.b16 %v7346, %v7346
      %v7411 = vpack.c.b16 %v7347, %v7347
      %v7412 = vpack.c.b16 %v7348, %v7348
      %v7413 = vpack.c.b16 %v7349, %v7349
      %v7414 = vpack.c.b16 %v7350, %v7350
      %v7415 = vpack.c.b16 %v7351, %v7351
      %v7416 = vpack.c.b16 %v7352, %v7352
      %v7417 = vpack.c.b16 %v7353, %v7353
      %v7418 = vpack.c.b16 %v7354, %v7354
      %v7419 = vpack.c.b16 %v7355, %v7355
      %v7420 = vpack.c.b16 %v7356, %v7356
      %v7421 = vpack.c.b16 %v7357, %v7357
      %v7422 = vpack.c.b16 %v7358, %v7358
      %v7423 = vpack.c.b16 %v7359, %v7359
      %v7424 = vpack.c.b16 %v7360, %v7360
      %v7425 = vpack.c.b16 %v7361, %v7361
      %v7426 = vpack.c.b16 %v7362, %v7362
      %v7427 = vpack.c.b16 %v7363, %v7363
      %v7428 = vpack.c.b16 %v7364, %v7364
      %v7429 = vpack.c.b16 %v7365, %v7365
      %v7430 = vpack.c.b16 %v7366, %v7366
      %v7431 = vpack.c.b16 %v7367, %v7367
      %v7432 = vpack.c.b16 %v7368, %v7368
      %v7433 = vpack.c.b16 %v7369, %v7369
      %v7434 = vpack.c.b16 %v7370, %v7370
      %v7435 = vpack.c.b16 %v7371, %v7371
      %v7436 = vpack.c.b16 %v7372, %v7372
      %v7437 = vpack.c.b16 %v7373, %v7373
      %v7438 = vpack.c.b16 %v7374, %v7374
      %v7439 = vpack.c.b16 %v7375, %v7375
      %v7440 = vpack.c.b16 %v7376, %v7376
      %7505 = vst [vmem:[%s442] sm:$0xf] %v7377
      %7506 = vst [vmem:[%s442 + $0x4] sm:$0xf] %v7378
      %7507 = vst [vmem:[%s442 + $0x8] sm:$0xf] %v7379
      %7508 = vst [vmem:[%s442 + $0xc] sm:$0xf] %v7380
      %7509 = vst [vmem:[%s442 + $0x10] sm:$0xf] %v7381
      %7510 = vst [vmem:[%s442 + $0x14] sm:$0xf] %v7382
      %7511 = vst [vmem:[%s442 + $0x18] sm:$0xf] %v7383
      %7512 = vst [vmem:[%s442 + $0x1c] sm:$0xf] %v7384
      %7513 = vst [vmem:[%s442 + $0x20] sm:$0xf] %v7385
      %7514 = vst [vmem:[%s442 + $0x24] sm:$0xf] %v7386
      %7515 = vst [vmem:[%s442 + $0x28] sm:$0xf] %v7387
      %7516 = vst [vmem:[%s442 + $0x2c] sm:$0xf] %v7388
      %7517 = vst [vmem:[%s442 + $0x30] sm:$0xf] %v7389
      %7518 = vst [vmem:[%s442 + $0x34] sm:$0xf] %v7390
      %7519 = vst [vmem:[%s442 + $0x38] sm:$0xf] %v7391
      %7520 = vst [vmem:[%s442 + $0x3c] sm:$0xf] %v7392
      %7521 = vst [vmem:[%s442 + $0x40] sm:$0xf] %v7393
      %7522 = vst [vmem:[%s442 + $0x44] sm:$0xf] %v7394
      %7523 = vst [vmem:[%s442 + $0x48] sm:$0xf] %v7395
      %7524 = vst [vmem:[%s442 + $0x4c] sm:$0xf] %v7396
      %7525 = vst [vmem:[%s442 + $0x50] sm:$0xf] %v7397
      %7526 = vst [vmem:[%s442 + $0x54] sm:$0xf] %v7398
      %7527 = vst [vmem:[%s442 + $0x58] sm:$0xf] %v7399
      %7528 = vst [vmem:[%s442 + $0x5c] sm:$0xf] %v7400
      %7529 = vst [vmem:[%s442 + $0x60] sm:$0xf] %v7401
      %7530 = vst [vmem:[%s442 + $0x64] sm:$0xf] %v7402
      %7531 = vst [vmem:[%s442 + $0x68] sm:$0xf] %v7403
      %7532 = vst [vmem:[%s442 + $0x6c] sm:$0xf] %v7404
      %7533 = vst [vmem:[%s442 + $0x70] sm:$0xf] %v7405
      %7534 = vst [vmem:[%s442 + $0x74] sm:$0xf] %v7406
      %7535 = vst [vmem:[%s442 + $0x78] sm:$0xf] %v7407
      %7536 = vst [vmem:[%s442 + $0x7c] sm:$0xf] %v7408
      %7537 = vst [vmem:[%s442 + $0x80] sm:$0xf] %v7409
      %7538 = vst [vmem:[%s442 + $0x84] sm:$0xf] %v7410
      %7539 = vst [vmem:[%s442 + $0x88] sm:$0xf] %v7411
      %7540 = vst [vmem:[%s442 + $0x8c] sm:$0xf] %v7412
      %7541 = vst [vmem:[%s442 + $0x90] sm:$0xf] %v7413
      %7542 = vst [vmem:[%s442 + $0x94] sm:$0xf] %v7414
      %7543 = vst [vmem:[%s442 + $0x98] sm:$0xf] %v7415
      %7544 = vst [vmem:[%s442 + $0x9c] sm:$0xf] %v7416
      %7545 = vst [vmem:[%s442 + $0xa0] sm:$0xf] %v7417
      %7546 = vst [vmem:[%s442 + $0xa4] sm:$0xf] %v7418
      %7547 = vst [vmem:[%s442 + $0xa8] sm:$0xf] %v7419
      %7548 = vst [vmem:[%s442 + $0xac] sm:$0xf] %v7420
      %7549 = vst [vmem:[%s442 + $0xb0] sm:$0xf] %v7421
      %7550 = vst [vmem:[%s442 + $0xb4] sm:$0xf] %v7422
      %7551 = vst [vmem:[%s442 + $0xb8] sm:$0xf] %v7423
      %7552 = vst [vmem:[%s442 + $0xbc] sm:$0xf] %v7424
      %7553 = vst [vmem:[%s442 + $0xc0] sm:$0xf] %v7425
      %7554 = vst [vmem:[%s442 + $0xc4] sm:$0xf] %v7426
      %7555 = vst [vmem:[%s442 + $0xc8] sm:$0xf] %v7427
      %7556 = vst [vmem:[%s442 + $0xcc] sm:$0xf] %v7428
      %7557 = vst [vmem:[%s442 + $0xd0] sm:$0xf] %v7429
      %7558 = vst [vmem:[%s442 + $0xd4] sm:$0xf] %v7430
      %7559 = vst [vmem:[%s442 + $0xd8] sm:$0xf] %v7431
      %7560 = vst [vmem:[%s442 + $0xdc] sm:$0xf] %v7432
      %7561 = vst [vmem:[%s442 + $0xe0] sm:$0xf] %v7433
      %7562 = vst [vmem:[%s442 + $0xe4] sm:$0xf] %v7434
      %7563 = vst [vmem:[%s442 + $0xe8] sm:$0xf] %v7435
      %7564 = vst [vmem:[%s442 + $0xec] sm:$0xf] %v7436
      %7565 = vst [vmem:[%s442 + $0xf0] sm:$0xf] %v7437
      %7566 = vst [vmem:[%s442 + $0xf4] sm:$0xf] %v7438
      %7567 = vst [vmem:[%s442 + $0xf8] sm:$0xf] %v7439
      %7568 = vst [vmem:[%s442 + $0xfc] sm:$0xf] %v7440
      %s7569 = smul.u32 64, %s24
      %p7570 = scmp.lt.s32.totalorder %s7569, 127
      %s7571 = scalar_select %p7570, %s7569, 127
      %s7572 = smul.addr %s7571, 4
      %s7573 = scalar_lea.vmem %s13, %s7572
      // Predicated region
      $region73: #{resnet_forward.1} parent=71 // pred_check
        %p7574 = pneg %p320
      $region74: #{resnet_forward.1} parent=71 // pred_check_branch
        %7576 = sbr.rel (%p7574) target = $region76
      $region75: #{resnet_forward.1} parent=71 // pred_region
        %s7577 = smul.u32 64, %s24
      $region76: #{resnet_forward.1} parent=71 // pred_fallthru
        _
    $region72: #{resnet_forward.1} parent=5 // pred_fallthru
      _
    %p7578 = scmp.le.s32.totalorder 2, %s19
    // Predicated region
    $region77: #{resnet_forward.1} parent=5 // pred_check
      %p7579 = pneg %p7578
    $region78: #{resnet_forward.1} parent=5 // pred_check_branch
      %7581 = sbr.rel (%p7579) target = $region80
    $region79: #{resnet_forward.1} parent=5 // pred_region
      %s7582 = ssub.s32 %s19, 2
      // Predicated region
      $region81: #{resnet_forward.1} parent=79 // pred_check
        %p7583 = pneg %p326
      $region82: #{resnet_forward.1} parent=79 // pred_check_branch
        %7585 = sbr.rel (%p7583) target = $region84
      $region83: #{resnet_forward.1} parent=79 // pred_region
        %s7586 = smul.u32 64, %s25
        %p7587 = scmp.lt.s32.totalorder %s7586, 127
        %s7588 = scalar_select %p7587, %s7586, 127
        %s7589 = smul.addr %s7588, 4
        %s7590 = scalar_lea.vmem %s13, %s7589
      $region84: #{resnet_forward.1} parent=79 // pred_fallthru
        _
    $region80: #{resnet_forward.1} parent=5 // pred_fallthru
      _
  $region6: #{resnet_forward.1} parent=0 // loop_footer
    %s23 = sadd.s32 1, %s19
  $region7: #{resnet_forward.1} parent=0 // loop_footer_branch
    %18 = sbr.rel target = $region3
  $region8: #{resnet_forward.1} parent=0 // loop_exit
    _

</llo_original>
